<compile_context>
chip_gen: v7x
topology: tpu7x:2x2x1
jax: 0.10.0
libtpu: 0.0.40
codegen_flags: <defaults>
</compile_context>

<pallas_src>
import math

import jax
import jax.numpy as jnp
import numpy as np
from jax.experimental import pallas as pl
from jax.experimental.pallas import tpu as pltpu


def _leaky_relu(x, slope=0.2):
    return jnp.where(x >= 0, x, slope * x)


def _make_resblock_kernel(W, TH, Cp):
    M1 = (TH + 2) * W      # rows of conv1's im2col (1-row halo top & bottom)
    M2 = TH * W            # rows of conv2 / conv3's im2col (= output tile)

    def kernel(x_ref, w1_ref, b1_ref, w2_ref, b2_ref, w3_ref, b3_ref,
               out_ref, h1_scr):
        # x_ref   : (TH+4, Wpad, Cp) bf16   padded input window for this row tile
        # w1/w2   : (9*Cp, Cp) bf16         3x3 kernels, taps flattened into K
        # w3      : (Cp, Cp) bf16, b*_ref : (1, Cp) f32
        # out_ref : (TH, W, Cp) f32         one row tile of the output
        # h1_scr  : (TH+2, W+2, Cp) bf16    W-padded conv1 activation for this tile
        r = pl.program_id(1)

        # ---- conv1 (+LeakyReLU) over TH+2 rows as ONE fused (M1,9Cp)@(9Cp,Cp) matmul.
        # TODO(synk): on v5e (128-wide MXU) per-tap K=Cp matmuls accumulated in f32
        # avoid the concat's extra vst/vld traffic; keep the fused form on v6e/v7x.
        cols = [x_ref[dy:dy + TH + 2, dx:dx + W, :].reshape(M1, Cp)
                for dy in range(3) for dx in range(3)]
        h1 = jnp.dot(jnp.concatenate(cols, axis=-1), w1_ref[...],
                     preferred_element_type=jnp.float32) + b1_ref[...]
        h1 = _leaky_relu(h1).astype(jnp.bfloat16).reshape(TH + 2, W, Cp)

        # re-pad W by 1 into scratch; halo columns re-zeroed every step (cheap and
        # megacore-safe: scratch is per-core, so no "first step only" init).
        zcol = jnp.zeros((TH + 2, 1, Cp), jnp.bfloat16)
        h1_scr[:, 0:1, :] = zcol
        h1_scr[:, W + 1:W + 2, :] = zcol
        h1_scr[:, 1:W + 1, :] = h1

        # Only the first / last row tiles touch the image border: zero the single
        # out-of-image conv1 row (it acts as conv2's zero padding).
        zrow = jnp.zeros((1, W, Cp), jnp.bfloat16)

        @pl.when(r == 0)
        def _():
            h1_scr[0:1, 1:W + 1, :] = zrow

        @pl.when(r == pl.num_programs(1) - 1)
        def _():
            h1_scr[TH + 1:TH + 2, 1:W + 1, :] = zrow

        # ---- conv2 (+LeakyReLU), same fused-matmul scheme -----------------------
        cols2 = [h1_scr[dy:dy + TH, dx:dx + W, :].reshape(M2, Cp)
                 for dy in range(3) for dx in range(3)]
        h2 = jnp.dot(jnp.concatenate(cols2, axis=-1), w2_ref[...],
                     preferred_element_type=jnp.float32) + b2_ref[...]
        h2 = _leaky_relu(h2).astype(jnp.bfloat16)

        # ---- conv3 (1x1) + residual (f32 accumulate, f32 output) ----------------
        h3 = jnp.dot(h2, w3_ref[...], preferred_element_type=jnp.float32) + b3_ref[...]
        res = x_ref[2:2 + TH, 1:W + 1, :].astype(jnp.float32)
        out_ref[...] = (h3.reshape(TH, W, Cp) + res).astype(out_ref.dtype)

    return kernel


def _pick_row_tile(h, target):
    th = min(h, target)
    while h % th:
        th -= 1
    return th


def resblock_pallas(x_nchw, params, *, row_tile=16):
    """x_nchw: (N, C, H, W); params: (w1 HWIO, b1, w2 HWIO, b2, w3 (Cin,Cout), b3)."""
    w1, b1, w2, b2, w3, b3 = params
    N, C, H, W = x_nchw.shape
    Cp = ((C + 127) // 128) * 128            # lane-dense channel padding
    pc = Cp - C
    TH = _pick_row_tile(H, row_tile)
    R = H // TH
    Wpad = ((W + 2 + 7) // 8) * 8            # sublane-friendly window width

    # NHWC, pad rows by 2 / cols by 1 (+ alignment) / channels -> Cp, bf16 operands.
    # TODO(synk): NCHW<->NHWC transposes + pads + window stacking run in XLA outside
    # the kernel; a production pipeline keeps activations NHWC end-to-end.
    x = jnp.transpose(x_nchw, (0, 2, 3, 1))
    xp = jnp.pad(x, ((0, 0), (2, 2), (1, Wpad - W - 1), (0, pc))).astype(jnp.bfloat16)
    # Row windows: window r covers padded rows r*TH .. r*TH+TH+3 (conv1+conv2 halos).
    xw = jnp.stack([xp[:, r * TH: r * TH + TH + 4] for r in range(R)], axis=1)

    def pack3x3(w):                          # HWIO (3,3,C,C) -> (9*Cp, Cp) bf16
        wp = jnp.pad(w, ((0, 0), (0, 0), (0, pc), (0, pc)))
        return wp.reshape(9 * Cp, Cp).astype(jnp.bfloat16)   # row = (dy*3+dx)*Cp + cin

    w1k, w2k = pack3x3(w1), pack3x3(w2)
    w3k = jnp.pad(w3, ((0, pc), (0, pc))).astype(jnp.bfloat16)
    b1r = jnp.pad(b1, (0, pc)).reshape(1, Cp).astype(jnp.float32)
    b2r = jnp.pad(b2, (0, pc)).reshape(1, Cp).astype(jnp.float32)
    b3r = jnp.pad(b3, (0, pc)).reshape(1, Cp).astype(jnp.float32)

    kernel = _make_resblock_kernel(W, TH, Cp)

    # VMEM footprint estimate (double-buffered operands + scratch + matmul temps).
    m1, m2 = (TH + 2) * W, TH * W
    vmem_est = (
        2 * (TH + 4) * Wpad * Cp * 2                  # input window x2 buffers (bf16)
        + 2 * (w1k.size + w2k.size + w3k.size) * 2    # weights x2 buffers (bf16)
        + 2 * 3 * Cp * 4                              # biases
        + 2 * TH * W * Cp * 4                         # output tile x2 buffers (f32)
        + (TH + 2) * (W + 2) * Cp * 2                 # h1 scratch (bf16)
        + (m1 + m2) * 9 * Cp * 2                      # im2col temporaries (bf16)
        + (m1 + 2 * m2) * Cp * 4                      # f32 accumulators
    )
    try:
        phys_vmem = pltpu.get_tpu_info().vmem_capacity_bytes
    except Exception:
        phys_vmem = 64 * 1024 * 1024                  # conservative (v7x per-TC)
    vmem_limit = int(min(phys_vmem * 3 // 4, max(2 * vmem_est, 32 * 1024 * 1024)))

    flops = 2 * N * H * W * (9 * Cp * Cp + 9 * Cp * Cp + Cp * Cp)
    bytes_accessed = (xw.size * 2 + N * H * W * Cp * 4
                      + (w1k.size + w2k.size + w3k.size) * 2 + 3 * Cp * 4)

    out_nhwc = pl.pallas_call(
        kernel,
        out_shape=jax.ShapeDtypeStruct((N, H, W, Cp), jnp.float32),
        grid_spec=pltpu.PrefetchScalarGridSpec(
            num_scalar_prefetch=0,
            grid=(N, R),
            in_specs=[
                # one (TH+4)-row window per grid step
                pl.BlockSpec((None, None, TH + 4, Wpad, Cp),
                             lambda n, r: (n, r, 0, 0, 0)),
                # weights / biases: constant index -> stay resident across steps
                pl.BlockSpec((9 * Cp, Cp), lambda n, r: (0, 0)),
                pl.BlockSpec((1, Cp), lambda n, r: (0, 0)),
                pl.BlockSpec((9 * Cp, Cp), lambda n, r: (0, 0)),
                pl.BlockSpec((1, Cp), lambda n, r: (0, 0)),
                pl.BlockSpec((Cp, Cp), lambda n, r: (0, 0)),
                pl.BlockSpec((1, Cp), lambda n, r: (0, 0)),
            ],
            out_specs=pl.BlockSpec((None, TH, W, Cp), lambda n, r: (n, r, 0, 0)),
            scratch_shapes=[pltpu.VMEM((TH + 2, W + 2, Cp), jnp.bfloat16)],
        ),
        compiler_params=pltpu.CompilerParams(
            dimension_semantics=("parallel", "parallel"),
            vmem_limit_bytes=vmem_limit,
        ),
        cost_estimate=pl.CostEstimate(
            flops=flops, transcendentals=0, bytes_accessed=bytes_accessed),
    )(xw, w1k, b1r, w2k, b2r, w3k, b3r)

    # TODO(synk): for C << 128 the Cp lane padding does (Cp/C)^2 extra MXU work and
    # Cp/C extra HBM output writes; for production C >= 128 this is free.
    out_nhwc = out_nhwc[..., :C]
    return jnp.transpose(out_nhwc, (0, 3, 1, 2))


def resblock_ref(x_nchw, params, *, compute_dtype=jnp.float32):
    """Pure-JAX reference (PyTorch module semantics). With compute_dtype=bf16 it
    rounds operands/activations at the same points as the kernel."""
    w1, b1, w2, b2, w3, b3 = params
    N, C, H, W = x_nchw.shape
    cd = compute_dtype
    x = jnp.transpose(x_nchw, (0, 2, 3, 1))
    xq = x.astype(cd).astype(jnp.float32)
    dn = ('NHWC', 'HWIO', 'NHWC')

    def conv(h, w, b, pad):
        wq = w.astype(cd).astype(jnp.float32)
        return jax.lax.conv_general_dilated(h, wq, (1, 1), pad,
                                            dimension_numbers=dn) + b

    h = _leaky_relu(conv(xq, w1, b1, ((1, 1), (1, 1))))
    h = h.astype(cd).astype(jnp.float32)
    h = _leaky_relu(conv(h, w2, b2, ((1, 1), (1, 1))))
    h = h.astype(cd).astype(jnp.float32)
    h = conv(h, w3.reshape(1, 1, C, C), b3, ((0, 0), (0, 0)))
    out = h + xq
    return jnp.transpose(out, (0, 3, 1, 2))


if __name__ == "__main__":
    N, C, H, W = 2, 4, 16, 16

    key = jax.random.PRNGKey(0)
    keys = jax.random.split(key, 7)
    x = jax.random.normal(keys[0], (N, C, H, W), jnp.float32)

    # Deterministic init mimicking PyTorch's default Conv2d init bounds (1/sqrt(fan_in)).
    bound3 = 1.0 / math.sqrt(C * 3 * 3)
    bound1 = 1.0 / math.sqrt(C * 1 * 1)
    w1 = jax.random.uniform(keys[1], (3, 3, C, C), jnp.float32, -bound3, bound3)  # HWIO
    b1 = jax.random.uniform(keys[2], (C,), jnp.float32, -bound3, bound3)
    w2 = jax.random.uniform(keys[3], (3, 3, C, C), jnp.float32, -bound3, bound3)  # HWIO
    b2 = jax.random.uniform(keys[4], (C,), jnp.float32, -bound3, bound3)
    w3 = jax.random.uniform(keys[5], (C, C), jnp.float32, -bound1, bound1)        # (Cin, Cout)
    b3 = jax.random.uniform(keys[6], (C,), jnp.float32, -bound1, bound1)
    params = (w1, b1, w2, b2, w3, b3)

    out = jax.block_until_ready(resblock_pallas(x, params))

    # Tight check vs. a reference that rounds operands/activations to bf16 at the same
    # points as the kernel (remaining difference is only f32 accumulation order).
    ref_matched = resblock_ref(x, params, compute_dtype=jnp.bfloat16)
    np.testing.assert_allclose(np.asarray(out), np.asarray(ref_matched),
                               atol=2e-3, rtol=2e-3)
    # Loose sanity check vs. the pure-f32 PyTorch-equivalent reference.
    ref_f32 = resblock_ref(x, params)
    np.testing.assert_allclose(np.asarray(out), np.asarray(ref_f32),
                               atol=1e-1, rtol=1e-1)

    print("KERNEL_OK")
</pallas_src>

<mosaic_0001>
module attributes {stable_mosaic.version = 11 : i64} {
  func.func @kernel(%arg0: i32, %arg1: i32, %arg2: memref<1x1x20x24x128xbf16, #tpu.memory_space<vmem>>, %arg3: memref<1152x128xbf16, #tpu.memory_space<vmem>>, %arg4: memref<1x128xf32, #tpu.memory_space<vmem>>, %arg5: memref<1152x128xbf16, #tpu.memory_space<vmem>>, %arg6: memref<1x128xf32, #tpu.memory_space<vmem>>, %arg7: memref<128x128xbf16, #tpu.memory_space<vmem>>, %arg8: memref<1x128xf32, #tpu.memory_space<vmem>>, %arg9: memref<1x16x16x128xf32, #tpu.memory_space<vmem>>, %arg10: memref<18x18x128xbf16, #tpu.memory_space<vmem>>) attributes {dimension_semantics = [#tpu.dimension_semantics<parallel>, #tpu.dimension_semantics<parallel>], iteration_bounds = array<i64: 2, 1>, scalar_prefetch = 0 : i64, scratch_operands = 1 : i64, tpu.core_type = #tpu.core_type<tc>, window_params = [{transform_indices = @transform_0, window_bounds = array<i64: 1, 1, 20, 24, 128>}, {pipeline_mode = #tpu.pipeline_mode<synchronous>, transform_indices = @transform_1, window_bounds = array<i64: 1152, 128>}, {pipeline_mode = #tpu.pipeline_mode<synchronous>, transform_indices = @transform_2, window_bounds = array<i64: 1, 128>}, {pipeline_mode = #tpu.pipeline_mode<synchronous>, transform_indices = @transform_3, window_bounds = array<i64: 1152, 128>}, {pipeline_mode = #tpu.pipeline_mode<synchronous>, transform_indices = @transform_4, window_bounds = array<i64: 1, 128>}, {pipeline_mode = #tpu.pipeline_mode<synchronous>, transform_indices = @transform_5, window_bounds = array<i64: 128, 128>}, {pipeline_mode = #tpu.pipeline_mode<synchronous>, transform_indices = @transform_6, window_bounds = array<i64: 1, 128>}, {transform_indices = @transform_7, window_bounds = array<i64: 1, 16, 16, 128>}]} {
    %c0 = arith.constant 0 : index
    %c0_0 = arith.constant 0 : index
    %c0_1 = arith.constant 0 : index
    %c0_2 = arith.constant 0 : index
    %c0_3 = arith.constant 0 : index
    %0 = vector.load %arg2[%c0, %c0_0, %c0_1, %c0_2, %c0_3] : memref<1x1x20x24x128xbf16, #tpu.memory_space<vmem>>, vector<1x1x18x16x128xbf16>
    %1 = vector.shape_cast %0 : vector<1x1x18x16x128xbf16> to vector<18x16x128xbf16>
    %2 = vector.shape_cast %1 : vector<18x16x128xbf16> to vector<288x128xbf16>
    %c0_4 = arith.constant 0 : index
    %c0_5 = arith.constant 0 : index
    %c0_6 = arith.constant 0 : index
    %c1 = arith.constant 1 : index
    %c0_7 = arith.constant 0 : index
    %3 = vector.load %arg2[%c0_4, %c0_5, %c0_6, %c1, %c0_7] : memref<1x1x20x24x128xbf16, #tpu.memory_space<vmem>>, vector<1x1x18x16x128xbf16>
    %4 = vector.shape_cast %3 : vector<1x1x18x16x128xbf16> to vector<18x16x128xbf16>
    %5 = vector.shape_cast %4 : vector<18x16x128xbf16> to vector<288x128xbf16>
    %c0_8 = arith.constant 0 : index
    %c0_9 = arith.constant 0 : index
    %c0_10 = arith.constant 0 : index
    %c2 = arith.constant 2 : index
    %c0_11 = arith.constant 0 : index
    %6 = vector.load %arg2[%c0_8, %c0_9, %c0_10, %c2, %c0_11] : memref<1x1x20x24x128xbf16, #tpu.memory_space<vmem>>, vector<1x1x18x16x128xbf16>
    %7 = vector.shape_cast %6 : vector<1x1x18x16x128xbf16> to vector<18x16x128xbf16>
    %8 = vector.shape_cast %7 : vector<18x16x128xbf16> to vector<288x128xbf16>
    %c0_12 = arith.constant 0 : index
    %c0_13 = arith.constant 0 : index
    %c1_14 = arith.constant 1 : index
    %c0_15 = arith.constant 0 : index
    %c0_16 = arith.constant 0 : index
    %9 = vector.load %arg2[%c0_12, %c0_13, %c1_14, %c0_15, %c0_16] : memref<1x1x20x24x128xbf16, #tpu.memory_space<vmem>>, vector<1x1x18x16x128xbf16>
    %10 = vector.shape_cast %9 : vector<1x1x18x16x128xbf16> to vector<18x16x128xbf16>
    %11 = vector.shape_cast %10 : vector<18x16x128xbf16> to vector<288x128xbf16>
    %c0_17 = arith.constant 0 : index
    %c0_18 = arith.constant 0 : index
    %c1_19 = arith.constant 1 : index
    %c1_20 = arith.constant 1 : index
    %c0_21 = arith.constant 0 : index
    %12 = vector.load %arg2[%c0_17, %c0_18, %c1_19, %c1_20, %c0_21] : memref<1x1x20x24x128xbf16, #tpu.memory_space<vmem>>, vector<1x1x18x16x128xbf16>
    %13 = vector.shape_cast %12 : vector<1x1x18x16x128xbf16> to vector<18x16x128xbf16>
    %14 = vector.shape_cast %13 : vector<18x16x128xbf16> to vector<288x128xbf16>
    %c0_22 = arith.constant 0 : index
    %c0_23 = arith.constant 0 : index
    %c1_24 = arith.constant 1 : index
    %c2_25 = arith.constant 2 : index
    %c0_26 = arith.constant 0 : index
    %15 = vector.load %arg2[%c0_22, %c0_23, %c1_24, %c2_25, %c0_26] : memref<1x1x20x24x128xbf16, #tpu.memory_space<vmem>>, vector<1x1x18x16x128xbf16>
    %16 = vector.shape_cast %15 : vector<1x1x18x16x128xbf16> to vector<18x16x128xbf16>
    %17 = vector.shape_cast %16 : vector<18x16x128xbf16> to vector<288x128xbf16>
    %c0_27 = arith.constant 0 : index
    %c0_28 = arith.constant 0 : index
    %c2_29 = arith.constant 2 : index
    %c0_30 = arith.constant 0 : index
    %c0_31 = arith.constant 0 : index
    %18 = vector.load %arg2[%c0_27, %c0_28, %c2_29, %c0_30, %c0_31] : memref<1x1x20x24x128xbf16, #tpu.memory_space<vmem>>, vector<1x1x18x16x128xbf16>
    %19 = vector.shape_cast %18 : vector<1x1x18x16x128xbf16> to vector<18x16x128xbf16>
    %20 = vector.shape_cast %19 : vector<18x16x128xbf16> to vector<288x128xbf16>
    %c0_32 = arith.constant 0 : index
    %c0_33 = arith.constant 0 : index
    %c2_34 = arith.constant 2 : index
    %c1_35 = arith.constant 1 : index
    %c0_36 = arith.constant 0 : index
    %21 = vector.load %arg2[%c0_32, %c0_33, %c2_34, %c1_35, %c0_36] : memref<1x1x20x24x128xbf16, #tpu.memory_space<vmem>>, vector<1x1x18x16x128xbf16>
    %22 = vector.shape_cast %21 : vector<1x1x18x16x128xbf16> to vector<18x16x128xbf16>
    %23 = vector.shape_cast %22 : vector<18x16x128xbf16> to vector<288x128xbf16>
    %c0_37 = arith.constant 0 : index
    %c0_38 = arith.constant 0 : index
    %c2_39 = arith.constant 2 : index
    %c2_40 = arith.constant 2 : index
    %c0_41 = arith.constant 0 : index
    %24 = vector.load %arg2[%c0_37, %c0_38, %c2_39, %c2_40, %c0_41] : memref<1x1x20x24x128xbf16, #tpu.memory_space<vmem>>, vector<1x1x18x16x128xbf16>
    %25 = vector.shape_cast %24 : vector<1x1x18x16x128xbf16> to vector<18x16x128xbf16>
    %26 = vector.shape_cast %25 : vector<18x16x128xbf16> to vector<288x128xbf16>
    %27 = tpu.concatenate %2, %5, %8, %11, %14, %17, %20, %23, %26 in 1 : vector<288x128xbf16>, vector<288x128xbf16>, vector<288x128xbf16>, vector<288x128xbf16>, vector<288x128xbf16>, vector<288x128xbf16>, vector<288x128xbf16>, vector<288x128xbf16>, vector<288x128xbf16> -> vector<288x1152xbf16>
    %c0_42 = arith.constant 0 : index
    %c0_43 = arith.constant 0 : index
    %28 = vector.load %arg3[%c0_42, %c0_43] : memref<1152x128xbf16, #tpu.memory_space<vmem>>, vector<1152x128xbf16>
    %cst = arith.constant dense<0.000000e+00> : vector<288x128xf32>
    %29 = tpu.matmul %27, %28, %cst {dimension_numbers = #tpu.dot_dimension_numbers<[1], [0], [0], [1], [0, 0, 1, 1], [], []>} : vector<288x1152xbf16>, vector<1152x128xbf16>, vector<288x128xf32> -> vector<288x128xf32>
    %c0_44 = arith.constant 0 : index
    %c0_45 = arith.constant 0 : index
    %30 = vector.load %arg4[%c0_44, %c0_45] : memref<1x128xf32, #tpu.memory_space<vmem>>, vector<1x128xf32>
    %31 = vector.broadcast %30 : vector<1x128xf32> to vector<288x128xf32>
    %32 = arith.addf %29, %31 : vector<288x128xf32>
    %cst_46 = arith.constant 0.000000e+00 : f32
    %33 = vector.broadcast %cst_46 : f32 to vector<288x128xf32>
    %34 = arith.cmpf oge, %32, %33 : vector<288x128xf32>
    %cst_47 = arith.constant 2.000000e-01 : f32
    %35 = vector.broadcast %cst_47 : f32 to vector<288x128xf32>
    %36 = arith.mulf %35, %32 : vector<288x128xf32>
    %37 = arith.select %34, %32, %36 : vector<288x128xi1>, vector<288x128xf32>
    %38 = arith.truncf %37 : vector<288x128xf32> to vector<288x128xbf16>
    %39 = vector.shape_cast %38 : vector<288x128xbf16> to vector<18x16x128xbf16>
    %cst_48 = arith.constant 0.000000e+00 : bf16
    %40 = vector.broadcast %cst_48 : bf16 to vector<18x1x128xbf16>
    %c0_49 = arith.constant 0 : index
    %c0_50 = arith.constant 0 : index
    %c0_51 = arith.constant 0 : index
    %41 = vector.load %arg10[%c0_49, %c0_50, %c0_51] : memref<18x18x128xbf16, #tpu.memory_space<vmem>>, vector<18x1x128xbf16>
    tpu.vector_store %arg10[%c0_49, %c0_50, %c0_51], %40 {strides = array<i32>} : memref<18x18x128xbf16, #tpu.memory_space<vmem>>, vector<18x1x128xbf16>,
    %c0_52 = arith.constant 0 : index
    %c17 = arith.constant 17 : index
    %c0_53 = arith.constant 0 : index
    %42 = vector.load %arg10[%c0_52, %c17, %c0_53] : memref<18x18x128xbf16, #tpu.memory_space<vmem>>, vector<18x1x128xbf16>
    tpu.vector_store %arg10[%c0_52, %c17, %c0_53], %40 {strides = array<i32>} : memref<18x18x128xbf16, #tpu.memory_space<vmem>>, vector<18x1x128xbf16>,
    %c0_54 = arith.constant 0 : index
    %c1_55 = arith.constant 1 : index
    %c0_56 = arith.constant 0 : index
    %43 = vector.load %arg10[%c0_54, %c1_55, %c0_56] : memref<18x18x128xbf16, #tpu.memory_space<vmem>>, vector<18x16x128xbf16>
    tpu.vector_store %arg10[%c0_54, %c1_55, %c0_56], %39 {strides = array<i32>} : memref<18x18x128xbf16, #tpu.memory_space<vmem>>, vector<18x16x128xbf16>,
    %cst_57 = arith.constant 0.000000e+00 : bf16
    %44 = vector.broadcast %cst_57 : bf16 to vector<1x16x128xbf16>
    %c0_i32 = arith.constant 0 : i32
    %45 = arith.cmpi eq, %arg1, %c0_i32 : i32
    %46 = arith.extui %45 : i1 to i32
    %c0_i32_58 = arith.constant 0 : i32
    %47 = arith.cmpi ne, %46, %c0_i32_58 : i32
    scf.if %47 {
      %c0_109 = arith.constant 0 : index
      %c1_110 = arith.constant 1 : index
      %c0_111 = arith.constant 0 : index
      %94 = vector.load %arg10[%c0_109, %c1_110, %c0_111] : memref<18x18x128xbf16, #tpu.memory_space<vmem>>, vector<1x16x128xbf16>
      tpu.vector_store %arg10[%c0_109, %c1_110, %c0_111], %44 {strides = array<i32>} : memref<18x18x128xbf16, #tpu.memory_space<vmem>>, vector<1x16x128xbf16>,
    } else {
    }
    %c0_i32_59 = arith.constant 0 : i32
    %48 = arith.cmpi eq, %arg1, %c0_i32_59 : i32
    %49 = arith.extui %48 : i1 to i32
    %c0_i32_60 = arith.constant 0 : i32
    %50 = arith.cmpi ne, %49, %c0_i32_60 : i32
    scf.if %50 {
      %c17_109 = arith.constant 17 : index
      %c1_110 = arith.constant 1 : index
      %c0_111 = arith.constant 0 : index
      %94 = vector.load %arg10[%c17_109, %c1_110, %c0_111] : memref<18x18x128xbf16, #tpu.memory_space<vmem>>, vector<1x16x128xbf16>
      tpu.vector_store %arg10[%c17_109, %c1_110, %c0_111], %44 {strides = array<i32>} : memref<18x18x128xbf16, #tpu.memory_space<vmem>>, vector<1x16x128xbf16>,
    } else {
    }
    %c0_61 = arith.constant 0 : index
    %c0_62 = arith.constant 0 : index
    %c0_63 = arith.constant 0 : index
    %51 = vector.load %arg10[%c0_61, %c0_62, %c0_63] : memref<18x18x128xbf16, #tpu.memory_space<vmem>>, vector<16x16x128xbf16>
    %52 = vector.shape_cast %51 : vector<16x16x128xbf16> to vector<256x128xbf16>
    %c0_64 = arith.constant 0 : index
    %c1_65 = arith.constant 1 : index
    %c0_66 = arith.constant 0 : index
    %53 = vector.load %arg10[%c0_64, %c1_65, %c0_66] : memref<18x18x128xbf16, #tpu.memory_space<vmem>>, vector<16x16x128xbf16>
    %54 = vector.shape_cast %53 : vector<16x16x128xbf16> to vector<256x128xbf16>
    %c0_67 = arith.constant 0 : index
    %c2_68 = arith.constant 2 : index
    %c0_69 = arith.constant 0 : index
    %55 = vector.load %arg10[%c0_67, %c2_68, %c0_69] : memref<18x18x128xbf16, #tpu.memory_space<vmem>>, vector<16x16x128xbf16>
    %56 = vector.shape_cast %55 : vector<16x16x128xbf16> to vector<256x128xbf16>
    %c1_70 = arith.constant 1 : index
    %c0_71 = arith.constant 0 : index
    %c0_72 = arith.constant 0 : index
    %57 = vector.load %arg10[%c1_70, %c0_71, %c0_72] : memref<18x18x128xbf16, #tpu.memory_space<vmem>>, vector<16x16x128xbf16>
    %58 = vector.shape_cast %57 : vector<16x16x128xbf16> to vector<256x128xbf16>
    %c1_73 = arith.constant 1 : index
    %c1_74 = arith.constant 1 : index
    %c0_75 = arith.constant 0 : index
    %59 = vector.load %arg10[%c1_73, %c1_74, %c0_75] : memref<18x18x128xbf16, #tpu.memory_space<vmem>>, vector<16x16x128xbf16>
    %60 = vector.shape_cast %59 : vector<16x16x128xbf16> to vector<256x128xbf16>
    %c1_76 = arith.constant 1 : index
    %c2_77 = arith.constant 2 : index
    %c0_78 = arith.constant 0 : index
    %61 = vector.load %arg10[%c1_76, %c2_77, %c0_78] : memref<18x18x128xbf16, #tpu.memory_space<vmem>>, vector<16x16x128xbf16>
    %62 = vector.shape_cast %61 : vector<16x16x128xbf16> to vector<256x128xbf16>
    %c2_79 = arith.constant 2 : index
    %c0_80 = arith.constant 0 : index
    %c0_81 = arith.constant 0 : index
    %63 = vector.load %arg10[%c2_79, %c0_80, %c0_81] : memref<18x18x128xbf16, #tpu.memory_space<vmem>>, vector<16x16x128xbf16>
    %64 = vector.shape_cast %63 : vector<16x16x128xbf16> to vector<256x128xbf16>
    %c2_82 = arith.constant 2 : index
    %c1_83 = arith.constant 1 : index
    %c0_84 = arith.constant 0 : index
    %65 = vector.load %arg10[%c2_82, %c1_83, %c0_84] : memref<18x18x128xbf16, #tpu.memory_space<vmem>>, vector<16x16x128xbf16>
    %66 = vector.shape_cast %65 : vector<16x16x128xbf16> to vector<256x128xbf16>
    %c2_85 = arith.constant 2 : index
    %c2_86 = arith.constant 2 : index
    %c0_87 = arith.constant 0 : index
    %67 = vector.load %arg10[%c2_85, %c2_86, %c0_87] : memref<18x18x128xbf16, #tpu.memory_space<vmem>>, vector<16x16x128xbf16>
    %68 = vector.shape_cast %67 : vector<16x16x128xbf16> to vector<256x128xbf16>
    %69 = tpu.concatenate %52, %54, %56, %58, %60, %62, %64, %66, %68 in 1 : vector<256x128xbf16>, vector<256x128xbf16>, vector<256x128xbf16>, vector<256x128xbf16>, vector<256x128xbf16>, vector<256x128xbf16>, vector<256x128xbf16>, vector<256x128xbf16>, vector<256x128xbf16> -> vector<256x1152xbf16>
    %c0_88 = arith.constant 0 : index
    %c0_89 = arith.constant 0 : index
    %70 = vector.load %arg5[%c0_88, %c0_89] : memref<1152x128xbf16, #tpu.memory_space<vmem>>, vector<1152x128xbf16>
    %cst_90 = arith.constant dense<0.000000e+00> : vector<256x128xf32>
    %71 = tpu.matmul %69, %70, %cst_90 {dimension_numbers = #tpu.dot_dimension_numbers<[1], [0], [0], [1], [0, 0, 1, 1], [], []>} : vector<256x1152xbf16>, vector<1152x128xbf16>, vector<256x128xf32> -> vector<256x128xf32>
    %c0_91 = arith.constant 0 : index
    %c0_92 = arith.constant 0 : index
    %72 = vector.load %arg6[%c0_91, %c0_92] : memref<1x128xf32, #tpu.memory_space<vmem>>, vector<1x128xf32>
    %73 = vector.broadcast %72 : vector<1x128xf32> to vector<256x128xf32>
    %74 = arith.addf %71, %73 : vector<256x128xf32>
    %cst_93 = arith.constant 0.000000e+00 : f32
    %75 = vector.broadcast %cst_93 : f32 to vector<256x128xf32>
    %76 = arith.cmpf oge, %74, %75 : vector<256x128xf32>
    %cst_94 = arith.constant 2.000000e-01 : f32
    %77 = vector.broadcast %cst_94 : f32 to vector<256x128xf32>
    %78 = arith.mulf %77, %74 : vector<256x128xf32>
    %79 = arith.select %76, %74, %78 : vector<256x128xi1>, vector<256x128xf32>
    %80 = arith.truncf %79 : vector<256x128xf32> to vector<256x128xbf16>
    %c0_95 = arith.constant 0 : index
    %c0_96 = arith.constant 0 : index
    %81 = vector.load %arg7[%c0_95, %c0_96] : memref<128x128xbf16, #tpu.memory_space<vmem>>, vector<128x128xbf16>
    %cst_97 = arith.constant dense<0.000000e+00> : vector<256x128xf32>
    %82 = tpu.matmul %80, %81, %cst_97 {dimension_numbers = #tpu.dot_dimension_numbers<[1], [0], [0], [1], [0, 0, 1, 1], [], []>} : vector<256x128xbf16>, vector<128x128xbf16>, vector<256x128xf32> -> vector<256x128xf32>
    %c0_98 = arith.constant 0 : index
    %c0_99 = arith.constant 0 : index
    %83 = vector.load %arg8[%c0_98, %c0_99] : memref<1x128xf32, #tpu.memory_space<vmem>>, vector<1x128xf32>
    %84 = vector.broadcast %83 : vector<1x128xf32> to vector<256x128xf32>
    %85 = arith.addf %82, %84 : vector<256x128xf32>
    %c0_100 = arith.constant 0 : index
    %c0_101 = arith.constant 0 : index
    %c2_102 = arith.constant 2 : index
    %c1_103 = arith.constant 1 : index
    %c0_104 = arith.constant 0 : index
    %86 = vector.load %arg2[%c0_100, %c0_101, %c2_102, %c1_103, %c0_104] : memref<1x1x20x24x128xbf16, #tpu.memory_space<vmem>>, vector<1x1x16x16x128xbf16>
    %87 = vector.shape_cast %86 : vector<1x1x16x16x128xbf16> to vector<16x16x128xbf16>
    %88 = arith.extf %87 : vector<16x16x128xbf16> to vector<16x16x128xf32>
    %89 = vector.shape_cast %85 : vector<256x128xf32> to vector<16x16x128xf32>
    %90 = arith.addf %89, %88 : vector<16x16x128xf32>
    %c0_105 = arith.constant 0 : index
    %c0_106 = arith.constant 0 : index
    %c0_107 = arith.constant 0 : index
    %c0_108 = arith.constant 0 : index
    %91 = vector.load %arg9[%c0_105, %c0_106, %c0_107, %c0_108] : memref<1x16x16x128xf32, #tpu.memory_space<vmem>>, vector<1x16x16x128xf32>
    %92 = vector.shape_cast %91 : vector<1x16x16x128xf32> to vector<16x16x128xf32>
    %93 = vector.shape_cast %90 : vector<16x16x128xf32> to vector<1x16x16x128xf32>
    tpu.vector_store %arg9[%c0_105, %c0_106, %c0_107, %c0_108], %93 {strides = array<i32>} : memref<1x16x16x128xf32, #tpu.memory_space<vmem>>, vector<1x16x16x128xf32>,
    return
  }
  func.func @transform_0(%arg0: i32, %arg1: i32) -> (i32, i32, i32, i32, i32) {
    %c0_i32 = arith.constant 0 : i32
    %c0_i32_0 = arith.constant 0 : i32
    %c0_i32_1 = arith.constant 0 : i32
    %c0_i32_2 = arith.constant 0 : i32
    return %arg0, %arg1, %c0_i32, %c0_i32_0, %c0_i32_1 : i32, i32, i32, i32, i32
  }
  func.func @transform_1(%arg0: i32, %arg1: i32) -> (i32, i32) {
    %c0_i32 = arith.constant 0 : i32
    %c0_i32_0 = arith.constant 0 : i32
    %c0_i32_1 = arith.constant 0 : i32
    return %c0_i32, %c0_i32_0 : i32, i32
  }
  func.func @transform_2(%arg0: i32, %arg1: i32) -> (i32, i32) {
    %c0_i32 = arith.constant 0 : i32
    %c0_i32_0 = arith.constant 0 : i32
    %c0_i32_1 = arith.constant 0 : i32
    return %c0_i32, %c0_i32_0 : i32, i32
  }
  func.func @transform_3(%arg0: i32, %arg1: i32) -> (i32, i32) {
    %c0_i32 = arith.constant 0 : i32
    %c0_i32_0 = arith.constant 0 : i32
    %c0_i32_1 = arith.constant 0 : i32
    return %c0_i32, %c0_i32_0 : i32, i32
  }
  func.func @transform_4(%arg0: i32, %arg1: i32) -> (i32, i32) {
    %c0_i32 = arith.constant 0 : i32
    %c0_i32_0 = arith.constant 0 : i32
    %c0_i32_1 = arith.constant 0 : i32
    return %c0_i32, %c0_i32_0 : i32, i32
  }
  func.func @transform_5(%arg0: i32, %arg1: i32) -> (i32, i32) {
    %c0_i32 = arith.constant 0 : i32
    %c0_i32_0 = arith.constant 0 : i32
    %c0_i32_1 = arith.constant 0 : i32
    return %c0_i32, %c0_i32_0 : i32, i32
  }
  func.func @transform_6(%arg0: i32, %arg1: i32) -> (i32, i32) {
    %c0_i32 = arith.constant 0 : i32
    %c0_i32_0 = arith.constant 0 : i32
    %c0_i32_1 = arith.constant 0 : i32
    return %c0_i32, %c0_i32_0 : i32, i32
  }
  func.func @transform_7(%arg0: i32, %arg1: i32) -> (i32, i32, i32, i32) {
    %c0_i32 = arith.constant 0 : i32
    %c0_i32_0 = arith.constant 0 : i32
    %c0_i32_1 = arith.constant 0 : i32
    return %arg0, %arg1, %c0_i32, %c0_i32_0 : i32, i32, i32, i32
  }
}

</mosaic_0001>

<llo_original>
// kernel: tpu_custom_call.1
$region0: #{tpu_custom_call.1}
  #allocation0 [shape = 'u32[]', space=smem, size = 0x4, offset = 0x4, fixed_abs, tag = 'smem constant byte address 0x4 - core index']
  #allocation1 [shape = 'u32[144,128]{1,0:T(1,128)}', space=vmem, size = 0x12000, scoped, tag = 'internal scratch']
  #allocation2 [shape = 'bf16[18,18,128]{2,1,0:T(8,128)(2,1)}', space=vmem, size = 0x1b000, scoped, tag = 'scratch operand']
  %s0 = inlined_call_operand.hbm [shape: bf16[2,1,20,24,128], index: 0, kind: input, shape index: {}]
  %s1 = inlined_call_operand.hbm [shape: bf16[1152,128], index: 1, kind: input, shape index: {}]
  %s2 = inlined_call_operand.vmem [shape: f32[1,128], index: 2, kind: input, shape index: {}]
  %s3 = inlined_call_operand.hbm [shape: bf16[1152,128], index: 3, kind: input, shape index: {}]
  %s4 = inlined_call_operand.vmem [shape: f32[1,128], index: 4, kind: input, shape index: {}]
  %s5 = inlined_call_operand.hbm [shape: bf16[128,128], index: 5, kind: input, shape index: {}]
  %s6 = inlined_call_operand.vmem [shape: f32[1,128], index: 6, kind: input, shape index: {}]
  %s7 = inlined_call_operand.hbm [shape: f32[2,16,16,128], index: 7, kind: output, shape index: {}]
  %s8 = sld [smem:[#allocation0]]
  $region81: #{tpu_custom_call.1} parent=0
    _
  %s10 = ssub.s32 1, %s8
  %s11 = scalar_select 0, %s10, %s8
  $region1: #{tpu_custom_call.1} parent=0
    #allocation3 [shape = 'u8[245760]{0}', space=vmem, size = 0x3c000, scoped, tag = 'input window, operand 0']
    #allocation4 [shape = 's32[2]{0}', space=sflag, size = 0x8, scoped, tag = 'scoped memory for tpu_custom_call.1']
    #allocation5 [shape = 's32[2]{0}', space=sflag, size = 0x8, scoped, tag = 'scoped memory for tpu_custom_call.1']
    #allocation6 [shape = 'u8[294912]{0}', space=vmem, size = 0x48000, scoped, tag = 'input window, operand 1, single buffered']
    #allocation7 [shape = 's32[1]{0}', space=sflag, size = 0x4, scoped, tag = 'scoped memory for tpu_custom_call.1']
    #allocation8 [shape = 'u8[294912]{0}', space=vmem, size = 0x48000, scoped, tag = 'input window, operand 3, single buffered']
    #allocation9 [shape = 'u8[32768]{0}', space=vmem, size = 0x8000, scoped, tag = 'input window, operand 5, single buffered']
    #allocation10 [shape = 's32[1]{0}', space=sflag, size = 0x4, scoped, tag = 'scoped memory for tpu_custom_call.1']
    #allocation11 [shape = 'u8[262144]{0}', space=vmem, size = 0x40000, scoped, tag = 'output window, operand 0']
    %12 = vsyncpa [#allocation4], 0
    %s13 = scalar_lea.sflag [#allocation4], 1
    %14 = vsyncpa %s13, 0
    %15 = vsyncpa [#allocation7], 0
    %16 = vsyncpa [#allocation10], 0
    %17 = vsyncpa [#allocation5], 0
    %s18 = scalar_lea.sflag [#allocation5], 1
    %19 = vsyncpa %s18, 0
    loop: start=0, step=1, limit=4
    $region2: #{tpu_custom_call.1} parent=1 // loop_pre_header
      _
    $region3: #{tpu_custom_call.1} parent=1 // loop_header
      %s21 = sphi 0, %s25
      %p22 = scmp.ge.s32.totalorder %s21, 4
      %s28 = sphi 0, %s40
      %s29 = sphi 0, %s36
      %s30 = sphi 0, %s28
      %s31 = sphi 0, %s29
      %s32 = sphi 0, %s30
      %s33 = sphi 0, %s31
      %s45 = sphi 0, %s47
      %s48 = sphi 0, %s45
      %s49 = sphi 0, %s48
      %s65 = sphi 0, %s49
      %s69 = sphi 0, %s69
      %s71 = sphi 0, %s69
      %s72 = sphi 0, %s71
      %s86 = sphi 0, %s72
      %s90 = sphi 0, %s90
      %s92 = sphi 0, %s90
      %s93 = sphi 0, %s92
      %s107 = sphi 0, %s93
      %s111 = sphi 0, %s111
      %s113 = sphi 0, %s111
      %s114 = sphi 0, %s113
      %s128 = sphi 0, %s114
      %s132 = sphi 0, %s132
      %s134 = sphi 0, %s132
      %s135 = sphi 0, %s134
      %s149 = sphi 0, %s135
      %s153 = sphi 0, %s153
      %s155 = sphi 0, %s153
      %s156 = sphi 0, %s155
      %s170 = sphi 0, %s156
      %s174 = sphi 0, %s174
      %s176 = sphi 0, %s174
      %s177 = sphi 0, %s176
      %s191 = sphi 0, %s177
      %s199 = sphi 0, %s201
      %s202 = sphi 0, %s199
      %s203 = sphi 0, %s202
      %s219 = sphi 0, %s203
    $region4: #{tpu_custom_call.1} parent=1 // loop_header_branch
      %24 = sbr.rel (%p22) target = $region8
    $region5: #{tpu_custom_call.1} parent=1 // loop_body
      %s26 = ssub.s32 %s21, 1
      %s27 = ssub.s32 %s21, 2
      %s34 = sadd.s32 1, %s29
      %p35 = scmp.ge.s32.totalorder %s34, 1
      %s36 = scalar_select %p35, 0, %s34
      %s37 = sadd.s32 1, %s28
      %s38 = scalar_select %p35, %s37, %s28
      %p39 = scmp.ge.s32.totalorder %s38, 2
      %s40 = scalar_select %p39, 0, %s38
      %s41 = ssub.s32 %s28, %s40
      %s42 = ssub.s32 %s29, %s36
      %s43 = sor.u32 %s41, %s42
      %p44 = scmp.eq.s32.totalorder %s43, 0
      %s46 = sadd.s32 %s45, 1
      %s47 = scalar_select %p44, %s45, %s46
      %p50 = pneg %p44
      %p51 = scmp.eq.s32.totalorder %s21, 1
      %p52 = por %p50, %p51
      %p53 = scmp.ne.s32.totalorder %s45, %s48
      %p54 = scmp.eq.s32.totalorder %s21, 0
      %p55 = por %p53, %p54
      %p56 = scmp.ne.s32.totalorder %s45, %s48
      %p57 = scmp.eq.s32.totalorder %s26, 1
      %p58 = por %p56, %p57
      %p59 = scmp.ne.s32.totalorder %s48, %s49
      %p60 = scmp.eq.s32.totalorder %s26, 0
      %p61 = por %p59, %p60
      %p62 = scmp.ne.s32.totalorder %s48, %s49
      %p63 = scmp.eq.s32.totalorder %s27, 1
      %p64 = por %p62, %p63
      %p66 = scmp.ne.s32.totalorder %s49, %s65
      %p67 = scmp.eq.s32.totalorder %s27, 0
      %p68 = por %p66, %p67
      %s70 = sadd.s32 %s69, 1
      %p73 = scmp.eq.s32.totalorder %s21, 1
      %p74 = scmp.ne.s32.totalorder %s69, %s71
      %p75 = scmp.eq.s32.totalorder %s21, 0
      %p76 = por %p74, %p75
      %p77 = scmp.ne.s32.totalorder %s69, %s71
      %p78 = scmp.eq.s32.totalorder %s26, 1
      %p79 = por %p77, %p78
      %p80 = scmp.ne.s32.totalorder %s71, %s72
      %p81 = scmp.eq.s32.totalorder %s26, 0
      %p82 = por %p80, %p81
      %p83 = scmp.ne.s32.totalorder %s71, %s72
      %p84 = scmp.eq.s32.totalorder %s27, 1
      %p85 = por %p83, %p84
      %p87 = scmp.ne.s32.totalorder %s72, %s86
      %p88 = scmp.eq.s32.totalorder %s27, 0
      %p89 = por %p87, %p88
      %s91 = sadd.s32 %s90, 1
      %p94 = scmp.eq.s32.totalorder %s21, 1
      %p95 = scmp.ne.s32.totalorder %s90, %s92
      %p96 = scmp.eq.s32.totalorder %s21, 0
      %p97 = por %p95, %p96
      %p98 = scmp.ne.s32.totalorder %s90, %s92
      %p99 = scmp.eq.s32.totalorder %s26, 1
      %p100 = por %p98, %p99
      %p101 = scmp.ne.s32.totalorder %s92, %s93
      %p102 = scmp.eq.s32.totalorder %s26, 0
      %p103 = por %p101, %p102
      %p104 = scmp.ne.s32.totalorder %s92, %s93
      %p105 = scmp.eq.s32.totalorder %s27, 1
      %p106 = por %p104, %p105
      %p108 = scmp.ne.s32.totalorder %s93, %s107
      %p109 = scmp.eq.s32.totalorder %s27, 0
      %p110 = por %p108, %p109
      %s112 = sadd.s32 %s111, 1
      %p115 = scmp.eq.s32.totalorder %s21, 1
      %p116 = scmp.ne.s32.totalorder %s111, %s113
      %p117 = scmp.eq.s32.totalorder %s21, 0
      %p118 = por %p116, %p117
      %p119 = scmp.ne.s32.totalorder %s111, %s113
      %p120 = scmp.eq.s32.totalorder %s26, 1
      %p121 = por %p119, %p120
      %p122 = scmp.ne.s32.totalorder %s113, %s114
      %p123 = scmp.eq.s32.totalorder %s26, 0
      %p124 = por %p122, %p123
      %p125 = scmp.ne.s32.totalorder %s113, %s114
      %p126 = scmp.eq.s32.totalorder %s27, 1
      %p127 = por %p125, %p126
      %p129 = scmp.ne.s32.totalorder %s114, %s128
      %p130 = scmp.eq.s32.totalorder %s27, 0
      %p131 = por %p129, %p130
      %s133 = sadd.s32 %s132, 1
      %p136 = scmp.eq.s32.totalorder %s21, 1
      %p137 = scmp.ne.s32.totalorder %s132, %s134
      %p138 = scmp.eq.s32.totalorder %s21, 0
      %p139 = por %p137, %p138
      %p140 = scmp.ne.s32.totalorder %s132, %s134
      %p141 = scmp.eq.s32.totalorder %s26, 1
      %p142 = por %p140, %p141
      %p143 = scmp.ne.s32.totalorder %s134, %s135
      %p144 = scmp.eq.s32.totalorder %s26, 0
      %p145 = por %p143, %p144
      %p146 = scmp.ne.s32.totalorder %s134, %s135
      %p147 = scmp.eq.s32.totalorder %s27, 1
      %p148 = por %p146, %p147
      %p150 = scmp.ne.s32.totalorder %s135, %s149
      %p151 = scmp.eq.s32.totalorder %s27, 0
      %p152 = por %p150, %p151
      %s154 = sadd.s32 %s153, 1
      %p157 = scmp.eq.s32.totalorder %s21, 1
      %p158 = scmp.ne.s32.totalorder %s153, %s155
      %p159 = scmp.eq.s32.totalorder %s21, 0
      %p160 = por %p158, %p159
      %p161 = scmp.ne.s32.totalorder %s153, %s155
      %p162 = scmp.eq.s32.totalorder %s26, 1
      %p163 = por %p161, %p162
      %p164 = scmp.ne.s32.totalorder %s155, %s156
      %p165 = scmp.eq.s32.totalorder %s26, 0
      %p166 = por %p164, %p165
      %p167 = scmp.ne.s32.totalorder %s155, %s156
      %p168 = scmp.eq.s32.totalorder %s27, 1
      %p169 = por %p167, %p168
      %p171 = scmp.ne.s32.totalorder %s156, %s170
      %p172 = scmp.eq.s32.totalorder %s27, 0
      %p173 = por %p171, %p172
      %s175 = sadd.s32 %s174, 1
      %p178 = scmp.eq.s32.totalorder %s21, 1
      %p179 = scmp.ne.s32.totalorder %s174, %s176
      %p180 = scmp.eq.s32.totalorder %s21, 0
      %p181 = por %p179, %p180
      %p182 = scmp.ne.s32.totalorder %s174, %s176
      %p183 = scmp.eq.s32.totalorder %s26, 1
      %p184 = por %p182, %p183
      %p185 = scmp.ne.s32.totalorder %s176, %s177
      %p186 = scmp.eq.s32.totalorder %s26, 0
      %p187 = por %p185, %p186
      %p188 = scmp.ne.s32.totalorder %s176, %s177
      %p189 = scmp.eq.s32.totalorder %s27, 1
      %p190 = por %p188, %p189
      %p192 = scmp.ne.s32.totalorder %s177, %s191
      %p193 = scmp.eq.s32.totalorder %s27, 0
      %p194 = por %p192, %p193
      %s195 = ssub.s32 %s28, %s40
      %s196 = ssub.s32 %s29, %s36
      %s197 = sor.u32 %s195, %s196
      %p198 = scmp.eq.s32.totalorder %s197, 0
      %s200 = sadd.s32 %s199, 1
      %s201 = scalar_select %p198, %s199, %s200
      %p204 = pneg %p198
      %p205 = scmp.eq.s32.totalorder %s21, 1
      %p206 = por %p204, %p205
      %p207 = scmp.ne.s32.totalorder %s199, %s202
      %p208 = scmp.eq.s32.totalorder %s21, 0
      %p209 = por %p207, %p208
      %p210 = scmp.ne.s32.totalorder %s199, %s202
      %p211 = scmp.eq.s32.totalorder %s26, 1
      %p212 = por %p210, %p211
      %p213 = scmp.ne.s32.totalorder %s202, %s203
      %p214 = scmp.eq.s32.totalorder %s26, 0
      %p215 = por %p213, %p214
      %p216 = scmp.ne.s32.totalorder %s202, %s203
      %p217 = scmp.eq.s32.totalorder %s27, 1
      %p218 = por %p216, %p217
      %p220 = scmp.ne.s32.totalorder %s203, %s219
      %p221 = scmp.eq.s32.totalorder %s27, 0
      %p222 = por %p220, %p221
      %p223 = scmp.le.s32.totalorder 1, %s21
      %p224 = scmp.lt.s32.totalorder %s21, 3
      %p225 = pnand %p223, %p224
      %p226 = pneg %p225
      // Predicated region
      $region9: #{tpu_custom_call.1} parent=5 // pred_check
        _
      $region10: #{tpu_custom_call.1} parent=5 // pred_check_branch
        %228 = sbr.rel (%p225) target = $region12
      $region11: #{tpu_custom_call.1} parent=5 // pred_region
        %s229 = ssub.s32 %s21, 1
        // Predicated region
        $region13: #{tpu_custom_call.1} parent=11 // pred_check
          %p230 = pneg %p82
        $region14: #{tpu_custom_call.1} parent=11 // pred_check_branch
          %232 = sbr.rel (%p230) target = $region16
        $region15: #{tpu_custom_call.1} parent=11 // pred_region
          %s234 = ssub.s32 9216, 9216
          %235 = vsyncadd [#allocation7], %s234
          %s236 = sshll.u32 [#allocation6], 4
          %s237 = int_to_ptr.vmem [resolvable:$true] %s236
          %242 = dma.hbm_to_vmem [thread:$0]  %s1, 9216, %s237, [#allocation7], 64, 64, 4
        $region16: #{tpu_custom_call.1} parent=11 // pred_fallthru
          _
        // Predicated region
        $region17: #{tpu_custom_call.1} parent=11 // pred_check
          %p243 = pneg %p103
        $region18: #{tpu_custom_call.1} parent=11 // pred_check_branch
          %245 = sbr.rel (%p243) target = $region20
        $region19: #{tpu_custom_call.1} parent=11 // pred_region
          _
        $region20: #{tpu_custom_call.1} parent=11 // pred_fallthru
          _
        // Predicated region
        $region21: #{tpu_custom_call.1} parent=11 // pred_check
          %p246 = pneg %p124
        $region22: #{tpu_custom_call.1} parent=11 // pred_check_branch
          %248 = sbr.rel (%p246) target = $region24
        $region23: #{tpu_custom_call.1} parent=11 // pred_region
          %s250 = ssub.s32 9216, 9216
          %251 = vsyncadd [#allocation7], %s250
          %s252 = sshll.u32 [#allocation8], 4
          %s253 = int_to_ptr.vmem [resolvable:$true] %s252
          %258 = dma.hbm_to_vmem [thread:$0]  %s3, 9216, %s253, [#allocation7], 64, 64, 4
        $region24: #{tpu_custom_call.1} parent=11 // pred_fallthru
          _
        // Predicated region
        $region25: #{tpu_custom_call.1} parent=11 // pred_check
          %p259 = pneg %p145
        $region26: #{tpu_custom_call.1} parent=11 // pred_check_branch
          %261 = sbr.rel (%p259) target = $region28
        $region27: #{tpu_custom_call.1} parent=11 // pred_region
          _
        $region28: #{tpu_custom_call.1} parent=11 // pred_fallthru
          _
        // Predicated region
        $region29: #{tpu_custom_call.1} parent=11 // pred_check
          %p262 = pneg %p166
        $region30: #{tpu_custom_call.1} parent=11 // pred_check_branch
          %264 = sbr.rel (%p262) target = $region32
        $region31: #{tpu_custom_call.1} parent=11 // pred_region
          %s266 = ssub.s32 1024, 1024
          %267 = vsyncadd [#allocation10], %s266
          %s268 = sshll.u32 [#allocation9], 4
          %s269 = int_to_ptr.vmem [resolvable:$true] %s268
          %274 = dma.hbm_to_vmem [thread:$0]  %s5, 1024, %s269, [#allocation10], 64, 64, 4
        $region32: #{tpu_custom_call.1} parent=11 // pred_fallthru
          _
        // Predicated region
        $region33: #{tpu_custom_call.1} parent=11 // pred_check
          %p275 = pneg %p187
        $region34: #{tpu_custom_call.1} parent=11 // pred_check_branch
          %277 = sbr.rel (%p275) target = $region36
        $region35: #{tpu_custom_call.1} parent=11 // pred_region
          _
        $region36: #{tpu_custom_call.1} parent=11 // pred_fallthru
          _
      $region12: #{tpu_custom_call.1} parent=5 // pred_fallthru
        _
      %p278 = scmp.lt.s32.totalorder %s21, 2
      // Predicated region
      $region37: #{tpu_custom_call.1} parent=5 // pred_check
        %p279 = pneg %p278
      $region38: #{tpu_custom_call.1} parent=5 // pred_check_branch
        %281 = sbr.rel (%p279) target = $region40
      $region39: #{tpu_custom_call.1} parent=5 // pred_region
        // Predicated region
        $region41: #{tpu_custom_call.1} parent=39 // pred_check
          %p282 = pneg %p55
        $region42: #{tpu_custom_call.1} parent=39 // pred_check_branch
          %284 = sbr.rel (%p282) target = $region44
        $region43: #{tpu_custom_call.1} parent=39 // pred_region
          %s285 = sand.u32 %s45, 1
          %s286 = scalar_lea.sflag [#allocation4], %s285
          %s287 = sand.u32 %s45, 1
          %s288 = smul.addr %s287, 240
          %s289 = scalar_lea.vmem [#allocation3], %s288
          %s291 = ssub.s32 3840, 3840
          %292 = vsyncadd %s286, %s291
          %s293 = smul.addr %s29, 60
          %s294 = smul.addr %s28, 60
          %s295 = sadd.s32 %s293, %s294
          %s296 = smul.addr %s295, 64
          %s297 = scalar_lea.hbm %s0, %s296
          %s298 = sshll.u32 %s289, 4
          %s299 = int_to_ptr.vmem [resolvable:$true] %s298
          %304 = dma.hbm_to_vmem [thread:$0]  %s297, 3840, %s299, %s286, 64, 64, 4
        $region44: #{tpu_custom_call.1} parent=39 // pred_fallthru
          _
      $region40: #{tpu_custom_call.1} parent=5 // pred_fallthru
        _
      %p305 = scmp.le.s32.totalorder 1, %s21
      %p306 = scmp.lt.s32.totalorder %s21, 3
      %p307 = pnand %p305, %p306
      %p308 = pneg %p307
      // Predicated region
      $region45: #{tpu_custom_call.1} parent=5 // pred_check
        _
      $region46: #{tpu_custom_call.1} parent=5 // pred_check_branch
        %310 = sbr.rel (%p307) target = $region48
      $region47: #{tpu_custom_call.1} parent=5 // pred_region
        %s311 = ssub.s32 %s21, 1
        %s312 = sand.u32 %s48, 1
        %s313 = scalar_lea.sflag [#allocation4], %s312
        %s314 = sand.u32 %s48, 1
        %s315 = smul.addr %s314, 240
        %s316 = scalar_lea.vmem [#allocation3], %s315
        // Predicated region
        $region49: #{tpu_custom_call.1} parent=47 // pred_check
          %p317 = pneg %p61
        $region50: #{tpu_custom_call.1} parent=47 // pred_check_branch
          %319 = sbr.rel (%p317) target = $region52
        $region51: #{tpu_custom_call.1} parent=47 // pred_region
          %320 = dma.done %s313, 3840
        $region52: #{tpu_custom_call.1} parent=47 // pred_fallthru
          _
        // Predicated region
        $region53: #{tpu_custom_call.1} parent=47 // pred_check
          %p321 = pneg %p82
        $region54: #{tpu_custom_call.1} parent=47 // pred_check_branch
          %323 = sbr.rel (%p321) target = $region56
        $region55: #{tpu_custom_call.1} parent=47 // pred_region
          %324 = dma.done [#allocation7], 9216
        $region56: #{tpu_custom_call.1} parent=47 // pred_fallthru
          _
        // Predicated region
        $region57: #{tpu_custom_call.1} parent=47 // pred_check
          %p325 = pneg %p124
        $region58: #{tpu_custom_call.1} parent=47 // pred_check_branch
          %327 = sbr.rel (%p325) target = $region60
        $region59: #{tpu_custom_call.1} parent=47 // pred_region
          %328 = dma.done [#allocation7], 9216
        $region60: #{tpu_custom_call.1} parent=47 // pred_fallthru
          _
        // Predicated region
        $region61: #{tpu_custom_call.1} parent=47 // pred_check
          %p329 = pneg %p166
        $region62: #{tpu_custom_call.1} parent=47 // pred_check_branch
          %331 = sbr.rel (%p329) target = $region64
        $region63: #{tpu_custom_call.1} parent=47 // pred_region
          %332 = dma.done [#allocation10], 1024
        $region64: #{tpu_custom_call.1} parent=47 // pred_fallthru
          _
        %s333 = sand.u32 %s48, 1
        %s334 = scalar_lea.sflag [#allocation4], %s333
        %s335 = sand.u32 %s48, 1
        %s336 = smul.addr %s335, 240
        %s337 = scalar_lea.vmem [#allocation3], %s336
        %p338 = pneg %p61
        %p339 = pneg %p58
        %p340 = pneg %p82
        %p341 = pneg %p79
        %p342 = pneg %p103
        %p343 = pneg %p100
        %p344 = pneg %p124
        %p345 = pneg %p121
        %p346 = pneg %p145
        %p347 = pneg %p142
        %p348 = pneg %p166
        %p349 = pneg %p163
        %p350 = pneg %p187
        %p351 = pneg %p184
        %p352 = pneg %p215
        %p353 = pneg %p212
        %s354 = sand.u32 %s202, 1
        %s355 = scalar_lea.sflag [#allocation5], %s354
        %s356 = sand.u32 %s202, 1
        %s357 = smul.addr %s356, 256
        %s358 = scalar_lea.vmem [#allocation11], %s357
        %s359 = smul.u32 16, %s31
        %v361 = vld [vmem:[%s316] sm:$0xf]
        %v362 = vld [vmem:[%s316 + $0x4] sm:$0xf]
        %v363 = vld [vmem:[%s316 + $0xc] sm:$0xf]
        %v364 = vld [vmem:[%s316 + $0x10] sm:$0xf]
        %v365 = vld [vmem:[%s316 + $0x18] sm:$0xf]
        %v366 = vld [vmem:[%s316 + $0x1c] sm:$0xf]
        %v367 = vld [vmem:[%s316 + $0x24] sm:$0xf]
        %v368 = vld [vmem:[%s316 + $0x28] sm:$0xf]
        %v369 = vld [vmem:[%s316 + $0x30] sm:$0xf]
        %v370 = vld [vmem:[%s316 + $0x34] sm:$0xf]
        %v371 = vld [vmem:[%s316 + $0x3c] sm:$0xf]
        %v372 = vld [vmem:[%s316 + $0x40] sm:$0xf]
        %v373 = vld [vmem:[%s316 + $0x48] sm:$0xf]
        %v374 = vld [vmem:[%s316 + $0x4c] sm:$0xf]
        %v375 = vld [vmem:[%s316 + $0x54] sm:$0xf]
        %v376 = vld [vmem:[%s316 + $0x58] sm:$0xf]
        %v377 = vld [vmem:[%s316 + $0x60] sm:$0xf]
        %v378 = vld [vmem:[%s316 + $0x64] sm:$0xf]
        %v379 = vld [vmem:[%s316 + $0x6c] sm:$0xf]
        %v380 = vld [vmem:[%s316 + $0x70] sm:$0xf]
        %v381 = vld [vmem:[%s316 + $0x78] sm:$0xf]
        %v382 = vld [vmem:[%s316 + $0x7c] sm:$0xf]
        %v383 = vld [vmem:[%s316 + $0x84] sm:$0xf]
        %v384 = vld [vmem:[%s316 + $0x88] sm:$0xf]
        %v385 = vld [vmem:[%s316 + $0x90] sm:$0xf]
        %v386 = vld [vmem:[%s316 + $0x94] sm:$0xf]
        %v387 = vld [vmem:[%s316 + $0x9c] sm:$0xf]
        %v388 = vld [vmem:[%s316 + $0xa0] sm:$0xf]
        %v389 = vld [vmem:[%s316 + $0xa8] sm:$0xf]
        %v390 = vld [vmem:[%s316 + $0xac] sm:$0xf]
        %v391 = vld [vmem:[%s316 + $0xb4] sm:$0xf]
        %v392 = vld [vmem:[%s316 + $0xb8] sm:$0xf]
        %v393 = vld [vmem:[%s316 + $0xc0] sm:$0xf]
        %v394 = vld [vmem:[%s316 + $0xc4] sm:$0xf]
        %v395 = vld [vmem:[%s316 + $0xcc] sm:$0xf]
        %v396 = vld [vmem:[%s316 + $0xd0] sm:$0xf]
        %v397 = vld [vmem:[%s316 + $0x8] sm:$0x1]
        %v398 = vld [vmem:[%s316 + $0x14] sm:$0x1]
        %v399 = vld [vmem:[%s316 + $0x20] sm:$0x1]
        %v400 = vld [vmem:[%s316 + $0x2c] sm:$0x1]
        %v401 = vld [vmem:[%s316 + $0x38] sm:$0x1]
        %v402 = vld [vmem:[%s316 + $0x44] sm:$0x1]
        %v403 = vld [vmem:[%s316 + $0x50] sm:$0x1]
        %v404 = vld [vmem:[%s316 + $0x5c] sm:$0x1]
        %v405 = vld [vmem:[%s316 + $0x68] sm:$0x1]
        %v406 = vld [vmem:[%s316 + $0x74] sm:$0x1]
        %v407 = vld [vmem:[%s316 + $0x80] sm:$0x1]
        %v408 = vld [vmem:[%s316 + $0x8c] sm:$0x1]
        %v409 = vld [vmem:[%s316 + $0x98] sm:$0x1]
        %v410 = vld [vmem:[%s316 + $0xa4] sm:$0x1]
        %v411 = vld [vmem:[%s316 + $0xb0] sm:$0x1]
        %v412 = vld [vmem:[%s316 + $0xbc] sm:$0x1]
        %v413 = vld [vmem:[%s316 + $0xc8] sm:$0x1]
        %v414 = vld [vmem:[%s316 + $0xd4] sm:$0x1]
        %vm415 = vsmask.f32 3328
        %vm416 = vsmask.f32 7440
        %vm417 = vmor %vm415, %vm416
        %v419 = vshrl.u32 %v361, 16
        %v421 = vrot.slane %v419, 4
        %v422 = vshll.u32 %v361, 16
        %v424 = vrot.slane %v422, 5
        %v425 = vor.u32 %v421, %v424
        %v426 = vrot.slane %v425, 4
        %v428 = vshll.u32 %v362, 16
        %v430 = vrot.slane %v428, 5
        %v431 = vsel %vm417, %v426, %v430
        %v432 = vshrl.u32 %v362, 16
        %v434 = vrot.slane %v432, 4
        %v435 = vor.u32 %v434, %v430
        %v436 = vrot.slane %v435, 4
        %v438 = vshll.u32 %v397, 16
        %v440 = vrot.slane %v438, 5
        %v441 = vsel %vm417, %v436, %v440
        %v443 = vshrl.u32 %v363, 16
        %v445 = vrot.slane %v443, 4
        %v446 = vshll.u32 %v363, 16
        %v448 = vrot.slane %v446, 5
        %v449 = vor.u32 %v445, %v448
        %v450 = vrot.slane %v449, 4
        %v452 = vshll.u32 %v364, 16
        %v454 = vrot.slane %v452, 5
        %v455 = vsel %vm417, %v450, %v454
        %v456 = vshrl.u32 %v364, 16
        %v458 = vrot.slane %v456, 4
        %v459 = vor.u32 %v458, %v454
        %v460 = vrot.slane %v459, 4
        %v462 = vshll.u32 %v398, 16
        %v464 = vrot.slane %v462, 5
        %v465 = vsel %vm417, %v460, %v464
        %v467 = vshrl.u32 %v365, 16
        %v469 = vrot.slane %v467, 4
        %v470 = vshll.u32 %v365, 16
        %v472 = vrot.slane %v470, 5
        %v473 = vor.u32 %v469, %v472
        %v474 = vrot.slane %v473, 4
        %v476 = vshll.u32 %v366, 16
        %v478 = vrot.slane %v476, 5
        %v479 = vsel %vm417, %v474, %v478
        %v480 = vshrl.u32 %v366, 16
        %v482 = vrot.slane %v480, 4
        %v483 = vor.u32 %v482, %v478
        %v484 = vrot.slane %v483, 4
        %v486 = vshll.u32 %v399, 16
        %v488 = vrot.slane %v486, 5
        %v489 = vsel %vm417, %v484, %v488
        %v491 = vshrl.u32 %v367, 16
        %v493 = vrot.slane %v491, 4
        %v494 = vshll.u32 %v367, 16
        %v496 = vrot.slane %v494, 5
        %v497 = vor.u32 %v493, %v496
        %v498 = vrot.slane %v497, 4
        %v500 = vshll.u32 %v368, 16
        %v502 = vrot.slane %v500, 5
        %v503 = vsel %vm417, %v498, %v502
        %v504 = vshrl.u32 %v368, 16
        %v506 = vrot.slane %v504, 4
        %v507 = vor.u32 %v506, %v502
        %v508 = vrot.slane %v507, 4
        %v510 = vshll.u32 %v400, 16
        %v512 = vrot.slane %v510, 5
        %v513 = vsel %vm417, %v508, %v512
        %v515 = vshrl.u32 %v369, 16
        %v517 = vrot.slane %v515, 4
        %v518 = vshll.u32 %v369, 16
        %v520 = vrot.slane %v518, 5
        %v521 = vor.u32 %v517, %v520
        %v522 = vrot.slane %v521, 4
        %v524 = vshll.u32 %v370, 16
        %v526 = vrot.slane %v524, 5
        %v527 = vsel %vm417, %v522, %v526
        %v528 = vshrl.u32 %v370, 16
        %v530 = vrot.slane %v528, 4
        %v531 = vor.u32 %v530, %v526
        %v532 = vrot.slane %v531, 4
        %v534 = vshll.u32 %v401, 16
        %v536 = vrot.slane %v534, 5
        %v537 = vsel %vm417, %v532, %v536
        %v539 = vshrl.u32 %v371, 16
        %v541 = vrot.slane %v539, 4
        %v542 = vshll.u32 %v371, 16
        %v544 = vrot.slane %v542, 5
        %v545 = vor.u32 %v541, %v544
        %v546 = vrot.slane %v545, 4
        %v548 = vshll.u32 %v372, 16
        %v550 = vrot.slane %v548, 5
        %v551 = vsel %vm417, %v546, %v550
        %v552 = vshrl.u32 %v372, 16
        %v554 = vrot.slane %v552, 4
        %v555 = vor.u32 %v554, %v550
        %v556 = vrot.slane %v555, 4
        %v558 = vshll.u32 %v402, 16
        %v560 = vrot.slane %v558, 5
        %v561 = vsel %vm417, %v556, %v560
        %v563 = vshrl.u32 %v373, 16
        %v565 = vrot.slane %v563, 4
        %v566 = vshll.u32 %v373, 16
        %v568 = vrot.slane %v566, 5
        %v569 = vor.u32 %v565, %v568
        %v570 = vrot.slane %v569, 4
        %v572 = vshll.u32 %v374, 16
        %v574 = vrot.slane %v572, 5
        %v575 = vsel %vm417, %v570, %v574
        %v576 = vshrl.u32 %v374, 16
        %v578 = vrot.slane %v576, 4
        %v579 = vor.u32 %v578, %v574
        %v580 = vrot.slane %v579, 4
        %v582 = vshll.u32 %v403, 16
        %v584 = vrot.slane %v582, 5
        %v585 = vsel %vm417, %v580, %v584
        %v587 = vshrl.u32 %v375, 16
        %v589 = vrot.slane %v587, 4
        %v590 = vshll.u32 %v375, 16
        %v592 = vrot.slane %v590, 5
        %v593 = vor.u32 %v589, %v592
        %v594 = vrot.slane %v593, 4
        %v596 = vshll.u32 %v376, 16
        %v598 = vrot.slane %v596, 5
        %v599 = vsel %vm417, %v594, %v598
        %v600 = vshrl.u32 %v376, 16
        %v602 = vrot.slane %v600, 4
        %v603 = vor.u32 %v602, %v598
        %v604 = vrot.slane %v603, 4
        %v606 = vshll.u32 %v404, 16
        %v608 = vrot.slane %v606, 5
        %v609 = vsel %vm417, %v604, %v608
        %v611 = vshrl.u32 %v377, 16
        %v613 = vrot.slane %v611, 4
        %v614 = vshll.u32 %v377, 16
        %v616 = vrot.slane %v614, 5
        %v617 = vor.u32 %v613, %v616
        %v618 = vrot.slane %v617, 4
        %v620 = vshll.u32 %v378, 16
        %v622 = vrot.slane %v620, 5
        %v623 = vsel %vm417, %v618, %v622
        %v624 = vshrl.u32 %v378, 16
        %v626 = vrot.slane %v624, 4
        %v627 = vor.u32 %v626, %v622
        %v628 = vrot.slane %v627, 4
        %v630 = vshll.u32 %v405, 16
        %v632 = vrot.slane %v630, 5
        %v633 = vsel %vm417, %v628, %v632
        %v635 = vshrl.u32 %v379, 16
        %v637 = vrot.slane %v635, 4
        %v638 = vshll.u32 %v379, 16
        %v640 = vrot.slane %v638, 5
        %v641 = vor.u32 %v637, %v640
        %v642 = vrot.slane %v641, 4
        %v644 = vshll.u32 %v380, 16
        %v646 = vrot.slane %v644, 5
        %v647 = vsel %vm417, %v642, %v646
        %v648 = vshrl.u32 %v380, 16
        %v650 = vrot.slane %v648, 4
        %v651 = vor.u32 %v650, %v646
        %v652 = vrot.slane %v651, 4
        %v654 = vshll.u32 %v406, 16
        %v656 = vrot.slane %v654, 5
        %v657 = vsel %vm417, %v652, %v656
        %v659 = vshrl.u32 %v381, 16
        %v661 = vrot.slane %v659, 4
        %v662 = vshll.u32 %v381, 16
        %v664 = vrot.slane %v662, 5
        %v665 = vor.u32 %v661, %v664
        %v666 = vrot.slane %v665, 4
        %v668 = vshll.u32 %v382, 16
        %v670 = vrot.slane %v668, 5
        %v671 = vsel %vm417, %v666, %v670
        %v672 = vshrl.u32 %v382, 16
        %v674 = vrot.slane %v672, 4
        %v675 = vor.u32 %v674, %v670
        %v676 = vrot.slane %v675, 4
        %v678 = vshll.u32 %v407, 16
        %v680 = vrot.slane %v678, 5
        %v681 = vsel %vm417, %v676, %v680
        %v683 = vshrl.u32 %v383, 16
        %v685 = vrot.slane %v683, 4
        %v686 = vshll.u32 %v383, 16
        %v688 = vrot.slane %v686, 5
        %v689 = vor.u32 %v685, %v688
        %v690 = vrot.slane %v689, 4
        %v692 = vshll.u32 %v384, 16
        %v694 = vrot.slane %v692, 5
        %v695 = vsel %vm417, %v690, %v694
        %v696 = vshrl.u32 %v384, 16
        %v698 = vrot.slane %v696, 4
        %v699 = vor.u32 %v698, %v694
        %v700 = vrot.slane %v699, 4
        %v702 = vshll.u32 %v408, 16
        %v704 = vrot.slane %v702, 5
        %v705 = vsel %vm417, %v700, %v704
        %v707 = vshrl.u32 %v385, 16
        %v709 = vrot.slane %v707, 4
        %v710 = vshll.u32 %v385, 16
        %v712 = vrot.slane %v710, 5
        %v713 = vor.u32 %v709, %v712
        %v714 = vrot.slane %v713, 4
        %v716 = vshll.u32 %v386, 16
        %v718 = vrot.slane %v716, 5
        %v719 = vsel %vm417, %v714, %v718
        %v720 = vshrl.u32 %v386, 16
        %v722 = vrot.slane %v720, 4
        %v723 = vor.u32 %v722, %v718
        %v724 = vrot.slane %v723, 4
        %v726 = vshll.u32 %v409, 16
        %v728 = vrot.slane %v726, 5
        %v729 = vsel %vm417, %v724, %v728
        %v731 = vshrl.u32 %v387, 16
        %v733 = vrot.slane %v731, 4
        %v734 = vshll.u32 %v387, 16
        %v736 = vrot.slane %v734, 5
        %v737 = vor.u32 %v733, %v736
        %v738 = vrot.slane %v737, 4
        %v740 = vshll.u32 %v388, 16
        %v742 = vrot.slane %v740, 5
        %v743 = vsel %vm417, %v738, %v742
        %v744 = vshrl.u32 %v388, 16
        %v746 = vrot.slane %v744, 4
        %v747 = vor.u32 %v746, %v742
        %v748 = vrot.slane %v747, 4
        %v750 = vshll.u32 %v410, 16
        %v752 = vrot.slane %v750, 5
        %v753 = vsel %vm417, %v748, %v752
        %v755 = vshrl.u32 %v389, 16
        %v757 = vrot.slane %v755, 4
        %v758 = vshll.u32 %v389, 16
        %v760 = vrot.slane %v758, 5
        %v761 = vor.u32 %v757, %v760
        %v762 = vrot.slane %v761, 4
        %v764 = vshll.u32 %v390, 16
        %v766 = vrot.slane %v764, 5
        %v767 = vsel %vm417, %v762, %v766
        %v768 = vshrl.u32 %v390, 16
        %v770 = vrot.slane %v768, 4
        %v771 = vor.u32 %v770, %v766
        %v772 = vrot.slane %v771, 4
        %v774 = vshll.u32 %v411, 16
        %v776 = vrot.slane %v774, 5
        %v777 = vsel %vm417, %v772, %v776
        %v779 = vshrl.u32 %v391, 16
        %v781 = vrot.slane %v779, 4
        %v782 = vshll.u32 %v391, 16
        %v784 = vrot.slane %v782, 5
        %v785 = vor.u32 %v781, %v784
        %v786 = vrot.slane %v785, 4
        %v788 = vshll.u32 %v392, 16
        %v790 = vrot.slane %v788, 5
        %v791 = vsel %vm417, %v786, %v790
        %v792 = vshrl.u32 %v392, 16
        %v794 = vrot.slane %v792, 4
        %v795 = vor.u32 %v794, %v790
        %v796 = vrot.slane %v795, 4
        %v798 = vshll.u32 %v412, 16
        %v800 = vrot.slane %v798, 5
        %v801 = vsel %vm417, %v796, %v800
        %v803 = vshrl.u32 %v393, 16
        %v805 = vrot.slane %v803, 4
        %v806 = vshll.u32 %v393, 16
        %v808 = vrot.slane %v806, 5
        %v809 = vor.u32 %v805, %v808
        %v810 = vrot.slane %v809, 4
        %v812 = vshll.u32 %v394, 16
        %v814 = vrot.slane %v812, 5
        %v815 = vsel %vm417, %v810, %v814
        %v816 = vshrl.u32 %v394, 16
        %v818 = vrot.slane %v816, 4
        %v819 = vor.u32 %v818, %v814
        %v820 = vrot.slane %v819, 4
        %v822 = vshll.u32 %v413, 16
        %v824 = vrot.slane %v822, 5
        %v825 = vsel %vm417, %v820, %v824
        %v827 = vshrl.u32 %v395, 16
        %v829 = vrot.slane %v827, 4
        %v830 = vshll.u32 %v395, 16
        %v832 = vrot.slane %v830, 5
        %v833 = vor.u32 %v829, %v832
        %v834 = vrot.slane %v833, 4
        %v836 = vshll.u32 %v396, 16
        %v838 = vrot.slane %v836, 5
        %v839 = vsel %vm417, %v834, %v838
        %v840 = vshrl.u32 %v396, 16
        %v842 = vrot.slane %v840, 4
        %v843 = vor.u32 %v842, %v838
        %v844 = vrot.slane %v843, 4
        %v846 = vshll.u32 %v414, 16
        %v848 = vrot.slane %v846, 5
        %v849 = vsel %vm417, %v844, %v848
        %v850 = vld [vmem:[%s316] sm:$0xe]
        %v851 = vld [vmem:[%s316 + $0xc] sm:$0xe]
        %v852 = vld [vmem:[%s316 + $0x18] sm:$0xe]
        %v853 = vld [vmem:[%s316 + $0x24] sm:$0xe]
        %v854 = vld [vmem:[%s316 + $0x30] sm:$0xe]
        %v855 = vld [vmem:[%s316 + $0x3c] sm:$0xe]
        %v856 = vld [vmem:[%s316 + $0x48] sm:$0xe]
        %v857 = vld [vmem:[%s316 + $0x54] sm:$0xe]
        %v858 = vld [vmem:[%s316 + $0x60] sm:$0xe]
        %v859 = vld [vmem:[%s316 + $0x6c] sm:$0xe]
        %v860 = vld [vmem:[%s316 + $0x78] sm:$0xe]
        %v861 = vld [vmem:[%s316 + $0x84] sm:$0xe]
        %v862 = vld [vmem:[%s316 + $0x90] sm:$0xe]
        %v863 = vld [vmem:[%s316 + $0x9c] sm:$0xe]
        %v864 = vld [vmem:[%s316 + $0xa8] sm:$0xe]
        %v865 = vld [vmem:[%s316 + $0xb4] sm:$0xe]
        %v866 = vld [vmem:[%s316 + $0xc0] sm:$0xe]
        %v867 = vld [vmem:[%s316 + $0xcc] sm:$0xe]
        %vm922 = vcmask 1042432
        %vm923 = vcmask 1046532
        %vm924 = vmor %vm922, %vm923
        %v925 = vrot.slane %v850, 5
        %v926 = vrot.slane %v925, 4
        %v927 = vrot.slane %v362, 5
        %v928 = vsel %vm924, %v926, %v927
        %v929 = vrot.slane %v927, 4
        %v930 = vrot.slane %v397, 5
        %v931 = vsel %vm924, %v929, %v930
        %v932 = vrot.slane %v851, 5
        %v933 = vrot.slane %v932, 4
        %v934 = vrot.slane %v364, 5
        %v935 = vsel %vm924, %v933, %v934
        %v936 = vrot.slane %v934, 4
        %v937 = vrot.slane %v398, 5
        %v938 = vsel %vm924, %v936, %v937
        %v939 = vrot.slane %v852, 5
        %v940 = vrot.slane %v939, 4
        %v941 = vrot.slane %v366, 5
        %v942 = vsel %vm924, %v940, %v941
        %v943 = vrot.slane %v941, 4
        %v944 = vrot.slane %v399, 5
        %v945 = vsel %vm924, %v943, %v944
        %v946 = vrot.slane %v853, 5
        %v947 = vrot.slane %v946, 4
        %v948 = vrot.slane %v368, 5
        %v949 = vsel %vm924, %v947, %v948
        %v950 = vrot.slane %v948, 4
        %v951 = vrot.slane %v400, 5
        %v952 = vsel %vm924, %v950, %v951
        %v953 = vrot.slane %v854, 5
        %v954 = vrot.slane %v953, 4
        %v955 = vrot.slane %v370, 5
        %v956 = vsel %vm924, %v954, %v955
        %v957 = vrot.slane %v955, 4
        %v958 = vrot.slane %v401, 5
        %v959 = vsel %vm924, %v957, %v958
        %v960 = vrot.slane %v855, 5
        %v961 = vrot.slane %v960, 4
        %v962 = vrot.slane %v372, 5
        %v963 = vsel %vm924, %v961, %v962
        %v964 = vrot.slane %v962, 4
        %v965 = vrot.slane %v402, 5
        %v966 = vsel %vm924, %v964, %v965
        %v967 = vrot.slane %v856, 5
        %v968 = vrot.slane %v967, 4
        %v969 = vrot.slane %v374, 5
        %v970 = vsel %vm924, %v968, %v969
        %v971 = vrot.slane %v969, 4
        %v972 = vrot.slane %v403, 5
        %v973 = vsel %vm924, %v971, %v972
        %v974 = vrot.slane %v857, 5
        %v975 = vrot.slane %v974, 4
        %v976 = vrot.slane %v376, 5
        %v977 = vsel %vm924, %v975, %v976
        %v978 = vrot.slane %v976, 4
        %v979 = vrot.slane %v404, 5
        %v980 = vsel %vm924, %v978, %v979
        %v981 = vrot.slane %v858, 5
        %v982 = vrot.slane %v981, 4
        %v983 = vrot.slane %v378, 5
        %v984 = vsel %vm924, %v982, %v983
        %v985 = vrot.slane %v983, 4
        %v986 = vrot.slane %v405, 5
        %v987 = vsel %vm924, %v985, %v986
        %v988 = vrot.slane %v859, 5
        %v989 = vrot.slane %v988, 4
        %v990 = vrot.slane %v380, 5
        %v991 = vsel %vm924, %v989, %v990
        %v992 = vrot.slane %v990, 4
        %v993 = vrot.slane %v406, 5
        %v994 = vsel %vm924, %v992, %v993
        %v995 = vrot.slane %v860, 5
        %v996 = vrot.slane %v995, 4
        %v997 = vrot.slane %v382, 5
        %v998 = vsel %vm924, %v996, %v997
        %v999 = vrot.slane %v997, 4
        %v1000 = vrot.slane %v407, 5
        %v1001 = vsel %vm924, %v999, %v1000
        %v1002 = vrot.slane %v861, 5
        %v1003 = vrot.slane %v1002, 4
        %v1004 = vrot.slane %v384, 5
        %v1005 = vsel %vm924, %v1003, %v1004
        %v1006 = vrot.slane %v1004, 4
        %v1007 = vrot.slane %v408, 5
        %v1008 = vsel %vm924, %v1006, %v1007
        %v1009 = vrot.slane %v862, 5
        %v1010 = vrot.slane %v1009, 4
        %v1011 = vrot.slane %v386, 5
        %v1012 = vsel %vm924, %v1010, %v1011
        %v1013 = vrot.slane %v1011, 4
        %v1014 = vrot.slane %v409, 5
        %v1015 = vsel %vm924, %v1013, %v1014
        %v1016 = vrot.slane %v863, 5
        %v1017 = vrot.slane %v1016, 4
        %v1018 = vrot.slane %v388, 5
        %v1019 = vsel %vm924, %v1017, %v1018
        %v1020 = vrot.slane %v1018, 4
        %v1021 = vrot.slane %v410, 5
        %v1022 = vsel %vm924, %v1020, %v1021
        %v1023 = vrot.slane %v864, 5
        %v1024 = vrot.slane %v1023, 4
        %v1025 = vrot.slane %v390, 5
        %v1026 = vsel %vm924, %v1024, %v1025
        %v1027 = vrot.slane %v1025, 4
        %v1028 = vrot.slane %v411, 5
        %v1029 = vsel %vm924, %v1027, %v1028
        %v1030 = vrot.slane %v865, 5
        %v1031 = vrot.slane %v1030, 4
        %v1032 = vrot.slane %v392, 5
        %v1033 = vsel %vm924, %v1031, %v1032
        %v1034 = vrot.slane %v1032, 4
        %v1035 = vrot.slane %v412, 5
        %v1036 = vsel %vm924, %v1034, %v1035
        %v1037 = vrot.slane %v866, 5
        %v1038 = vrot.slane %v1037, 4
        %v1039 = vrot.slane %v394, 5
        %v1040 = vsel %vm924, %v1038, %v1039
        %v1041 = vrot.slane %v1039, 4
        %v1042 = vrot.slane %v413, 5
        %v1043 = vsel %vm924, %v1041, %v1042
        %v1044 = vrot.slane %v867, 5
        %v1045 = vrot.slane %v1044, 4
        %v1046 = vrot.slane %v396, 5
        %v1047 = vsel %vm924, %v1045, %v1046
        %v1048 = vrot.slane %v1046, 4
        %v1049 = vrot.slane %v414, 5
        %v1050 = vsel %vm924, %v1048, %v1049
        %s1051 = scalar_lea.vmem %s316, 12 [#allocation3]
        %v1052 = vld [vmem:[%s1051] sm:$0xf]
        %v1053 = vld [vmem:[%s1051 + $0x4] sm:$0xf]
        %v1054 = vld [vmem:[%s1051 + $0xc] sm:$0xf]
        %v1055 = vld [vmem:[%s1051 + $0x10] sm:$0xf]
        %v1056 = vld [vmem:[%s1051 + $0x18] sm:$0xf]
        %v1057 = vld [vmem:[%s1051 + $0x1c] sm:$0xf]
        %v1058 = vld [vmem:[%s1051 + $0x24] sm:$0xf]
        %v1059 = vld [vmem:[%s1051 + $0x28] sm:$0xf]
        %v1060 = vld [vmem:[%s1051 + $0x30] sm:$0xf]
        %v1061 = vld [vmem:[%s1051 + $0x34] sm:$0xf]
        %v1062 = vld [vmem:[%s1051 + $0x3c] sm:$0xf]
        %v1063 = vld [vmem:[%s1051 + $0x40] sm:$0xf]
        %v1064 = vld [vmem:[%s1051 + $0x48] sm:$0xf]
        %v1065 = vld [vmem:[%s1051 + $0x4c] sm:$0xf]
        %v1066 = vld [vmem:[%s1051 + $0x54] sm:$0xf]
        %v1067 = vld [vmem:[%s1051 + $0x58] sm:$0xf]
        %v1068 = vld [vmem:[%s1051 + $0x60] sm:$0xf]
        %v1069 = vld [vmem:[%s1051 + $0x64] sm:$0xf]
        %v1070 = vld [vmem:[%s1051 + $0x6c] sm:$0xf]
        %v1071 = vld [vmem:[%s1051 + $0x70] sm:$0xf]
        %v1072 = vld [vmem:[%s1051 + $0x78] sm:$0xf]
        %v1073 = vld [vmem:[%s1051 + $0x7c] sm:$0xf]
        %v1074 = vld [vmem:[%s1051 + $0x84] sm:$0xf]
        %v1075 = vld [vmem:[%s1051 + $0x88] sm:$0xf]
        %v1076 = vld [vmem:[%s1051 + $0x90] sm:$0xf]
        %v1077 = vld [vmem:[%s1051 + $0x94] sm:$0xf]
        %v1078 = vld [vmem:[%s1051 + $0x9c] sm:$0xf]
        %v1079 = vld [vmem:[%s1051 + $0xa0] sm:$0xf]
        %v1080 = vld [vmem:[%s1051 + $0xa8] sm:$0xf]
        %v1081 = vld [vmem:[%s1051 + $0xac] sm:$0xf]
        %v1082 = vld [vmem:[%s1051 + $0xb4] sm:$0xf]
        %v1083 = vld [vmem:[%s1051 + $0xb8] sm:$0xf]
        %v1084 = vld [vmem:[%s1051 + $0xc0] sm:$0xf]
        %v1085 = vld [vmem:[%s1051 + $0xc4] sm:$0xf]
        %v1086 = vld [vmem:[%s1051 + $0xcc] sm:$0xf]
        %v1087 = vld [vmem:[%s1051 + $0xd0] sm:$0xf]
        %v1088 = vld [vmem:[%s1051 + $0x8] sm:$0x1]
        %v1089 = vld [vmem:[%s1051 + $0x14] sm:$0x1]
        %v1090 = vld [vmem:[%s1051 + $0x20] sm:$0x1]
        %v1091 = vld [vmem:[%s1051 + $0x2c] sm:$0x1]
        %v1092 = vld [vmem:[%s1051 + $0x38] sm:$0x1]
        %v1093 = vld [vmem:[%s1051 + $0x44] sm:$0x1]
        %v1094 = vld [vmem:[%s1051 + $0x50] sm:$0x1]
        %v1095 = vld [vmem:[%s1051 + $0x5c] sm:$0x1]
        %v1096 = vld [vmem:[%s1051 + $0x68] sm:$0x1]
        %v1097 = vld [vmem:[%s1051 + $0x74] sm:$0x1]
        %v1098 = vld [vmem:[%s1051 + $0x80] sm:$0x1]
        %v1099 = vld [vmem:[%s1051 + $0x8c] sm:$0x1]
        %v1100 = vld [vmem:[%s1051 + $0x98] sm:$0x1]
        %v1101 = vld [vmem:[%s1051 + $0xa4] sm:$0x1]
        %v1102 = vld [vmem:[%s1051 + $0xb0] sm:$0x1]
        %v1103 = vld [vmem:[%s1051 + $0xbc] sm:$0x1]
        %v1104 = vld [vmem:[%s1051 + $0xc8] sm:$0x1]
        %v1105 = vld [vmem:[%s1051 + $0xd4] sm:$0x1]
        %v1107 = vshrl.u32 %v1052, 16
        %v1109 = vrot.slane %v1107, 4
        %v1110 = vshll.u32 %v1052, 16
        %v1112 = vrot.slane %v1110, 5
        %v1113 = vor.u32 %v1109, %v1112
        %v1114 = vrot.slane %v1113, 4
        %v1116 = vshll.u32 %v1053, 16
        %v1118 = vrot.slane %v1116, 5
        %v1119 = vsel %vm417, %v1114, %v1118
        %v1120 = vshrl.u32 %v1053, 16
        %v1122 = vrot.slane %v1120, 4
        %v1123 = vor.u32 %v1122, %v1118
        %v1124 = vrot.slane %v1123, 4
        %v1126 = vshll.u32 %v1088, 16
        %v1128 = vrot.slane %v1126, 5
        %v1129 = vsel %vm417, %v1124, %v1128
        %v1131 = vshrl.u32 %v1054, 16
        %v1133 = vrot.slane %v1131, 4
        %v1134 = vshll.u32 %v1054, 16
        %v1136 = vrot.slane %v1134, 5
        %v1137 = vor.u32 %v1133, %v1136
        %v1138 = vrot.slane %v1137, 4
        %v1140 = vshll.u32 %v1055, 16
        %v1142 = vrot.slane %v1140, 5
        %v1143 = vsel %vm417, %v1138, %v1142
        %v1144 = vshrl.u32 %v1055, 16
        %v1146 = vrot.slane %v1144, 4
        %v1147 = vor.u32 %v1146, %v1142
        %v1148 = vrot.slane %v1147, 4
        %v1150 = vshll.u32 %v1089, 16
        %v1152 = vrot.slane %v1150, 5
        %v1153 = vsel %vm417, %v1148, %v1152
        %v1155 = vshrl.u32 %v1056, 16
        %v1157 = vrot.slane %v1155, 4
        %v1158 = vshll.u32 %v1056, 16
        %v1160 = vrot.slane %v1158, 5
        %v1161 = vor.u32 %v1157, %v1160
        %v1162 = vrot.slane %v1161, 4
        %v1164 = vshll.u32 %v1057, 16
        %v1166 = vrot.slane %v1164, 5
        %v1167 = vsel %vm417, %v1162, %v1166
        %v1168 = vshrl.u32 %v1057, 16
        %v1170 = vrot.slane %v1168, 4
        %v1171 = vor.u32 %v1170, %v1166
        %v1172 = vrot.slane %v1171, 4
        %v1174 = vshll.u32 %v1090, 16
        %v1176 = vrot.slane %v1174, 5
        %v1177 = vsel %vm417, %v1172, %v1176
        %v1179 = vshrl.u32 %v1058, 16
        %v1181 = vrot.slane %v1179, 4
        %v1182 = vshll.u32 %v1058, 16
        %v1184 = vrot.slane %v1182, 5
        %v1185 = vor.u32 %v1181, %v1184
        %v1186 = vrot.slane %v1185, 4
        %v1188 = vshll.u32 %v1059, 16
        %v1190 = vrot.slane %v1188, 5
        %v1191 = vsel %vm417, %v1186, %v1190
        %v1192 = vshrl.u32 %v1059, 16
        %v1194 = vrot.slane %v1192, 4
        %v1195 = vor.u32 %v1194, %v1190
        %v1196 = vrot.slane %v1195, 4
        %v1198 = vshll.u32 %v1091, 16
        %v1200 = vrot.slane %v1198, 5
        %v1201 = vsel %vm417, %v1196, %v1200
        %v1203 = vshrl.u32 %v1060, 16
        %v1205 = vrot.slane %v1203, 4
        %v1206 = vshll.u32 %v1060, 16
        %v1208 = vrot.slane %v1206, 5
        %v1209 = vor.u32 %v1205, %v1208
        %v1210 = vrot.slane %v1209, 4
        %v1212 = vshll.u32 %v1061, 16
        %v1214 = vrot.slane %v1212, 5
        %v1215 = vsel %vm417, %v1210, %v1214
        %v1216 = vshrl.u32 %v1061, 16
        %v1218 = vrot.slane %v1216, 4
        %v1219 = vor.u32 %v1218, %v1214
        %v1220 = vrot.slane %v1219, 4
        %v1222 = vshll.u32 %v1092, 16
        %v1224 = vrot.slane %v1222, 5
        %v1225 = vsel %vm417, %v1220, %v1224
        %v1227 = vshrl.u32 %v1062, 16
        %v1229 = vrot.slane %v1227, 4
        %v1230 = vshll.u32 %v1062, 16
        %v1232 = vrot.slane %v1230, 5
        %v1233 = vor.u32 %v1229, %v1232
        %v1234 = vrot.slane %v1233, 4
        %v1236 = vshll.u32 %v1063, 16
        %v1238 = vrot.slane %v1236, 5
        %v1239 = vsel %vm417, %v1234, %v1238
        %v1240 = vshrl.u32 %v1063, 16
        %v1242 = vrot.slane %v1240, 4
        %v1243 = vor.u32 %v1242, %v1238
        %v1244 = vrot.slane %v1243, 4
        %v1246 = vshll.u32 %v1093, 16
        %v1248 = vrot.slane %v1246, 5
        %v1249 = vsel %vm417, %v1244, %v1248
        %v1251 = vshrl.u32 %v1064, 16
        %v1253 = vrot.slane %v1251, 4
        %v1254 = vshll.u32 %v1064, 16
        %v1256 = vrot.slane %v1254, 5
        %v1257 = vor.u32 %v1253, %v1256
        %v1258 = vrot.slane %v1257, 4
        %v1260 = vshll.u32 %v1065, 16
        %v1262 = vrot.slane %v1260, 5
        %v1263 = vsel %vm417, %v1258, %v1262
        %v1264 = vshrl.u32 %v1065, 16
        %v1266 = vrot.slane %v1264, 4
        %v1267 = vor.u32 %v1266, %v1262
        %v1268 = vrot.slane %v1267, 4
        %v1270 = vshll.u32 %v1094, 16
        %v1272 = vrot.slane %v1270, 5
        %v1273 = vsel %vm417, %v1268, %v1272
        %v1275 = vshrl.u32 %v1066, 16
        %v1277 = vrot.slane %v1275, 4
        %v1278 = vshll.u32 %v1066, 16
        %v1280 = vrot.slane %v1278, 5
        %v1281 = vor.u32 %v1277, %v1280
        %v1282 = vrot.slane %v1281, 4
        %v1284 = vshll.u32 %v1067, 16
        %v1286 = vrot.slane %v1284, 5
        %v1287 = vsel %vm417, %v1282, %v1286
        %v1288 = vshrl.u32 %v1067, 16
        %v1290 = vrot.slane %v1288, 4
        %v1291 = vor.u32 %v1290, %v1286
        %v1292 = vrot.slane %v1291, 4
        %v1294 = vshll.u32 %v1095, 16
        %v1296 = vrot.slane %v1294, 5
        %v1297 = vsel %vm417, %v1292, %v1296
        %v1299 = vshrl.u32 %v1068, 16
        %v1301 = vrot.slane %v1299, 4
        %v1302 = vshll.u32 %v1068, 16
        %v1304 = vrot.slane %v1302, 5
        %v1305 = vor.u32 %v1301, %v1304
        %v1306 = vrot.slane %v1305, 4
        %v1308 = vshll.u32 %v1069, 16
        %v1310 = vrot.slane %v1308, 5
        %v1311 = vsel %vm417, %v1306, %v1310
        %v1312 = vshrl.u32 %v1069, 16
        %v1314 = vrot.slane %v1312, 4
        %v1315 = vor.u32 %v1314, %v1310
        %v1316 = vrot.slane %v1315, 4
        %v1318 = vshll.u32 %v1096, 16
        %v1320 = vrot.slane %v1318, 5
        %v1321 = vsel %vm417, %v1316, %v1320
        %v1323 = vshrl.u32 %v1070, 16
        %v1325 = vrot.slane %v1323, 4
        %v1326 = vshll.u32 %v1070, 16
        %v1328 = vrot.slane %v1326, 5
        %v1329 = vor.u32 %v1325, %v1328
        %v1330 = vrot.slane %v1329, 4
        %v1332 = vshll.u32 %v1071, 16
        %v1334 = vrot.slane %v1332, 5
        %v1335 = vsel %vm417, %v1330, %v1334
        %v1336 = vshrl.u32 %v1071, 16
        %v1338 = vrot.slane %v1336, 4
        %v1339 = vor.u32 %v1338, %v1334
        %v1340 = vrot.slane %v1339, 4
        %v1342 = vshll.u32 %v1097, 16
        %v1344 = vrot.slane %v1342, 5
        %v1345 = vsel %vm417, %v1340, %v1344
        %v1347 = vshrl.u32 %v1072, 16
        %v1349 = vrot.slane %v1347, 4
        %v1350 = vshll.u32 %v1072, 16
        %v1352 = vrot.slane %v1350, 5
        %v1353 = vor.u32 %v1349, %v1352
        %v1354 = vrot.slane %v1353, 4
        %v1356 = vshll.u32 %v1073, 16
        %v1358 = vrot.slane %v1356, 5
        %v1359 = vsel %vm417, %v1354, %v1358
        %v1360 = vshrl.u32 %v1073, 16
        %v1362 = vrot.slane %v1360, 4
        %v1363 = vor.u32 %v1362, %v1358
        %v1364 = vrot.slane %v1363, 4
        %v1366 = vshll.u32 %v1098, 16
        %v1368 = vrot.slane %v1366, 5
        %v1369 = vsel %vm417, %v1364, %v1368
        %v1371 = vshrl.u32 %v1074, 16
        %v1373 = vrot.slane %v1371, 4
        %v1374 = vshll.u32 %v1074, 16
        %v1376 = vrot.slane %v1374, 5
        %v1377 = vor.u32 %v1373, %v1376
        %v1378 = vrot.slane %v1377, 4
        %v1380 = vshll.u32 %v1075, 16
        %v1382 = vrot.slane %v1380, 5
        %v1383 = vsel %vm417, %v1378, %v1382
        %v1384 = vshrl.u32 %v1075, 16
        %v1386 = vrot.slane %v1384, 4
        %v1387 = vor.u32 %v1386, %v1382
        %v1388 = vrot.slane %v1387, 4
        %v1390 = vshll.u32 %v1099, 16
        %v1392 = vrot.slane %v1390, 5
        %v1393 = vsel %vm417, %v1388, %v1392
        %v1395 = vshrl.u32 %v1076, 16
        %v1397 = vrot.slane %v1395, 4
        %v1398 = vshll.u32 %v1076, 16
        %v1400 = vrot.slane %v1398, 5
        %v1401 = vor.u32 %v1397, %v1400
        %v1402 = vrot.slane %v1401, 4
        %v1404 = vshll.u32 %v1077, 16
        %v1406 = vrot.slane %v1404, 5
        %v1407 = vsel %vm417, %v1402, %v1406
        %v1408 = vshrl.u32 %v1077, 16
        %v1410 = vrot.slane %v1408, 4
        %v1411 = vor.u32 %v1410, %v1406
        %v1412 = vrot.slane %v1411, 4
        %v1414 = vshll.u32 %v1100, 16
        %v1416 = vrot.slane %v1414, 5
        %v1417 = vsel %vm417, %v1412, %v1416
        %v1419 = vshrl.u32 %v1078, 16
        %v1421 = vrot.slane %v1419, 4
        %v1422 = vshll.u32 %v1078, 16
        %v1424 = vrot.slane %v1422, 5
        %v1425 = vor.u32 %v1421, %v1424
        %v1426 = vrot.slane %v1425, 4
        %v1428 = vshll.u32 %v1079, 16
        %v1430 = vrot.slane %v1428, 5
        %v1431 = vsel %vm417, %v1426, %v1430
        %v1432 = vshrl.u32 %v1079, 16
        %v1434 = vrot.slane %v1432, 4
        %v1435 = vor.u32 %v1434, %v1430
        %v1436 = vrot.slane %v1435, 4
        %v1438 = vshll.u32 %v1101, 16
        %v1440 = vrot.slane %v1438, 5
        %v1441 = vsel %vm417, %v1436, %v1440
        %v1443 = vshrl.u32 %v1080, 16
        %v1445 = vrot.slane %v1443, 4
        %v1446 = vshll.u32 %v1080, 16
        %v1448 = vrot.slane %v1446, 5
        %v1449 = vor.u32 %v1445, %v1448
        %v1450 = vrot.slane %v1449, 4
        %v1452 = vshll.u32 %v1081, 16
        %v1454 = vrot.slane %v1452, 5
        %v1455 = vsel %vm417, %v1450, %v1454
        %v1456 = vshrl.u32 %v1081, 16
        %v1458 = vrot.slane %v1456, 4
        %v1459 = vor.u32 %v1458, %v1454
        %v1460 = vrot.slane %v1459, 4
        %v1462 = vshll.u32 %v1102, 16
        %v1464 = vrot.slane %v1462, 5
        %v1465 = vsel %vm417, %v1460, %v1464
        %v1467 = vshrl.u32 %v1082, 16
        %v1469 = vrot.slane %v1467, 4
        %v1470 = vshll.u32 %v1082, 16
        %v1472 = vrot.slane %v1470, 5
        %v1473 = vor.u32 %v1469, %v1472
        %v1474 = vrot.slane %v1473, 4
        %v1476 = vshll.u32 %v1083, 16
        %v1478 = vrot.slane %v1476, 5
        %v1479 = vsel %vm417, %v1474, %v1478
        %v1480 = vshrl.u32 %v1083, 16
        %v1482 = vrot.slane %v1480, 4
        %v1483 = vor.u32 %v1482, %v1478
        %v1484 = vrot.slane %v1483, 4
        %v1486 = vshll.u32 %v1103, 16
        %v1488 = vrot.slane %v1486, 5
        %v1489 = vsel %vm417, %v1484, %v1488
        %v1491 = vshrl.u32 %v1084, 16
        %v1493 = vrot.slane %v1491, 4
        %v1494 = vshll.u32 %v1084, 16
        %v1496 = vrot.slane %v1494, 5
        %v1497 = vor.u32 %v1493, %v1496
        %v1498 = vrot.slane %v1497, 4
        %v1500 = vshll.u32 %v1085, 16
        %v1502 = vrot.slane %v1500, 5
        %v1503 = vsel %vm417, %v1498, %v1502
        %v1504 = vshrl.u32 %v1085, 16
        %v1506 = vrot.slane %v1504, 4
        %v1507 = vor.u32 %v1506, %v1502
        %v1508 = vrot.slane %v1507, 4
        %v1510 = vshll.u32 %v1104, 16
        %v1512 = vrot.slane %v1510, 5
        %v1513 = vsel %vm417, %v1508, %v1512
        %v1515 = vshrl.u32 %v1086, 16
        %v1517 = vrot.slane %v1515, 4
        %v1518 = vshll.u32 %v1086, 16
        %v1520 = vrot.slane %v1518, 5
        %v1521 = vor.u32 %v1517, %v1520
        %v1522 = vrot.slane %v1521, 4
        %v1524 = vshll.u32 %v1087, 16
        %v1526 = vrot.slane %v1524, 5
        %v1527 = vsel %vm417, %v1522, %v1526
        %v1528 = vshrl.u32 %v1087, 16
        %v1530 = vrot.slane %v1528, 4
        %v1531 = vor.u32 %v1530, %v1526
        %v1532 = vrot.slane %v1531, 4
        %v1534 = vshll.u32 %v1105, 16
        %v1536 = vrot.slane %v1534, 5
        %v1537 = vsel %vm417, %v1532, %v1536
        %v1538 = vld [vmem:[%s1051] sm:$0xe]
        %v1539 = vld [vmem:[%s1051 + $0xc] sm:$0xe]
        %v1540 = vld [vmem:[%s1051 + $0x18] sm:$0xe]
        %v1541 = vld [vmem:[%s1051 + $0x24] sm:$0xe]
        %v1542 = vld [vmem:[%s1051 + $0x30] sm:$0xe]
        %v1543 = vld [vmem:[%s1051 + $0x3c] sm:$0xe]
        %v1544 = vld [vmem:[%s1051 + $0x48] sm:$0xe]
        %v1545 = vld [vmem:[%s1051 + $0x54] sm:$0xe]
        %v1546 = vld [vmem:[%s1051 + $0x60] sm:$0xe]
        %v1547 = vld [vmem:[%s1051 + $0x6c] sm:$0xe]
        %v1548 = vld [vmem:[%s1051 + $0x78] sm:$0xe]
        %v1549 = vld [vmem:[%s1051 + $0x84] sm:$0xe]
        %v1550 = vld [vmem:[%s1051 + $0x90] sm:$0xe]
        %v1551 = vld [vmem:[%s1051 + $0x9c] sm:$0xe]
        %v1552 = vld [vmem:[%s1051 + $0xa8] sm:$0xe]
        %v1553 = vld [vmem:[%s1051 + $0xb4] sm:$0xe]
        %v1554 = vld [vmem:[%s1051 + $0xc0] sm:$0xe]
        %v1555 = vld [vmem:[%s1051 + $0xcc] sm:$0xe]
        %v1610 = vrot.slane %v1538, 5
        %v1611 = vrot.slane %v1610, 4
        %v1612 = vrot.slane %v1053, 5
        %v1613 = vsel %vm924, %v1611, %v1612
        %v1614 = vrot.slane %v1612, 4
        %v1615 = vrot.slane %v1088, 5
        %v1616 = vsel %vm924, %v1614, %v1615
        %v1617 = vrot.slane %v1539, 5
        %v1618 = vrot.slane %v1617, 4
        %v1619 = vrot.slane %v1055, 5
        %v1620 = vsel %vm924, %v1618, %v1619
        %v1621 = vrot.slane %v1619, 4
        %v1622 = vrot.slane %v1089, 5
        %v1623 = vsel %vm924, %v1621, %v1622
        %v1624 = vrot.slane %v1540, 5
        %v1625 = vrot.slane %v1624, 4
        %v1626 = vrot.slane %v1057, 5
        %v1627 = vsel %vm924, %v1625, %v1626
        %v1628 = vrot.slane %v1626, 4
        %v1629 = vrot.slane %v1090, 5
        %v1630 = vsel %vm924, %v1628, %v1629
        %v1631 = vrot.slane %v1541, 5
        %v1632 = vrot.slane %v1631, 4
        %v1633 = vrot.slane %v1059, 5
        %v1634 = vsel %vm924, %v1632, %v1633
        %v1635 = vrot.slane %v1633, 4
        %v1636 = vrot.slane %v1091, 5
        %v1637 = vsel %vm924, %v1635, %v1636
        %v1638 = vrot.slane %v1542, 5
        %v1639 = vrot.slane %v1638, 4
        %v1640 = vrot.slane %v1061, 5
        %v1641 = vsel %vm924, %v1639, %v1640
        %v1642 = vrot.slane %v1640, 4
        %v1643 = vrot.slane %v1092, 5
        %v1644 = vsel %vm924, %v1642, %v1643
        %v1645 = vrot.slane %v1543, 5
        %v1646 = vrot.slane %v1645, 4
        %v1647 = vrot.slane %v1063, 5
        %v1648 = vsel %vm924, %v1646, %v1647
        %v1649 = vrot.slane %v1647, 4
        %v1650 = vrot.slane %v1093, 5
        %v1651 = vsel %vm924, %v1649, %v1650
        %v1652 = vrot.slane %v1544, 5
        %v1653 = vrot.slane %v1652, 4
        %v1654 = vrot.slane %v1065, 5
        %v1655 = vsel %vm924, %v1653, %v1654
        %v1656 = vrot.slane %v1654, 4
        %v1657 = vrot.slane %v1094, 5
        %v1658 = vsel %vm924, %v1656, %v1657
        %v1659 = vrot.slane %v1545, 5
        %v1660 = vrot.slane %v1659, 4
        %v1661 = vrot.slane %v1067, 5
        %v1662 = vsel %vm924, %v1660, %v1661
        %v1663 = vrot.slane %v1661, 4
        %v1664 = vrot.slane %v1095, 5
        %v1665 = vsel %vm924, %v1663, %v1664
        %v1666 = vrot.slane %v1546, 5
        %v1667 = vrot.slane %v1666, 4
        %v1668 = vrot.slane %v1069, 5
        %v1669 = vsel %vm924, %v1667, %v1668
        %v1670 = vrot.slane %v1668, 4
        %v1671 = vrot.slane %v1096, 5
        %v1672 = vsel %vm924, %v1670, %v1671
        %v1673 = vrot.slane %v1547, 5
        %v1674 = vrot.slane %v1673, 4
        %v1675 = vrot.slane %v1071, 5
        %v1676 = vsel %vm924, %v1674, %v1675
        %v1677 = vrot.slane %v1675, 4
        %v1678 = vrot.slane %v1097, 5
        %v1679 = vsel %vm924, %v1677, %v1678
        %v1680 = vrot.slane %v1548, 5
        %v1681 = vrot.slane %v1680, 4
        %v1682 = vrot.slane %v1073, 5
        %v1683 = vsel %vm924, %v1681, %v1682
        %v1684 = vrot.slane %v1682, 4
        %v1685 = vrot.slane %v1098, 5
        %v1686 = vsel %vm924, %v1684, %v1685
        %v1687 = vrot.slane %v1549, 5
        %v1688 = vrot.slane %v1687, 4
        %v1689 = vrot.slane %v1075, 5
        %v1690 = vsel %vm924, %v1688, %v1689
        %v1691 = vrot.slane %v1689, 4
        %v1692 = vrot.slane %v1099, 5
        %v1693 = vsel %vm924, %v1691, %v1692
        %v1694 = vrot.slane %v1550, 5
        %v1695 = vrot.slane %v1694, 4
        %v1696 = vrot.slane %v1077, 5
        %v1697 = vsel %vm924, %v1695, %v1696
        %v1698 = vrot.slane %v1696, 4
        %v1699 = vrot.slane %v1100, 5
        %v1700 = vsel %vm924, %v1698, %v1699
        %v1701 = vrot.slane %v1551, 5
        %v1702 = vrot.slane %v1701, 4
        %v1703 = vrot.slane %v1079, 5
        %v1704 = vsel %vm924, %v1702, %v1703
        %v1705 = vrot.slane %v1703, 4
        %v1706 = vrot.slane %v1101, 5
        %v1707 = vsel %vm924, %v1705, %v1706
        %v1708 = vrot.slane %v1552, 5
        %v1709 = vrot.slane %v1708, 4
        %v1710 = vrot.slane %v1081, 5
        %v1711 = vsel %vm924, %v1709, %v1710
        %v1712 = vrot.slane %v1710, 4
        %v1713 = vrot.slane %v1102, 5
        %v1714 = vsel %vm924, %v1712, %v1713
        %v1715 = vrot.slane %v1553, 5
        %v1716 = vrot.slane %v1715, 4
        %v1717 = vrot.slane %v1083, 5
        %v1718 = vsel %vm924, %v1716, %v1717
        %v1719 = vrot.slane %v1717, 4
        %v1720 = vrot.slane %v1103, 5
        %v1721 = vsel %vm924, %v1719, %v1720
        %v1722 = vrot.slane %v1554, 5
        %v1723 = vrot.slane %v1722, 4
        %v1724 = vrot.slane %v1085, 5
        %v1725 = vsel %vm924, %v1723, %v1724
        %v1726 = vrot.slane %v1724, 4
        %v1727 = vrot.slane %v1104, 5
        %v1728 = vsel %vm924, %v1726, %v1727
        %v1729 = vrot.slane %v1555, 5
        %v1730 = vrot.slane %v1729, 4
        %v1731 = vrot.slane %v1087, 5
        %v1732 = vsel %vm924, %v1730, %v1731
        %v1733 = vrot.slane %v1731, 4
        %v1734 = vrot.slane %v1105, 5
        %v1735 = vsel %vm924, %v1733, %v1734
        %s1736 = scalar_lea.vmem %s316, 24 [#allocation3]
        %v1737 = vld [vmem:[%s1736] sm:$0xf]
        %v1738 = vld [vmem:[%s1736 + $0x4] sm:$0xf]
        %v1739 = vld [vmem:[%s1736 + $0xc] sm:$0xf]
        %v1740 = vld [vmem:[%s1736 + $0x10] sm:$0xf]
        %v1741 = vld [vmem:[%s1736 + $0x18] sm:$0xf]
        %v1742 = vld [vmem:[%s1736 + $0x1c] sm:$0xf]
        %v1743 = vld [vmem:[%s1736 + $0x24] sm:$0xf]
        %v1744 = vld [vmem:[%s1736 + $0x28] sm:$0xf]
        %v1745 = vld [vmem:[%s1736 + $0x30] sm:$0xf]
        %v1746 = vld [vmem:[%s1736 + $0x34] sm:$0xf]
        %v1747 = vld [vmem:[%s1736 + $0x3c] sm:$0xf]
        %v1748 = vld [vmem:[%s1736 + $0x40] sm:$0xf]
        %v1749 = vld [vmem:[%s1736 + $0x48] sm:$0xf]
        %v1750 = vld [vmem:[%s1736 + $0x4c] sm:$0xf]
        %v1751 = vld [vmem:[%s1736 + $0x54] sm:$0xf]
        %v1752 = vld [vmem:[%s1736 + $0x58] sm:$0xf]
        %v1753 = vld [vmem:[%s1736 + $0x60] sm:$0xf]
        %v1754 = vld [vmem:[%s1736 + $0x64] sm:$0xf]
        %v1755 = vld [vmem:[%s1736 + $0x6c] sm:$0xf]
        %v1756 = vld [vmem:[%s1736 + $0x70] sm:$0xf]
        %v1757 = vld [vmem:[%s1736 + $0x78] sm:$0xf]
        %v1758 = vld [vmem:[%s1736 + $0x7c] sm:$0xf]
        %v1759 = vld [vmem:[%s1736 + $0x84] sm:$0xf]
        %v1760 = vld [vmem:[%s1736 + $0x88] sm:$0xf]
        %v1761 = vld [vmem:[%s1736 + $0x90] sm:$0xf]
        %v1762 = vld [vmem:[%s1736 + $0x94] sm:$0xf]
        %v1763 = vld [vmem:[%s1736 + $0x9c] sm:$0xf]
        %v1764 = vld [vmem:[%s1736 + $0xa0] sm:$0xf]
        %v1765 = vld [vmem:[%s1736 + $0xa8] sm:$0xf]
        %v1766 = vld [vmem:[%s1736 + $0xac] sm:$0xf]
        %v1767 = vld [vmem:[%s1736 + $0xb4] sm:$0xf]
        %v1768 = vld [vmem:[%s1736 + $0xb8] sm:$0xf]
        %v1769 = vld [vmem:[%s1736 + $0xc0] sm:$0xf]
        %v1770 = vld [vmem:[%s1736 + $0xc4] sm:$0xf]
        %v1771 = vld [vmem:[%s1736 + $0xcc] sm:$0xf]
        %v1772 = vld [vmem:[%s1736 + $0xd0] sm:$0xf]
        %v1773 = vld [vmem:[%s1736 + $0x8] sm:$0x1]
        %v1774 = vld [vmem:[%s1736 + $0x14] sm:$0x1]
        %v1775 = vld [vmem:[%s1736 + $0x20] sm:$0x1]
        %v1776 = vld [vmem:[%s1736 + $0x2c] sm:$0x1]
        %v1777 = vld [vmem:[%s1736 + $0x38] sm:$0x1]
        %v1778 = vld [vmem:[%s1736 + $0x44] sm:$0x1]
        %v1779 = vld [vmem:[%s1736 + $0x50] sm:$0x1]
        %v1780 = vld [vmem:[%s1736 + $0x5c] sm:$0x1]
        %v1781 = vld [vmem:[%s1736 + $0x68] sm:$0x1]
        %v1782 = vld [vmem:[%s1736 + $0x74] sm:$0x1]
        %v1783 = vld [vmem:[%s1736 + $0x80] sm:$0x1]
        %v1784 = vld [vmem:[%s1736 + $0x8c] sm:$0x1]
        %v1785 = vld [vmem:[%s1736 + $0x98] sm:$0x1]
        %v1786 = vld [vmem:[%s1736 + $0xa4] sm:$0x1]
        %v1787 = vld [vmem:[%s1736 + $0xb0] sm:$0x1]
        %v1788 = vld [vmem:[%s1736 + $0xbc] sm:$0x1]
        %v1789 = vld [vmem:[%s1736 + $0xc8] sm:$0x1]
        %v1790 = vld [vmem:[%s1736 + $0xd4] sm:$0x1]
        %v1792 = vshrl.u32 %v1737, 16
        %v1794 = vrot.slane %v1792, 4
        %v1795 = vshll.u32 %v1737, 16
        %v1797 = vrot.slane %v1795, 5
        %v1798 = vor.u32 %v1794, %v1797
        %v1799 = vrot.slane %v1798, 4
        %v1801 = vshll.u32 %v1738, 16
        %v1803 = vrot.slane %v1801, 5
        %v1804 = vsel %vm417, %v1799, %v1803
        %v1805 = vshrl.u32 %v1738, 16
        %v1807 = vrot.slane %v1805, 4
        %v1808 = vor.u32 %v1807, %v1803
        %v1809 = vrot.slane %v1808, 4
        %v1811 = vshll.u32 %v1773, 16
        %v1813 = vrot.slane %v1811, 5
        %v1814 = vsel %vm417, %v1809, %v1813
        %v1816 = vshrl.u32 %v1739, 16
        %v1818 = vrot.slane %v1816, 4
        %v1819 = vshll.u32 %v1739, 16
        %v1821 = vrot.slane %v1819, 5
        %v1822 = vor.u32 %v1818, %v1821
        %v1823 = vrot.slane %v1822, 4
        %v1825 = vshll.u32 %v1740, 16
        %v1827 = vrot.slane %v1825, 5
        %v1828 = vsel %vm417, %v1823, %v1827
        %v1829 = vshrl.u32 %v1740, 16
        %v1831 = vrot.slane %v1829, 4
        %v1832 = vor.u32 %v1831, %v1827
        %v1833 = vrot.slane %v1832, 4
        %v1835 = vshll.u32 %v1774, 16
        %v1837 = vrot.slane %v1835, 5
        %v1838 = vsel %vm417, %v1833, %v1837
        %v1840 = vshrl.u32 %v1741, 16
        %v1842 = vrot.slane %v1840, 4
        %v1843 = vshll.u32 %v1741, 16
        %v1845 = vrot.slane %v1843, 5
        %v1846 = vor.u32 %v1842, %v1845
        %v1847 = vrot.slane %v1846, 4
        %v1849 = vshll.u32 %v1742, 16
        %v1851 = vrot.slane %v1849, 5
        %v1852 = vsel %vm417, %v1847, %v1851
        %v1853 = vshrl.u32 %v1742, 16
        %v1855 = vrot.slane %v1853, 4
        %v1856 = vor.u32 %v1855, %v1851
        %v1857 = vrot.slane %v1856, 4
        %v1859 = vshll.u32 %v1775, 16
        %v1861 = vrot.slane %v1859, 5
        %v1862 = vsel %vm417, %v1857, %v1861
        %v1864 = vshrl.u32 %v1743, 16
        %v1866 = vrot.slane %v1864, 4
        %v1867 = vshll.u32 %v1743, 16
        %v1869 = vrot.slane %v1867, 5
        %v1870 = vor.u32 %v1866, %v1869
        %v1871 = vrot.slane %v1870, 4
        %v1873 = vshll.u32 %v1744, 16
        %v1875 = vrot.slane %v1873, 5
        %v1876 = vsel %vm417, %v1871, %v1875
        %v1877 = vshrl.u32 %v1744, 16
        %v1879 = vrot.slane %v1877, 4
        %v1880 = vor.u32 %v1879, %v1875
        %v1881 = vrot.slane %v1880, 4
        %v1883 = vshll.u32 %v1776, 16
        %v1885 = vrot.slane %v1883, 5
        %v1886 = vsel %vm417, %v1881, %v1885
        %v1888 = vshrl.u32 %v1745, 16
        %v1890 = vrot.slane %v1888, 4
        %v1891 = vshll.u32 %v1745, 16
        %v1893 = vrot.slane %v1891, 5
        %v1894 = vor.u32 %v1890, %v1893
        %v1895 = vrot.slane %v1894, 4
        %v1897 = vshll.u32 %v1746, 16
        %v1899 = vrot.slane %v1897, 5
        %v1900 = vsel %vm417, %v1895, %v1899
        %v1901 = vshrl.u32 %v1746, 16
        %v1903 = vrot.slane %v1901, 4
        %v1904 = vor.u32 %v1903, %v1899
        %v1905 = vrot.slane %v1904, 4
        %v1907 = vshll.u32 %v1777, 16
        %v1909 = vrot.slane %v1907, 5
        %v1910 = vsel %vm417, %v1905, %v1909
        %v1912 = vshrl.u32 %v1747, 16
        %v1914 = vrot.slane %v1912, 4
        %v1915 = vshll.u32 %v1747, 16
        %v1917 = vrot.slane %v1915, 5
        %v1918 = vor.u32 %v1914, %v1917
        %v1919 = vrot.slane %v1918, 4
        %v1921 = vshll.u32 %v1748, 16
        %v1923 = vrot.slane %v1921, 5
        %v1924 = vsel %vm417, %v1919, %v1923
        %v1925 = vshrl.u32 %v1748, 16
        %v1927 = vrot.slane %v1925, 4
        %v1928 = vor.u32 %v1927, %v1923
        %v1929 = vrot.slane %v1928, 4
        %v1931 = vshll.u32 %v1778, 16
        %v1933 = vrot.slane %v1931, 5
        %v1934 = vsel %vm417, %v1929, %v1933
        %v1936 = vshrl.u32 %v1749, 16
        %v1938 = vrot.slane %v1936, 4
        %v1939 = vshll.u32 %v1749, 16
        %v1941 = vrot.slane %v1939, 5
        %v1942 = vor.u32 %v1938, %v1941
        %v1943 = vrot.slane %v1942, 4
        %v1945 = vshll.u32 %v1750, 16
        %v1947 = vrot.slane %v1945, 5
        %v1948 = vsel %vm417, %v1943, %v1947
        %v1949 = vshrl.u32 %v1750, 16
        %v1951 = vrot.slane %v1949, 4
        %v1952 = vor.u32 %v1951, %v1947
        %v1953 = vrot.slane %v1952, 4
        %v1955 = vshll.u32 %v1779, 16
        %v1957 = vrot.slane %v1955, 5
        %v1958 = vsel %vm417, %v1953, %v1957
        %v1960 = vshrl.u32 %v1751, 16
        %v1962 = vrot.slane %v1960, 4
        %v1963 = vshll.u32 %v1751, 16
        %v1965 = vrot.slane %v1963, 5
        %v1966 = vor.u32 %v1962, %v1965
        %v1967 = vrot.slane %v1966, 4
        %v1969 = vshll.u32 %v1752, 16
        %v1971 = vrot.slane %v1969, 5
        %v1972 = vsel %vm417, %v1967, %v1971
        %v1973 = vshrl.u32 %v1752, 16
        %v1975 = vrot.slane %v1973, 4
        %v1976 = vor.u32 %v1975, %v1971
        %v1977 = vrot.slane %v1976, 4
        %v1979 = vshll.u32 %v1780, 16
        %v1981 = vrot.slane %v1979, 5
        %v1982 = vsel %vm417, %v1977, %v1981
        %v1984 = vshrl.u32 %v1753, 16
        %v1986 = vrot.slane %v1984, 4
        %v1987 = vshll.u32 %v1753, 16
        %v1989 = vrot.slane %v1987, 5
        %v1990 = vor.u32 %v1986, %v1989
        %v1991 = vrot.slane %v1990, 4
        %v1993 = vshll.u32 %v1754, 16
        %v1995 = vrot.slane %v1993, 5
        %v1996 = vsel %vm417, %v1991, %v1995
        %v1997 = vshrl.u32 %v1754, 16
        %v1999 = vrot.slane %v1997, 4
        %v2000 = vor.u32 %v1999, %v1995
        %v2001 = vrot.slane %v2000, 4
        %v2003 = vshll.u32 %v1781, 16
        %v2005 = vrot.slane %v2003, 5
        %v2006 = vsel %vm417, %v2001, %v2005
        %v2008 = vshrl.u32 %v1755, 16
        %v2010 = vrot.slane %v2008, 4
        %v2011 = vshll.u32 %v1755, 16
        %v2013 = vrot.slane %v2011, 5
        %v2014 = vor.u32 %v2010, %v2013
        %v2015 = vrot.slane %v2014, 4
        %v2017 = vshll.u32 %v1756, 16
        %v2019 = vrot.slane %v2017, 5
        %v2020 = vsel %vm417, %v2015, %v2019
        %v2021 = vshrl.u32 %v1756, 16
        %v2023 = vrot.slane %v2021, 4
        %v2024 = vor.u32 %v2023, %v2019
        %v2025 = vrot.slane %v2024, 4
        %v2027 = vshll.u32 %v1782, 16
        %v2029 = vrot.slane %v2027, 5
        %v2030 = vsel %vm417, %v2025, %v2029
        %v2032 = vshrl.u32 %v1757, 16
        %v2034 = vrot.slane %v2032, 4
        %v2035 = vshll.u32 %v1757, 16
        %v2037 = vrot.slane %v2035, 5
        %v2038 = vor.u32 %v2034, %v2037
        %v2039 = vrot.slane %v2038, 4
        %v2041 = vshll.u32 %v1758, 16
        %v2043 = vrot.slane %v2041, 5
        %v2044 = vsel %vm417, %v2039, %v2043
        %v2045 = vshrl.u32 %v1758, 16
        %v2047 = vrot.slane %v2045, 4
        %v2048 = vor.u32 %v2047, %v2043
        %v2049 = vrot.slane %v2048, 4
        %v2051 = vshll.u32 %v1783, 16
        %v2053 = vrot.slane %v2051, 5
        %v2054 = vsel %vm417, %v2049, %v2053
        %v2056 = vshrl.u32 %v1759, 16
        %v2058 = vrot.slane %v2056, 4
        %v2059 = vshll.u32 %v1759, 16
        %v2061 = vrot.slane %v2059, 5
        %v2062 = vor.u32 %v2058, %v2061
        %v2063 = vrot.slane %v2062, 4
        %v2065 = vshll.u32 %v1760, 16
        %v2067 = vrot.slane %v2065, 5
        %v2068 = vsel %vm417, %v2063, %v2067
        %v2069 = vshrl.u32 %v1760, 16
        %v2071 = vrot.slane %v2069, 4
        %v2072 = vor.u32 %v2071, %v2067
        %v2073 = vrot.slane %v2072, 4
        %v2075 = vshll.u32 %v1784, 16
        %v2077 = vrot.slane %v2075, 5
        %v2078 = vsel %vm417, %v2073, %v2077
        %v2080 = vshrl.u32 %v1761, 16
        %v2082 = vrot.slane %v2080, 4
        %v2083 = vshll.u32 %v1761, 16
        %v2085 = vrot.slane %v2083, 5
        %v2086 = vor.u32 %v2082, %v2085
        %v2087 = vrot.slane %v2086, 4
        %v2089 = vshll.u32 %v1762, 16
        %v2091 = vrot.slane %v2089, 5
        %v2092 = vsel %vm417, %v2087, %v2091
        %v2093 = vshrl.u32 %v1762, 16
        %v2095 = vrot.slane %v2093, 4
        %v2096 = vor.u32 %v2095, %v2091
        %v2097 = vrot.slane %v2096, 4
        %v2099 = vshll.u32 %v1785, 16
        %v2101 = vrot.slane %v2099, 5
        %v2102 = vsel %vm417, %v2097, %v2101
        %v2104 = vshrl.u32 %v1763, 16
        %v2106 = vrot.slane %v2104, 4
        %v2107 = vshll.u32 %v1763, 16
        %v2109 = vrot.slane %v2107, 5
        %v2110 = vor.u32 %v2106, %v2109
        %v2111 = vrot.slane %v2110, 4
        %v2113 = vshll.u32 %v1764, 16
        %v2115 = vrot.slane %v2113, 5
        %v2116 = vsel %vm417, %v2111, %v2115
        %v2117 = vshrl.u32 %v1764, 16
        %v2119 = vrot.slane %v2117, 4
        %v2120 = vor.u32 %v2119, %v2115
        %v2121 = vrot.slane %v2120, 4
        %v2123 = vshll.u32 %v1786, 16
        %v2125 = vrot.slane %v2123, 5
        %v2126 = vsel %vm417, %v2121, %v2125
        %v2128 = vshrl.u32 %v1765, 16
        %v2130 = vrot.slane %v2128, 4
        %v2131 = vshll.u32 %v1765, 16
        %v2133 = vrot.slane %v2131, 5
        %v2134 = vor.u32 %v2130, %v2133
        %v2135 = vrot.slane %v2134, 4
        %v2137 = vshll.u32 %v1766, 16
        %v2139 = vrot.slane %v2137, 5
        %v2140 = vsel %vm417, %v2135, %v2139
        %v2141 = vshrl.u32 %v1766, 16
        %v2143 = vrot.slane %v2141, 4
        %v2144 = vor.u32 %v2143, %v2139
        %v2145 = vrot.slane %v2144, 4
        %v2147 = vshll.u32 %v1787, 16
        %v2149 = vrot.slane %v2147, 5
        %v2150 = vsel %vm417, %v2145, %v2149
        %v2152 = vshrl.u32 %v1767, 16
        %v2154 = vrot.slane %v2152, 4
        %v2155 = vshll.u32 %v1767, 16
        %v2157 = vrot.slane %v2155, 5
        %v2158 = vor.u32 %v2154, %v2157
        %v2159 = vrot.slane %v2158, 4
        %v2161 = vshll.u32 %v1768, 16
        %v2163 = vrot.slane %v2161, 5
        %v2164 = vsel %vm417, %v2159, %v2163
        %v2165 = vshrl.u32 %v1768, 16
        %v2167 = vrot.slane %v2165, 4
        %v2168 = vor.u32 %v2167, %v2163
        %v2169 = vrot.slane %v2168, 4
        %v2171 = vshll.u32 %v1788, 16
        %v2173 = vrot.slane %v2171, 5
        %v2174 = vsel %vm417, %v2169, %v2173
        %v2176 = vshrl.u32 %v1769, 16
        %v2178 = vrot.slane %v2176, 4
        %v2179 = vshll.u32 %v1769, 16
        %v2181 = vrot.slane %v2179, 5
        %v2182 = vor.u32 %v2178, %v2181
        %v2183 = vrot.slane %v2182, 4
        %v2185 = vshll.u32 %v1770, 16
        %v2187 = vrot.slane %v2185, 5
        %v2188 = vsel %vm417, %v2183, %v2187
        %v2189 = vshrl.u32 %v1770, 16
        %v2191 = vrot.slane %v2189, 4
        %v2192 = vor.u32 %v2191, %v2187
        %v2193 = vrot.slane %v2192, 4
        %v2195 = vshll.u32 %v1789, 16
        %v2197 = vrot.slane %v2195, 5
        %v2198 = vsel %vm417, %v2193, %v2197
        %v2200 = vshrl.u32 %v1771, 16
        %v2202 = vrot.slane %v2200, 4
        %v2203 = vshll.u32 %v1771, 16
        %v2205 = vrot.slane %v2203, 5
        %v2206 = vor.u32 %v2202, %v2205
        %v2207 = vrot.slane %v2206, 4
        %v2209 = vshll.u32 %v1772, 16
        %v2211 = vrot.slane %v2209, 5
        %v2212 = vsel %vm417, %v2207, %v2211
        %v2213 = vshrl.u32 %v1772, 16
        %v2215 = vrot.slane %v2213, 4
        %v2216 = vor.u32 %v2215, %v2211
        %v2217 = vrot.slane %v2216, 4
        %v2219 = vshll.u32 %v1790, 16
        %v2221 = vrot.slane %v2219, 5
        %v2222 = vsel %vm417, %v2217, %v2221
        %v2223 = vld [vmem:[%s1736] sm:$0xe]
        %v2224 = vld [vmem:[%s1736 + $0xc] sm:$0xe]
        %v2225 = vld [vmem:[%s1736 + $0x18] sm:$0xe]
        %v2226 = vld [vmem:[%s1736 + $0x24] sm:$0xe]
        %v2227 = vld [vmem:[%s1736 + $0x30] sm:$0xe]
        %v2228 = vld [vmem:[%s1736 + $0x3c] sm:$0xe]
        %v2229 = vld [vmem:[%s1736 + $0x48] sm:$0xe]
        %v2230 = vld [vmem:[%s1736 + $0x54] sm:$0xe]
        %v2231 = vld [vmem:[%s1736 + $0x60] sm:$0xe]
        %v2232 = vld [vmem:[%s1736 + $0x6c] sm:$0xe]
        %v2233 = vld [vmem:[%s1736 + $0x78] sm:$0xe]
        %v2234 = vld [vmem:[%s1736 + $0x84] sm:$0xe]
        %v2235 = vld [vmem:[%s1736 + $0x90] sm:$0xe]
        %v2236 = vld [vmem:[%s1736 + $0x9c] sm:$0xe]
        %v2237 = vld [vmem:[%s1736 + $0xa8] sm:$0xe]
        %v2238 = vld [vmem:[%s1736 + $0xb4] sm:$0xe]
        %v2239 = vld [vmem:[%s1736 + $0xc0] sm:$0xe]
        %v2240 = vld [vmem:[%s1736 + $0xcc] sm:$0xe]
        %v2295 = vrot.slane %v2223, 5
        %v2296 = vrot.slane %v2295, 4
        %v2297 = vrot.slane %v1738, 5
        %v2298 = vsel %vm924, %v2296, %v2297
        %v2299 = vrot.slane %v2297, 4
        %v2300 = vrot.slane %v1773, 5
        %v2301 = vsel %vm924, %v2299, %v2300
        %v2302 = vrot.slane %v2224, 5
        %v2303 = vrot.slane %v2302, 4
        %v2304 = vrot.slane %v1740, 5
        %v2305 = vsel %vm924, %v2303, %v2304
        %v2306 = vrot.slane %v2304, 4
        %v2307 = vrot.slane %v1774, 5
        %v2308 = vsel %vm924, %v2306, %v2307
        %v2309 = vrot.slane %v2225, 5
        %v2310 = vrot.slane %v2309, 4
        %v2311 = vrot.slane %v1742, 5
        %v2312 = vsel %vm924, %v2310, %v2311
        %v2313 = vrot.slane %v2311, 4
        %v2314 = vrot.slane %v1775, 5
        %v2315 = vsel %vm924, %v2313, %v2314
        %v2316 = vrot.slane %v2226, 5
        %v2317 = vrot.slane %v2316, 4
        %v2318 = vrot.slane %v1744, 5
        %v2319 = vsel %vm924, %v2317, %v2318
        %v2320 = vrot.slane %v2318, 4
        %v2321 = vrot.slane %v1776, 5
        %v2322 = vsel %vm924, %v2320, %v2321
        %v2323 = vrot.slane %v2227, 5
        %v2324 = vrot.slane %v2323, 4
        %v2325 = vrot.slane %v1746, 5
        %v2326 = vsel %vm924, %v2324, %v2325
        %v2327 = vrot.slane %v2325, 4
        %v2328 = vrot.slane %v1777, 5
        %v2329 = vsel %vm924, %v2327, %v2328
        %v2330 = vrot.slane %v2228, 5
        %v2331 = vrot.slane %v2330, 4
        %v2332 = vrot.slane %v1748, 5
        %v2333 = vsel %vm924, %v2331, %v2332
        %v2334 = vrot.slane %v2332, 4
        %v2335 = vrot.slane %v1778, 5
        %v2336 = vsel %vm924, %v2334, %v2335
        %v2337 = vrot.slane %v2229, 5
        %v2338 = vrot.slane %v2337, 4
        %v2339 = vrot.slane %v1750, 5
        %v2340 = vsel %vm924, %v2338, %v2339
        %v2341 = vrot.slane %v2339, 4
        %v2342 = vrot.slane %v1779, 5
        %v2343 = vsel %vm924, %v2341, %v2342
        %v2344 = vrot.slane %v2230, 5
        %v2345 = vrot.slane %v2344, 4
        %v2346 = vrot.slane %v1752, 5
        %v2347 = vsel %vm924, %v2345, %v2346
        %v2348 = vrot.slane %v2346, 4
        %v2349 = vrot.slane %v1780, 5
        %v2350 = vsel %vm924, %v2348, %v2349
        %v2351 = vrot.slane %v2231, 5
        %v2352 = vrot.slane %v2351, 4
        %v2353 = vrot.slane %v1754, 5
        %v2354 = vsel %vm924, %v2352, %v2353
        %v2355 = vrot.slane %v2353, 4
        %v2356 = vrot.slane %v1781, 5
        %v2357 = vsel %vm924, %v2355, %v2356
        %v2358 = vrot.slane %v2232, 5
        %v2359 = vrot.slane %v2358, 4
        %v2360 = vrot.slane %v1756, 5
        %v2361 = vsel %vm924, %v2359, %v2360
        %v2362 = vrot.slane %v2360, 4
        %v2363 = vrot.slane %v1782, 5
        %v2364 = vsel %vm924, %v2362, %v2363
        %v2365 = vrot.slane %v2233, 5
        %v2366 = vrot.slane %v2365, 4
        %v2367 = vrot.slane %v1758, 5
        %v2368 = vsel %vm924, %v2366, %v2367
        %v2369 = vrot.slane %v2367, 4
        %v2370 = vrot.slane %v1783, 5
        %v2371 = vsel %vm924, %v2369, %v2370
        %v2372 = vrot.slane %v2234, 5
        %v2373 = vrot.slane %v2372, 4
        %v2374 = vrot.slane %v1760, 5
        %v2375 = vsel %vm924, %v2373, %v2374
        %v2376 = vrot.slane %v2374, 4
        %v2377 = vrot.slane %v1784, 5
        %v2378 = vsel %vm924, %v2376, %v2377
        %v2379 = vrot.slane %v2235, 5
        %v2380 = vrot.slane %v2379, 4
        %v2381 = vrot.slane %v1762, 5
        %v2382 = vsel %vm924, %v2380, %v2381
        %v2383 = vrot.slane %v2381, 4
        %v2384 = vrot.slane %v1785, 5
        %v2385 = vsel %vm924, %v2383, %v2384
        %v2386 = vrot.slane %v2236, 5
        %v2387 = vrot.slane %v2386, 4
        %v2388 = vrot.slane %v1764, 5
        %v2389 = vsel %vm924, %v2387, %v2388
        %v2390 = vrot.slane %v2388, 4
        %v2391 = vrot.slane %v1786, 5
        %v2392 = vsel %vm924, %v2390, %v2391
        %v2393 = vrot.slane %v2237, 5
        %v2394 = vrot.slane %v2393, 4
        %v2395 = vrot.slane %v1766, 5
        %v2396 = vsel %vm924, %v2394, %v2395
        %v2397 = vrot.slane %v2395, 4
        %v2398 = vrot.slane %v1787, 5
        %v2399 = vsel %vm924, %v2397, %v2398
        %v2400 = vrot.slane %v2238, 5
        %v2401 = vrot.slane %v2400, 4
        %v2402 = vrot.slane %v1768, 5
        %v2403 = vsel %vm924, %v2401, %v2402
        %v2404 = vrot.slane %v2402, 4
        %v2405 = vrot.slane %v1788, 5
        %v2406 = vsel %vm924, %v2404, %v2405
        %v2407 = vrot.slane %v2239, 5
        %v2408 = vrot.slane %v2407, 4
        %v2409 = vrot.slane %v1770, 5
        %v2410 = vsel %vm924, %v2408, %v2409
        %v2411 = vrot.slane %v2409, 4
        %v2412 = vrot.slane %v1789, 5
        %v2413 = vsel %vm924, %v2411, %v2412
        %v2414 = vrot.slane %v2240, 5
        %v2415 = vrot.slane %v2414, 4
        %v2416 = vrot.slane %v1772, 5
        %v2417 = vsel %vm924, %v2415, %v2416
        %v2418 = vrot.slane %v2416, 4
        %v2419 = vrot.slane %v1790, 5
        %v2420 = vsel %vm924, %v2418, %v2419
        %v2439 = vunpack.c.l.b16 %v361
        %v2440 = vunpack.c.l.b16 %v362
        %v2441 = vunpack.c.l.b16 %v363
        %v2442 = vunpack.c.l.b16 %v364
        %v2443 = vunpack.c.l.b16 %v365
        %v2444 = vunpack.c.l.b16 %v366
        %v2445 = vunpack.c.l.b16 %v367
        %v2446 = vunpack.c.l.b16 %v368
        %v2447 = vunpack.c.l.b16 %v369
        %v2448 = vunpack.c.l.b16 %v370
        %v2449 = vunpack.c.l.b16 %v371
        %v2450 = vunpack.c.l.b16 %v372
        %v2451 = vunpack.c.l.b16 %v373
        %v2452 = vunpack.c.l.b16 %v374
        %v2453 = vunpack.c.l.b16 %v375
        %v2454 = vunpack.c.l.b16 %v376
        %v2455 = vunpack.c.l.b16 %v377
        %v2456 = vunpack.c.l.b16 %v378
        %v2457 = vunpack.c.l.b16 %v379
        %v2458 = vunpack.c.l.b16 %v380
        %v2459 = vunpack.c.l.b16 %v381
        %v2460 = vunpack.c.l.b16 %v382
        %v2461 = vunpack.c.l.b16 %v383
        %v2462 = vunpack.c.l.b16 %v384
        %v2463 = vunpack.c.l.b16 %v385
        %v2464 = vunpack.c.l.b16 %v386
        %v2465 = vunpack.c.l.b16 %v387
        %v2466 = vunpack.c.l.b16 %v388
        %v2467 = vunpack.c.l.b16 %v389
        %v2468 = vunpack.c.l.b16 %v390
        %v2469 = vunpack.c.l.b16 %v391
        %v2470 = vunpack.c.l.b16 %v392
        %v2471 = vunpack.c.l.b16 %v393
        %v2472 = vunpack.c.l.b16 %v394
        %v2473 = vunpack.c.l.b16 %v395
        %v2474 = vunpack.c.l.b16 %v396
        %v2475 = vpack.c.b16 %v2440, %v2439
        %v2476 = vpack.c.b16 %v2442, %v2441
        %v2477 = vpack.c.b16 %v2444, %v2443
        %v2478 = vpack.c.b16 %v2446, %v2445
        %v2479 = vpack.c.b16 %v2448, %v2447
        %v2480 = vpack.c.b16 %v2450, %v2449
        %v2481 = vpack.c.b16 %v2452, %v2451
        %v2482 = vpack.c.b16 %v2454, %v2453
        %v2483 = vpack.c.b16 %v2456, %v2455
        %v2484 = vpack.c.b16 %v2458, %v2457
        %v2485 = vpack.c.b16 %v2460, %v2459
        %v2486 = vpack.c.b16 %v2462, %v2461
        %v2487 = vpack.c.b16 %v2464, %v2463
        %v2488 = vpack.c.b16 %v2466, %v2465
        %v2489 = vpack.c.b16 %v2468, %v2467
        %v2490 = vpack.c.b16 %v2470, %v2469
        %v2491 = vpack.c.b16 %v2472, %v2471
        %v2492 = vpack.c.b16 %v2474, %v2473
        %v2511 = vunpack.c.l.b16 %v431
        %v2512 = vunpack.c.l.b16 %v441
        %v2513 = vunpack.c.l.b16 %v455
        %v2514 = vunpack.c.l.b16 %v465
        %v2515 = vunpack.c.l.b16 %v479
        %v2516 = vunpack.c.l.b16 %v489
        %v2517 = vunpack.c.l.b16 %v503
        %v2518 = vunpack.c.l.b16 %v513
        %v2519 = vunpack.c.l.b16 %v527
        %v2520 = vunpack.c.l.b16 %v537
        %v2521 = vunpack.c.l.b16 %v551
        %v2522 = vunpack.c.l.b16 %v561
        %v2523 = vunpack.c.l.b16 %v575
        %v2524 = vunpack.c.l.b16 %v585
        %v2525 = vunpack.c.l.b16 %v599
        %v2526 = vunpack.c.l.b16 %v609
        %v2527 = vunpack.c.l.b16 %v623
        %v2528 = vunpack.c.l.b16 %v633
        %v2529 = vunpack.c.l.b16 %v647
        %v2530 = vunpack.c.l.b16 %v657
        %v2531 = vunpack.c.l.b16 %v671
        %v2532 = vunpack.c.l.b16 %v681
        %v2533 = vunpack.c.l.b16 %v695
        %v2534 = vunpack.c.l.b16 %v705
        %v2535 = vunpack.c.l.b16 %v719
        %v2536 = vunpack.c.l.b16 %v729
        %v2537 = vunpack.c.l.b16 %v743
        %v2538 = vunpack.c.l.b16 %v753
        %v2539 = vunpack.c.l.b16 %v767
        %v2540 = vunpack.c.l.b16 %v777
        %v2541 = vunpack.c.l.b16 %v791
        %v2542 = vunpack.c.l.b16 %v801
        %v2543 = vunpack.c.l.b16 %v815
        %v2544 = vunpack.c.l.b16 %v825
        %v2545 = vunpack.c.l.b16 %v839
        %v2546 = vunpack.c.l.b16 %v849
        %v2547 = vpack.c.b16 %v2512, %v2511
        %v2548 = vpack.c.b16 %v2514, %v2513
        %v2549 = vpack.c.b16 %v2516, %v2515
        %v2550 = vpack.c.b16 %v2518, %v2517
        %v2551 = vpack.c.b16 %v2520, %v2519
        %v2552 = vpack.c.b16 %v2522, %v2521
        %v2553 = vpack.c.b16 %v2524, %v2523
        %v2554 = vpack.c.b16 %v2526, %v2525
        %v2555 = vpack.c.b16 %v2528, %v2527
        %v2556 = vpack.c.b16 %v2530, %v2529
        %v2557 = vpack.c.b16 %v2532, %v2531
        %v2558 = vpack.c.b16 %v2534, %v2533
        %v2559 = vpack.c.b16 %v2536, %v2535
        %v2560 = vpack.c.b16 %v2538, %v2537
        %v2561 = vpack.c.b16 %v2540, %v2539
        %v2562 = vpack.c.b16 %v2542, %v2541
        %v2563 = vpack.c.b16 %v2544, %v2543
        %v2564 = vpack.c.b16 %v2546, %v2545
        %v2583 = vunpack.c.l.b16 %v928
        %v2584 = vunpack.c.l.b16 %v931
        %v2585 = vunpack.c.l.b16 %v935
        %v2586 = vunpack.c.l.b16 %v938
        %v2587 = vunpack.c.l.b16 %v942
        %v2588 = vunpack.c.l.b16 %v945
        %v2589 = vunpack.c.l.b16 %v949
        %v2590 = vunpack.c.l.b16 %v952
        %v2591 = vunpack.c.l.b16 %v956
        %v2592 = vunpack.c.l.b16 %v959
        %v2593 = vunpack.c.l.b16 %v963
        %v2594 = vunpack.c.l.b16 %v966
        %v2595 = vunpack.c.l.b16 %v970
        %v2596 = vunpack.c.l.b16 %v973
        %v2597 = vunpack.c.l.b16 %v977
        %v2598 = vunpack.c.l.b16 %v980
        %v2599 = vunpack.c.l.b16 %v984
        %v2600 = vunpack.c.l.b16 %v987
        %v2601 = vunpack.c.l.b16 %v991
        %v2602 = vunpack.c.l.b16 %v994
        %v2603 = vunpack.c.l.b16 %v998
        %v2604 = vunpack.c.l.b16 %v1001
        %v2605 = vunpack.c.l.b16 %v1005
        %v2606 = vunpack.c.l.b16 %v1008
        %v2607 = vunpack.c.l.b16 %v1012
        %v2608 = vunpack.c.l.b16 %v1015
        %v2609 = vunpack.c.l.b16 %v1019
        %v2610 = vunpack.c.l.b16 %v1022
        %v2611 = vunpack.c.l.b16 %v1026
        %v2612 = vunpack.c.l.b16 %v1029
        %v2613 = vunpack.c.l.b16 %v1033
        %v2614 = vunpack.c.l.b16 %v1036
        %v2615 = vunpack.c.l.b16 %v1040
        %v2616 = vunpack.c.l.b16 %v1043
        %v2617 = vunpack.c.l.b16 %v1047
        %v2618 = vunpack.c.l.b16 %v1050
        %v2619 = vpack.c.b16 %v2584, %v2583
        %v2620 = vpack.c.b16 %v2586, %v2585
        %v2621 = vpack.c.b16 %v2588, %v2587
        %v2622 = vpack.c.b16 %v2590, %v2589
        %v2623 = vpack.c.b16 %v2592, %v2591
        %v2624 = vpack.c.b16 %v2594, %v2593
        %v2625 = vpack.c.b16 %v2596, %v2595
        %v2626 = vpack.c.b16 %v2598, %v2597
        %v2627 = vpack.c.b16 %v2600, %v2599
        %v2628 = vpack.c.b16 %v2602, %v2601
        %v2629 = vpack.c.b16 %v2604, %v2603
        %v2630 = vpack.c.b16 %v2606, %v2605
        %v2631 = vpack.c.b16 %v2608, %v2607
        %v2632 = vpack.c.b16 %v2610, %v2609
        %v2633 = vpack.c.b16 %v2612, %v2611
        %v2634 = vpack.c.b16 %v2614, %v2613
        %v2635 = vpack.c.b16 %v2616, %v2615
        %v2636 = vpack.c.b16 %v2618, %v2617
        %v2673 = vunpack.c.l.b16 %v1052
        %v2674 = vunpack.c.l.b16 %v1053
        %v2675 = vunpack.c.l.b16 %v1054
        %v2676 = vunpack.c.l.b16 %v1055
        %v2677 = vunpack.c.l.b16 %v1056
        %v2678 = vunpack.c.l.b16 %v1057
        %v2679 = vunpack.c.l.b16 %v1058
        %v2680 = vunpack.c.l.b16 %v1059
        %v2681 = vunpack.c.l.b16 %v1060
        %v2682 = vunpack.c.l.b16 %v1061
        %v2683 = vunpack.c.l.b16 %v1062
        %v2684 = vunpack.c.l.b16 %v1063
        %v2685 = vunpack.c.l.b16 %v1064
        %v2686 = vunpack.c.l.b16 %v1065
        %v2687 = vunpack.c.l.b16 %v1066
        %v2688 = vunpack.c.l.b16 %v1067
        %v2689 = vunpack.c.l.b16 %v1068
        %v2690 = vunpack.c.l.b16 %v1069
        %v2691 = vunpack.c.l.b16 %v1070
        %v2692 = vunpack.c.l.b16 %v1071
        %v2693 = vunpack.c.l.b16 %v1072
        %v2694 = vunpack.c.l.b16 %v1073
        %v2695 = vunpack.c.l.b16 %v1074
        %v2696 = vunpack.c.l.b16 %v1075
        %v2697 = vunpack.c.l.b16 %v1076
        %v2698 = vunpack.c.l.b16 %v1077
        %v2699 = vunpack.c.l.b16 %v1078
        %v2700 = vunpack.c.l.b16 %v1079
        %v2701 = vunpack.c.l.b16 %v1080
        %v2702 = vunpack.c.l.b16 %v1081
        %v2703 = vunpack.c.l.b16 %v1082
        %v2704 = vunpack.c.l.b16 %v1083
        %v2705 = vunpack.c.l.b16 %v1084
        %v2706 = vunpack.c.l.b16 %v1085
        %v2707 = vunpack.c.l.b16 %v1086
        %v2708 = vunpack.c.l.b16 %v1087
        %v2709 = vpack.c.b16 %v2674, %v2673
        %v2710 = vpack.c.b16 %v2676, %v2675
        %v2711 = vpack.c.b16 %v2678, %v2677
        %v2712 = vpack.c.b16 %v2680, %v2679
        %v2713 = vpack.c.b16 %v2682, %v2681
        %v2714 = vpack.c.b16 %v2684, %v2683
        %v2715 = vpack.c.b16 %v2686, %v2685
        %v2716 = vpack.c.b16 %v2688, %v2687
        %v2717 = vpack.c.b16 %v2690, %v2689
        %v2718 = vpack.c.b16 %v2692, %v2691
        %v2719 = vpack.c.b16 %v2694, %v2693
        %v2720 = vpack.c.b16 %v2696, %v2695
        %v2721 = vpack.c.b16 %v2698, %v2697
        %v2722 = vpack.c.b16 %v2700, %v2699
        %v2723 = vpack.c.b16 %v2702, %v2701
        %v2724 = vpack.c.b16 %v2704, %v2703
        %v2725 = vpack.c.b16 %v2706, %v2705
        %v2726 = vpack.c.b16 %v2708, %v2707
        %v2745 = vunpack.c.l.b16 %v1119
        %v2746 = vunpack.c.l.b16 %v1129
        %v2747 = vunpack.c.l.b16 %v1143
        %v2748 = vunpack.c.l.b16 %v1153
        %v2749 = vunpack.c.l.b16 %v1167
        %v2750 = vunpack.c.l.b16 %v1177
        %v2751 = vunpack.c.l.b16 %v1191
        %v2752 = vunpack.c.l.b16 %v1201
        %v2753 = vunpack.c.l.b16 %v1215
        %v2754 = vunpack.c.l.b16 %v1225
        %v2755 = vunpack.c.l.b16 %v1239
        %v2756 = vunpack.c.l.b16 %v1249
        %v2757 = vunpack.c.l.b16 %v1263
        %v2758 = vunpack.c.l.b16 %v1273
        %v2759 = vunpack.c.l.b16 %v1287
        %v2760 = vunpack.c.l.b16 %v1297
        %v2761 = vunpack.c.l.b16 %v1311
        %v2762 = vunpack.c.l.b16 %v1321
        %v2763 = vunpack.c.l.b16 %v1335
        %v2764 = vunpack.c.l.b16 %v1345
        %v2765 = vunpack.c.l.b16 %v1359
        %v2766 = vunpack.c.l.b16 %v1369
        %v2767 = vunpack.c.l.b16 %v1383
        %v2768 = vunpack.c.l.b16 %v1393
        %v2769 = vunpack.c.l.b16 %v1407
        %v2770 = vunpack.c.l.b16 %v1417
        %v2771 = vunpack.c.l.b16 %v1431
        %v2772 = vunpack.c.l.b16 %v1441
        %v2773 = vunpack.c.l.b16 %v1455
        %v2774 = vunpack.c.l.b16 %v1465
        %v2775 = vunpack.c.l.b16 %v1479
        %v2776 = vunpack.c.l.b16 %v1489
        %v2777 = vunpack.c.l.b16 %v1503
        %v2778 = vunpack.c.l.b16 %v1513
        %v2779 = vunpack.c.l.b16 %v1527
        %v2780 = vunpack.c.l.b16 %v1537
        %v2781 = vpack.c.b16 %v2746, %v2745
        %v2782 = vpack.c.b16 %v2748, %v2747
        %v2783 = vpack.c.b16 %v2750, %v2749
        %v2784 = vpack.c.b16 %v2752, %v2751
        %v2785 = vpack.c.b16 %v2754, %v2753
        %v2786 = vpack.c.b16 %v2756, %v2755
        %v2787 = vpack.c.b16 %v2758, %v2757
        %v2788 = vpack.c.b16 %v2760, %v2759
        %v2789 = vpack.c.b16 %v2762, %v2761
        %v2790 = vpack.c.b16 %v2764, %v2763
        %v2791 = vpack.c.b16 %v2766, %v2765
        %v2792 = vpack.c.b16 %v2768, %v2767
        %v2793 = vpack.c.b16 %v2770, %v2769
        %v2794 = vpack.c.b16 %v2772, %v2771
        %v2795 = vpack.c.b16 %v2774, %v2773
        %v2796 = vpack.c.b16 %v2776, %v2775
        %v2797 = vpack.c.b16 %v2778, %v2777
        %v2798 = vpack.c.b16 %v2780, %v2779
        %v2817 = vunpack.c.l.b16 %v1613
        %v2818 = vunpack.c.l.b16 %v1616
        %v2819 = vunpack.c.l.b16 %v1620
        %v2820 = vunpack.c.l.b16 %v1623
        %v2821 = vunpack.c.l.b16 %v1627
        %v2822 = vunpack.c.l.b16 %v1630
        %v2823 = vunpack.c.l.b16 %v1634
        %v2824 = vunpack.c.l.b16 %v1637
        %v2825 = vunpack.c.l.b16 %v1641
        %v2826 = vunpack.c.l.b16 %v1644
        %v2827 = vunpack.c.l.b16 %v1648
        %v2828 = vunpack.c.l.b16 %v1651
        %v2829 = vunpack.c.l.b16 %v1655
        %v2830 = vunpack.c.l.b16 %v1658
        %v2831 = vunpack.c.l.b16 %v1662
        %v2832 = vunpack.c.l.b16 %v1665
        %v2833 = vunpack.c.l.b16 %v1669
        %v2834 = vunpack.c.l.b16 %v1672
        %v2835 = vunpack.c.l.b16 %v1676
        %v2836 = vunpack.c.l.b16 %v1679
        %v2837 = vunpack.c.l.b16 %v1683
        %v2838 = vunpack.c.l.b16 %v1686
        %v2839 = vunpack.c.l.b16 %v1690
        %v2840 = vunpack.c.l.b16 %v1693
        %v2841 = vunpack.c.l.b16 %v1697
        %v2842 = vunpack.c.l.b16 %v1700
        %v2843 = vunpack.c.l.b16 %v1704
        %v2844 = vunpack.c.l.b16 %v1707
        %v2845 = vunpack.c.l.b16 %v1711
        %v2846 = vunpack.c.l.b16 %v1714
        %v2847 = vunpack.c.l.b16 %v1718
        %v2848 = vunpack.c.l.b16 %v1721
        %v2849 = vunpack.c.l.b16 %v1725
        %v2850 = vunpack.c.l.b16 %v1728
        %v2851 = vunpack.c.l.b16 %v1732
        %v2852 = vunpack.c.l.b16 %v1735
        %v2853 = vpack.c.b16 %v2818, %v2817
        %v2854 = vpack.c.b16 %v2820, %v2819
        %v2855 = vpack.c.b16 %v2822, %v2821
        %v2856 = vpack.c.b16 %v2824, %v2823
        %v2857 = vpack.c.b16 %v2826, %v2825
        %v2858 = vpack.c.b16 %v2828, %v2827
        %v2859 = vpack.c.b16 %v2830, %v2829
        %v2860 = vpack.c.b16 %v2832, %v2831
        %v2861 = vpack.c.b16 %v2834, %v2833
        %v2862 = vpack.c.b16 %v2836, %v2835
        %v2863 = vpack.c.b16 %v2838, %v2837
        %v2864 = vpack.c.b16 %v2840, %v2839
        %v2865 = vpack.c.b16 %v2842, %v2841
        %v2866 = vpack.c.b16 %v2844, %v2843
        %v2867 = vpack.c.b16 %v2846, %v2845
        %v2868 = vpack.c.b16 %v2848, %v2847
        %v2869 = vpack.c.b16 %v2850, %v2849
        %v2870 = vpack.c.b16 %v2852, %v2851
        %v2907 = vunpack.c.l.b16 %v1737
        %v2908 = vunpack.c.l.b16 %v1738
        %v2909 = vunpack.c.l.b16 %v1739
        %v2910 = vunpack.c.l.b16 %v1740
        %v2911 = vunpack.c.l.b16 %v1741
        %v2912 = vunpack.c.l.b16 %v1742
        %v2913 = vunpack.c.l.b16 %v1743
        %v2914 = vunpack.c.l.b16 %v1744
        %v2915 = vunpack.c.l.b16 %v1745
        %v2916 = vunpack.c.l.b16 %v1746
        %v2917 = vunpack.c.l.b16 %v1747
        %v2918 = vunpack.c.l.b16 %v1748
        %v2919 = vunpack.c.l.b16 %v1749
        %v2920 = vunpack.c.l.b16 %v1750
        %v2921 = vunpack.c.l.b16 %v1751
        %v2922 = vunpack.c.l.b16 %v1752
        %v2923 = vunpack.c.l.b16 %v1753
        %v2924 = vunpack.c.l.b16 %v1754
        %v2925 = vunpack.c.l.b16 %v1755
        %v2926 = vunpack.c.l.b16 %v1756
        %v2927 = vunpack.c.l.b16 %v1757
        %v2928 = vunpack.c.l.b16 %v1758
        %v2929 = vunpack.c.l.b16 %v1759
        %v2930 = vunpack.c.l.b16 %v1760
        %v2931 = vunpack.c.l.b16 %v1761
        %v2932 = vunpack.c.l.b16 %v1762
        %v2933 = vunpack.c.l.b16 %v1763
        %v2934 = vunpack.c.l.b16 %v1764
        %v2935 = vunpack.c.l.b16 %v1765
        %v2936 = vunpack.c.l.b16 %v1766
        %v2937 = vunpack.c.l.b16 %v1767
        %v2938 = vunpack.c.l.b16 %v1768
        %v2939 = vunpack.c.l.b16 %v1769
        %v2940 = vunpack.c.l.b16 %v1770
        %v2941 = vunpack.c.l.b16 %v1771
        %v2942 = vunpack.c.l.b16 %v1772
        %v2943 = vpack.c.b16 %v2908, %v2907
        %v2944 = vpack.c.b16 %v2910, %v2909
        %v2945 = vpack.c.b16 %v2912, %v2911
        %v2946 = vpack.c.b16 %v2914, %v2913
        %v2947 = vpack.c.b16 %v2916, %v2915
        %v2948 = vpack.c.b16 %v2918, %v2917
        %v2949 = vpack.c.b16 %v2920, %v2919
        %v2950 = vpack.c.b16 %v2922, %v2921
        %v2951 = vpack.c.b16 %v2924, %v2923
        %v2952 = vpack.c.b16 %v2926, %v2925
        %v2953 = vpack.c.b16 %v2928, %v2927
        %v2954 = vpack.c.b16 %v2930, %v2929
        %v2955 = vpack.c.b16 %v2932, %v2931
        %v2956 = vpack.c.b16 %v2934, %v2933
        %v2957 = vpack.c.b16 %v2936, %v2935
        %v2958 = vpack.c.b16 %v2938, %v2937
        %v2959 = vpack.c.b16 %v2940, %v2939
        %v2960 = vpack.c.b16 %v2942, %v2941
        %v2979 = vunpack.c.l.b16 %v1804
        %v2980 = vunpack.c.l.b16 %v1814
        %v2981 = vunpack.c.l.b16 %v1828
        %v2982 = vunpack.c.l.b16 %v1838
        %v2983 = vunpack.c.l.b16 %v1852
        %v2984 = vunpack.c.l.b16 %v1862
        %v2985 = vunpack.c.l.b16 %v1876
        %v2986 = vunpack.c.l.b16 %v1886
        %v2987 = vunpack.c.l.b16 %v1900
        %v2988 = vunpack.c.l.b16 %v1910
        %v2989 = vunpack.c.l.b16 %v1924
        %v2990 = vunpack.c.l.b16 %v1934
        %v2991 = vunpack.c.l.b16 %v1948
        %v2992 = vunpack.c.l.b16 %v1958
        %v2993 = vunpack.c.l.b16 %v1972
        %v2994 = vunpack.c.l.b16 %v1982
        %v2995 = vunpack.c.l.b16 %v1996
        %v2996 = vunpack.c.l.b16 %v2006
        %v2997 = vunpack.c.l.b16 %v2020
        %v2998 = vunpack.c.l.b16 %v2030
        %v2999 = vunpack.c.l.b16 %v2044
        %v3000 = vunpack.c.l.b16 %v2054
        %v3001 = vunpack.c.l.b16 %v2068
        %v3002 = vunpack.c.l.b16 %v2078
        %v3003 = vunpack.c.l.b16 %v2092
        %v3004 = vunpack.c.l.b16 %v2102
        %v3005 = vunpack.c.l.b16 %v2116
        %v3006 = vunpack.c.l.b16 %v2126
        %v3007 = vunpack.c.l.b16 %v2140
        %v3008 = vunpack.c.l.b16 %v2150
        %v3009 = vunpack.c.l.b16 %v2164
        %v3010 = vunpack.c.l.b16 %v2174
        %v3011 = vunpack.c.l.b16 %v2188
        %v3012 = vunpack.c.l.b16 %v2198
        %v3013 = vunpack.c.l.b16 %v2212
        %v3014 = vunpack.c.l.b16 %v2222
        %v3015 = vpack.c.b16 %v2980, %v2979
        %v3016 = vpack.c.b16 %v2982, %v2981
        %v3017 = vpack.c.b16 %v2984, %v2983
        %v3018 = vpack.c.b16 %v2986, %v2985
        %v3019 = vpack.c.b16 %v2988, %v2987
        %v3020 = vpack.c.b16 %v2990, %v2989
        %v3021 = vpack.c.b16 %v2992, %v2991
        %v3022 = vpack.c.b16 %v2994, %v2993
        %v3023 = vpack.c.b16 %v2996, %v2995
        %v3024 = vpack.c.b16 %v2998, %v2997
        %v3025 = vpack.c.b16 %v3000, %v2999
        %v3026 = vpack.c.b16 %v3002, %v3001
        %v3027 = vpack.c.b16 %v3004, %v3003
        %v3028 = vpack.c.b16 %v3006, %v3005
        %v3029 = vpack.c.b16 %v3008, %v3007
        %v3030 = vpack.c.b16 %v3010, %v3009
        %v3031 = vpack.c.b16 %v3012, %v3011
        %v3032 = vpack.c.b16 %v3014, %v3013
        %v3051 = vunpack.c.l.b16 %v2298
        %v3052 = vunpack.c.l.b16 %v2301
        %v3053 = vunpack.c.l.b16 %v2305
        %v3054 = vunpack.c.l.b16 %v2308
        %v3055 = vunpack.c.l.b16 %v2312
        %v3056 = vunpack.c.l.b16 %v2315
        %v3057 = vunpack.c.l.b16 %v2319
        %v3058 = vunpack.c.l.b16 %v2322
        %v3059 = vunpack.c.l.b16 %v2326
        %v3060 = vunpack.c.l.b16 %v2329
        %v3061 = vunpack.c.l.b16 %v2333
        %v3062 = vunpack.c.l.b16 %v2336
        %v3063 = vunpack.c.l.b16 %v2340
        %v3064 = vunpack.c.l.b16 %v2343
        %v3065 = vunpack.c.l.b16 %v2347
        %v3066 = vunpack.c.l.b16 %v2350
        %v3067 = vunpack.c.l.b16 %v2354
        %v3068 = vunpack.c.l.b16 %v2357
        %v3069 = vunpack.c.l.b16 %v2361
        %v3070 = vunpack.c.l.b16 %v2364
        %v3071 = vunpack.c.l.b16 %v2368
        %v3072 = vunpack.c.l.b16 %v2371
        %v3073 = vunpack.c.l.b16 %v2375
        %v3074 = vunpack.c.l.b16 %v2378
        %v3075 = vunpack.c.l.b16 %v2382
        %v3076 = vunpack.c.l.b16 %v2385
        %v3077 = vunpack.c.l.b16 %v2389
        %v3078 = vunpack.c.l.b16 %v2392
        %v3079 = vunpack.c.l.b16 %v2396
        %v3080 = vunpack.c.l.b16 %v2399
        %v3081 = vunpack.c.l.b16 %v2403
        %v3082 = vunpack.c.l.b16 %v2406
        %v3083 = vunpack.c.l.b16 %v2410
        %v3084 = vunpack.c.l.b16 %v2413
        %v3085 = vunpack.c.l.b16 %v2417
        %v3086 = vunpack.c.l.b16 %v2420
        %v3087 = vpack.c.b16 %v3052, %v3051
        %v3088 = vpack.c.b16 %v3054, %v3053
        %v3089 = vpack.c.b16 %v3056, %v3055
        %v3090 = vpack.c.b16 %v3058, %v3057
        %v3091 = vpack.c.b16 %v3060, %v3059
        %v3092 = vpack.c.b16 %v3062, %v3061
        %v3093 = vpack.c.b16 %v3064, %v3063
        %v3094 = vpack.c.b16 %v3066, %v3065
        %v3095 = vpack.c.b16 %v3068, %v3067
        %v3096 = vpack.c.b16 %v3070, %v3069
        %v3097 = vpack.c.b16 %v3072, %v3071
        %v3098 = vpack.c.b16 %v3074, %v3073
        %v3099 = vpack.c.b16 %v3076, %v3075
        %v3100 = vpack.c.b16 %v3078, %v3077
        %v3101 = vpack.c.b16 %v3080, %v3079
        %v3102 = vpack.c.b16 %v3082, %v3081
        %v3103 = vpack.c.b16 %v3084, %v3083
        %v3104 = vpack.c.b16 %v3086, %v3085
        %v3123 = vld [vmem:[#allocation6] sm:$0xf]
        %v3124 = vld [vmem:[#allocation6 + $0x4] sm:$0xf]
        %v3125 = vld [vmem:[#allocation6 + $0x8] sm:$0xf]
        %v3126 = vld [vmem:[#allocation6 + $0xc] sm:$0xf]
        %v3127 = vld [vmem:[#allocation6 + $0x10] sm:$0xf]
        %v3128 = vld [vmem:[#allocation6 + $0x14] sm:$0xf]
        %v3129 = vld [vmem:[#allocation6 + $0x18] sm:$0xf]
        %v3130 = vld [vmem:[#allocation6 + $0x1c] sm:$0xf]
        %v3131 = vld [vmem:[#allocation6 + $0x20] sm:$0xf]
        %v3132 = vld [vmem:[#allocation6 + $0x24] sm:$0xf]
        %v3133 = vld [vmem:[#allocation6 + $0x28] sm:$0xf]
        %v3134 = vld [vmem:[#allocation6 + $0x2c] sm:$0xf]
        %v3135 = vld [vmem:[#allocation6 + $0x30] sm:$0xf]
        %v3136 = vld [vmem:[#allocation6 + $0x34] sm:$0xf]
        %v3137 = vld [vmem:[#allocation6 + $0x38] sm:$0xf]
        %v3138 = vld [vmem:[#allocation6 + $0x3c] sm:$0xf]
        %v3139 = vld [vmem:[#allocation6 + $0x40] sm:$0xf]
        %v3140 = vld [vmem:[#allocation6 + $0x44] sm:$0xf]
        %v3141 = vld [vmem:[#allocation6 + $0x48] sm:$0xf]
        %v3142 = vld [vmem:[#allocation6 + $0x4c] sm:$0xf]
        %v3143 = vld [vmem:[#allocation6 + $0x50] sm:$0xf]
        %v3144 = vld [vmem:[#allocation6 + $0x54] sm:$0xf]
        %v3145 = vld [vmem:[#allocation6 + $0x58] sm:$0xf]
        %v3146 = vld [vmem:[#allocation6 + $0x5c] sm:$0xf]
        %v3147 = vld [vmem:[#allocation6 + $0x60] sm:$0xf]
        %v3148 = vld [vmem:[#allocation6 + $0x64] sm:$0xf]
        %v3149 = vld [vmem:[#allocation6 + $0x68] sm:$0xf]
        %v3150 = vld [vmem:[#allocation6 + $0x6c] sm:$0xf]
        %v3151 = vld [vmem:[#allocation6 + $0x70] sm:$0xf]
        %v3152 = vld [vmem:[#allocation6 + $0x74] sm:$0xf]
        %v3153 = vld [vmem:[#allocation6 + $0x78] sm:$0xf]
        %v3154 = vld [vmem:[#allocation6 + $0x7c] sm:$0xf]
        %v3155 = vld [vmem:[#allocation6 + $0x80] sm:$0xf]
        %v3156 = vld [vmem:[#allocation6 + $0x84] sm:$0xf]
        %v3157 = vld [vmem:[#allocation6 + $0x88] sm:$0xf]
        %v3158 = vld [vmem:[#allocation6 + $0x8c] sm:$0xf]
        %v3159 = vld [vmem:[#allocation6 + $0x90] sm:$0xf]
        %v3160 = vld [vmem:[#allocation6 + $0x94] sm:$0xf]
        %v3161 = vld [vmem:[#allocation6 + $0x98] sm:$0xf]
        %v3162 = vld [vmem:[#allocation6 + $0x9c] sm:$0xf]
        %v3163 = vld [vmem:[#allocation6 + $0xa0] sm:$0xf]
        %v3164 = vld [vmem:[#allocation6 + $0xa4] sm:$0xf]
        %v3165 = vld [vmem:[#allocation6 + $0xa8] sm:$0xf]
        %v3166 = vld [vmem:[#allocation6 + $0xac] sm:$0xf]
        %v3167 = vld [vmem:[#allocation6 + $0xb0] sm:$0xf]
        %v3168 = vld [vmem:[#allocation6 + $0xb4] sm:$0xf]
        %v3169 = vld [vmem:[#allocation6 + $0xb8] sm:$0xf]
        %v3170 = vld [vmem:[#allocation6 + $0xbc] sm:$0xf]
        %v3171 = vld [vmem:[#allocation6 + $0xc0] sm:$0xf]
        %v3172 = vld [vmem:[#allocation6 + $0xc4] sm:$0xf]
        %v3173 = vld [vmem:[#allocation6 + $0xc8] sm:$0xf]
        %v3174 = vld [vmem:[#allocation6 + $0xcc] sm:$0xf]
        %v3175 = vld [vmem:[#allocation6 + $0xd0] sm:$0xf]
        %v3176 = vld [vmem:[#allocation6 + $0xd4] sm:$0xf]
        %v3177 = vld [vmem:[#allocation6 + $0xd8] sm:$0xf]
        %v3178 = vld [vmem:[#allocation6 + $0xdc] sm:$0xf]
        %v3179 = vld [vmem:[#allocation6 + $0xe0] sm:$0xf]
        %v3180 = vld [vmem:[#allocation6 + $0xe4] sm:$0xf]
        %v3181 = vld [vmem:[#allocation6 + $0xe8] sm:$0xf]
        %v3182 = vld [vmem:[#allocation6 + $0xec] sm:$0xf]
        %v3183 = vld [vmem:[#allocation6 + $0xf0] sm:$0xf]
        %v3184 = vld [vmem:[#allocation6 + $0xf4] sm:$0xf]
        %v3185 = vld [vmem:[#allocation6 + $0xf8] sm:$0xf]
        %v3186 = vld [vmem:[#allocation6 + $0xfc] sm:$0xf]
        %v3187 = vld [vmem:[#allocation6 + $0x100] sm:$0xf]
        %v3188 = vld [vmem:[#allocation6 + $0x104] sm:$0xf]
        %v3189 = vld [vmem:[#allocation6 + $0x108] sm:$0xf]
        %v3190 = vld [vmem:[#allocation6 + $0x10c] sm:$0xf]
        %v3191 = vld [vmem:[#allocation6 + $0x110] sm:$0xf]
        %v3192 = vld [vmem:[#allocation6 + $0x114] sm:$0xf]
        %v3193 = vld [vmem:[#allocation6 + $0x118] sm:$0xf]
        %v3194 = vld [vmem:[#allocation6 + $0x11c] sm:$0xf]
        %v3195 = vld [vmem:[#allocation6 + $0x120] sm:$0xf]
        %v3196 = vld [vmem:[#allocation6 + $0x124] sm:$0xf]
        %v3197 = vld [vmem:[#allocation6 + $0x128] sm:$0xf]
        %v3198 = vld [vmem:[#allocation6 + $0x12c] sm:$0xf]
        %v3199 = vld [vmem:[#allocation6 + $0x130] sm:$0xf]
        %v3200 = vld [vmem:[#allocation6 + $0x134] sm:$0xf]
        %v3201 = vld [vmem:[#allocation6 + $0x138] sm:$0xf]
        %v3202 = vld [vmem:[#allocation6 + $0x13c] sm:$0xf]
        %v3203 = vld [vmem:[#allocation6 + $0x140] sm:$0xf]
        %v3204 = vld [vmem:[#allocation6 + $0x144] sm:$0xf]
        %v3205 = vld [vmem:[#allocation6 + $0x148] sm:$0xf]
        %v3206 = vld [vmem:[#allocation6 + $0x14c] sm:$0xf]
        %v3207 = vld [vmem:[#allocation6 + $0x150] sm:$0xf]
        %v3208 = vld [vmem:[#allocation6 + $0x154] sm:$0xf]
        %v3209 = vld [vmem:[#allocation6 + $0x158] sm:$0xf]
        %v3210 = vld [vmem:[#allocation6 + $0x15c] sm:$0xf]
        %v3211 = vld [vmem:[#allocation6 + $0x160] sm:$0xf]
        %v3212 = vld [vmem:[#allocation6 + $0x164] sm:$0xf]
        %v3213 = vld [vmem:[#allocation6 + $0x168] sm:$0xf]
        %v3214 = vld [vmem:[#allocation6 + $0x16c] sm:$0xf]
        %v3215 = vld [vmem:[#allocation6 + $0x170] sm:$0xf]
        %v3216 = vld [vmem:[#allocation6 + $0x174] sm:$0xf]
        %v3217 = vld [vmem:[#allocation6 + $0x178] sm:$0xf]
        %v3218 = vld [vmem:[#allocation6 + $0x17c] sm:$0xf]
        %v3219 = vld [vmem:[#allocation6 + $0x180] sm:$0xf]
        %v3220 = vld [vmem:[#allocation6 + $0x184] sm:$0xf]
        %v3221 = vld [vmem:[#allocation6 + $0x188] sm:$0xf]
        %v3222 = vld [vmem:[#allocation6 + $0x18c] sm:$0xf]
        %v3223 = vld [vmem:[#allocation6 + $0x190] sm:$0xf]
        %v3224 = vld [vmem:[#allocation6 + $0x194] sm:$0xf]
        %v3225 = vld [vmem:[#allocation6 + $0x198] sm:$0xf]
        %v3226 = vld [vmem:[#allocation6 + $0x19c] sm:$0xf]
        %v3227 = vld [vmem:[#allocation6 + $0x1a0] sm:$0xf]
        %v3228 = vld [vmem:[#allocation6 + $0x1a4] sm:$0xf]
        %v3229 = vld [vmem:[#allocation6 + $0x1a8] sm:$0xf]
        %v3230 = vld [vmem:[#allocation6 + $0x1ac] sm:$0xf]
        %v3231 = vld [vmem:[#allocation6 + $0x1b0] sm:$0xf]
        %v3232 = vld [vmem:[#allocation6 + $0x1b4] sm:$0xf]
        %v3233 = vld [vmem:[#allocation6 + $0x1b8] sm:$0xf]
        %v3234 = vld [vmem:[#allocation6 + $0x1bc] sm:$0xf]
        %v3235 = vld [vmem:[#allocation6 + $0x1c0] sm:$0xf]
        %v3236 = vld [vmem:[#allocation6 + $0x1c4] sm:$0xf]
        %v3237 = vld [vmem:[#allocation6 + $0x1c8] sm:$0xf]
        %v3238 = vld [vmem:[#allocation6 + $0x1cc] sm:$0xf]
        %v3239 = vld [vmem:[#allocation6 + $0x1d0] sm:$0xf]
        %v3240 = vld [vmem:[#allocation6 + $0x1d4] sm:$0xf]
        %v3241 = vld [vmem:[#allocation6 + $0x1d8] sm:$0xf]
        %v3242 = vld [vmem:[#allocation6 + $0x1dc] sm:$0xf]
        %v3243 = vld [vmem:[#allocation6 + $0x1e0] sm:$0xf]
        %v3244 = vld [vmem:[#allocation6 + $0x1e4] sm:$0xf]
        %v3245 = vld [vmem:[#allocation6 + $0x1e8] sm:$0xf]
        %v3246 = vld [vmem:[#allocation6 + $0x1ec] sm:$0xf]
        %v3247 = vld [vmem:[#allocation6 + $0x1f0] sm:$0xf]
        %v3248 = vld [vmem:[#allocation6 + $0x1f4] sm:$0xf]
        %v3249 = vld [vmem:[#allocation6 + $0x1f8] sm:$0xf]
        %v3250 = vld [vmem:[#allocation6 + $0x1fc] sm:$0xf]
        %v3251 = vld [vmem:[#allocation6 + $0x200] sm:$0xf]
        %v3252 = vld [vmem:[#allocation6 + $0x204] sm:$0xf]
        %v3253 = vld [vmem:[#allocation6 + $0x208] sm:$0xf]
        %v3254 = vld [vmem:[#allocation6 + $0x20c] sm:$0xf]
        %v3255 = vld [vmem:[#allocation6 + $0x210] sm:$0xf]
        %v3256 = vld [vmem:[#allocation6 + $0x214] sm:$0xf]
        %v3257 = vld [vmem:[#allocation6 + $0x218] sm:$0xf]
        %v3258 = vld [vmem:[#allocation6 + $0x21c] sm:$0xf]
        %v3259 = vld [vmem:[#allocation6 + $0x220] sm:$0xf]
        %v3260 = vld [vmem:[#allocation6 + $0x224] sm:$0xf]
        %v3261 = vld [vmem:[#allocation6 + $0x228] sm:$0xf]
        %v3262 = vld [vmem:[#allocation6 + $0x22c] sm:$0xf]
        %v3263 = vld [vmem:[#allocation6 + $0x230] sm:$0xf]
        %v3264 = vld [vmem:[#allocation6 + $0x234] sm:$0xf]
        %v3265 = vld [vmem:[#allocation6 + $0x238] sm:$0xf]
        %v3266 = vld [vmem:[#allocation6 + $0x23c] sm:$0xf]
        %v3267 = vld [vmem:[%s2] sm:$0x1]
        %v3269 = vlaneseq
        %v3270 = vshrl.u32 %v3269, 7
        %v3271 = vsub.s32 0, %v3270
        %v3272 = vrot.slane %v3267, %v3271
        %v3418 = vunpack.c.l.b16 %v3123
        %v3419 = vunpack.c.l.b16 %v3124
        %v3420 = vunpack.c.l.b16 %v3125
        %v3421 = vunpack.c.l.b16 %v3126
        %v3422 = vunpack.c.l.b16 %v3127
        %v3423 = vunpack.c.l.b16 %v3128
        %v3424 = vunpack.c.l.b16 %v3129
        %v3425 = vunpack.c.l.b16 %v3130
        %v3426 = vunpack.c.l.b16 %v3131
        %v3427 = vunpack.c.l.b16 %v3132
        %v3428 = vunpack.c.l.b16 %v3133
        %v3429 = vunpack.c.l.b16 %v3134
        %v3430 = vunpack.c.l.b16 %v3135
        %v3431 = vunpack.c.l.b16 %v3136
        %v3432 = vunpack.c.l.b16 %v3137
        %v3433 = vunpack.c.l.b16 %v3138
        %v3434 = vunpack.c.l.b16 %v3139
        %v3435 = vunpack.c.l.b16 %v3140
        %v3436 = vunpack.c.l.b16 %v3141
        %v3437 = vunpack.c.l.b16 %v3142
        %v3438 = vunpack.c.l.b16 %v3143
        %v3439 = vunpack.c.l.b16 %v3144
        %v3440 = vunpack.c.l.b16 %v3145
        %v3441 = vunpack.c.l.b16 %v3146
        %v3442 = vunpack.c.l.b16 %v3147
        %v3443 = vunpack.c.l.b16 %v3148
        %v3444 = vunpack.c.l.b16 %v3149
        %v3445 = vunpack.c.l.b16 %v3150
        %v3446 = vunpack.c.l.b16 %v3151
        %v3447 = vunpack.c.l.b16 %v3152
        %v3448 = vunpack.c.l.b16 %v3153
        %v3449 = vunpack.c.l.b16 %v3154
        %v3450 = vunpack.c.l.b16 %v3155
        %v3451 = vunpack.c.l.b16 %v3156
        %v3452 = vunpack.c.l.b16 %v3157
        %v3453 = vunpack.c.l.b16 %v3158
        %v3454 = vunpack.c.l.b16 %v3159
        %v3455 = vunpack.c.l.b16 %v3160
        %v3456 = vunpack.c.l.b16 %v3161
        %v3457 = vunpack.c.l.b16 %v3162
        %v3458 = vunpack.c.l.b16 %v3163
        %v3459 = vunpack.c.l.b16 %v3164
        %v3460 = vunpack.c.l.b16 %v3165
        %v3461 = vunpack.c.l.b16 %v3166
        %v3462 = vunpack.c.l.b16 %v3167
        %v3463 = vunpack.c.l.b16 %v3168
        %v3464 = vunpack.c.l.b16 %v3169
        %v3465 = vunpack.c.l.b16 %v3170
        %v3466 = vunpack.c.l.b16 %v3171
        %v3467 = vunpack.c.l.b16 %v3172
        %v3468 = vunpack.c.l.b16 %v3173
        %v3469 = vunpack.c.l.b16 %v3174
        %v3470 = vunpack.c.l.b16 %v3175
        %v3471 = vunpack.c.l.b16 %v3176
        %v3472 = vunpack.c.l.b16 %v3177
        %v3473 = vunpack.c.l.b16 %v3178
        %v3474 = vunpack.c.l.b16 %v3179
        %v3475 = vunpack.c.l.b16 %v3180
        %v3476 = vunpack.c.l.b16 %v3181
        %v3477 = vunpack.c.l.b16 %v3182
        %v3478 = vunpack.c.l.b16 %v3183
        %v3479 = vunpack.c.l.b16 %v3184
        %v3480 = vunpack.c.l.b16 %v3185
        %v3481 = vunpack.c.l.b16 %v3186
        %v3482 = vunpack.c.l.b16 %v3187
        %v3483 = vunpack.c.l.b16 %v3188
        %v3484 = vunpack.c.l.b16 %v3189
        %v3485 = vunpack.c.l.b16 %v3190
        %v3486 = vunpack.c.l.b16 %v3191
        %v3487 = vunpack.c.l.b16 %v3192
        %v3488 = vunpack.c.l.b16 %v3193
        %v3489 = vunpack.c.l.b16 %v3194
        %v3490 = vunpack.c.l.b16 %v3195
        %v3491 = vunpack.c.l.b16 %v3196
        %v3492 = vunpack.c.l.b16 %v3197
        %v3493 = vunpack.c.l.b16 %v3198
        %v3494 = vunpack.c.l.b16 %v3199
        %v3495 = vunpack.c.l.b16 %v3200
        %v3496 = vunpack.c.l.b16 %v3201
        %v3497 = vunpack.c.l.b16 %v3202
        %v3498 = vunpack.c.l.b16 %v3203
        %v3499 = vunpack.c.l.b16 %v3204
        %v3500 = vunpack.c.l.b16 %v3205
        %v3501 = vunpack.c.l.b16 %v3206
        %v3502 = vunpack.c.l.b16 %v3207
        %v3503 = vunpack.c.l.b16 %v3208
        %v3504 = vunpack.c.l.b16 %v3209
        %v3505 = vunpack.c.l.b16 %v3210
        %v3506 = vunpack.c.l.b16 %v3211
        %v3507 = vunpack.c.l.b16 %v3212
        %v3508 = vunpack.c.l.b16 %v3213
        %v3509 = vunpack.c.l.b16 %v3214
        %v3510 = vunpack.c.l.b16 %v3215
        %v3511 = vunpack.c.l.b16 %v3216
        %v3512 = vunpack.c.l.b16 %v3217
        %v3513 = vunpack.c.l.b16 %v3218
        %v3514 = vunpack.c.l.b16 %v3219
        %v3515 = vunpack.c.l.b16 %v3220
        %v3516 = vunpack.c.l.b16 %v3221
        %v3517 = vunpack.c.l.b16 %v3222
        %v3518 = vunpack.c.l.b16 %v3223
        %v3519 = vunpack.c.l.b16 %v3224
        %v3520 = vunpack.c.l.b16 %v3225
        %v3521 = vunpack.c.l.b16 %v3226
        %v3522 = vunpack.c.l.b16 %v3227
        %v3523 = vunpack.c.l.b16 %v3228
        %v3524 = vunpack.c.l.b16 %v3229
        %v3525 = vunpack.c.l.b16 %v3230
        %v3526 = vunpack.c.l.b16 %v3231
        %v3527 = vunpack.c.l.b16 %v3232
        %v3528 = vunpack.c.l.b16 %v3233
        %v3529 = vunpack.c.l.b16 %v3234
        %v3530 = vunpack.c.l.b16 %v3235
        %v3531 = vunpack.c.l.b16 %v3236
        %v3532 = vunpack.c.l.b16 %v3237
        %v3533 = vunpack.c.l.b16 %v3238
        %v3534 = vunpack.c.l.b16 %v3239
        %v3535 = vunpack.c.l.b16 %v3240
        %v3536 = vunpack.c.l.b16 %v3241
        %v3537 = vunpack.c.l.b16 %v3242
        %v3538 = vunpack.c.l.b16 %v3243
        %v3539 = vunpack.c.l.b16 %v3244
        %v3540 = vunpack.c.l.b16 %v3245
        %v3541 = vunpack.c.l.b16 %v3246
        %v3542 = vunpack.c.l.b16 %v3247
        %v3543 = vunpack.c.l.b16 %v3248
        %v3544 = vunpack.c.l.b16 %v3249
        %v3545 = vunpack.c.l.b16 %v3250
        %v3546 = vunpack.c.l.b16 %v3251
        %v3547 = vunpack.c.l.b16 %v3252
        %v3548 = vunpack.c.l.b16 %v3253
        %v3549 = vunpack.c.l.b16 %v3254
        %v3550 = vunpack.c.l.b16 %v3255
        %v3551 = vunpack.c.l.b16 %v3256
        %v3552 = vunpack.c.l.b16 %v3257
        %v3553 = vunpack.c.l.b16 %v3258
        %v3554 = vunpack.c.l.b16 %v3259
        %v3555 = vunpack.c.l.b16 %v3260
        %v3556 = vunpack.c.l.b16 %v3261
        %v3557 = vunpack.c.l.b16 %v3262
        %v3558 = vunpack.c.l.b16 %v3263
        %v3559 = vunpack.c.l.b16 %v3264
        %v3560 = vunpack.c.l.b16 %v3265
        %v3561 = vunpack.c.l.b16 %v3266
        %v3562 = vpack.c.b16 %v3419, %v3418
        %v3563 = vpack.c.b16 %v3421, %v3420
        %v3564 = vpack.c.b16 %v3423, %v3422
        %v3565 = vpack.c.b16 %v3425, %v3424
        %v3566 = vpack.c.b16 %v3427, %v3426
        %v3567 = vpack.c.b16 %v3429, %v3428
        %v3568 = vpack.c.b16 %v3431, %v3430
        %v3569 = vpack.c.b16 %v3433, %v3432
        %v3570 = vpack.c.b16 %v3435, %v3434
        %v3571 = vpack.c.b16 %v3437, %v3436
        %v3572 = vpack.c.b16 %v3439, %v3438
        %v3573 = vpack.c.b16 %v3441, %v3440
        %v3574 = vpack.c.b16 %v3443, %v3442
        %v3575 = vpack.c.b16 %v3445, %v3444
        %v3576 = vpack.c.b16 %v3447, %v3446
        %v3577 = vpack.c.b16 %v3449, %v3448
        %v3578 = vpack.c.b16 %v3451, %v3450
        %v3579 = vpack.c.b16 %v3453, %v3452
        %v3580 = vpack.c.b16 %v3455, %v3454
        %v3581 = vpack.c.b16 %v3457, %v3456
        %v3582 = vpack.c.b16 %v3459, %v3458
        %v3583 = vpack.c.b16 %v3461, %v3460
        %v3584 = vpack.c.b16 %v3463, %v3462
        %v3585 = vpack.c.b16 %v3465, %v3464
        %v3586 = vpack.c.b16 %v3467, %v3466
        %v3587 = vpack.c.b16 %v3469, %v3468
        %v3588 = vpack.c.b16 %v3471, %v3470
        %v3589 = vpack.c.b16 %v3473, %v3472
        %v3590 = vpack.c.b16 %v3475, %v3474
        %v3591 = vpack.c.b16 %v3477, %v3476
        %v3592 = vpack.c.b16 %v3479, %v3478
        %v3593 = vpack.c.b16 %v3481, %v3480
        %v3594 = vpack.c.b16 %v3483, %v3482
        %v3595 = vpack.c.b16 %v3485, %v3484
        %v3596 = vpack.c.b16 %v3487, %v3486
        %v3597 = vpack.c.b16 %v3489, %v3488
        %v3598 = vpack.c.b16 %v3491, %v3490
        %v3599 = vpack.c.b16 %v3493, %v3492
        %v3600 = vpack.c.b16 %v3495, %v3494
        %v3601 = vpack.c.b16 %v3497, %v3496
        %v3602 = vpack.c.b16 %v3499, %v3498
        %v3603 = vpack.c.b16 %v3501, %v3500
        %v3604 = vpack.c.b16 %v3503, %v3502
        %v3605 = vpack.c.b16 %v3505, %v3504
        %v3606 = vpack.c.b16 %v3507, %v3506
        %v3607 = vpack.c.b16 %v3509, %v3508
        %v3608 = vpack.c.b16 %v3511, %v3510
        %v3609 = vpack.c.b16 %v3513, %v3512
        %v3610 = vpack.c.b16 %v3515, %v3514
        %v3611 = vpack.c.b16 %v3517, %v3516
        %v3612 = vpack.c.b16 %v3519, %v3518
        %v3613 = vpack.c.b16 %v3521, %v3520
        %v3614 = vpack.c.b16 %v3523, %v3522
        %v3615 = vpack.c.b16 %v3525, %v3524
        %v3616 = vpack.c.b16 %v3527, %v3526
        %v3617 = vpack.c.b16 %v3529, %v3528
        %v3618 = vpack.c.b16 %v3531, %v3530
        %v3619 = vpack.c.b16 %v3533, %v3532
        %v3620 = vpack.c.b16 %v3535, %v3534
        %v3621 = vpack.c.b16 %v3537, %v3536
        %v3622 = vpack.c.b16 %v3539, %v3538
        %v3623 = vpack.c.b16 %v3541, %v3540
        %v3624 = vpack.c.b16 %v3543, %v3542
        %v3625 = vpack.c.b16 %v3545, %v3544
        %v3626 = vpack.c.b16 %v3547, %v3546
        %v3627 = vpack.c.b16 %v3549, %v3548
        %v3628 = vpack.c.b16 %v3551, %v3550
        %v3629 = vpack.c.b16 %v3553, %v3552
        %v3630 = vpack.c.b16 %v3555, %v3554
        %v3631 = vpack.c.b16 %v3557, %v3556
        %v3632 = vpack.c.b16 %v3559, %v3558
        %v3633 = vpack.c.b16 %v3561, %v3560
        %3706 = vmatprep.subr.bf16.mxu0 0
        %3707 = vmatpush1.bf16.msra.mxu0 %v3562
        %3708 = vmatprep.subr.bf16.mxu0 0
        %3709 = vmatpush1.bf16.msra.mxu0 %v3563
        %3710 = vmatprep.subr.bf16.mxu0 0
        %3711 = vmatpush1.bf16.msra.mxu0 %v3564
        %3712 = vmatprep.subr.bf16.mxu0 0
        %3713 = vmatpush1.bf16.msra.mxu0 %v3565
        %3714 = vmatprep.subr.bf16.mxu0 0
        %3715 = vmatpush1.bf16.msra.mxu0 %v3566
        %3716 = vmatprep.subr.bf16.mxu0 0
        %3717 = vmatpush1.bf16.msra.mxu0 %v3567
        %3718 = vmatprep.subr.bf16.mxu0 0
        %3719 = vmatpush1.bf16.msra.mxu0 %v3568
        %3720 = vmatprep.subr.bf16.mxu0 0
        %3721 = vmatpush1.bf16.msra.mxu0 %v3569
        %3722 = vmatprep.subr.bf16.mxu0 0
        %3723 = vmatpush1.bf16.msra.mxu0 %v3570
        %3724 = vmatprep.subr.bf16.mxu0 0
        %3725 = vmatpush1.bf16.msra.mxu0 %v3571
        %3726 = vmatprep.subr.bf16.mxu0 0
        %3727 = vmatpush1.bf16.msra.mxu0 %v3572
        %3728 = vmatprep.subr.bf16.mxu0 0
        %3729 = vmatpush1.bf16.msra.mxu0 %v3573
        %3730 = vmatprep.subr.bf16.mxu0 0
        %3731 = vmatpush1.bf16.msra.mxu0 %v3574
        %3732 = vmatprep.subr.bf16.mxu0 0
        %3733 = vmatpush1.bf16.msra.mxu0 %v3575
        %3734 = vmatprep.subr.bf16.mxu0 0
        %3735 = vmatpush1.bf16.msra.mxu0 %v3576
        %3736 = vmatprep.subr.bf16.mxu0 0
        %3737 = vmatpush1.bf16.msra.mxu0 %v3577
        %3738 = vmatprep.mubr.bf16.mxu0 %v2547
        %3739 = vmatmul.mubr.bf16.gmra.mrb[0].mxu0 %v2475
        %v3740 = vpop.f32.mrb[0].mxu0
        %v3741 = vadd.f32 %v3272, %v3740
        %v3742 = vpop.f32.mrb[0].mxu0
        %v3743 = vpop.f32.mrb[0].mxu0
        %v3744 = vadd.f32 %v3272, %v3743
        %v3745 = vpop.f32.mrb[0].mxu0
        %3746 = vmatprep.mubr.bf16.mxu0 %v2548
        %3747 = vmatmul.mubr.bf16.gmra.mrb[0].mxu0 %v2476
        %v3748 = vpop.f32.mrb[0].mxu0
        %v3749 = vadd.f32 %v3272, %v3748
        %v3750 = vpop.f32.mrb[0].mxu0
        %v3751 = vpop.f32.mrb[0].mxu0
        %v3752 = vadd.f32 %v3272, %v3751
        %v3753 = vpop.f32.mrb[0].mxu0
        %3754 = vmatprep.mubr.bf16.mxu0 %v2549
        %3755 = vmatmul.mubr.bf16.gmra.mrb[0].mxu0 %v2477
        %v3756 = vpop.f32.mrb[0].mxu0
        %v3757 = vadd.f32 %v3272, %v3756
        %v3758 = vpop.f32.mrb[0].mxu0
        %v3759 = vpop.f32.mrb[0].mxu0
        %v3760 = vadd.f32 %v3272, %v3759
        %v3761 = vpop.f32.mrb[0].mxu0
        %3762 = vmatprep.mubr.bf16.mxu0 %v2550
        %3763 = vmatmul.mubr.bf16.gmra.mrb[0].mxu0 %v2478
        %v3764 = vpop.f32.mrb[0].mxu0
        %v3765 = vadd.f32 %v3272, %v3764
        %v3766 = vpop.f32.mrb[0].mxu0
        %v3767 = vpop.f32.mrb[0].mxu0
        %v3768 = vadd.f32 %v3272, %v3767
        %v3769 = vpop.f32.mrb[0].mxu0
        %3770 = vmatprep.mubr.bf16.mxu0 %v2551
        %3771 = vmatmul.mubr.bf16.gmra.mrb[0].mxu0 %v2479
        %v3772 = vpop.f32.mrb[0].mxu0
        %v3773 = vadd.f32 %v3272, %v3772
        %v3774 = vpop.f32.mrb[0].mxu0
        %v3775 = vpop.f32.mrb[0].mxu0
        %v3776 = vadd.f32 %v3272, %v3775
        %v3777 = vpop.f32.mrb[0].mxu0
        %3778 = vmatprep.mubr.bf16.mxu0 %v2552
        %3779 = vmatmul.mubr.bf16.gmra.mrb[0].mxu0 %v2480
        %v3780 = vpop.f32.mrb[0].mxu0
        %v3781 = vadd.f32 %v3272, %v3780
        %v3782 = vpop.f32.mrb[0].mxu0
        %v3783 = vpop.f32.mrb[0].mxu0
        %v3784 = vadd.f32 %v3272, %v3783
        %v3785 = vpop.f32.mrb[0].mxu0
        %3786 = vmatprep.mubr.bf16.mxu0 %v2553
        %3787 = vmatmul.mubr.bf16.gmra.mrb[0].mxu0 %v2481
        %v3788 = vpop.f32.mrb[0].mxu0
        %v3789 = vadd.f32 %v3272, %v3788
        %v3790 = vpop.f32.mrb[0].mxu0
        %v3791 = vpop.f32.mrb[0].mxu0
        %v3792 = vadd.f32 %v3272, %v3791
        %v3793 = vpop.f32.mrb[0].mxu0
        %3794 = vmatprep.mubr.bf16.mxu0 %v2554
        %3795 = vmatmul.mubr.bf16.gmra.mrb[0].mxu0 %v2482
        %v3796 = vpop.f32.mrb[0].mxu0
        %v3797 = vadd.f32 %v3272, %v3796
        %v3798 = vpop.f32.mrb[0].mxu0
        %v3799 = vpop.f32.mrb[0].mxu0
        %v3800 = vadd.f32 %v3272, %v3799
        %v3801 = vpop.f32.mrb[0].mxu0
        %3802 = vmatprep.mubr.bf16.mxu0 %v2555
        %3803 = vmatmul.mubr.bf16.gmra.mrb[0].mxu0 %v2483
        %v3804 = vpop.f32.mrb[0].mxu0
        %v3805 = vadd.f32 %v3272, %v3804
        %v3806 = vpop.f32.mrb[0].mxu0
        %v3807 = vpop.f32.mrb[0].mxu0
        %v3808 = vadd.f32 %v3272, %v3807
        %v3809 = vpop.f32.mrb[0].mxu0
        %3810 = vmatprep.mubr.bf16.mxu0 %v2556
        %3811 = vmatmul.mubr.bf16.gmra.mrb[0].mxu0 %v2484
        %v3812 = vpop.f32.mrb[0].mxu0
        %v3813 = vadd.f32 %v3272, %v3812
        %v3814 = vpop.f32.mrb[0].mxu0
        %v3815 = vpop.f32.mrb[0].mxu0
        %v3816 = vadd.f32 %v3272, %v3815
        %v3817 = vpop.f32.mrb[0].mxu0
        %3818 = vmatprep.mubr.bf16.mxu0 %v2557
        %3819 = vmatmul.mubr.bf16.gmra.mrb[0].mxu0 %v2485
        %v3820 = vpop.f32.mrb[0].mxu0
        %v3821 = vadd.f32 %v3272, %v3820
        %v3822 = vpop.f32.mrb[0].mxu0
        %v3823 = vpop.f32.mrb[0].mxu0
        %v3824 = vadd.f32 %v3272, %v3823
        %v3825 = vpop.f32.mrb[0].mxu0
        %3826 = vmatprep.mubr.bf16.mxu0 %v2558
        %3827 = vmatmul.mubr.bf16.gmra.mrb[0].mxu0 %v2486
        %v3828 = vpop.f32.mrb[0].mxu0
        %v3829 = vadd.f32 %v3272, %v3828
        %v3830 = vpop.f32.mrb[0].mxu0
        %v3831 = vpop.f32.mrb[0].mxu0
        %v3832 = vadd.f32 %v3272, %v3831
        %v3833 = vpop.f32.mrb[0].mxu0
        %3834 = vmatprep.mubr.bf16.mxu0 %v2559
        %3835 = vmatmul.mubr.bf16.gmra.mrb[0].mxu0 %v2487
        %v3836 = vpop.f32.mrb[0].mxu0
        %v3837 = vadd.f32 %v3272, %v3836
        %v3838 = vpop.f32.mrb[0].mxu0
        %v3839 = vpop.f32.mrb[0].mxu0
        %v3840 = vadd.f32 %v3272, %v3839
        %v3841 = vpop.f32.mrb[0].mxu0
        %3842 = vmatprep.mubr.bf16.mxu0 %v2560
        %3843 = vmatmul.mubr.bf16.gmra.mrb[0].mxu0 %v2488
        %v3844 = vpop.f32.mrb[0].mxu0
        %v3845 = vadd.f32 %v3272, %v3844
        %v3846 = vpop.f32.mrb[0].mxu0
        %v3847 = vpop.f32.mrb[0].mxu0
        %v3848 = vadd.f32 %v3272, %v3847
        %v3849 = vpop.f32.mrb[0].mxu0
        %3850 = vmatprep.mubr.bf16.mxu0 %v2561
        %3851 = vmatmul.mubr.bf16.gmra.mrb[0].mxu0 %v2489
        %v3852 = vpop.f32.mrb[0].mxu0
        %v3853 = vadd.f32 %v3272, %v3852
        %v3854 = vpop.f32.mrb[0].mxu0
        %v3855 = vpop.f32.mrb[0].mxu0
        %v3856 = vadd.f32 %v3272, %v3855
        %v3857 = vpop.f32.mrb[0].mxu0
        %3858 = vmatprep.mubr.bf16.mxu0 %v2562
        %3859 = vmatmul.mubr.bf16.gmra.mrb[0].mxu0 %v2490
        %v3860 = vpop.f32.mrb[0].mxu0
        %v3861 = vadd.f32 %v3272, %v3860
        %v3862 = vpop.f32.mrb[0].mxu0
        %v3863 = vpop.f32.mrb[0].mxu0
        %v3864 = vadd.f32 %v3272, %v3863
        %v3865 = vpop.f32.mrb[0].mxu0
        %3866 = vmatprep.mubr.bf16.mxu0 %v2563
        %3867 = vmatmul.mubr.bf16.gmra.mrb[0].mxu0 %v2491
        %v3868 = vpop.f32.mrb[0].mxu0
        %v3869 = vadd.f32 %v3272, %v3868
        %v3870 = vpop.f32.mrb[0].mxu0
        %v3871 = vpop.f32.mrb[0].mxu0
        %v3872 = vadd.f32 %v3272, %v3871
        %v3873 = vpop.f32.mrb[0].mxu0
        %3874 = vmatprep.mubr.bf16.mxu0 %v2564
        %3875 = vmatmul.mubr.bf16.gmra.mrb[0].mxu0 %v2492
        %v3876 = vpop.f32.mrb[0].mxu0
        %v3877 = vadd.f32 %v3272, %v3876
        %v3878 = vpop.f32.mrb[0].mxu0
        %v3879 = vpop.f32.mrb[0].mxu0
        %v3880 = vadd.f32 %v3272, %v3879
        %v3881 = vpop.f32.mrb[0].mxu0
        %3882 = vdwg.mxu0
        %3883 = vmatprep.subr.bf16.mxu0 0
        %3884 = vmatpush1.bf16.msra.mxu0 %v3578
        %3885 = vmatprep.subr.bf16.mxu0 0
        %3886 = vmatpush1.bf16.msra.mxu0 %v3579
        %3887 = vmatprep.subr.bf16.mxu0 0
        %3888 = vmatpush1.bf16.msra.mxu0 %v3580
        %3889 = vmatprep.subr.bf16.mxu0 0
        %3890 = vmatpush1.bf16.msra.mxu0 %v3581
        %3891 = vmatprep.subr.bf16.mxu0 0
        %3892 = vmatpush1.bf16.msra.mxu0 %v3582
        %3893 = vmatprep.subr.bf16.mxu0 0
        %3894 = vmatpush1.bf16.msra.mxu0 %v3583
        %3895 = vmatprep.subr.bf16.mxu0 0
        %3896 = vmatpush1.bf16.msra.mxu0 %v3584
        %3897 = vmatprep.subr.bf16.mxu0 0
        %3898 = vmatpush1.bf16.msra.mxu0 %v3585
        %3899 = vmatprep.subr.bf16.mxu0 0
        %3900 = vmatpush1.bf16.msra.mxu0 %v3586
        %3901 = vmatprep.subr.bf16.mxu0 0
        %3902 = vmatpush1.bf16.msra.mxu0 %v3587
        %3903 = vmatprep.subr.bf16.mxu0 0
        %3904 = vmatpush1.bf16.msra.mxu0 %v3588
        %3905 = vmatprep.subr.bf16.mxu0 0
        %3906 = vmatpush1.bf16.msra.mxu0 %v3589
        %3907 = vmatprep.subr.bf16.mxu0 0
        %3908 = vmatpush1.bf16.msra.mxu0 %v3590
        %3909 = vmatprep.subr.bf16.mxu0 0
        %3910 = vmatpush1.bf16.msra.mxu0 %v3591
        %3911 = vmatprep.subr.bf16.mxu0 0
        %3912 = vmatpush1.bf16.msra.mxu0 %v3592
        %3913 = vmatprep.subr.bf16.mxu0 0
        %3914 = vmatpush1.bf16.msra.mxu0 %v3593
        %3915 = vmatprep.mubr.bf16.mxu0 %v2709
        %3916 = vmatmul.mubr.bf16.gmra.mrb[0].mxu0 %v2619
        %v3917 = vpop.f32.mrb[0].mxu0
        %v3918 = vadd.f32 %v3741, %v3917
        %v3919 = vpop.f32.mrb[0].mxu0
        %v3920 = vpop.f32.mrb[0].mxu0
        %v3921 = vadd.f32 %v3744, %v3920
        %v3922 = vpop.f32.mrb[0].mxu0
        %3923 = vmatprep.mubr.bf16.mxu0 %v2710
        %3924 = vmatmul.mubr.bf16.gmra.mrb[0].mxu0 %v2620
        %v3925 = vpop.f32.mrb[0].mxu0
        %v3926 = vadd.f32 %v3749, %v3925
        %v3927 = vpop.f32.mrb[0].mxu0
        %v3928 = vpop.f32.mrb[0].mxu0
        %v3929 = vadd.f32 %v3752, %v3928
        %v3930 = vpop.f32.mrb[0].mxu0
        %3931 = vmatprep.mubr.bf16.mxu0 %v2711
        %3932 = vmatmul.mubr.bf16.gmra.mrb[0].mxu0 %v2621
        %v3933 = vpop.f32.mrb[0].mxu0
        %v3934 = vadd.f32 %v3757, %v3933
        %v3935 = vpop.f32.mrb[0].mxu0
        %v3936 = vpop.f32.mrb[0].mxu0
        %v3937 = vadd.f32 %v3760, %v3936
        %v3938 = vpop.f32.mrb[0].mxu0
        %3939 = vmatprep.mubr.bf16.mxu0 %v2712
        %3940 = vmatmul.mubr.bf16.gmra.mrb[0].mxu0 %v2622
        %v3941 = vpop.f32.mrb[0].mxu0
        %v3942 = vadd.f32 %v3765, %v3941
        %v3943 = vpop.f32.mrb[0].mxu0
        %v3944 = vpop.f32.mrb[0].mxu0
        %v3945 = vadd.f32 %v3768, %v3944
        %v3946 = vpop.f32.mrb[0].mxu0
        %3947 = vmatprep.mubr.bf16.mxu0 %v2713
        %3948 = vmatmul.mubr.bf16.gmra.mrb[0].mxu0 %v2623
        %v3949 = vpop.f32.mrb[0].mxu0
        %v3950 = vadd.f32 %v3773, %v3949
        %v3951 = vpop.f32.mrb[0].mxu0
        %v3952 = vpop.f32.mrb[0].mxu0
        %v3953 = vadd.f32 %v3776, %v3952
        %v3954 = vpop.f32.mrb[0].mxu0
        %3955 = vmatprep.mubr.bf16.mxu0 %v2714
        %3956 = vmatmul.mubr.bf16.gmra.mrb[0].mxu0 %v2624
        %v3957 = vpop.f32.mrb[0].mxu0
        %v3958 = vadd.f32 %v3781, %v3957
        %v3959 = vpop.f32.mrb[0].mxu0
        %v3960 = vpop.f32.mrb[0].mxu0
        %v3961 = vadd.f32 %v3784, %v3960
        %v3962 = vpop.f32.mrb[0].mxu0
        %3963 = vmatprep.mubr.bf16.mxu0 %v2715
        %3964 = vmatmul.mubr.bf16.gmra.mrb[0].mxu0 %v2625
        %v3965 = vpop.f32.mrb[0].mxu0
        %v3966 = vadd.f32 %v3789, %v3965
        %v3967 = vpop.f32.mrb[0].mxu0
        %v3968 = vpop.f32.mrb[0].mxu0
        %v3969 = vadd.f32 %v3792, %v3968
        %v3970 = vpop.f32.mrb[0].mxu0
        %3971 = vmatprep.mubr.bf16.mxu0 %v2716
        %3972 = vmatmul.mubr.bf16.gmra.mrb[0].mxu0 %v2626
        %v3973 = vpop.f32.mrb[0].mxu0
        %v3974 = vadd.f32 %v3797, %v3973
        %v3975 = vpop.f32.mrb[0].mxu0
        %v3976 = vpop.f32.mrb[0].mxu0
        %v3977 = vadd.f32 %v3800, %v3976
        %v3978 = vpop.f32.mrb[0].mxu0
        %3979 = vmatprep.mubr.bf16.mxu0 %v2717
        %3980 = vmatmul.mubr.bf16.gmra.mrb[0].mxu0 %v2627
        %v3981 = vpop.f32.mrb[0].mxu0
        %v3982 = vadd.f32 %v3805, %v3981
        %v3983 = vpop.f32.mrb[0].mxu0
        %v3984 = vpop.f32.mrb[0].mxu0
        %v3985 = vadd.f32 %v3808, %v3984
        %v3986 = vpop.f32.mrb[0].mxu0
        %3987 = vmatprep.mubr.bf16.mxu0 %v2718
        %3988 = vmatmul.mubr.bf16.gmra.mrb[0].mxu0 %v2628
        %v3989 = vpop.f32.mrb[0].mxu0
        %v3990 = vadd.f32 %v3813, %v3989
        %v3991 = vpop.f32.mrb[0].mxu0
        %v3992 = vpop.f32.mrb[0].mxu0
        %v3993 = vadd.f32 %v3816, %v3992
        %v3994 = vpop.f32.mrb[0].mxu0
        %3995 = vmatprep.mubr.bf16.mxu0 %v2719
        %3996 = vmatmul.mubr.bf16.gmra.mrb[0].mxu0 %v2629
        %v3997 = vpop.f32.mrb[0].mxu0
        %v3998 = vadd.f32 %v3821, %v3997
        %v3999 = vpop.f32.mrb[0].mxu0
        %v4000 = vpop.f32.mrb[0].mxu0
        %v4001 = vadd.f32 %v3824, %v4000
        %v4002 = vpop.f32.mrb[0].mxu0
        %4003 = vmatprep.mubr.bf16.mxu0 %v2720
        %4004 = vmatmul.mubr.bf16.gmra.mrb[0].mxu0 %v2630
        %v4005 = vpop.f32.mrb[0].mxu0
        %v4006 = vadd.f32 %v3829, %v4005
        %v4007 = vpop.f32.mrb[0].mxu0
        %v4008 = vpop.f32.mrb[0].mxu0
        %v4009 = vadd.f32 %v3832, %v4008
        %v4010 = vpop.f32.mrb[0].mxu0
        %4011 = vmatprep.mubr.bf16.mxu0 %v2721
        %4012 = vmatmul.mubr.bf16.gmra.mrb[0].mxu0 %v2631
        %v4013 = vpop.f32.mrb[0].mxu0
        %v4014 = vadd.f32 %v3837, %v4013
        %v4015 = vpop.f32.mrb[0].mxu0
        %v4016 = vpop.f32.mrb[0].mxu0
        %v4017 = vadd.f32 %v3840, %v4016
        %v4018 = vpop.f32.mrb[0].mxu0
        %4019 = vmatprep.mubr.bf16.mxu0 %v2722
        %4020 = vmatmul.mubr.bf16.gmra.mrb[0].mxu0 %v2632
        %v4021 = vpop.f32.mrb[0].mxu0
        %v4022 = vadd.f32 %v3845, %v4021
        %v4023 = vpop.f32.mrb[0].mxu0
        %v4024 = vpop.f32.mrb[0].mxu0
        %v4025 = vadd.f32 %v3848, %v4024
        %v4026 = vpop.f32.mrb[0].mxu0
        %4027 = vmatprep.mubr.bf16.mxu0 %v2723
        %4028 = vmatmul.mubr.bf16.gmra.mrb[0].mxu0 %v2633
        %v4029 = vpop.f32.mrb[0].mxu0
        %v4030 = vadd.f32 %v3853, %v4029
        %v4031 = vpop.f32.mrb[0].mxu0
        %v4032 = vpop.f32.mrb[0].mxu0
        %v4033 = vadd.f32 %v3856, %v4032
        %v4034 = vpop.f32.mrb[0].mxu0
        %4035 = vmatprep.mubr.bf16.mxu0 %v2724
        %4036 = vmatmul.mubr.bf16.gmra.mrb[0].mxu0 %v2634
        %v4037 = vpop.f32.mrb[0].mxu0
        %v4038 = vadd.f32 %v3861, %v4037
        %v4039 = vpop.f32.mrb[0].mxu0
        %v4040 = vpop.f32.mrb[0].mxu0
        %v4041 = vadd.f32 %v3864, %v4040
        %v4042 = vpop.f32.mrb[0].mxu0
        %4043 = vmatprep.mubr.bf16.mxu0 %v2725
        %4044 = vmatmul.mubr.bf16.gmra.mrb[0].mxu0 %v2635
        %v4045 = vpop.f32.mrb[0].mxu0
        %v4046 = vadd.f32 %v3869, %v4045
        %v4047 = vpop.f32.mrb[0].mxu0
        %v4048 = vpop.f32.mrb[0].mxu0
        %v4049 = vadd.f32 %v3872, %v4048
        %v4050 = vpop.f32.mrb[0].mxu0
        %4051 = vmatprep.mubr.bf16.mxu0 %v2726
        %4052 = vmatmul.mubr.bf16.gmra.mrb[0].mxu0 %v2636
        %v4053 = vpop.f32.mrb[0].mxu0
        %v4054 = vadd.f32 %v3877, %v4053
        %v4055 = vpop.f32.mrb[0].mxu0
        %v4056 = vpop.f32.mrb[0].mxu0
        %v4057 = vadd.f32 %v3880, %v4056
        %v4058 = vpop.f32.mrb[0].mxu0
        %4059 = vdwg.mxu0
        %4060 = vmatprep.subr.bf16.mxu0 0
        %4061 = vmatpush1.bf16.msra.mxu0 %v3594
        %4062 = vmatprep.subr.bf16.mxu0 0
        %4063 = vmatpush1.bf16.msra.mxu0 %v3595
        %4064 = vmatprep.subr.bf16.mxu0 0
        %4065 = vmatpush1.bf16.msra.mxu0 %v3596
        %4066 = vmatprep.subr.bf16.mxu0 0
        %4067 = vmatpush1.bf16.msra.mxu0 %v3597
        %4068 = vmatprep.subr.bf16.mxu0 0
        %4069 = vmatpush1.bf16.msra.mxu0 %v3598
        %4070 = vmatprep.subr.bf16.mxu0 0
        %4071 = vmatpush1.bf16.msra.mxu0 %v3599
        %4072 = vmatprep.subr.bf16.mxu0 0
        %4073 = vmatpush1.bf16.msra.mxu0 %v3600
        %4074 = vmatprep.subr.bf16.mxu0 0
        %4075 = vmatpush1.bf16.msra.mxu0 %v3601
        %4076 = vmatprep.subr.bf16.mxu0 0
        %4077 = vmatpush1.bf16.msra.mxu0 %v3602
        %4078 = vmatprep.subr.bf16.mxu0 0
        %4079 = vmatpush1.bf16.msra.mxu0 %v3603
        %4080 = vmatprep.subr.bf16.mxu0 0
        %4081 = vmatpush1.bf16.msra.mxu0 %v3604
        %4082 = vmatprep.subr.bf16.mxu0 0
        %4083 = vmatpush1.bf16.msra.mxu0 %v3605
        %4084 = vmatprep.subr.bf16.mxu0 0
        %4085 = vmatpush1.bf16.msra.mxu0 %v3606
        %4086 = vmatprep.subr.bf16.mxu0 0
        %4087 = vmatpush1.bf16.msra.mxu0 %v3607
        %4088 = vmatprep.subr.bf16.mxu0 0
        %4089 = vmatpush1.bf16.msra.mxu0 %v3608
        %4090 = vmatprep.subr.bf16.mxu0 0
        %4091 = vmatpush1.bf16.msra.mxu0 %v3609
        %4092 = vmatprep.mubr.bf16.mxu0 %v2853
        %4093 = vmatmul.mubr.bf16.gmra.mrb[0].mxu0 %v2781
        %v4094 = vpop.f32.mrb[0].mxu0
        %v4095 = vadd.f32 %v3918, %v4094
        %v4096 = vpop.f32.mrb[0].mxu0
        %v4097 = vpop.f32.mrb[0].mxu0
        %v4098 = vadd.f32 %v3921, %v4097
        %v4099 = vpop.f32.mrb[0].mxu0
        %4100 = vmatprep.mubr.bf16.mxu0 %v2854
        %4101 = vmatmul.mubr.bf16.gmra.mrb[0].mxu0 %v2782
        %v4102 = vpop.f32.mrb[0].mxu0
        %v4103 = vadd.f32 %v3926, %v4102
        %v4104 = vpop.f32.mrb[0].mxu0
        %v4105 = vpop.f32.mrb[0].mxu0
        %v4106 = vadd.f32 %v3929, %v4105
        %v4107 = vpop.f32.mrb[0].mxu0
        %4108 = vmatprep.mubr.bf16.mxu0 %v2855
        %4109 = vmatmul.mubr.bf16.gmra.mrb[0].mxu0 %v2783
        %v4110 = vpop.f32.mrb[0].mxu0
        %v4111 = vadd.f32 %v3934, %v4110
        %v4112 = vpop.f32.mrb[0].mxu0
        %v4113 = vpop.f32.mrb[0].mxu0
        %v4114 = vadd.f32 %v3937, %v4113
        %v4115 = vpop.f32.mrb[0].mxu0
        %4116 = vmatprep.mubr.bf16.mxu0 %v2856
        %4117 = vmatmul.mubr.bf16.gmra.mrb[0].mxu0 %v2784
        %v4118 = vpop.f32.mrb[0].mxu0
        %v4119 = vadd.f32 %v3942, %v4118
        %v4120 = vpop.f32.mrb[0].mxu0
        %v4121 = vpop.f32.mrb[0].mxu0
        %v4122 = vadd.f32 %v3945, %v4121
        %v4123 = vpop.f32.mrb[0].mxu0
        %4124 = vmatprep.mubr.bf16.mxu0 %v2857
        %4125 = vmatmul.mubr.bf16.gmra.mrb[0].mxu0 %v2785
        %v4126 = vpop.f32.mrb[0].mxu0
        %v4127 = vadd.f32 %v3950, %v4126
        %v4128 = vpop.f32.mrb[0].mxu0
        %v4129 = vpop.f32.mrb[0].mxu0
        %v4130 = vadd.f32 %v3953, %v4129
        %v4131 = vpop.f32.mrb[0].mxu0
        %4132 = vmatprep.mubr.bf16.mxu0 %v2858
        %4133 = vmatmul.mubr.bf16.gmra.mrb[0].mxu0 %v2786
        %v4134 = vpop.f32.mrb[0].mxu0
        %v4135 = vadd.f32 %v3958, %v4134
        %v4136 = vpop.f32.mrb[0].mxu0
        %v4137 = vpop.f32.mrb[0].mxu0
        %v4138 = vadd.f32 %v3961, %v4137
        %v4139 = vpop.f32.mrb[0].mxu0
        %4140 = vmatprep.mubr.bf16.mxu0 %v2859
        %4141 = vmatmul.mubr.bf16.gmra.mrb[0].mxu0 %v2787
        %v4142 = vpop.f32.mrb[0].mxu0
        %v4143 = vadd.f32 %v3966, %v4142
        %v4144 = vpop.f32.mrb[0].mxu0
        %v4145 = vpop.f32.mrb[0].mxu0
        %v4146 = vadd.f32 %v3969, %v4145
        %v4147 = vpop.f32.mrb[0].mxu0
        %4148 = vmatprep.mubr.bf16.mxu0 %v2860
        %4149 = vmatmul.mubr.bf16.gmra.mrb[0].mxu0 %v2788
        %v4150 = vpop.f32.mrb[0].mxu0
        %v4151 = vadd.f32 %v3974, %v4150
        %v4152 = vpop.f32.mrb[0].mxu0
        %v4153 = vpop.f32.mrb[0].mxu0
        %v4154 = vadd.f32 %v3977, %v4153
        %v4155 = vpop.f32.mrb[0].mxu0
        %4156 = vmatprep.mubr.bf16.mxu0 %v2861
        %4157 = vmatmul.mubr.bf16.gmra.mrb[0].mxu0 %v2789
        %v4158 = vpop.f32.mrb[0].mxu0
        %v4159 = vadd.f32 %v3982, %v4158
        %v4160 = vpop.f32.mrb[0].mxu0
        %v4161 = vpop.f32.mrb[0].mxu0
        %v4162 = vadd.f32 %v3985, %v4161
        %v4163 = vpop.f32.mrb[0].mxu0
        %4164 = vmatprep.mubr.bf16.mxu0 %v2862
        %4165 = vmatmul.mubr.bf16.gmra.mrb[0].mxu0 %v2790
        %v4166 = vpop.f32.mrb[0].mxu0
        %v4167 = vadd.f32 %v3990, %v4166
        %v4168 = vpop.f32.mrb[0].mxu0
        %v4169 = vpop.f32.mrb[0].mxu0
        %v4170 = vadd.f32 %v3993, %v4169
        %v4171 = vpop.f32.mrb[0].mxu0
        %4172 = vmatprep.mubr.bf16.mxu0 %v2863
        %4173 = vmatmul.mubr.bf16.gmra.mrb[0].mxu0 %v2791
        %v4174 = vpop.f32.mrb[0].mxu0
        %v4175 = vadd.f32 %v3998, %v4174
        %v4176 = vpop.f32.mrb[0].mxu0
        %v4177 = vpop.f32.mrb[0].mxu0
        %v4178 = vadd.f32 %v4001, %v4177
        %v4179 = vpop.f32.mrb[0].mxu0
        %4180 = vmatprep.mubr.bf16.mxu0 %v2864
        %4181 = vmatmul.mubr.bf16.gmra.mrb[0].mxu0 %v2792
        %v4182 = vpop.f32.mrb[0].mxu0
        %v4183 = vadd.f32 %v4006, %v4182
        %v4184 = vpop.f32.mrb[0].mxu0
        %v4185 = vpop.f32.mrb[0].mxu0
        %v4186 = vadd.f32 %v4009, %v4185
        %v4187 = vpop.f32.mrb[0].mxu0
        %4188 = vmatprep.mubr.bf16.mxu0 %v2865
        %4189 = vmatmul.mubr.bf16.gmra.mrb[0].mxu0 %v2793
        %v4190 = vpop.f32.mrb[0].mxu0
        %v4191 = vadd.f32 %v4014, %v4190
        %v4192 = vpop.f32.mrb[0].mxu0
        %v4193 = vpop.f32.mrb[0].mxu0
        %v4194 = vadd.f32 %v4017, %v4193
        %v4195 = vpop.f32.mrb[0].mxu0
        %4196 = vmatprep.mubr.bf16.mxu0 %v2866
        %4197 = vmatmul.mubr.bf16.gmra.mrb[0].mxu0 %v2794
        %v4198 = vpop.f32.mrb[0].mxu0
        %v4199 = vadd.f32 %v4022, %v4198
        %v4200 = vpop.f32.mrb[0].mxu0
        %v4201 = vpop.f32.mrb[0].mxu0
        %v4202 = vadd.f32 %v4025, %v4201
        %v4203 = vpop.f32.mrb[0].mxu0
        %4204 = vmatprep.mubr.bf16.mxu0 %v2867
        %4205 = vmatmul.mubr.bf16.gmra.mrb[0].mxu0 %v2795
        %v4206 = vpop.f32.mrb[0].mxu0
        %v4207 = vadd.f32 %v4030, %v4206
        %v4208 = vpop.f32.mrb[0].mxu0
        %v4209 = vpop.f32.mrb[0].mxu0
        %v4210 = vadd.f32 %v4033, %v4209
        %v4211 = vpop.f32.mrb[0].mxu0
        %4212 = vmatprep.mubr.bf16.mxu0 %v2868
        %4213 = vmatmul.mubr.bf16.gmra.mrb[0].mxu0 %v2796
        %v4214 = vpop.f32.mrb[0].mxu0
        %v4215 = vadd.f32 %v4038, %v4214
        %v4216 = vpop.f32.mrb[0].mxu0
        %v4217 = vpop.f32.mrb[0].mxu0
        %v4218 = vadd.f32 %v4041, %v4217
        %v4219 = vpop.f32.mrb[0].mxu0
        %4220 = vmatprep.mubr.bf16.mxu0 %v2869
        %4221 = vmatmul.mubr.bf16.gmra.mrb[0].mxu0 %v2797
        %v4222 = vpop.f32.mrb[0].mxu0
        %v4223 = vadd.f32 %v4046, %v4222
        %v4224 = vpop.f32.mrb[0].mxu0
        %v4225 = vpop.f32.mrb[0].mxu0
        %v4226 = vadd.f32 %v4049, %v4225
        %v4227 = vpop.f32.mrb[0].mxu0
        %4228 = vmatprep.mubr.bf16.mxu0 %v2870
        %4229 = vmatmul.mubr.bf16.gmra.mrb[0].mxu0 %v2798
        %v4230 = vpop.f32.mrb[0].mxu0
        %v4231 = vadd.f32 %v4054, %v4230
        %v4232 = vpop.f32.mrb[0].mxu0
        %v4233 = vpop.f32.mrb[0].mxu0
        %v4234 = vadd.f32 %v4057, %v4233
        %v4235 = vpop.f32.mrb[0].mxu0
        %4236 = vdwg.mxu0
        %4237 = vmatprep.subr.bf16.mxu0 0
        %4238 = vmatpush1.bf16.msra.mxu0 %v3610
        %4239 = vmatprep.subr.bf16.mxu0 0
        %4240 = vmatpush1.bf16.msra.mxu0 %v3611
        %4241 = vmatprep.subr.bf16.mxu0 0
        %4242 = vmatpush1.bf16.msra.mxu0 %v3612
        %4243 = vmatprep.subr.bf16.mxu0 0
        %4244 = vmatpush1.bf16.msra.mxu0 %v3613
        %4245 = vmatprep.subr.bf16.mxu0 0
        %4246 = vmatpush1.bf16.msra.mxu0 %v3614
        %4247 = vmatprep.subr.bf16.mxu0 0
        %4248 = vmatpush1.bf16.msra.mxu0 %v3615
        %4249 = vmatprep.subr.bf16.mxu0 0
        %4250 = vmatpush1.bf16.msra.mxu0 %v3616
        %4251 = vmatprep.subr.bf16.mxu0 0
        %4252 = vmatpush1.bf16.msra.mxu0 %v3617
        %4253 = vmatprep.subr.bf16.mxu0 0
        %4254 = vmatpush1.bf16.msra.mxu0 %v3618
        %4255 = vmatprep.subr.bf16.mxu0 0
        %4256 = vmatpush1.bf16.msra.mxu0 %v3619
        %4257 = vmatprep.subr.bf16.mxu0 0
        %4258 = vmatpush1.bf16.msra.mxu0 %v3620
        %4259 = vmatprep.subr.bf16.mxu0 0
        %4260 = vmatpush1.bf16.msra.mxu0 %v3621
        %4261 = vmatprep.subr.bf16.mxu0 0
        %4262 = vmatpush1.bf16.msra.mxu0 %v3622
        %4263 = vmatprep.subr.bf16.mxu0 0
        %4264 = vmatpush1.bf16.msra.mxu0 %v3623
        %4265 = vmatprep.subr.bf16.mxu0 0
        %4266 = vmatpush1.bf16.msra.mxu0 %v3624
        %4267 = vmatprep.subr.bf16.mxu0 0
        %4268 = vmatpush1.bf16.msra.mxu0 %v3625
        %4269 = vmatprep.mubr.bf16.mxu0 %v3015
        %4270 = vmatmul.mubr.bf16.gmra.mrb[0].mxu0 %v2943
        %v4271 = vpop.f32.mrb[0].mxu0
        %v4272 = vadd.f32 %v4095, %v4271
        %v4273 = vpop.f32.mrb[0].mxu0
        %v4274 = vpop.f32.mrb[0].mxu0
        %v4275 = vadd.f32 %v4098, %v4274
        %v4276 = vpop.f32.mrb[0].mxu0
        %4277 = vmatprep.mubr.bf16.mxu0 %v3016
        %4278 = vmatmul.mubr.bf16.gmra.mrb[0].mxu0 %v2944
        %v4279 = vpop.f32.mrb[0].mxu0
        %v4280 = vadd.f32 %v4103, %v4279
        %v4281 = vpop.f32.mrb[0].mxu0
        %v4282 = vpop.f32.mrb[0].mxu0
        %v4283 = vadd.f32 %v4106, %v4282
        %v4284 = vpop.f32.mrb[0].mxu0
        %4285 = vmatprep.mubr.bf16.mxu0 %v3017
        %4286 = vmatmul.mubr.bf16.gmra.mrb[0].mxu0 %v2945
        %v4287 = vpop.f32.mrb[0].mxu0
        %v4288 = vadd.f32 %v4111, %v4287
        %v4289 = vpop.f32.mrb[0].mxu0
        %v4290 = vpop.f32.mrb[0].mxu0
        %v4291 = vadd.f32 %v4114, %v4290
        %v4292 = vpop.f32.mrb[0].mxu0
        %4293 = vmatprep.mubr.bf16.mxu0 %v3018
        %4294 = vmatmul.mubr.bf16.gmra.mrb[0].mxu0 %v2946
        %v4295 = vpop.f32.mrb[0].mxu0
        %v4296 = vadd.f32 %v4119, %v4295
        %v4297 = vpop.f32.mrb[0].mxu0
        %v4298 = vpop.f32.mrb[0].mxu0
        %v4299 = vadd.f32 %v4122, %v4298
        %v4300 = vpop.f32.mrb[0].mxu0
        %4301 = vmatprep.mubr.bf16.mxu0 %v3019
        %4302 = vmatmul.mubr.bf16.gmra.mrb[0].mxu0 %v2947
        %v4303 = vpop.f32.mrb[0].mxu0
        %v4304 = vadd.f32 %v4127, %v4303
        %v4305 = vpop.f32.mrb[0].mxu0
        %v4306 = vpop.f32.mrb[0].mxu0
        %v4307 = vadd.f32 %v4130, %v4306
        %v4308 = vpop.f32.mrb[0].mxu0
        %4309 = vmatprep.mubr.bf16.mxu0 %v3020
        %4310 = vmatmul.mubr.bf16.gmra.mrb[0].mxu0 %v2948
        %v4311 = vpop.f32.mrb[0].mxu0
        %v4312 = vadd.f32 %v4135, %v4311
        %v4313 = vpop.f32.mrb[0].mxu0
        %v4314 = vpop.f32.mrb[0].mxu0
        %v4315 = vadd.f32 %v4138, %v4314
        %v4316 = vpop.f32.mrb[0].mxu0
        %4317 = vmatprep.mubr.bf16.mxu0 %v3021
        %4318 = vmatmul.mubr.bf16.gmra.mrb[0].mxu0 %v2949
        %v4319 = vpop.f32.mrb[0].mxu0
        %v4320 = vadd.f32 %v4143, %v4319
        %v4321 = vpop.f32.mrb[0].mxu0
        %v4322 = vpop.f32.mrb[0].mxu0
        %v4323 = vadd.f32 %v4146, %v4322
        %v4324 = vpop.f32.mrb[0].mxu0
        %4325 = vmatprep.mubr.bf16.mxu0 %v3022
        %4326 = vmatmul.mubr.bf16.gmra.mrb[0].mxu0 %v2950
        %v4327 = vpop.f32.mrb[0].mxu0
        %v4328 = vadd.f32 %v4151, %v4327
        %v4329 = vpop.f32.mrb[0].mxu0
        %v4330 = vpop.f32.mrb[0].mxu0
        %v4331 = vadd.f32 %v4154, %v4330
        %v4332 = vpop.f32.mrb[0].mxu0
        %4333 = vmatprep.mubr.bf16.mxu0 %v3023
        %4334 = vmatmul.mubr.bf16.gmra.mrb[0].mxu0 %v2951
        %v4335 = vpop.f32.mrb[0].mxu0
        %v4336 = vadd.f32 %v4159, %v4335
        %v4337 = vpop.f32.mrb[0].mxu0
        %v4338 = vpop.f32.mrb[0].mxu0
        %v4339 = vadd.f32 %v4162, %v4338
        %v4340 = vpop.f32.mrb[0].mxu0
        %4341 = vmatprep.mubr.bf16.mxu0 %v3024
        %4342 = vmatmul.mubr.bf16.gmra.mrb[0].mxu0 %v2952
        %v4343 = vpop.f32.mrb[0].mxu0
        %v4344 = vadd.f32 %v4167, %v4343
        %v4345 = vpop.f32.mrb[0].mxu0
        %v4346 = vpop.f32.mrb[0].mxu0
        %v4347 = vadd.f32 %v4170, %v4346
        %v4348 = vpop.f32.mrb[0].mxu0
        %4349 = vmatprep.mubr.bf16.mxu0 %v3025
        %4350 = vmatmul.mubr.bf16.gmra.mrb[0].mxu0 %v2953
        %v4351 = vpop.f32.mrb[0].mxu0
        %v4352 = vadd.f32 %v4175, %v4351
        %v4353 = vpop.f32.mrb[0].mxu0
        %v4354 = vpop.f32.mrb[0].mxu0
        %v4355 = vadd.f32 %v4178, %v4354
        %v4356 = vpop.f32.mrb[0].mxu0
        %4357 = vmatprep.mubr.bf16.mxu0 %v3026
        %4358 = vmatmul.mubr.bf16.gmra.mrb[0].mxu0 %v2954
        %v4359 = vpop.f32.mrb[0].mxu0
        %v4360 = vadd.f32 %v4183, %v4359
        %v4361 = vpop.f32.mrb[0].mxu0
        %v4362 = vpop.f32.mrb[0].mxu0
        %v4363 = vadd.f32 %v4186, %v4362
        %v4364 = vpop.f32.mrb[0].mxu0
        %4365 = vmatprep.mubr.bf16.mxu0 %v3027
        %4366 = vmatmul.mubr.bf16.gmra.mrb[0].mxu0 %v2955
        %v4367 = vpop.f32.mrb[0].mxu0
        %v4368 = vadd.f32 %v4191, %v4367
        %v4369 = vpop.f32.mrb[0].mxu0
        %v4370 = vpop.f32.mrb[0].mxu0
        %v4371 = vadd.f32 %v4194, %v4370
        %v4372 = vpop.f32.mrb[0].mxu0
        %4373 = vmatprep.mubr.bf16.mxu0 %v3028
        %4374 = vmatmul.mubr.bf16.gmra.mrb[0].mxu0 %v2956
        %v4375 = vpop.f32.mrb[0].mxu0
        %v4376 = vadd.f32 %v4199, %v4375
        %v4377 = vpop.f32.mrb[0].mxu0
        %v4378 = vpop.f32.mrb[0].mxu0
        %v4379 = vadd.f32 %v4202, %v4378
        %v4380 = vpop.f32.mrb[0].mxu0
        %4381 = vmatprep.mubr.bf16.mxu0 %v3029
        %4382 = vmatmul.mubr.bf16.gmra.mrb[0].mxu0 %v2957
        %v4383 = vpop.f32.mrb[0].mxu0
        %v4384 = vadd.f32 %v4207, %v4383
        %v4385 = vpop.f32.mrb[0].mxu0
        %v4386 = vpop.f32.mrb[0].mxu0
        %v4387 = vadd.f32 %v4210, %v4386
        %v4388 = vpop.f32.mrb[0].mxu0
        %4389 = vmatprep.mubr.bf16.mxu0 %v3030
        %4390 = vmatmul.mubr.bf16.gmra.mrb[0].mxu0 %v2958
        %v4391 = vpop.f32.mrb[0].mxu0
        %v4392 = vadd.f32 %v4215, %v4391
        %v4393 = vpop.f32.mrb[0].mxu0
        %v4394 = vpop.f32.mrb[0].mxu0
        %v4395 = vadd.f32 %v4218, %v4394
        %v4396 = vpop.f32.mrb[0].mxu0
        %4397 = vmatprep.mubr.bf16.mxu0 %v3031
        %4398 = vmatmul.mubr.bf16.gmra.mrb[0].mxu0 %v2959
        %v4399 = vpop.f32.mrb[0].mxu0
        %v4400 = vadd.f32 %v4223, %v4399
        %v4401 = vpop.f32.mrb[0].mxu0
        %v4402 = vpop.f32.mrb[0].mxu0
        %v4403 = vadd.f32 %v4226, %v4402
        %v4404 = vpop.f32.mrb[0].mxu0
        %4405 = vmatprep.mubr.bf16.mxu0 %v3032
        %4406 = vmatmul.mubr.bf16.gmra.mrb[0].mxu0 %v2960
        %v4407 = vpop.f32.mrb[0].mxu0
        %v4408 = vadd.f32 %v4231, %v4407
        %v4409 = vpop.f32.mrb[0].mxu0
        %v4410 = vpop.f32.mrb[0].mxu0
        %v4411 = vadd.f32 %v4234, %v4410
        %v4412 = vpop.f32.mrb[0].mxu0
        %4413 = vdwg.mxu0
        %4414 = vmatprep.subr.bf16.mxu0 0
        %4415 = vmatpush1.bf16.msra.mxu0 %v3626
        %4416 = vmatprep.subr.bf16.mxu0 0
        %4417 = vmatpush1.bf16.msra.mxu0 %v3627
        %4418 = vmatprep.subr.bf16.mxu0 0
        %4419 = vmatpush1.bf16.msra.mxu0 %v3628
        %4420 = vmatprep.subr.bf16.mxu0 0
        %4421 = vmatpush1.bf16.msra.mxu0 %v3629
        %4422 = vmatprep.subr.bf16.mxu0 0
        %4423 = vmatpush1.bf16.msra.mxu0 %v3630
        %4424 = vmatprep.subr.bf16.mxu0 0
        %4425 = vmatpush1.bf16.msra.mxu0 %v3631
        %4426 = vmatprep.subr.bf16.mxu0 0
        %4427 = vmatpush1.bf16.msra.mxu0 %v3632
        %4428 = vmatprep.subr.bf16.mxu0 0
        %4429 = vmatpush1.bf16.msra.mxu0 %v3633
        %4430 = vmatprep.subr.bf16.mxu0 0
        %4431 = vmatpush1.bf16.msra.mxu0 0
        %4432 = vmatprep.subr.bf16.mxu0 0
        %4433 = vmatpush1.bf16.msra.mxu0 0
        %4434 = vmatprep.subr.bf16.mxu0 0
        %4435 = vmatpush1.bf16.msra.mxu0 0
        %4436 = vmatprep.subr.bf16.mxu0 0
        %4437 = vmatpush1.bf16.msra.mxu0 0
        %4438 = vmatprep.subr.bf16.mxu0 0
        %4439 = vmatpush1.bf16.msra.mxu0 0
        %4440 = vmatprep.subr.bf16.mxu0 0
        %4441 = vmatpush1.bf16.msra.mxu0 0
        %4442 = vmatprep.subr.bf16.mxu0 0
        %4443 = vmatpush1.bf16.msra.mxu0 0
        %4444 = vmatprep.subr.bf16.mxu0 0
        %4445 = vmatpush1.bf16.msra.mxu0 0
        %4446 = vmatprep.mubr.bf16.mxu0 0
        %4447 = vmatmul.mubr.bf16.gmra.mrb[0].mxu0 %v3087
        %v4448 = vpop.f32.mrb[0].mxu0
        %v4449 = vadd.f32 %v4272, %v4448
        %v4450 = vpop.f32.mrb[0].mxu0
        %v4451 = vpop.f32.mrb[0].mxu0
        %v4452 = vadd.f32 %v4275, %v4451
        %v4453 = vpop.f32.mrb[0].mxu0
        %4454 = vmatprep.mubr.bf16.mxu0 0
        %4455 = vmatmul.mubr.bf16.gmra.mrb[0].mxu0 %v3088
        %v4456 = vpop.f32.mrb[0].mxu0
        %v4457 = vadd.f32 %v4280, %v4456
        %v4458 = vpop.f32.mrb[0].mxu0
        %v4459 = vpop.f32.mrb[0].mxu0
        %v4460 = vadd.f32 %v4283, %v4459
        %v4461 = vpop.f32.mrb[0].mxu0
        %4462 = vmatprep.mubr.bf16.mxu0 0
        %4463 = vmatmul.mubr.bf16.gmra.mrb[0].mxu0 %v3089
        %v4464 = vpop.f32.mrb[0].mxu0
        %v4465 = vadd.f32 %v4288, %v4464
        %v4466 = vpop.f32.mrb[0].mxu0
        %v4467 = vpop.f32.mrb[0].mxu0
        %v4468 = vadd.f32 %v4291, %v4467
        %v4469 = vpop.f32.mrb[0].mxu0
        %4470 = vmatprep.mubr.bf16.mxu0 0
        %4471 = vmatmul.mubr.bf16.gmra.mrb[0].mxu0 %v3090
        %v4472 = vpop.f32.mrb[0].mxu0
        %v4473 = vadd.f32 %v4296, %v4472
        %v4474 = vpop.f32.mrb[0].mxu0
        %v4475 = vpop.f32.mrb[0].mxu0
        %v4476 = vadd.f32 %v4299, %v4475
        %v4477 = vpop.f32.mrb[0].mxu0
        %4478 = vmatprep.mubr.bf16.mxu0 0
        %4479 = vmatmul.mubr.bf16.gmra.mrb[0].mxu0 %v3091
        %v4480 = vpop.f32.mrb[0].mxu0
        %v4481 = vadd.f32 %v4304, %v4480
        %v4482 = vpop.f32.mrb[0].mxu0
        %v4483 = vpop.f32.mrb[0].mxu0
        %v4484 = vadd.f32 %v4307, %v4483
        %v4485 = vpop.f32.mrb[0].mxu0
        %4486 = vmatprep.mubr.bf16.mxu0 0
        %4487 = vmatmul.mubr.bf16.gmra.mrb[0].mxu0 %v3092
        %v4488 = vpop.f32.mrb[0].mxu0
        %v4489 = vadd.f32 %v4312, %v4488
        %v4490 = vpop.f32.mrb[0].mxu0
        %v4491 = vpop.f32.mrb[0].mxu0
        %v4492 = vadd.f32 %v4315, %v4491
        %v4493 = vpop.f32.mrb[0].mxu0
        %4494 = vmatprep.mubr.bf16.mxu0 0
        %4495 = vmatmul.mubr.bf16.gmra.mrb[0].mxu0 %v3093
        %v4496 = vpop.f32.mrb[0].mxu0
        %v4497 = vadd.f32 %v4320, %v4496
        %v4498 = vpop.f32.mrb[0].mxu0
        %v4499 = vpop.f32.mrb[0].mxu0
        %v4500 = vadd.f32 %v4323, %v4499
        %v4501 = vpop.f32.mrb[0].mxu0
        %4502 = vmatprep.mubr.bf16.mxu0 0
        %4503 = vmatmul.mubr.bf16.gmra.mrb[0].mxu0 %v3094
        %v4504 = vpop.f32.mrb[0].mxu0
        %v4505 = vadd.f32 %v4328, %v4504
        %v4506 = vpop.f32.mrb[0].mxu0
        %v4507 = vpop.f32.mrb[0].mxu0
        %v4508 = vadd.f32 %v4331, %v4507
        %v4509 = vpop.f32.mrb[0].mxu0
        %4510 = vmatprep.mubr.bf16.mxu0 0
        %4511 = vmatmul.mubr.bf16.gmra.mrb[0].mxu0 %v3095
        %v4512 = vpop.f32.mrb[0].mxu0
        %v4513 = vadd.f32 %v4336, %v4512
        %v4514 = vpop.f32.mrb[0].mxu0
        %v4515 = vpop.f32.mrb[0].mxu0
        %v4516 = vadd.f32 %v4339, %v4515
        %v4517 = vpop.f32.mrb[0].mxu0
        %4518 = vmatprep.mubr.bf16.mxu0 0
        %4519 = vmatmul.mubr.bf16.gmra.mrb[0].mxu0 %v3096
        %v4520 = vpop.f32.mrb[0].mxu0
        %v4521 = vadd.f32 %v4344, %v4520
        %v4522 = vpop.f32.mrb[0].mxu0
        %v4523 = vpop.f32.mrb[0].mxu0
        %v4524 = vadd.f32 %v4347, %v4523
        %v4525 = vpop.f32.mrb[0].mxu0
        %4526 = vmatprep.mubr.bf16.mxu0 0
        %4527 = vmatmul.mubr.bf16.gmra.mrb[0].mxu0 %v3097
        %v4528 = vpop.f32.mrb[0].mxu0
        %v4529 = vadd.f32 %v4352, %v4528
        %v4530 = vpop.f32.mrb[0].mxu0
        %v4531 = vpop.f32.mrb[0].mxu0
        %v4532 = vadd.f32 %v4355, %v4531
        %v4533 = vpop.f32.mrb[0].mxu0
        %4534 = vmatprep.mubr.bf16.mxu0 0
        %4535 = vmatmul.mubr.bf16.gmra.mrb[0].mxu0 %v3098
        %v4536 = vpop.f32.mrb[0].mxu0
        %v4537 = vadd.f32 %v4360, %v4536
        %v4538 = vpop.f32.mrb[0].mxu0
        %v4539 = vpop.f32.mrb[0].mxu0
        %v4540 = vadd.f32 %v4363, %v4539
        %v4541 = vpop.f32.mrb[0].mxu0
        %4542 = vmatprep.mubr.bf16.mxu0 0
        %4543 = vmatmul.mubr.bf16.gmra.mrb[0].mxu0 %v3099
        %v4544 = vpop.f32.mrb[0].mxu0
        %v4545 = vadd.f32 %v4368, %v4544
        %v4546 = vpop.f32.mrb[0].mxu0
        %v4547 = vpop.f32.mrb[0].mxu0
        %v4548 = vadd.f32 %v4371, %v4547
        %v4549 = vpop.f32.mrb[0].mxu0
        %4550 = vmatprep.mubr.bf16.mxu0 0
        %4551 = vmatmul.mubr.bf16.gmra.mrb[0].mxu0 %v3100
        %v4552 = vpop.f32.mrb[0].mxu0
        %v4553 = vadd.f32 %v4376, %v4552
        %v4554 = vpop.f32.mrb[0].mxu0
        %v4555 = vpop.f32.mrb[0].mxu0
        %v4556 = vadd.f32 %v4379, %v4555
        %v4557 = vpop.f32.mrb[0].mxu0
        %4558 = vmatprep.mubr.bf16.mxu0 0
        %4559 = vmatmul.mubr.bf16.gmra.mrb[0].mxu0 %v3101
        %v4560 = vpop.f32.mrb[0].mxu0
        %v4561 = vadd.f32 %v4384, %v4560
        %v4562 = vpop.f32.mrb[0].mxu0
        %v4563 = vpop.f32.mrb[0].mxu0
        %v4564 = vadd.f32 %v4387, %v4563
        %v4565 = vpop.f32.mrb[0].mxu0
        %4566 = vmatprep.mubr.bf16.mxu0 0
        %4567 = vmatmul.mubr.bf16.gmra.mrb[0].mxu0 %v3102
        %v4568 = vpop.f32.mrb[0].mxu0
        %v4569 = vadd.f32 %v4392, %v4568
        %v4570 = vpop.f32.mrb[0].mxu0
        %v4571 = vpop.f32.mrb[0].mxu0
        %v4572 = vadd.f32 %v4395, %v4571
        %v4573 = vpop.f32.mrb[0].mxu0
        %4574 = vmatprep.mubr.bf16.mxu0 0
        %4575 = vmatmul.mubr.bf16.gmra.mrb[0].mxu0 %v3103
        %v4576 = vpop.f32.mrb[0].mxu0
        %v4577 = vadd.f32 %v4400, %v4576
        %v4578 = vpop.f32.mrb[0].mxu0
        %v4579 = vpop.f32.mrb[0].mxu0
        %v4580 = vadd.f32 %v4403, %v4579
        %v4581 = vpop.f32.mrb[0].mxu0
        %4582 = vmatprep.mubr.bf16.mxu0 0
        %4583 = vmatmul.mubr.bf16.gmra.mrb[0].mxu0 %v3104
        %v4584 = vpop.f32.mrb[0].mxu0
        %v4585 = vadd.f32 %v4408, %v4584
        %v4586 = vpop.f32.mrb[0].mxu0
        %v4587 = vpop.f32.mrb[0].mxu0
        %v4588 = vadd.f32 %v4411, %v4587
        %v4589 = vpop.f32.mrb[0].mxu0
        %4590 = vdwg.mxu0
        %vm4591 = vcmp.ge.f32.partialorder %v4449, 0.0
        %vm4592 = vcmp.ge.f32.partialorder %v4452, 0.0
        %vm4593 = vcmp.ge.f32.partialorder %v4457, 0.0
        %vm4594 = vcmp.ge.f32.partialorder %v4460, 0.0
        %vm4595 = vcmp.ge.f32.partialorder %v4465, 0.0
        %vm4596 = vcmp.ge.f32.partialorder %v4468, 0.0
        %vm4597 = vcmp.ge.f32.partialorder %v4473, 0.0
        %vm4598 = vcmp.ge.f32.partialorder %v4476, 0.0
        %vm4599 = vcmp.ge.f32.partialorder %v4481, 0.0
        %vm4600 = vcmp.ge.f32.partialorder %v4484, 0.0
        %vm4601 = vcmp.ge.f32.partialorder %v4489, 0.0
        %vm4602 = vcmp.ge.f32.partialorder %v4492, 0.0
        %vm4603 = vcmp.ge.f32.partialorder %v4497, 0.0
        %vm4604 = vcmp.ge.f32.partialorder %v4500, 0.0
        %vm4605 = vcmp.ge.f32.partialorder %v4505, 0.0
        %vm4606 = vcmp.ge.f32.partialorder %v4508, 0.0
        %vm4607 = vcmp.ge.f32.partialorder %v4513, 0.0
        %vm4608 = vcmp.ge.f32.partialorder %v4516, 0.0
        %vm4609 = vcmp.ge.f32.partialorder %v4521, 0.0
        %vm4610 = vcmp.ge.f32.partialorder %v4524, 0.0
        %vm4611 = vcmp.ge.f32.partialorder %v4529, 0.0
        %vm4612 = vcmp.ge.f32.partialorder %v4532, 0.0
        %vm4613 = vcmp.ge.f32.partialorder %v4537, 0.0
        %vm4614 = vcmp.ge.f32.partialorder %v4540, 0.0
        %vm4615 = vcmp.ge.f32.partialorder %v4545, 0.0
        %vm4616 = vcmp.ge.f32.partialorder %v4548, 0.0
        %vm4617 = vcmp.ge.f32.partialorder %v4553, 0.0
        %vm4618 = vcmp.ge.f32.partialorder %v4556, 0.0
        %vm4619 = vcmp.ge.f32.partialorder %v4561, 0.0
        %vm4620 = vcmp.ge.f32.partialorder %v4564, 0.0
        %vm4621 = vcmp.ge.f32.partialorder %v4569, 0.0
        %vm4622 = vcmp.ge.f32.partialorder %v4572, 0.0
        %vm4623 = vcmp.ge.f32.partialorder %v4577, 0.0
        %vm4624 = vcmp.ge.f32.partialorder %v4580, 0.0
        %vm4625 = vcmp.ge.f32.partialorder %v4585, 0.0
        %vm4626 = vcmp.ge.f32.partialorder %v4588, 0.0
        %v4627 = vmul.f32 %v4449, 0.2
        %v4628 = vmul.f32 %v4452, 0.2
        %v4629 = vmul.f32 %v4457, 0.2
        %v4630 = vmul.f32 %v4460, 0.2
        %v4631 = vmul.f32 %v4465, 0.2
        %v4632 = vmul.f32 %v4468, 0.2
        %v4633 = vmul.f32 %v4473, 0.2
        %v4634 = vmul.f32 %v4476, 0.2
        %v4635 = vmul.f32 %v4481, 0.2
        %v4636 = vmul.f32 %v4484, 0.2
        %v4637 = vmul.f32 %v4489, 0.2
        %v4638 = vmul.f32 %v4492, 0.2
        %v4639 = vmul.f32 %v4497, 0.2
        %v4640 = vmul.f32 %v4500, 0.2
        %v4641 = vmul.f32 %v4505, 0.2
        %v4642 = vmul.f32 %v4508, 0.2
        %v4643 = vmul.f32 %v4513, 0.2
        %v4644 = vmul.f32 %v4516, 0.2
        %v4645 = vmul.f32 %v4521, 0.2
        %v4646 = vmul.f32 %v4524, 0.2
        %v4647 = vmul.f32 %v4529, 0.2
        %v4648 = vmul.f32 %v4532, 0.2
        %v4649 = vmul.f32 %v4537, 0.2
        %v4650 = vmul.f32 %v4540, 0.2
        %v4651 = vmul.f32 %v4545, 0.2
        %v4652 = vmul.f32 %v4548, 0.2
        %v4653 = vmul.f32 %v4553, 0.2
        %v4654 = vmul.f32 %v4556, 0.2
        %v4655 = vmul.f32 %v4561, 0.2
        %v4656 = vmul.f32 %v4564, 0.2
        %v4657 = vmul.f32 %v4569, 0.2
        %v4658 = vmul.f32 %v4572, 0.2
        %v4659 = vmul.f32 %v4577, 0.2
        %v4660 = vmul.f32 %v4580, 0.2
        %v4661 = vmul.f32 %v4585, 0.2
        %v4662 = vmul.f32 %v4588, 0.2
        %v4663 = vsel %vm4591, %v4449, %v4627
        %v4664 = vsel %vm4592, %v4452, %v4628
        %v4665 = vsel %vm4593, %v4457, %v4629
        %v4666 = vsel %vm4594, %v4460, %v4630
        %v4667 = vsel %vm4595, %v4465, %v4631
        %v4668 = vsel %vm4596, %v4468, %v4632
        %v4669 = vsel %vm4597, %v4473, %v4633
        %v4670 = vsel %vm4598, %v4476, %v4634
        %v4671 = vsel %vm4599, %v4481, %v4635
        %v4672 = vsel %vm4600, %v4484, %v4636
        %v4673 = vsel %vm4601, %v4489, %v4637
        %v4674 = vsel %vm4602, %v4492, %v4638
        %v4675 = vsel %vm4603, %v4497, %v4639
        %v4676 = vsel %vm4604, %v4500, %v4640
        %v4677 = vsel %vm4605, %v4505, %v4641
        %v4678 = vsel %vm4606, %v4508, %v4642
        %v4679 = vsel %vm4607, %v4513, %v4643
        %v4680 = vsel %vm4608, %v4516, %v4644
        %v4681 = vsel %vm4609, %v4521, %v4645
        %v4682 = vsel %vm4610, %v4524, %v4646
        %v4683 = vsel %vm4611, %v4529, %v4647
        %v4684 = vsel %vm4612, %v4532, %v4648
        %v4685 = vsel %vm4613, %v4537, %v4649
        %v4686 = vsel %vm4614, %v4540, %v4650
        %v4687 = vsel %vm4615, %v4545, %v4651
        %v4688 = vsel %vm4616, %v4548, %v4652
        %v4689 = vsel %vm4617, %v4553, %v4653
        %v4690 = vsel %vm4618, %v4556, %v4654
        %v4691 = vsel %vm4619, %v4561, %v4655
        %v4692 = vsel %vm4620, %v4564, %v4656
        %v4693 = vsel %vm4621, %v4569, %v4657
        %v4694 = vsel %vm4622, %v4572, %v4658
        %v4695 = vsel %vm4623, %v4577, %v4659
        %v4696 = vsel %vm4624, %v4580, %v4660
        %v4697 = vsel %vm4625, %v4585, %v4661
        %v4698 = vsel %vm4626, %v4588, %v4662
        %v4699 = vpack.c.bf16 %v4664, %v4663
        %v4700 = vpack.c.bf16 %v4666, %v4665
        %v4701 = vpack.c.bf16 %v4668, %v4667
        %v4702 = vpack.c.bf16 %v4670, %v4669
        %v4703 = vpack.c.bf16 %v4672, %v4671
        %v4704 = vpack.c.bf16 %v4674, %v4673
        %v4705 = vpack.c.bf16 %v4676, %v4675
        %v4706 = vpack.c.bf16 %v4678, %v4677
        %v4707 = vpack.c.bf16 %v4680, %v4679
        %v4708 = vpack.c.bf16 %v4682, %v4681
        %v4709 = vpack.c.bf16 %v4684, %v4683
        %v4710 = vpack.c.bf16 %v4686, %v4685
        %v4711 = vpack.c.bf16 %v4688, %v4687
        %v4712 = vpack.c.bf16 %v4690, %v4689
        %v4713 = vpack.c.bf16 %v4692, %v4691
        %v4714 = vpack.c.bf16 %v4694, %v4693
        %v4715 = vpack.c.bf16 %v4696, %v4695
        %v4716 = vpack.c.bf16 %v4698, %v4697
        %vm4717 = vcmask 1040384
        %vm4718 = vsmask.f32 256
        %vm4719 = vmand %vm4717, %vm4718
        %v4720 = vld [vmem:[#allocation2] sm:$0x1]
        %v4721 = vsel %vm4719, 0, %v4720
        %4722 = vst [vmem:[#allocation2] sm:$0x1] %v4721
        %v4723 = vld [vmem:[#allocation2 + $0xc] sm:$0x1]
        %v4724 = vsel %vm4719, 0, %v4723
        %4725 = vst [vmem:[#allocation2 + $0xc] sm:$0x1] %v4724
        %v4726 = vld [vmem:[#allocation2 + $0x18] sm:$0x1]
        %v4727 = vsel %vm4719, 0, %v4726
        %4728 = vst [vmem:[#allocation2 + $0x18] sm:$0x1] %v4727
        %v4729 = vld [vmem:[#allocation2 + $0x24] sm:$0x1]
        %v4730 = vsel %vm4719, 0, %v4729
        %4731 = vst [vmem:[#allocation2 + $0x24] sm:$0x1] %v4730
        %v4732 = vld [vmem:[#allocation2 + $0x30] sm:$0x1]
        %v4733 = vsel %vm4719, 0, %v4732
        %4734 = vst [vmem:[#allocation2 + $0x30] sm:$0x1] %v4733
        %v4735 = vld [vmem:[#allocation2 + $0x3c] sm:$0x1]
        %v4736 = vsel %vm4719, 0, %v4735
        %4737 = vst [vmem:[#allocation2 + $0x3c] sm:$0x1] %v4736
        %v4738 = vld [vmem:[#allocation2 + $0x48] sm:$0x1]
        %v4739 = vsel %vm4719, 0, %v4738
        %4740 = vst [vmem:[#allocation2 + $0x48] sm:$0x1] %v4739
        %v4741 = vld [vmem:[#allocation2 + $0x54] sm:$0x1]
        %v4742 = vsel %vm4719, 0, %v4741
        %4743 = vst [vmem:[#allocation2 + $0x54] sm:$0x1] %v4742
        %v4744 = vld [vmem:[#allocation2 + $0x60] sm:$0x1]
        %v4745 = vsel %vm4719, 0, %v4744
        %4746 = vst [vmem:[#allocation2 + $0x60] sm:$0x1] %v4745
        %v4747 = vld [vmem:[#allocation2 + $0x6c] sm:$0x1]
        %v4748 = vsel %vm4719, 0, %v4747
        %4749 = vst [vmem:[#allocation2 + $0x6c] sm:$0x1] %v4748
        %v4750 = vld [vmem:[#allocation2 + $0x78] sm:$0x1]
        %v4751 = vsel %vm4719, 0, %v4750
        %4752 = vst [vmem:[#allocation2 + $0x78] sm:$0x1] %v4751
        %v4753 = vld [vmem:[#allocation2 + $0x84] sm:$0x1]
        %v4754 = vsel %vm4719, 0, %v4753
        %4755 = vst [vmem:[#allocation2 + $0x84] sm:$0x1] %v4754
        %v4756 = vld [vmem:[#allocation2 + $0x90] sm:$0x1]
        %v4757 = vsel %vm4719, 0, %v4756
        %4758 = vst [vmem:[#allocation2 + $0x90] sm:$0x1] %v4757
        %v4759 = vld [vmem:[#allocation2 + $0x9c] sm:$0x1]
        %v4760 = vsel %vm4719, 0, %v4759
        %4761 = vst [vmem:[#allocation2 + $0x9c] sm:$0x1] %v4760
        %v4762 = vld [vmem:[#allocation2 + $0xa8] sm:$0x1]
        %v4763 = vsel %vm4719, 0, %v4762
        %4764 = vst [vmem:[#allocation2 + $0xa8] sm:$0x1] %v4763
        %v4765 = vld [vmem:[#allocation2 + $0xb4] sm:$0x1]
        %v4766 = vsel %vm4719, 0, %v4765
        %4767 = vst [vmem:[#allocation2 + $0xb4] sm:$0x1] %v4766
        %v4768 = vld [vmem:[#allocation2 + $0xc0] sm:$0x1]
        %v4769 = vsel %vm4719, 0, %v4768
        %4770 = vst [vmem:[#allocation2 + $0xc0] sm:$0x1] %v4769
        %v4771 = vld [vmem:[#allocation2 + $0xcc] sm:$0x1]
        %v4772 = vsel %vm4719, 0, %v4771
        %4773 = vst [vmem:[#allocation2 + $0xcc] sm:$0x1] %v4772
        %vm4774 = vsmask.f32 7938
        %vm4775 = vmand %vm4717, %vm4774
        %v4776 = vld [vmem:[#allocation2 + $0x8] sm:$0x1]
        %v4777 = vsel %vm4775, 0, %v4776
        %4778 = vst [vmem:[#allocation2 + $0x8] sm:$0x1] %v4777
        %v4779 = vld [vmem:[#allocation2 + $0x14] sm:$0x1]
        %v4780 = vsel %vm4775, 0, %v4779
        %4781 = vst [vmem:[#allocation2 + $0x14] sm:$0x1] %v4780
        %v4782 = vld [vmem:[#allocation2 + $0x20] sm:$0x1]
        %v4783 = vsel %vm4775, 0, %v4782
        %4784 = vst [vmem:[#allocation2 + $0x20] sm:$0x1] %v4783
        %v4785 = vld [vmem:[#allocation2 + $0x2c] sm:$0x1]
        %v4786 = vsel %vm4775, 0, %v4785
        %4787 = vst [vmem:[#allocation2 + $0x2c] sm:$0x1] %v4786
        %v4788 = vld [vmem:[#allocation2 + $0x38] sm:$0x1]
        %v4789 = vsel %vm4775, 0, %v4788
        %4790 = vst [vmem:[#allocation2 + $0x38] sm:$0x1] %v4789
        %v4791 = vld [vmem:[#allocation2 + $0x44] sm:$0x1]
        %v4792 = vsel %vm4775, 0, %v4791
        %4793 = vst [vmem:[#allocation2 + $0x44] sm:$0x1] %v4792
        %v4794 = vld [vmem:[#allocation2 + $0x50] sm:$0x1]
        %v4795 = vsel %vm4775, 0, %v4794
        %4796 = vst [vmem:[#allocation2 + $0x50] sm:$0x1] %v4795
        %v4797 = vld [vmem:[#allocation2 + $0x5c] sm:$0x1]
        %v4798 = vsel %vm4775, 0, %v4797
        %4799 = vst [vmem:[#allocation2 + $0x5c] sm:$0x1] %v4798
        %v4800 = vld [vmem:[#allocation2 + $0x68] sm:$0x1]
        %v4801 = vsel %vm4775, 0, %v4800
        %4802 = vst [vmem:[#allocation2 + $0x68] sm:$0x1] %v4801
        %v4803 = vld [vmem:[#allocation2 + $0x74] sm:$0x1]
        %v4804 = vsel %vm4775, 0, %v4803
        %4805 = vst [vmem:[#allocation2 + $0x74] sm:$0x1] %v4804
        %v4806 = vld [vmem:[#allocation2 + $0x80] sm:$0x1]
        %v4807 = vsel %vm4775, 0, %v4806
        %4808 = vst [vmem:[#allocation2 + $0x80] sm:$0x1] %v4807
        %v4809 = vld [vmem:[#allocation2 + $0x8c] sm:$0x1]
        %v4810 = vsel %vm4775, 0, %v4809
        %4811 = vst [vmem:[#allocation2 + $0x8c] sm:$0x1] %v4810
        %v4812 = vld [vmem:[#allocation2 + $0x98] sm:$0x1]
        %v4813 = vsel %vm4775, 0, %v4812
        %4814 = vst [vmem:[#allocation2 + $0x98] sm:$0x1] %v4813
        %v4815 = vld [vmem:[#allocation2 + $0xa4] sm:$0x1]
        %v4816 = vsel %vm4775, 0, %v4815
        %4817 = vst [vmem:[#allocation2 + $0xa4] sm:$0x1] %v4816
        %v4818 = vld [vmem:[#allocation2 + $0xb0] sm:$0x1]
        %v4819 = vsel %vm4775, 0, %v4818
        %4820 = vst [vmem:[#allocation2 + $0xb0] sm:$0x1] %v4819
        %v4821 = vld [vmem:[#allocation2 + $0xbc] sm:$0x1]
        %v4822 = vsel %vm4775, 0, %v4821
        %4823 = vst [vmem:[#allocation2 + $0xbc] sm:$0x1] %v4822
        %v4824 = vld [vmem:[#allocation2 + $0xc8] sm:$0x1]
        %v4825 = vsel %vm4775, 0, %v4824
        %4826 = vst [vmem:[#allocation2 + $0xc8] sm:$0x1] %v4825
        %v4827 = vld [vmem:[#allocation2 + $0xd4] sm:$0x1]
        %v4828 = vsel %vm4775, 0, %v4827
        %4829 = vst [vmem:[#allocation2 + $0xd4] sm:$0x1] %v4828
        %v4848 = vunpack.c.l.b16 %v4699
        %v4849 = vunpack.c.h.b16 %v4699
        %v4850 = vunpack.c.l.b16 %v4700
        %v4851 = vunpack.c.h.b16 %v4700
        %v4852 = vunpack.c.l.b16 %v4701
        %v4853 = vunpack.c.h.b16 %v4701
        %v4854 = vunpack.c.l.b16 %v4702
        %v4855 = vunpack.c.h.b16 %v4702
        %v4856 = vunpack.c.l.b16 %v4703
        %v4857 = vunpack.c.h.b16 %v4703
        %v4858 = vunpack.c.l.b16 %v4704
        %v4859 = vunpack.c.h.b16 %v4704
        %v4860 = vunpack.c.l.b16 %v4705
        %v4861 = vunpack.c.h.b16 %v4705
        %v4862 = vunpack.c.l.b16 %v4706
        %v4863 = vunpack.c.h.b16 %v4706
        %v4864 = vunpack.c.l.b16 %v4707
        %v4865 = vunpack.c.h.b16 %v4707
        %v4866 = vunpack.c.l.b16 %v4708
        %v4867 = vunpack.c.h.b16 %v4708
        %v4868 = vunpack.c.l.b16 %v4709
        %v4869 = vunpack.c.h.b16 %v4709
        %v4870 = vunpack.c.l.b16 %v4710
        %v4871 = vunpack.c.h.b16 %v4710
        %v4872 = vunpack.c.l.b16 %v4711
        %v4873 = vunpack.c.h.b16 %v4711
        %v4874 = vunpack.c.l.b16 %v4712
        %v4875 = vunpack.c.h.b16 %v4712
        %v4876 = vunpack.c.l.b16 %v4713
        %v4877 = vunpack.c.h.b16 %v4713
        %v4878 = vunpack.c.l.b16 %v4714
        %v4879 = vunpack.c.h.b16 %v4714
        %v4880 = vunpack.c.l.b16 %v4715
        %v4881 = vunpack.c.h.b16 %v4715
        %v4882 = vunpack.c.l.b16 %v4716
        %v4883 = vunpack.c.h.b16 %v4716
        %v4884 = vpack.c.b16 %v4848, %v4848
        %v4885 = vpack.c.b16 %v4849, %v4849
        %v4886 = vpack.c.b16 %v4850, %v4850
        %v4887 = vpack.c.b16 %v4851, %v4851
        %v4888 = vpack.c.b16 %v4852, %v4852
        %v4889 = vpack.c.b16 %v4853, %v4853
        %v4890 = vpack.c.b16 %v4854, %v4854
        %v4891 = vpack.c.b16 %v4855, %v4855
        %v4892 = vpack.c.b16 %v4856, %v4856
        %v4893 = vpack.c.b16 %v4857, %v4857
        %v4894 = vpack.c.b16 %v4858, %v4858
        %v4895 = vpack.c.b16 %v4859, %v4859
        %v4896 = vpack.c.b16 %v4860, %v4860
        %v4897 = vpack.c.b16 %v4861, %v4861
        %v4898 = vpack.c.b16 %v4862, %v4862
        %v4899 = vpack.c.b16 %v4863, %v4863
        %v4900 = vpack.c.b16 %v4864, %v4864
        %v4901 = vpack.c.b16 %v4865, %v4865
        %v4902 = vpack.c.b16 %v4866, %v4866
        %v4903 = vpack.c.b16 %v4867, %v4867
        %v4904 = vpack.c.b16 %v4868, %v4868
        %v4905 = vpack.c.b16 %v4869, %v4869
        %v4906 = vpack.c.b16 %v4870, %v4870
        %v4907 = vpack.c.b16 %v4871, %v4871
        %v4908 = vpack.c.b16 %v4872, %v4872
        %v4909 = vpack.c.b16 %v4873, %v4873
        %v4910 = vpack.c.b16 %v4874, %v4874
        %v4911 = vpack.c.b16 %v4875, %v4875
        %v4912 = vpack.c.b16 %v4876, %v4876
        %v4913 = vpack.c.b16 %v4877, %v4877
        %v4914 = vpack.c.b16 %v4878, %v4878
        %v4915 = vpack.c.b16 %v4879, %v4879
        %v4916 = vpack.c.b16 %v4880, %v4880
        %v4917 = vpack.c.b16 %v4881, %v4881
        %v4918 = vpack.c.b16 %v4882, %v4882
        %v4919 = vpack.c.b16 %v4883, %v4883
        %vm4920 = vsmask.f32 4368
        %vm4921 = vmor %vm4718, %vm4920
        %v4923 = vshrl.u32 %v4884, 16
        %v4925 = vrot.slane %v4923, 7
        %v4926 = vshll.u32 %v4884, 16
        %v4928 = vor.u32 %v4925, %v4926
        %v4929 = vrot.slane %v4925, 4
        %v4931 = vshrl.u32 %v4885, 16
        %v4933 = vrot.slane %v4931, 7
        %v4934 = vshll.u32 %v4885, 16
        %v4936 = vor.u32 %v4933, %v4934
        %v4937 = vsel %vm4921, %v4929, %v4936
        %v4938 = vrot.slane %v4933, 4
        %v4940 = vshrl.u32 %v4886, 16
        %v4942 = vrot.slane %v4940, 7
        %v4943 = vshll.u32 %v4886, 16
        %v4945 = vor.u32 %v4942, %v4943
        %v4946 = vrot.slane %v4942, 4
        %v4948 = vshrl.u32 %v4887, 16
        %v4950 = vrot.slane %v4948, 7
        %v4951 = vshll.u32 %v4887, 16
        %v4953 = vor.u32 %v4950, %v4951
        %v4954 = vsel %vm4921, %v4946, %v4953
        %v4955 = vrot.slane %v4950, 4
        %v4957 = vshrl.u32 %v4888, 16
        %v4959 = vrot.slane %v4957, 7
        %v4960 = vshll.u32 %v4888, 16
        %v4962 = vor.u32 %v4959, %v4960
        %v4963 = vrot.slane %v4959, 4
        %v4965 = vshrl.u32 %v4889, 16
        %v4967 = vrot.slane %v4965, 7
        %v4968 = vshll.u32 %v4889, 16
        %v4970 = vor.u32 %v4967, %v4968
        %v4971 = vsel %vm4921, %v4963, %v4970
        %v4972 = vrot.slane %v4967, 4
        %v4974 = vshrl.u32 %v4890, 16
        %v4976 = vrot.slane %v4974, 7
        %v4977 = vshll.u32 %v4890, 16
        %v4979 = vor.u32 %v4976, %v4977
        %v4980 = vrot.slane %v4976, 4
        %v4982 = vshrl.u32 %v4891, 16
        %v4984 = vrot.slane %v4982, 7
        %v4985 = vshll.u32 %v4891, 16
        %v4987 = vor.u32 %v4984, %v4985
        %v4988 = vsel %vm4921, %v4980, %v4987
        %v4989 = vrot.slane %v4984, 4
        %v4991 = vshrl.u32 %v4892, 16
        %v4993 = vrot.slane %v4991, 7
        %v4994 = vshll.u32 %v4892, 16
        %v4996 = vor.u32 %v4993, %v4994
        %v4997 = vrot.slane %v4993, 4
        %v4999 = vshrl.u32 %v4893, 16
        %v5001 = vrot.slane %v4999, 7
        %v5002 = vshll.u32 %v4893, 16
        %v5004 = vor.u32 %v5001, %v5002
        %v5005 = vsel %vm4921, %v4997, %v5004
        %v5006 = vrot.slane %v5001, 4
        %v5008 = vshrl.u32 %v4894, 16
        %v5010 = vrot.slane %v5008, 7
        %v5011 = vshll.u32 %v4894, 16
        %v5013 = vor.u32 %v5010, %v5011
        %v5014 = vrot.slane %v5010, 4
        %v5016 = vshrl.u32 %v4895, 16
        %v5018 = vrot.slane %v5016, 7
        %v5019 = vshll.u32 %v4895, 16
        %v5021 = vor.u32 %v5018, %v5019
        %v5022 = vsel %vm4921, %v5014, %v5021
        %v5023 = vrot.slane %v5018, 4
        %v5025 = vshrl.u32 %v4896, 16
        %v5027 = vrot.slane %v5025, 7
        %v5028 = vshll.u32 %v4896, 16
        %v5030 = vor.u32 %v5027, %v5028
        %v5031 = vrot.slane %v5027, 4
        %v5033 = vshrl.u32 %v4897, 16
        %v5035 = vrot.slane %v5033, 7
        %v5036 = vshll.u32 %v4897, 16
        %v5038 = vor.u32 %v5035, %v5036
        %v5039 = vsel %vm4921, %v5031, %v5038
        %v5040 = vrot.slane %v5035, 4
        %v5042 = vshrl.u32 %v4898, 16
        %v5044 = vrot.slane %v5042, 7
        %v5045 = vshll.u32 %v4898, 16
        %v5047 = vor.u32 %v5044, %v5045
        %v5048 = vrot.slane %v5044, 4
        %v5050 = vshrl.u32 %v4899, 16
        %v5052 = vrot.slane %v5050, 7
        %v5053 = vshll.u32 %v4899, 16
        %v5055 = vor.u32 %v5052, %v5053
        %v5056 = vsel %vm4921, %v5048, %v5055
        %v5057 = vrot.slane %v5052, 4
        %v5059 = vshrl.u32 %v4900, 16
        %v5061 = vrot.slane %v5059, 7
        %v5062 = vshll.u32 %v4900, 16
        %v5064 = vor.u32 %v5061, %v5062
        %v5065 = vrot.slane %v5061, 4
        %v5067 = vshrl.u32 %v4901, 16
        %v5069 = vrot.slane %v5067, 7
        %v5070 = vshll.u32 %v4901, 16
        %v5072 = vor.u32 %v5069, %v5070
        %v5073 = vsel %vm4921, %v5065, %v5072
        %v5074 = vrot.slane %v5069, 4
        %v5076 = vshrl.u32 %v4902, 16
        %v5078 = vrot.slane %v5076, 7
        %v5079 = vshll.u32 %v4902, 16
        %v5081 = vor.u32 %v5078, %v5079
        %v5082 = vrot.slane %v5078, 4
        %v5084 = vshrl.u32 %v4903, 16
        %v5086 = vrot.slane %v5084, 7
        %v5087 = vshll.u32 %v4903, 16
        %v5089 = vor.u32 %v5086, %v5087
        %v5090 = vsel %vm4921, %v5082, %v5089
        %v5091 = vrot.slane %v5086, 4
        %v5093 = vshrl.u32 %v4904, 16
        %v5095 = vrot.slane %v5093, 7
        %v5096 = vshll.u32 %v4904, 16
        %v5098 = vor.u32 %v5095, %v5096
        %v5099 = vrot.slane %v5095, 4
        %v5101 = vshrl.u32 %v4905, 16
        %v5103 = vrot.slane %v5101, 7
        %v5104 = vshll.u32 %v4905, 16
        %v5106 = vor.u32 %v5103, %v5104
        %v5107 = vsel %vm4921, %v5099, %v5106
        %v5108 = vrot.slane %v5103, 4
        %v5110 = vshrl.u32 %v4906, 16
        %v5112 = vrot.slane %v5110, 7
        %v5113 = vshll.u32 %v4906, 16
        %v5115 = vor.u32 %v5112, %v5113
        %v5116 = vrot.slane %v5112, 4
        %v5118 = vshrl.u32 %v4907, 16
        %v5120 = vrot.slane %v5118, 7
        %v5121 = vshll.u32 %v4907, 16
        %v5123 = vor.u32 %v5120, %v5121
        %v5124 = vsel %vm4921, %v5116, %v5123
        %v5125 = vrot.slane %v5120, 4
        %v5127 = vshrl.u32 %v4908, 16
        %v5129 = vrot.slane %v5127, 7
        %v5130 = vshll.u32 %v4908, 16
        %v5132 = vor.u32 %v5129, %v5130
        %v5133 = vrot.slane %v5129, 4
        %v5135 = vshrl.u32 %v4909, 16
        %v5137 = vrot.slane %v5135, 7
        %v5138 = vshll.u32 %v4909, 16
        %v5140 = vor.u32 %v5137, %v5138
        %v5141 = vsel %vm4921, %v5133, %v5140
        %v5142 = vrot.slane %v5137, 4
        %v5144 = vshrl.u32 %v4910, 16
        %v5146 = vrot.slane %v5144, 7
        %v5147 = vshll.u32 %v4910, 16
        %v5149 = vor.u32 %v5146, %v5147
        %v5150 = vrot.slane %v5146, 4
        %v5152 = vshrl.u32 %v4911, 16
        %v5154 = vrot.slane %v5152, 7
        %v5155 = vshll.u32 %v4911, 16
        %v5157 = vor.u32 %v5154, %v5155
        %v5158 = vsel %vm4921, %v5150, %v5157
        %v5159 = vrot.slane %v5154, 4
        %v5161 = vshrl.u32 %v4912, 16
        %v5163 = vrot.slane %v5161, 7
        %v5164 = vshll.u32 %v4912, 16
        %v5166 = vor.u32 %v5163, %v5164
        %v5167 = vrot.slane %v5163, 4
        %v5169 = vshrl.u32 %v4913, 16
        %v5171 = vrot.slane %v5169, 7
        %v5172 = vshll.u32 %v4913, 16
        %v5174 = vor.u32 %v5171, %v5172
        %v5175 = vsel %vm4921, %v5167, %v5174
        %v5176 = vrot.slane %v5171, 4
        %v5178 = vshrl.u32 %v4914, 16
        %v5180 = vrot.slane %v5178, 7
        %v5181 = vshll.u32 %v4914, 16
        %v5183 = vor.u32 %v5180, %v5181
        %v5184 = vrot.slane %v5180, 4
        %v5186 = vshrl.u32 %v4915, 16
        %v5188 = vrot.slane %v5186, 7
        %v5189 = vshll.u32 %v4915, 16
        %v5191 = vor.u32 %v5188, %v5189
        %v5192 = vsel %vm4921, %v5184, %v5191
        %v5193 = vrot.slane %v5188, 4
        %v5195 = vshrl.u32 %v4916, 16
        %v5197 = vrot.slane %v5195, 7
        %v5198 = vshll.u32 %v4916, 16
        %v5200 = vor.u32 %v5197, %v5198
        %v5201 = vrot.slane %v5197, 4
        %v5203 = vshrl.u32 %v4917, 16
        %v5205 = vrot.slane %v5203, 7
        %v5206 = vshll.u32 %v4917, 16
        %v5208 = vor.u32 %v5205, %v5206
        %v5209 = vsel %vm4921, %v5201, %v5208
        %v5210 = vrot.slane %v5205, 4
        %v5212 = vshrl.u32 %v4918, 16
        %v5214 = vrot.slane %v5212, 7
        %v5215 = vshll.u32 %v4918, 16
        %v5217 = vor.u32 %v5214, %v5215
        %v5218 = vrot.slane %v5214, 4
        %v5220 = vshrl.u32 %v4919, 16
        %v5222 = vrot.slane %v5220, 7
        %v5223 = vshll.u32 %v4919, 16
        %v5225 = vor.u32 %v5222, %v5223
        %v5226 = vsel %vm4921, %v5218, %v5225
        %v5227 = vrot.slane %v5222, 4
        %vm5282 = vcmask 1043456
        %vm5283 = vmand %vm5282, %vm4774
        %v5284 = vld [vmem:[#allocation2] sm:$0xf]
        %v5285 = vsel %vm5283, %v4928, %v5284
        %5286 = vst [vmem:[#allocation2] sm:$0xf] %v5285
        %5287 = vst [vmem:[#allocation2 + $0x4] sm:$0xf] %v4937
        %v5288 = vld [vmem:[#allocation2 + $0x8] sm:$0x1]
        %v5289 = vsel %vm4719, %v4938, %v5288
        %5290 = vst [vmem:[#allocation2 + $0x8] sm:$0x1] %v5289
        %v5291 = vld [vmem:[#allocation2 + $0xc] sm:$0xf]
        %v5292 = vsel %vm5283, %v4945, %v5291
        %5293 = vst [vmem:[#allocation2 + $0xc] sm:$0xf] %v5292
        %5294 = vst [vmem:[#allocation2 + $0x10] sm:$0xf] %v4954
        %v5295 = vld [vmem:[#allocation2 + $0x14] sm:$0x1]
        %v5296 = vsel %vm4719, %v4955, %v5295
        %5297 = vst [vmem:[#allocation2 + $0x14] sm:$0x1] %v5296
        %v5298 = vld [vmem:[#allocation2 + $0x18] sm:$0xf]
        %v5299 = vsel %vm5283, %v4962, %v5298
        %5300 = vst [vmem:[#allocation2 + $0x18] sm:$0xf] %v5299
        %5301 = vst [vmem:[#allocation2 + $0x1c] sm:$0xf] %v4971
        %v5302 = vld [vmem:[#allocation2 + $0x20] sm:$0x1]
        %v5303 = vsel %vm4719, %v4972, %v5302
        %5304 = vst [vmem:[#allocation2 + $0x20] sm:$0x1] %v5303
        %v5305 = vld [vmem:[#allocation2 + $0x24] sm:$0xf]
        %v5306 = vsel %vm5283, %v4979, %v5305
        %5307 = vst [vmem:[#allocation2 + $0x24] sm:$0xf] %v5306
        %5308 = vst [vmem:[#allocation2 + $0x28] sm:$0xf] %v4988
        %v5309 = vld [vmem:[#allocation2 + $0x2c] sm:$0x1]
        %v5310 = vsel %vm4719, %v4989, %v5309
        %5311 = vst [vmem:[#allocation2 + $0x2c] sm:$0x1] %v5310
        %v5312 = vld [vmem:[#allocation2 + $0x30] sm:$0xf]
        %v5313 = vsel %vm5283, %v4996, %v5312
        %5314 = vst [vmem:[#allocation2 + $0x30] sm:$0xf] %v5313
        %5315 = vst [vmem:[#allocation2 + $0x34] sm:$0xf] %v5005
        %v5316 = vld [vmem:[#allocation2 + $0x38] sm:$0x1]
        %v5317 = vsel %vm4719, %v5006, %v5316
        %5318 = vst [vmem:[#allocation2 + $0x38] sm:$0x1] %v5317
        %v5319 = vld [vmem:[#allocation2 + $0x3c] sm:$0xf]
        %v5320 = vsel %vm5283, %v5013, %v5319
        %5321 = vst [vmem:[#allocation2 + $0x3c] sm:$0xf] %v5320
        %5322 = vst [vmem:[#allocation2 + $0x40] sm:$0xf] %v5022
        %v5323 = vld [vmem:[#allocation2 + $0x44] sm:$0x1]
        %v5324 = vsel %vm4719, %v5023, %v5323
        %5325 = vst [vmem:[#allocation2 + $0x44] sm:$0x1] %v5324
        %v5326 = vld [vmem:[#allocation2 + $0x48] sm:$0xf]
        %v5327 = vsel %vm5283, %v5030, %v5326
        %5328 = vst [vmem:[#allocation2 + $0x48] sm:$0xf] %v5327
        %5329 = vst [vmem:[#allocation2 + $0x4c] sm:$0xf] %v5039
        %v5330 = vld [vmem:[#allocation2 + $0x50] sm:$0x1]
        %v5331 = vsel %vm4719, %v5040, %v5330
        %5332 = vst [vmem:[#allocation2 + $0x50] sm:$0x1] %v5331
        %v5333 = vld [vmem:[#allocation2 + $0x54] sm:$0xf]
        %v5334 = vsel %vm5283, %v5047, %v5333
        %5335 = vst [vmem:[#allocation2 + $0x54] sm:$0xf] %v5334
        %5336 = vst [vmem:[#allocation2 + $0x58] sm:$0xf] %v5056
        %v5337 = vld [vmem:[#allocation2 + $0x5c] sm:$0x1]
        %v5338 = vsel %vm4719, %v5057, %v5337
        %5339 = vst [vmem:[#allocation2 + $0x5c] sm:$0x1] %v5338
        %v5340 = vld [vmem:[#allocation2 + $0x60] sm:$0xf]
        %v5341 = vsel %vm5283, %v5064, %v5340
        %5342 = vst [vmem:[#allocation2 + $0x60] sm:$0xf] %v5341
        %5343 = vst [vmem:[#allocation2 + $0x64] sm:$0xf] %v5073
        %v5344 = vld [vmem:[#allocation2 + $0x68] sm:$0x1]
        %v5345 = vsel %vm4719, %v5074, %v5344
        %5346 = vst [vmem:[#allocation2 + $0x68] sm:$0x1] %v5345
        %v5347 = vld [vmem:[#allocation2 + $0x6c] sm:$0xf]
        %v5348 = vsel %vm5283, %v5081, %v5347
        %5349 = vst [vmem:[#allocation2 + $0x6c] sm:$0xf] %v5348
        %5350 = vst [vmem:[#allocation2 + $0x70] sm:$0xf] %v5090
        %v5351 = vld [vmem:[#allocation2 + $0x74] sm:$0x1]
        %v5352 = vsel %vm4719, %v5091, %v5351
        %5353 = vst [vmem:[#allocation2 + $0x74] sm:$0x1] %v5352
        %v5354 = vld [vmem:[#allocation2 + $0x78] sm:$0xf]
        %v5355 = vsel %vm5283, %v5098, %v5354
        %5356 = vst [vmem:[#allocation2 + $0x78] sm:$0xf] %v5355
        %5357 = vst [vmem:[#allocation2 + $0x7c] sm:$0xf] %v5107
        %v5358 = vld [vmem:[#allocation2 + $0x80] sm:$0x1]
        %v5359 = vsel %vm4719, %v5108, %v5358
        %5360 = vst [vmem:[#allocation2 + $0x80] sm:$0x1] %v5359
        %v5361 = vld [vmem:[#allocation2 + $0x84] sm:$0xf]
        %v5362 = vsel %vm5283, %v5115, %v5361
        %5363 = vst [vmem:[#allocation2 + $0x84] sm:$0xf] %v5362
        %5364 = vst [vmem:[#allocation2 + $0x88] sm:$0xf] %v5124
        %v5365 = vld [vmem:[#allocation2 + $0x8c] sm:$0x1]
        %v5366 = vsel %vm4719, %v5125, %v5365
        %5367 = vst [vmem:[#allocation2 + $0x8c] sm:$0x1] %v5366
        %v5368 = vld [vmem:[#allocation2 + $0x90] sm:$0xf]
        %v5369 = vsel %vm5283, %v5132, %v5368
        %5370 = vst [vmem:[#allocation2 + $0x90] sm:$0xf] %v5369
        %5371 = vst [vmem:[#allocation2 + $0x94] sm:$0xf] %v5141
        %v5372 = vld [vmem:[#allocation2 + $0x98] sm:$0x1]
        %v5373 = vsel %vm4719, %v5142, %v5372
        %5374 = vst [vmem:[#allocation2 + $0x98] sm:$0x1] %v5373
        %v5375 = vld [vmem:[#allocation2 + $0x9c] sm:$0xf]
        %v5376 = vsel %vm5283, %v5149, %v5375
        %5377 = vst [vmem:[#allocation2 + $0x9c] sm:$0xf] %v5376
        %5378 = vst [vmem:[#allocation2 + $0xa0] sm:$0xf] %v5158
        %v5379 = vld [vmem:[#allocation2 + $0xa4] sm:$0x1]
        %v5380 = vsel %vm4719, %v5159, %v5379
        %5381 = vst [vmem:[#allocation2 + $0xa4] sm:$0x1] %v5380
        %v5382 = vld [vmem:[#allocation2 + $0xa8] sm:$0xf]
        %v5383 = vsel %vm5283, %v5166, %v5382
        %5384 = vst [vmem:[#allocation2 + $0xa8] sm:$0xf] %v5383
        %5385 = vst [vmem:[#allocation2 + $0xac] sm:$0xf] %v5175
        %v5386 = vld [vmem:[#allocation2 + $0xb0] sm:$0x1]
        %v5387 = vsel %vm4719, %v5176, %v5386
        %5388 = vst [vmem:[#allocation2 + $0xb0] sm:$0x1] %v5387
        %v5389 = vld [vmem:[#allocation2 + $0xb4] sm:$0xf]
        %v5390 = vsel %vm5283, %v5183, %v5389
        %5391 = vst [vmem:[#allocation2 + $0xb4] sm:$0xf] %v5390
        %5392 = vst [vmem:[#allocation2 + $0xb8] sm:$0xf] %v5192
        %v5393 = vld [vmem:[#allocation2 + $0xbc] sm:$0x1]
        %v5394 = vsel %vm4719, %v5193, %v5393
        %5395 = vst [vmem:[#allocation2 + $0xbc] sm:$0x1] %v5394
        %v5396 = vld [vmem:[#allocation2 + $0xc0] sm:$0xf]
        %v5397 = vsel %vm5283, %v5200, %v5396
        %5398 = vst [vmem:[#allocation2 + $0xc0] sm:$0xf] %v5397
        %5399 = vst [vmem:[#allocation2 + $0xc4] sm:$0xf] %v5209
        %v5400 = vld [vmem:[#allocation2 + $0xc8] sm:$0x1]
        %v5401 = vsel %vm4719, %v5210, %v5400
        %5402 = vst [vmem:[#allocation2 + $0xc8] sm:$0x1] %v5401
        %v5403 = vld [vmem:[#allocation2 + $0xcc] sm:$0xf]
        %v5404 = vsel %vm5283, %v5217, %v5403
        %5405 = vst [vmem:[#allocation2 + $0xcc] sm:$0xf] %v5404
        %5406 = vst [vmem:[#allocation2 + $0xd0] sm:$0xf] %v5226
        %v5407 = vld [vmem:[#allocation2 + $0xd4] sm:$0x1]
        %v5408 = vsel %vm4719, %v5227, %v5407
        %5409 = vst [vmem:[#allocation2 + $0xd4] sm:$0x1] %v5408
        %p5410 = scmp.eq.s32.totalorder %s31, 0
        // Predicated region
        $region65: #{tpu_custom_call.1} parent=47 // pred_check
          %p5411 = pneg %p5410
        $region66: #{tpu_custom_call.1} parent=47 // pred_check_branch
          %5413 = sbr.rel (%p5411) target = $region68
        $region67: #{tpu_custom_call.1} parent=47 // pred_region
          %v5414 = vld [vmem:[#allocation2] sm:$0xf]
          %v5415 = vsel %vm5283, 0, %v5414
          %5416 = vst [vmem:[#allocation2] sm:$0xf] %v5415
          %5417 = vst [vmem:[#allocation2 + $0x4] sm:$0xf] 0
          %v5418 = vld [vmem:[#allocation2 + $0x8] sm:$0x1]
          %v5419 = vsel %vm4719, 0, %v5418
          %5420 = vst [vmem:[#allocation2 + $0x8] sm:$0x1] %v5419
          %s5421 = scalar_lea.vmem [#allocation2], 204
          %v5422 = vld [vmem:[%s5421] sm:$0xf]
          %v5423 = vsel %vm5283, 0, %v5422
          %5424 = vst [vmem:[%s5421] sm:$0xf] %v5423
          %5425 = vst [vmem:[%s5421 + $0x4] sm:$0xf] 0
          %v5426 = vld [vmem:[%s5421 + $0x8] sm:$0x1]
          %v5427 = vsel %vm4719, 0, %v5426
          %5428 = vst [vmem:[%s5421 + $0x8] sm:$0x1] %v5427
        $region68: #{tpu_custom_call.1} parent=47 // pred_fallthru
          _
        %v5429 = vld [vmem:[#allocation2] sm:$0xf]
        %v5430 = vld [vmem:[#allocation2 + $0x4] sm:$0xf]
        %v5431 = vld [vmem:[#allocation2 + $0xc] sm:$0xf]
        %v5432 = vld [vmem:[#allocation2 + $0x10] sm:$0xf]
        %v5433 = vld [vmem:[#allocation2 + $0x18] sm:$0xf]
        %v5434 = vld [vmem:[#allocation2 + $0x1c] sm:$0xf]
        %v5435 = vld [vmem:[#allocation2 + $0x24] sm:$0xf]
        %v5436 = vld [vmem:[#allocation2 + $0x28] sm:$0xf]
        %v5437 = vld [vmem:[#allocation2 + $0x30] sm:$0xf]
        %v5438 = vld [vmem:[#allocation2 + $0x34] sm:$0xf]
        %v5439 = vld [vmem:[#allocation2 + $0x3c] sm:$0xf]
        %v5440 = vld [vmem:[#allocation2 + $0x40] sm:$0xf]
        %v5441 = vld [vmem:[#allocation2 + $0x48] sm:$0xf]
        %v5442 = vld [vmem:[#allocation2 + $0x4c] sm:$0xf]
        %v5443 = vld [vmem:[#allocation2 + $0x54] sm:$0xf]
        %v5444 = vld [vmem:[#allocation2 + $0x58] sm:$0xf]
        %v5445 = vld [vmem:[#allocation2 + $0x60] sm:$0xf]
        %v5446 = vld [vmem:[#allocation2 + $0x64] sm:$0xf]
        %v5447 = vld [vmem:[#allocation2 + $0x6c] sm:$0xf]
        %v5448 = vld [vmem:[#allocation2 + $0x70] sm:$0xf]
        %v5449 = vld [vmem:[#allocation2 + $0x78] sm:$0xf]
        %v5450 = vld [vmem:[#allocation2 + $0x7c] sm:$0xf]
        %v5451 = vld [vmem:[#allocation2 + $0x84] sm:$0xf]
        %v5452 = vld [vmem:[#allocation2 + $0x88] sm:$0xf]
        %v5453 = vld [vmem:[#allocation2 + $0x90] sm:$0xf]
        %v5454 = vld [vmem:[#allocation2 + $0x94] sm:$0xf]
        %v5455 = vld [vmem:[#allocation2 + $0x9c] sm:$0xf]
        %v5456 = vld [vmem:[#allocation2 + $0xa0] sm:$0xf]
        %v5457 = vld [vmem:[#allocation2 + $0xa8] sm:$0xf]
        %v5458 = vld [vmem:[#allocation2 + $0xac] sm:$0xf]
        %v5459 = vld [vmem:[#allocation2 + $0xb4] sm:$0xf]
        %v5460 = vld [vmem:[#allocation2 + $0xb8] sm:$0xf]
        %v5461 = vld [vmem:[#allocation2 + $0x8] sm:$0x1]
        %v5462 = vld [vmem:[#allocation2 + $0x14] sm:$0x1]
        %v5463 = vld [vmem:[#allocation2 + $0x20] sm:$0x1]
        %v5464 = vld [vmem:[#allocation2 + $0x2c] sm:$0x1]
        %v5465 = vld [vmem:[#allocation2 + $0x38] sm:$0x1]
        %v5466 = vld [vmem:[#allocation2 + $0x44] sm:$0x1]
        %v5467 = vld [vmem:[#allocation2 + $0x50] sm:$0x1]
        %v5468 = vld [vmem:[#allocation2 + $0x5c] sm:$0x1]
        %v5469 = vld [vmem:[#allocation2 + $0x68] sm:$0x1]
        %v5470 = vld [vmem:[#allocation2 + $0x74] sm:$0x1]
        %v5471 = vld [vmem:[#allocation2 + $0x80] sm:$0x1]
        %v5472 = vld [vmem:[#allocation2 + $0x8c] sm:$0x1]
        %v5473 = vld [vmem:[#allocation2 + $0x98] sm:$0x1]
        %v5474 = vld [vmem:[#allocation2 + $0xa4] sm:$0x1]
        %v5475 = vld [vmem:[#allocation2 + $0xb0] sm:$0x1]
        %v5476 = vld [vmem:[#allocation2 + $0xbc] sm:$0x1]
        %v5478 = vshrl.u32 %v5429, 16
        %v5480 = vrot.slane %v5478, 4
        %v5481 = vshll.u32 %v5429, 16
        %v5483 = vrot.slane %v5481, 5
        %v5484 = vor.u32 %v5480, %v5483
        %v5485 = vrot.slane %v5484, 4
        %v5487 = vshll.u32 %v5430, 16
        %v5489 = vrot.slane %v5487, 5
        %v5490 = vsel %vm417, %v5485, %v5489
        %v5491 = vshrl.u32 %v5430, 16
        %v5493 = vrot.slane %v5491, 4
        %v5494 = vor.u32 %v5493, %v5489
        %v5495 = vrot.slane %v5494, 4
        %v5497 = vshll.u32 %v5461, 16
        %v5499 = vrot.slane %v5497, 5
        %v5500 = vsel %vm417, %v5495, %v5499
        %v5502 = vshrl.u32 %v5431, 16
        %v5504 = vrot.slane %v5502, 4
        %v5505 = vshll.u32 %v5431, 16
        %v5507 = vrot.slane %v5505, 5
        %v5508 = vor.u32 %v5504, %v5507
        %v5509 = vrot.slane %v5508, 4
        %v5511 = vshll.u32 %v5432, 16
        %v5513 = vrot.slane %v5511, 5
        %v5514 = vsel %vm417, %v5509, %v5513
        %v5515 = vshrl.u32 %v5432, 16
        %v5517 = vrot.slane %v5515, 4
        %v5518 = vor.u32 %v5517, %v5513
        %v5519 = vrot.slane %v5518, 4
        %v5521 = vshll.u32 %v5462, 16
        %v5523 = vrot.slane %v5521, 5
        %v5524 = vsel %vm417, %v5519, %v5523
        %v5526 = vshrl.u32 %v5433, 16
        %v5528 = vrot.slane %v5526, 4
        %v5529 = vshll.u32 %v5433, 16
        %v5531 = vrot.slane %v5529, 5
        %v5532 = vor.u32 %v5528, %v5531
        %v5533 = vrot.slane %v5532, 4
        %v5535 = vshll.u32 %v5434, 16
        %v5537 = vrot.slane %v5535, 5
        %v5538 = vsel %vm417, %v5533, %v5537
        %v5539 = vshrl.u32 %v5434, 16
        %v5541 = vrot.slane %v5539, 4
        %v5542 = vor.u32 %v5541, %v5537
        %v5543 = vrot.slane %v5542, 4
        %v5545 = vshll.u32 %v5463, 16
        %v5547 = vrot.slane %v5545, 5
        %v5548 = vsel %vm417, %v5543, %v5547
        %v5550 = vshrl.u32 %v5435, 16
        %v5552 = vrot.slane %v5550, 4
        %v5553 = vshll.u32 %v5435, 16
        %v5555 = vrot.slane %v5553, 5
        %v5556 = vor.u32 %v5552, %v5555
        %v5557 = vrot.slane %v5556, 4
        %v5559 = vshll.u32 %v5436, 16
        %v5561 = vrot.slane %v5559, 5
        %v5562 = vsel %vm417, %v5557, %v5561
        %v5563 = vshrl.u32 %v5436, 16
        %v5565 = vrot.slane %v5563, 4
        %v5566 = vor.u32 %v5565, %v5561
        %v5567 = vrot.slane %v5566, 4
        %v5569 = vshll.u32 %v5464, 16
        %v5571 = vrot.slane %v5569, 5
        %v5572 = vsel %vm417, %v5567, %v5571
        %v5574 = vshrl.u32 %v5437, 16
        %v5576 = vrot.slane %v5574, 4
        %v5577 = vshll.u32 %v5437, 16
        %v5579 = vrot.slane %v5577, 5
        %v5580 = vor.u32 %v5576, %v5579
        %v5581 = vrot.slane %v5580, 4
        %v5583 = vshll.u32 %v5438, 16
        %v5585 = vrot.slane %v5583, 5
        %v5586 = vsel %vm417, %v5581, %v5585
        %v5587 = vshrl.u32 %v5438, 16
        %v5589 = vrot.slane %v5587, 4
        %v5590 = vor.u32 %v5589, %v5585
        %v5591 = vrot.slane %v5590, 4
        %v5593 = vshll.u32 %v5465, 16
        %v5595 = vrot.slane %v5593, 5
        %v5596 = vsel %vm417, %v5591, %v5595
        %v5598 = vshrl.u32 %v5439, 16
        %v5600 = vrot.slane %v5598, 4
        %v5601 = vshll.u32 %v5439, 16
        %v5603 = vrot.slane %v5601, 5
        %v5604 = vor.u32 %v5600, %v5603
        %v5605 = vrot.slane %v5604, 4
        %v5607 = vshll.u32 %v5440, 16
        %v5609 = vrot.slane %v5607, 5
        %v5610 = vsel %vm417, %v5605, %v5609
        %v5611 = vshrl.u32 %v5440, 16
        %v5613 = vrot.slane %v5611, 4
        %v5614 = vor.u32 %v5613, %v5609
        %v5615 = vrot.slane %v5614, 4
        %v5617 = vshll.u32 %v5466, 16
        %v5619 = vrot.slane %v5617, 5
        %v5620 = vsel %vm417, %v5615, %v5619
        %v5622 = vshrl.u32 %v5441, 16
        %v5624 = vrot.slane %v5622, 4
        %v5625 = vshll.u32 %v5441, 16
        %v5627 = vrot.slane %v5625, 5
        %v5628 = vor.u32 %v5624, %v5627
        %v5629 = vrot.slane %v5628, 4
        %v5631 = vshll.u32 %v5442, 16
        %v5633 = vrot.slane %v5631, 5
        %v5634 = vsel %vm417, %v5629, %v5633
        %v5635 = vshrl.u32 %v5442, 16
        %v5637 = vrot.slane %v5635, 4
        %v5638 = vor.u32 %v5637, %v5633
        %v5639 = vrot.slane %v5638, 4
        %v5641 = vshll.u32 %v5467, 16
        %v5643 = vrot.slane %v5641, 5
        %v5644 = vsel %vm417, %v5639, %v5643
        %v5646 = vshrl.u32 %v5443, 16
        %v5648 = vrot.slane %v5646, 4
        %v5649 = vshll.u32 %v5443, 16
        %v5651 = vrot.slane %v5649, 5
        %v5652 = vor.u32 %v5648, %v5651
        %v5653 = vrot.slane %v5652, 4
        %v5655 = vshll.u32 %v5444, 16
        %v5657 = vrot.slane %v5655, 5
        %v5658 = vsel %vm417, %v5653, %v5657
        %v5659 = vshrl.u32 %v5444, 16
        %v5661 = vrot.slane %v5659, 4
        %v5662 = vor.u32 %v5661, %v5657
        %v5663 = vrot.slane %v5662, 4
        %v5665 = vshll.u32 %v5468, 16
        %v5667 = vrot.slane %v5665, 5
        %v5668 = vsel %vm417, %v5663, %v5667
        %v5670 = vshrl.u32 %v5445, 16
        %v5672 = vrot.slane %v5670, 4
        %v5673 = vshll.u32 %v5445, 16
        %v5675 = vrot.slane %v5673, 5
        %v5676 = vor.u32 %v5672, %v5675
        %v5677 = vrot.slane %v5676, 4
        %v5679 = vshll.u32 %v5446, 16
        %v5681 = vrot.slane %v5679, 5
        %v5682 = vsel %vm417, %v5677, %v5681
        %v5683 = vshrl.u32 %v5446, 16
        %v5685 = vrot.slane %v5683, 4
        %v5686 = vor.u32 %v5685, %v5681
        %v5687 = vrot.slane %v5686, 4
        %v5689 = vshll.u32 %v5469, 16
        %v5691 = vrot.slane %v5689, 5
        %v5692 = vsel %vm417, %v5687, %v5691
        %v5694 = vshrl.u32 %v5447, 16
        %v5696 = vrot.slane %v5694, 4
        %v5697 = vshll.u32 %v5447, 16
        %v5699 = vrot.slane %v5697, 5
        %v5700 = vor.u32 %v5696, %v5699
        %v5701 = vrot.slane %v5700, 4
        %v5703 = vshll.u32 %v5448, 16
        %v5705 = vrot.slane %v5703, 5
        %v5706 = vsel %vm417, %v5701, %v5705
        %v5707 = vshrl.u32 %v5448, 16
        %v5709 = vrot.slane %v5707, 4
        %v5710 = vor.u32 %v5709, %v5705
        %v5711 = vrot.slane %v5710, 4
        %v5713 = vshll.u32 %v5470, 16
        %v5715 = vrot.slane %v5713, 5
        %v5716 = vsel %vm417, %v5711, %v5715
        %v5718 = vshrl.u32 %v5449, 16
        %v5720 = vrot.slane %v5718, 4
        %v5721 = vshll.u32 %v5449, 16
        %v5723 = vrot.slane %v5721, 5
        %v5724 = vor.u32 %v5720, %v5723
        %v5725 = vrot.slane %v5724, 4
        %v5727 = vshll.u32 %v5450, 16
        %v5729 = vrot.slane %v5727, 5
        %v5730 = vsel %vm417, %v5725, %v5729
        %v5731 = vshrl.u32 %v5450, 16
        %v5733 = vrot.slane %v5731, 4
        %v5734 = vor.u32 %v5733, %v5729
        %v5735 = vrot.slane %v5734, 4
        %v5737 = vshll.u32 %v5471, 16
        %v5739 = vrot.slane %v5737, 5
        %v5740 = vsel %vm417, %v5735, %v5739
        %v5742 = vshrl.u32 %v5451, 16
        %v5744 = vrot.slane %v5742, 4
        %v5745 = vshll.u32 %v5451, 16
        %v5747 = vrot.slane %v5745, 5
        %v5748 = vor.u32 %v5744, %v5747
        %v5749 = vrot.slane %v5748, 4
        %v5751 = vshll.u32 %v5452, 16
        %v5753 = vrot.slane %v5751, 5
        %v5754 = vsel %vm417, %v5749, %v5753
        %v5755 = vshrl.u32 %v5452, 16
        %v5757 = vrot.slane %v5755, 4
        %v5758 = vor.u32 %v5757, %v5753
        %v5759 = vrot.slane %v5758, 4
        %v5761 = vshll.u32 %v5472, 16
        %v5763 = vrot.slane %v5761, 5
        %v5764 = vsel %vm417, %v5759, %v5763
        %v5766 = vshrl.u32 %v5453, 16
        %v5768 = vrot.slane %v5766, 4
        %v5769 = vshll.u32 %v5453, 16
        %v5771 = vrot.slane %v5769, 5
        %v5772 = vor.u32 %v5768, %v5771
        %v5773 = vrot.slane %v5772, 4
        %v5775 = vshll.u32 %v5454, 16
        %v5777 = vrot.slane %v5775, 5
        %v5778 = vsel %vm417, %v5773, %v5777
        %v5779 = vshrl.u32 %v5454, 16
        %v5781 = vrot.slane %v5779, 4
        %v5782 = vor.u32 %v5781, %v5777
        %v5783 = vrot.slane %v5782, 4
        %v5785 = vshll.u32 %v5473, 16
        %v5787 = vrot.slane %v5785, 5
        %v5788 = vsel %vm417, %v5783, %v5787
        %v5790 = vshrl.u32 %v5455, 16
        %v5792 = vrot.slane %v5790, 4
        %v5793 = vshll.u32 %v5455, 16
        %v5795 = vrot.slane %v5793, 5
        %v5796 = vor.u32 %v5792, %v5795
        %v5797 = vrot.slane %v5796, 4
        %v5799 = vshll.u32 %v5456, 16
        %v5801 = vrot.slane %v5799, 5
        %v5802 = vsel %vm417, %v5797, %v5801
        %v5803 = vshrl.u32 %v5456, 16
        %v5805 = vrot.slane %v5803, 4
        %v5806 = vor.u32 %v5805, %v5801
        %v5807 = vrot.slane %v5806, 4
        %v5809 = vshll.u32 %v5474, 16
        %v5811 = vrot.slane %v5809, 5
        %v5812 = vsel %vm417, %v5807, %v5811
        %v5814 = vshrl.u32 %v5457, 16
        %v5816 = vrot.slane %v5814, 4
        %v5817 = vshll.u32 %v5457, 16
        %v5819 = vrot.slane %v5817, 5
        %v5820 = vor.u32 %v5816, %v5819
        %v5821 = vrot.slane %v5820, 4
        %v5823 = vshll.u32 %v5458, 16
        %v5825 = vrot.slane %v5823, 5
        %v5826 = vsel %vm417, %v5821, %v5825
        %v5827 = vshrl.u32 %v5458, 16
        %v5829 = vrot.slane %v5827, 4
        %v5830 = vor.u32 %v5829, %v5825
        %v5831 = vrot.slane %v5830, 4
        %v5833 = vshll.u32 %v5475, 16
        %v5835 = vrot.slane %v5833, 5
        %v5836 = vsel %vm417, %v5831, %v5835
        %v5838 = vshrl.u32 %v5459, 16
        %v5840 = vrot.slane %v5838, 4
        %v5841 = vshll.u32 %v5459, 16
        %v5843 = vrot.slane %v5841, 5
        %v5844 = vor.u32 %v5840, %v5843
        %v5845 = vrot.slane %v5844, 4
        %v5847 = vshll.u32 %v5460, 16
        %v5849 = vrot.slane %v5847, 5
        %v5850 = vsel %vm417, %v5845, %v5849
        %v5851 = vshrl.u32 %v5460, 16
        %v5853 = vrot.slane %v5851, 4
        %v5854 = vor.u32 %v5853, %v5849
        %v5855 = vrot.slane %v5854, 4
        %v5857 = vshll.u32 %v5476, 16
        %v5859 = vrot.slane %v5857, 5
        %v5860 = vsel %vm417, %v5855, %v5859
        %v5861 = vld [vmem:[#allocation2] sm:$0xe]
        %v5862 = vld [vmem:[#allocation2 + $0xc] sm:$0xe]
        %v5863 = vld [vmem:[#allocation2 + $0x18] sm:$0xe]
        %v5864 = vld [vmem:[#allocation2 + $0x24] sm:$0xe]
        %v5865 = vld [vmem:[#allocation2 + $0x30] sm:$0xe]
        %v5866 = vld [vmem:[#allocation2 + $0x3c] sm:$0xe]
        %v5867 = vld [vmem:[#allocation2 + $0x48] sm:$0xe]
        %v5868 = vld [vmem:[#allocation2 + $0x54] sm:$0xe]
        %v5869 = vld [vmem:[#allocation2 + $0x60] sm:$0xe]
        %v5870 = vld [vmem:[#allocation2 + $0x6c] sm:$0xe]
        %v5871 = vld [vmem:[#allocation2 + $0x78] sm:$0xe]
        %v5872 = vld [vmem:[#allocation2 + $0x84] sm:$0xe]
        %v5873 = vld [vmem:[#allocation2 + $0x90] sm:$0xe]
        %v5874 = vld [vmem:[#allocation2 + $0x9c] sm:$0xe]
        %v5875 = vld [vmem:[#allocation2 + $0xa8] sm:$0xe]
        %v5876 = vld [vmem:[#allocation2 + $0xb4] sm:$0xe]
        %v5925 = vrot.slane %v5861, 5
        %v5926 = vrot.slane %v5925, 4
        %v5927 = vrot.slane %v5430, 5
        %v5928 = vsel %vm924, %v5926, %v5927
        %v5929 = vrot.slane %v5927, 4
        %v5930 = vrot.slane %v5461, 5
        %v5931 = vsel %vm924, %v5929, %v5930
        %v5932 = vrot.slane %v5862, 5
        %v5933 = vrot.slane %v5932, 4
        %v5934 = vrot.slane %v5432, 5
        %v5935 = vsel %vm924, %v5933, %v5934
        %v5936 = vrot.slane %v5934, 4
        %v5937 = vrot.slane %v5462, 5
        %v5938 = vsel %vm924, %v5936, %v5937
        %v5939 = vrot.slane %v5863, 5
        %v5940 = vrot.slane %v5939, 4
        %v5941 = vrot.slane %v5434, 5
        %v5942 = vsel %vm924, %v5940, %v5941
        %v5943 = vrot.slane %v5941, 4
        %v5944 = vrot.slane %v5463, 5
        %v5945 = vsel %vm924, %v5943, %v5944
        %v5946 = vrot.slane %v5864, 5
        %v5947 = vrot.slane %v5946, 4
        %v5948 = vrot.slane %v5436, 5
        %v5949 = vsel %vm924, %v5947, %v5948
        %v5950 = vrot.slane %v5948, 4
        %v5951 = vrot.slane %v5464, 5
        %v5952 = vsel %vm924, %v5950, %v5951
        %v5953 = vrot.slane %v5865, 5
        %v5954 = vrot.slane %v5953, 4
        %v5955 = vrot.slane %v5438, 5
        %v5956 = vsel %vm924, %v5954, %v5955
        %v5957 = vrot.slane %v5955, 4
        %v5958 = vrot.slane %v5465, 5
        %v5959 = vsel %vm924, %v5957, %v5958
        %v5960 = vrot.slane %v5866, 5
        %v5961 = vrot.slane %v5960, 4
        %v5962 = vrot.slane %v5440, 5
        %v5963 = vsel %vm924, %v5961, %v5962
        %v5964 = vrot.slane %v5962, 4
        %v5965 = vrot.slane %v5466, 5
        %v5966 = vsel %vm924, %v5964, %v5965
        %v5967 = vrot.slane %v5867, 5
        %v5968 = vrot.slane %v5967, 4
        %v5969 = vrot.slane %v5442, 5
        %v5970 = vsel %vm924, %v5968, %v5969
        %v5971 = vrot.slane %v5969, 4
        %v5972 = vrot.slane %v5467, 5
        %v5973 = vsel %vm924, %v5971, %v5972
        %v5974 = vrot.slane %v5868, 5
        %v5975 = vrot.slane %v5974, 4
        %v5976 = vrot.slane %v5444, 5
        %v5977 = vsel %vm924, %v5975, %v5976
        %v5978 = vrot.slane %v5976, 4
        %v5979 = vrot.slane %v5468, 5
        %v5980 = vsel %vm924, %v5978, %v5979
        %v5981 = vrot.slane %v5869, 5
        %v5982 = vrot.slane %v5981, 4
        %v5983 = vrot.slane %v5446, 5
        %v5984 = vsel %vm924, %v5982, %v5983
        %v5985 = vrot.slane %v5983, 4
        %v5986 = vrot.slane %v5469, 5
        %v5987 = vsel %vm924, %v5985, %v5986
        %v5988 = vrot.slane %v5870, 5
        %v5989 = vrot.slane %v5988, 4
        %v5990 = vrot.slane %v5448, 5
        %v5991 = vsel %vm924, %v5989, %v5990
        %v5992 = vrot.slane %v5990, 4
        %v5993 = vrot.slane %v5470, 5
        %v5994 = vsel %vm924, %v5992, %v5993
        %v5995 = vrot.slane %v5871, 5
        %v5996 = vrot.slane %v5995, 4
        %v5997 = vrot.slane %v5450, 5
        %v5998 = vsel %vm924, %v5996, %v5997
        %v5999 = vrot.slane %v5997, 4
        %v6000 = vrot.slane %v5471, 5
        %v6001 = vsel %vm924, %v5999, %v6000
        %v6002 = vrot.slane %v5872, 5
        %v6003 = vrot.slane %v6002, 4
        %v6004 = vrot.slane %v5452, 5
        %v6005 = vsel %vm924, %v6003, %v6004
        %v6006 = vrot.slane %v6004, 4
        %v6007 = vrot.slane %v5472, 5
        %v6008 = vsel %vm924, %v6006, %v6007
        %v6009 = vrot.slane %v5873, 5
        %v6010 = vrot.slane %v6009, 4
        %v6011 = vrot.slane %v5454, 5
        %v6012 = vsel %vm924, %v6010, %v6011
        %v6013 = vrot.slane %v6011, 4
        %v6014 = vrot.slane %v5473, 5
        %v6015 = vsel %vm924, %v6013, %v6014
        %v6016 = vrot.slane %v5874, 5
        %v6017 = vrot.slane %v6016, 4
        %v6018 = vrot.slane %v5456, 5
        %v6019 = vsel %vm924, %v6017, %v6018
        %v6020 = vrot.slane %v6018, 4
        %v6021 = vrot.slane %v5474, 5
        %v6022 = vsel %vm924, %v6020, %v6021
        %v6023 = vrot.slane %v5875, 5
        %v6024 = vrot.slane %v6023, 4
        %v6025 = vrot.slane %v5458, 5
        %v6026 = vsel %vm924, %v6024, %v6025
        %v6027 = vrot.slane %v6025, 4
        %v6028 = vrot.slane %v5475, 5
        %v6029 = vsel %vm924, %v6027, %v6028
        %v6030 = vrot.slane %v5876, 5
        %v6031 = vrot.slane %v6030, 4
        %v6032 = vrot.slane %v5460, 5
        %v6033 = vsel %vm924, %v6031, %v6032
        %v6034 = vrot.slane %v6032, 4
        %v6035 = vrot.slane %v5476, 5
        %v6036 = vsel %vm924, %v6034, %v6035
        %s6037 = scalar_lea.vmem [#allocation2], 12
        %v6038 = vld [vmem:[%s6037] sm:$0xf]
        %v6039 = vld [vmem:[%s6037 + $0x4] sm:$0xf]
        %v6040 = vld [vmem:[%s6037 + $0xc] sm:$0xf]
        %v6041 = vld [vmem:[%s6037 + $0x10] sm:$0xf]
        %v6042 = vld [vmem:[%s6037 + $0x18] sm:$0xf]
        %v6043 = vld [vmem:[%s6037 + $0x1c] sm:$0xf]
        %v6044 = vld [vmem:[%s6037 + $0x24] sm:$0xf]
        %v6045 = vld [vmem:[%s6037 + $0x28] sm:$0xf]
        %v6046 = vld [vmem:[%s6037 + $0x30] sm:$0xf]
        %v6047 = vld [vmem:[%s6037 + $0x34] sm:$0xf]
        %v6048 = vld [vmem:[%s6037 + $0x3c] sm:$0xf]
        %v6049 = vld [vmem:[%s6037 + $0x40] sm:$0xf]
        %v6050 = vld [vmem:[%s6037 + $0x48] sm:$0xf]
        %v6051 = vld [vmem:[%s6037 + $0x4c] sm:$0xf]
        %v6052 = vld [vmem:[%s6037 + $0x54] sm:$0xf]
        %v6053 = vld [vmem:[%s6037 + $0x58] sm:$0xf]
        %v6054 = vld [vmem:[%s6037 + $0x60] sm:$0xf]
        %v6055 = vld [vmem:[%s6037 + $0x64] sm:$0xf]
        %v6056 = vld [vmem:[%s6037 + $0x6c] sm:$0xf]
        %v6057 = vld [vmem:[%s6037 + $0x70] sm:$0xf]
        %v6058 = vld [vmem:[%s6037 + $0x78] sm:$0xf]
        %v6059 = vld [vmem:[%s6037 + $0x7c] sm:$0xf]
        %v6060 = vld [vmem:[%s6037 + $0x84] sm:$0xf]
        %v6061 = vld [vmem:[%s6037 + $0x88] sm:$0xf]
        %v6062 = vld [vmem:[%s6037 + $0x90] sm:$0xf]
        %v6063 = vld [vmem:[%s6037 + $0x94] sm:$0xf]
        %v6064 = vld [vmem:[%s6037 + $0x9c] sm:$0xf]
        %v6065 = vld [vmem:[%s6037 + $0xa0] sm:$0xf]
        %v6066 = vld [vmem:[%s6037 + $0xa8] sm:$0xf]
        %v6067 = vld [vmem:[%s6037 + $0xac] sm:$0xf]
        %v6068 = vld [vmem:[%s6037 + $0xb4] sm:$0xf]
        %v6069 = vld [vmem:[%s6037 + $0xb8] sm:$0xf]
        %v6070 = vld [vmem:[%s6037 + $0x8] sm:$0x1]
        %v6071 = vld [vmem:[%s6037 + $0x14] sm:$0x1]
        %v6072 = vld [vmem:[%s6037 + $0x20] sm:$0x1]
        %v6073 = vld [vmem:[%s6037 + $0x2c] sm:$0x1]
        %v6074 = vld [vmem:[%s6037 + $0x38] sm:$0x1]
        %v6075 = vld [vmem:[%s6037 + $0x44] sm:$0x1]
        %v6076 = vld [vmem:[%s6037 + $0x50] sm:$0x1]
        %v6077 = vld [vmem:[%s6037 + $0x5c] sm:$0x1]
        %v6078 = vld [vmem:[%s6037 + $0x68] sm:$0x1]
        %v6079 = vld [vmem:[%s6037 + $0x74] sm:$0x1]
        %v6080 = vld [vmem:[%s6037 + $0x80] sm:$0x1]
        %v6081 = vld [vmem:[%s6037 + $0x8c] sm:$0x1]
        %v6082 = vld [vmem:[%s6037 + $0x98] sm:$0x1]
        %v6083 = vld [vmem:[%s6037 + $0xa4] sm:$0x1]
        %v6084 = vld [vmem:[%s6037 + $0xb0] sm:$0x1]
        %v6085 = vld [vmem:[%s6037 + $0xbc] sm:$0x1]
        %v6087 = vshrl.u32 %v6038, 16
        %v6089 = vrot.slane %v6087, 4
        %v6090 = vshll.u32 %v6038, 16
        %v6092 = vrot.slane %v6090, 5
        %v6093 = vor.u32 %v6089, %v6092
        %v6094 = vrot.slane %v6093, 4
        %v6096 = vshll.u32 %v6039, 16
        %v6098 = vrot.slane %v6096, 5
        %v6099 = vsel %vm417, %v6094, %v6098
        %v6100 = vshrl.u32 %v6039, 16
        %v6102 = vrot.slane %v6100, 4
        %v6103 = vor.u32 %v6102, %v6098
        %v6104 = vrot.slane %v6103, 4
        %v6106 = vshll.u32 %v6070, 16
        %v6108 = vrot.slane %v6106, 5
        %v6109 = vsel %vm417, %v6104, %v6108
        %v6111 = vshrl.u32 %v6040, 16
        %v6113 = vrot.slane %v6111, 4
        %v6114 = vshll.u32 %v6040, 16
        %v6116 = vrot.slane %v6114, 5
        %v6117 = vor.u32 %v6113, %v6116
        %v6118 = vrot.slane %v6117, 4
        %v6120 = vshll.u32 %v6041, 16
        %v6122 = vrot.slane %v6120, 5
        %v6123 = vsel %vm417, %v6118, %v6122
        %v6124 = vshrl.u32 %v6041, 16
        %v6126 = vrot.slane %v6124, 4
        %v6127 = vor.u32 %v6126, %v6122
        %v6128 = vrot.slane %v6127, 4
        %v6130 = vshll.u32 %v6071, 16
        %v6132 = vrot.slane %v6130, 5
        %v6133 = vsel %vm417, %v6128, %v6132
        %v6135 = vshrl.u32 %v6042, 16
        %v6137 = vrot.slane %v6135, 4
        %v6138 = vshll.u32 %v6042, 16
        %v6140 = vrot.slane %v6138, 5
        %v6141 = vor.u32 %v6137, %v6140
        %v6142 = vrot.slane %v6141, 4
        %v6144 = vshll.u32 %v6043, 16
        %v6146 = vrot.slane %v6144, 5
        %v6147 = vsel %vm417, %v6142, %v6146
        %v6148 = vshrl.u32 %v6043, 16
        %v6150 = vrot.slane %v6148, 4
        %v6151 = vor.u32 %v6150, %v6146
        %v6152 = vrot.slane %v6151, 4
        %v6154 = vshll.u32 %v6072, 16
        %v6156 = vrot.slane %v6154, 5
        %v6157 = vsel %vm417, %v6152, %v6156
        %v6159 = vshrl.u32 %v6044, 16
        %v6161 = vrot.slane %v6159, 4
        %v6162 = vshll.u32 %v6044, 16
        %v6164 = vrot.slane %v6162, 5
        %v6165 = vor.u32 %v6161, %v6164
        %v6166 = vrot.slane %v6165, 4
        %v6168 = vshll.u32 %v6045, 16
        %v6170 = vrot.slane %v6168, 5
        %v6171 = vsel %vm417, %v6166, %v6170
        %v6172 = vshrl.u32 %v6045, 16
        %v6174 = vrot.slane %v6172, 4
        %v6175 = vor.u32 %v6174, %v6170
        %v6176 = vrot.slane %v6175, 4
        %v6178 = vshll.u32 %v6073, 16
        %v6180 = vrot.slane %v6178, 5
        %v6181 = vsel %vm417, %v6176, %v6180
        %v6183 = vshrl.u32 %v6046, 16
        %v6185 = vrot.slane %v6183, 4
        %v6186 = vshll.u32 %v6046, 16
        %v6188 = vrot.slane %v6186, 5
        %v6189 = vor.u32 %v6185, %v6188
        %v6190 = vrot.slane %v6189, 4
        %v6192 = vshll.u32 %v6047, 16
        %v6194 = vrot.slane %v6192, 5
        %v6195 = vsel %vm417, %v6190, %v6194
        %v6196 = vshrl.u32 %v6047, 16
        %v6198 = vrot.slane %v6196, 4
        %v6199 = vor.u32 %v6198, %v6194
        %v6200 = vrot.slane %v6199, 4
        %v6202 = vshll.u32 %v6074, 16
        %v6204 = vrot.slane %v6202, 5
        %v6205 = vsel %vm417, %v6200, %v6204
        %v6207 = vshrl.u32 %v6048, 16
        %v6209 = vrot.slane %v6207, 4
        %v6210 = vshll.u32 %v6048, 16
        %v6212 = vrot.slane %v6210, 5
        %v6213 = vor.u32 %v6209, %v6212
        %v6214 = vrot.slane %v6213, 4
        %v6216 = vshll.u32 %v6049, 16
        %v6218 = vrot.slane %v6216, 5
        %v6219 = vsel %vm417, %v6214, %v6218
        %v6220 = vshrl.u32 %v6049, 16
        %v6222 = vrot.slane %v6220, 4
        %v6223 = vor.u32 %v6222, %v6218
        %v6224 = vrot.slane %v6223, 4
        %v6226 = vshll.u32 %v6075, 16
        %v6228 = vrot.slane %v6226, 5
        %v6229 = vsel %vm417, %v6224, %v6228
        %v6231 = vshrl.u32 %v6050, 16
        %v6233 = vrot.slane %v6231, 4
        %v6234 = vshll.u32 %v6050, 16
        %v6236 = vrot.slane %v6234, 5
        %v6237 = vor.u32 %v6233, %v6236
        %v6238 = vrot.slane %v6237, 4
        %v6240 = vshll.u32 %v6051, 16
        %v6242 = vrot.slane %v6240, 5
        %v6243 = vsel %vm417, %v6238, %v6242
        %v6244 = vshrl.u32 %v6051, 16
        %v6246 = vrot.slane %v6244, 4
        %v6247 = vor.u32 %v6246, %v6242
        %v6248 = vrot.slane %v6247, 4
        %v6250 = vshll.u32 %v6076, 16
        %v6252 = vrot.slane %v6250, 5
        %v6253 = vsel %vm417, %v6248, %v6252
        %v6255 = vshrl.u32 %v6052, 16
        %v6257 = vrot.slane %v6255, 4
        %v6258 = vshll.u32 %v6052, 16
        %v6260 = vrot.slane %v6258, 5
        %v6261 = vor.u32 %v6257, %v6260
        %v6262 = vrot.slane %v6261, 4
        %v6264 = vshll.u32 %v6053, 16
        %v6266 = vrot.slane %v6264, 5
        %v6267 = vsel %vm417, %v6262, %v6266
        %v6268 = vshrl.u32 %v6053, 16
        %v6270 = vrot.slane %v6268, 4
        %v6271 = vor.u32 %v6270, %v6266
        %v6272 = vrot.slane %v6271, 4
        %v6274 = vshll.u32 %v6077, 16
        %v6276 = vrot.slane %v6274, 5
        %v6277 = vsel %vm417, %v6272, %v6276
        %v6279 = vshrl.u32 %v6054, 16
        %v6281 = vrot.slane %v6279, 4
        %v6282 = vshll.u32 %v6054, 16
        %v6284 = vrot.slane %v6282, 5
        %v6285 = vor.u32 %v6281, %v6284
        %v6286 = vrot.slane %v6285, 4
        %v6288 = vshll.u32 %v6055, 16
        %v6290 = vrot.slane %v6288, 5
        %v6291 = vsel %vm417, %v6286, %v6290
        %v6292 = vshrl.u32 %v6055, 16
        %v6294 = vrot.slane %v6292, 4
        %v6295 = vor.u32 %v6294, %v6290
        %v6296 = vrot.slane %v6295, 4
        %v6298 = vshll.u32 %v6078, 16
        %v6300 = vrot.slane %v6298, 5
        %v6301 = vsel %vm417, %v6296, %v6300
        %v6303 = vshrl.u32 %v6056, 16
        %v6305 = vrot.slane %v6303, 4
        %v6306 = vshll.u32 %v6056, 16
        %v6308 = vrot.slane %v6306, 5
        %v6309 = vor.u32 %v6305, %v6308
        %v6310 = vrot.slane %v6309, 4
        %v6312 = vshll.u32 %v6057, 16
        %v6314 = vrot.slane %v6312, 5
        %v6315 = vsel %vm417, %v6310, %v6314
        %v6316 = vshrl.u32 %v6057, 16
        %v6318 = vrot.slane %v6316, 4
        %v6319 = vor.u32 %v6318, %v6314
        %v6320 = vrot.slane %v6319, 4
        %v6322 = vshll.u32 %v6079, 16
        %v6324 = vrot.slane %v6322, 5
        %v6325 = vsel %vm417, %v6320, %v6324
        %v6327 = vshrl.u32 %v6058, 16
        %v6329 = vrot.slane %v6327, 4
        %v6330 = vshll.u32 %v6058, 16
        %v6332 = vrot.slane %v6330, 5
        %v6333 = vor.u32 %v6329, %v6332
        %v6334 = vrot.slane %v6333, 4
        %v6336 = vshll.u32 %v6059, 16
        %v6338 = vrot.slane %v6336, 5
        %v6339 = vsel %vm417, %v6334, %v6338
        %v6340 = vshrl.u32 %v6059, 16
        %v6342 = vrot.slane %v6340, 4
        %v6343 = vor.u32 %v6342, %v6338
        %v6344 = vrot.slane %v6343, 4
        %v6346 = vshll.u32 %v6080, 16
        %v6348 = vrot.slane %v6346, 5
        %v6349 = vsel %vm417, %v6344, %v6348
        %v6351 = vshrl.u32 %v6060, 16
        %v6353 = vrot.slane %v6351, 4
        %v6354 = vshll.u32 %v6060, 16
        %v6356 = vrot.slane %v6354, 5
        %v6357 = vor.u32 %v6353, %v6356
        %v6358 = vrot.slane %v6357, 4
        %v6360 = vshll.u32 %v6061, 16
        %v6362 = vrot.slane %v6360, 5
        %v6363 = vsel %vm417, %v6358, %v6362
        %v6364 = vshrl.u32 %v6061, 16
        %v6366 = vrot.slane %v6364, 4
        %v6367 = vor.u32 %v6366, %v6362
        %v6368 = vrot.slane %v6367, 4
        %v6370 = vshll.u32 %v6081, 16
        %v6372 = vrot.slane %v6370, 5
        %v6373 = vsel %vm417, %v6368, %v6372
        %v6375 = vshrl.u32 %v6062, 16
        %v6377 = vrot.slane %v6375, 4
        %v6378 = vshll.u32 %v6062, 16
        %v6380 = vrot.slane %v6378, 5
        %v6381 = vor.u32 %v6377, %v6380
        %v6382 = vrot.slane %v6381, 4
        %v6384 = vshll.u32 %v6063, 16
        %v6386 = vrot.slane %v6384, 5
        %v6387 = vsel %vm417, %v6382, %v6386
        %v6388 = vshrl.u32 %v6063, 16
        %v6390 = vrot.slane %v6388, 4
        %v6391 = vor.u32 %v6390, %v6386
        %v6392 = vrot.slane %v6391, 4
        %v6394 = vshll.u32 %v6082, 16
        %v6396 = vrot.slane %v6394, 5
        %v6397 = vsel %vm417, %v6392, %v6396
        %v6399 = vshrl.u32 %v6064, 16
        %v6401 = vrot.slane %v6399, 4
        %v6402 = vshll.u32 %v6064, 16
        %v6404 = vrot.slane %v6402, 5
        %v6405 = vor.u32 %v6401, %v6404
        %v6406 = vrot.slane %v6405, 4
        %v6408 = vshll.u32 %v6065, 16
        %v6410 = vrot.slane %v6408, 5
        %v6411 = vsel %vm417, %v6406, %v6410
        %v6412 = vshrl.u32 %v6065, 16
        %v6414 = vrot.slane %v6412, 4
        %v6415 = vor.u32 %v6414, %v6410
        %v6416 = vrot.slane %v6415, 4
        %v6418 = vshll.u32 %v6083, 16
        %v6420 = vrot.slane %v6418, 5
        %v6421 = vsel %vm417, %v6416, %v6420
        %v6423 = vshrl.u32 %v6066, 16
        %v6425 = vrot.slane %v6423, 4
        %v6426 = vshll.u32 %v6066, 16
        %v6428 = vrot.slane %v6426, 5
        %v6429 = vor.u32 %v6425, %v6428
        %v6430 = vrot.slane %v6429, 4
        %v6432 = vshll.u32 %v6067, 16
        %v6434 = vrot.slane %v6432, 5
        %v6435 = vsel %vm417, %v6430, %v6434
        %v6436 = vshrl.u32 %v6067, 16
        %v6438 = vrot.slane %v6436, 4
        %v6439 = vor.u32 %v6438, %v6434
        %v6440 = vrot.slane %v6439, 4
        %v6442 = vshll.u32 %v6084, 16
        %v6444 = vrot.slane %v6442, 5
        %v6445 = vsel %vm417, %v6440, %v6444
        %v6447 = vshrl.u32 %v6068, 16
        %v6449 = vrot.slane %v6447, 4
        %v6450 = vshll.u32 %v6068, 16
        %v6452 = vrot.slane %v6450, 5
        %v6453 = vor.u32 %v6449, %v6452
        %v6454 = vrot.slane %v6453, 4
        %v6456 = vshll.u32 %v6069, 16
        %v6458 = vrot.slane %v6456, 5
        %v6459 = vsel %vm417, %v6454, %v6458
        %v6460 = vshrl.u32 %v6069, 16
        %v6462 = vrot.slane %v6460, 4
        %v6463 = vor.u32 %v6462, %v6458
        %v6464 = vrot.slane %v6463, 4
        %v6466 = vshll.u32 %v6085, 16
        %v6468 = vrot.slane %v6466, 5
        %v6469 = vsel %vm417, %v6464, %v6468
        %v6470 = vld [vmem:[%s6037] sm:$0xe]
        %v6471 = vld [vmem:[%s6037 + $0xc] sm:$0xe]
        %v6472 = vld [vmem:[%s6037 + $0x18] sm:$0xe]
        %v6473 = vld [vmem:[%s6037 + $0x24] sm:$0xe]
        %v6474 = vld [vmem:[%s6037 + $0x30] sm:$0xe]
        %v6475 = vld [vmem:[%s6037 + $0x3c] sm:$0xe]
        %v6476 = vld [vmem:[%s6037 + $0x48] sm:$0xe]
        %v6477 = vld [vmem:[%s6037 + $0x54] sm:$0xe]
        %v6478 = vld [vmem:[%s6037 + $0x60] sm:$0xe]
        %v6479 = vld [vmem:[%s6037 + $0x6c] sm:$0xe]
        %v6480 = vld [vmem:[%s6037 + $0x78] sm:$0xe]
        %v6481 = vld [vmem:[%s6037 + $0x84] sm:$0xe]
        %v6482 = vld [vmem:[%s6037 + $0x90] sm:$0xe]
        %v6483 = vld [vmem:[%s6037 + $0x9c] sm:$0xe]
        %v6484 = vld [vmem:[%s6037 + $0xa8] sm:$0xe]
        %v6485 = vld [vmem:[%s6037 + $0xb4] sm:$0xe]
        %v6534 = vrot.slane %v6470, 5
        %v6535 = vrot.slane %v6534, 4
        %v6536 = vrot.slane %v6039, 5
        %v6537 = vsel %vm924, %v6535, %v6536
        %v6538 = vrot.slane %v6536, 4
        %v6539 = vrot.slane %v6070, 5
        %v6540 = vsel %vm924, %v6538, %v6539
        %v6541 = vrot.slane %v6471, 5
        %v6542 = vrot.slane %v6541, 4
        %v6543 = vrot.slane %v6041, 5
        %v6544 = vsel %vm924, %v6542, %v6543
        %v6545 = vrot.slane %v6543, 4
        %v6546 = vrot.slane %v6071, 5
        %v6547 = vsel %vm924, %v6545, %v6546
        %v6548 = vrot.slane %v6472, 5
        %v6549 = vrot.slane %v6548, 4
        %v6550 = vrot.slane %v6043, 5
        %v6551 = vsel %vm924, %v6549, %v6550
        %v6552 = vrot.slane %v6550, 4
        %v6553 = vrot.slane %v6072, 5
        %v6554 = vsel %vm924, %v6552, %v6553
        %v6555 = vrot.slane %v6473, 5
        %v6556 = vrot.slane %v6555, 4
        %v6557 = vrot.slane %v6045, 5
        %v6558 = vsel %vm924, %v6556, %v6557
        %v6559 = vrot.slane %v6557, 4
        %v6560 = vrot.slane %v6073, 5
        %v6561 = vsel %vm924, %v6559, %v6560
        %v6562 = vrot.slane %v6474, 5
        %v6563 = vrot.slane %v6562, 4
        %v6564 = vrot.slane %v6047, 5
        %v6565 = vsel %vm924, %v6563, %v6564
        %v6566 = vrot.slane %v6564, 4
        %v6567 = vrot.slane %v6074, 5
        %v6568 = vsel %vm924, %v6566, %v6567
        %v6569 = vrot.slane %v6475, 5
        %v6570 = vrot.slane %v6569, 4
        %v6571 = vrot.slane %v6049, 5
        %v6572 = vsel %vm924, %v6570, %v6571
        %v6573 = vrot.slane %v6571, 4
        %v6574 = vrot.slane %v6075, 5
        %v6575 = vsel %vm924, %v6573, %v6574
        %v6576 = vrot.slane %v6476, 5
        %v6577 = vrot.slane %v6576, 4
        %v6578 = vrot.slane %v6051, 5
        %v6579 = vsel %vm924, %v6577, %v6578
        %v6580 = vrot.slane %v6578, 4
        %v6581 = vrot.slane %v6076, 5
        %v6582 = vsel %vm924, %v6580, %v6581
        %v6583 = vrot.slane %v6477, 5
        %v6584 = vrot.slane %v6583, 4
        %v6585 = vrot.slane %v6053, 5
        %v6586 = vsel %vm924, %v6584, %v6585
        %v6587 = vrot.slane %v6585, 4
        %v6588 = vrot.slane %v6077, 5
        %v6589 = vsel %vm924, %v6587, %v6588
        %v6590 = vrot.slane %v6478, 5
        %v6591 = vrot.slane %v6590, 4
        %v6592 = vrot.slane %v6055, 5
        %v6593 = vsel %vm924, %v6591, %v6592
        %v6594 = vrot.slane %v6592, 4
        %v6595 = vrot.slane %v6078, 5
        %v6596 = vsel %vm924, %v6594, %v6595
        %v6597 = vrot.slane %v6479, 5
        %v6598 = vrot.slane %v6597, 4
        %v6599 = vrot.slane %v6057, 5
        %v6600 = vsel %vm924, %v6598, %v6599
        %v6601 = vrot.slane %v6599, 4
        %v6602 = vrot.slane %v6079, 5
        %v6603 = vsel %vm924, %v6601, %v6602
        %v6604 = vrot.slane %v6480, 5
        %v6605 = vrot.slane %v6604, 4
        %v6606 = vrot.slane %v6059, 5
        %v6607 = vsel %vm924, %v6605, %v6606
        %v6608 = vrot.slane %v6606, 4
        %v6609 = vrot.slane %v6080, 5
        %v6610 = vsel %vm924, %v6608, %v6609
        %v6611 = vrot.slane %v6481, 5
        %v6612 = vrot.slane %v6611, 4
        %v6613 = vrot.slane %v6061, 5
        %v6614 = vsel %vm924, %v6612, %v6613
        %v6615 = vrot.slane %v6613, 4
        %v6616 = vrot.slane %v6081, 5
        %v6617 = vsel %vm924, %v6615, %v6616
        %v6618 = vrot.slane %v6482, 5
        %v6619 = vrot.slane %v6618, 4
        %v6620 = vrot.slane %v6063, 5
        %v6621 = vsel %vm924, %v6619, %v6620
        %v6622 = vrot.slane %v6620, 4
        %v6623 = vrot.slane %v6082, 5
        %v6624 = vsel %vm924, %v6622, %v6623
        %v6625 = vrot.slane %v6483, 5
        %v6626 = vrot.slane %v6625, 4
        %v6627 = vrot.slane %v6065, 5
        %v6628 = vsel %vm924, %v6626, %v6627
        %v6629 = vrot.slane %v6627, 4
        %v6630 = vrot.slane %v6083, 5
        %v6631 = vsel %vm924, %v6629, %v6630
        %v6632 = vrot.slane %v6484, 5
        %v6633 = vrot.slane %v6632, 4
        %v6634 = vrot.slane %v6067, 5
        %v6635 = vsel %vm924, %v6633, %v6634
        %v6636 = vrot.slane %v6634, 4
        %v6637 = vrot.slane %v6084, 5
        %v6638 = vsel %vm924, %v6636, %v6637
        %v6639 = vrot.slane %v6485, 5
        %v6640 = vrot.slane %v6639, 4
        %v6641 = vrot.slane %v6069, 5
        %v6642 = vsel %vm924, %v6640, %v6641
        %v6643 = vrot.slane %v6641, 4
        %v6644 = vrot.slane %v6085, 5
        %v6645 = vsel %vm924, %v6643, %v6644
        %s6646 = scalar_lea.vmem [#allocation2], 24
        %v6647 = vld [vmem:[%s6646] sm:$0xf]
        %v6648 = vld [vmem:[%s6646 + $0x4] sm:$0xf]
        %v6649 = vld [vmem:[%s6646 + $0xc] sm:$0xf]
        %v6650 = vld [vmem:[%s6646 + $0x10] sm:$0xf]
        %v6651 = vld [vmem:[%s6646 + $0x18] sm:$0xf]
        %v6652 = vld [vmem:[%s6646 + $0x1c] sm:$0xf]
        %v6653 = vld [vmem:[%s6646 + $0x24] sm:$0xf]
        %v6654 = vld [vmem:[%s6646 + $0x28] sm:$0xf]
        %v6655 = vld [vmem:[%s6646 + $0x30] sm:$0xf]
        %v6656 = vld [vmem:[%s6646 + $0x34] sm:$0xf]
        %v6657 = vld [vmem:[%s6646 + $0x3c] sm:$0xf]
        %v6658 = vld [vmem:[%s6646 + $0x40] sm:$0xf]
        %v6659 = vld [vmem:[%s6646 + $0x48] sm:$0xf]
        %v6660 = vld [vmem:[%s6646 + $0x4c] sm:$0xf]
        %v6661 = vld [vmem:[%s6646 + $0x54] sm:$0xf]
        %v6662 = vld [vmem:[%s6646 + $0x58] sm:$0xf]
        %v6663 = vld [vmem:[%s6646 + $0x60] sm:$0xf]
        %v6664 = vld [vmem:[%s6646 + $0x64] sm:$0xf]
        %v6665 = vld [vmem:[%s6646 + $0x6c] sm:$0xf]
        %v6666 = vld [vmem:[%s6646 + $0x70] sm:$0xf]
        %v6667 = vld [vmem:[%s6646 + $0x78] sm:$0xf]
        %v6668 = vld [vmem:[%s6646 + $0x7c] sm:$0xf]
        %v6669 = vld [vmem:[%s6646 + $0x84] sm:$0xf]
        %v6670 = vld [vmem:[%s6646 + $0x88] sm:$0xf]
        %v6671 = vld [vmem:[%s6646 + $0x90] sm:$0xf]
        %v6672 = vld [vmem:[%s6646 + $0x94] sm:$0xf]
        %v6673 = vld [vmem:[%s6646 + $0x9c] sm:$0xf]
        %v6674 = vld [vmem:[%s6646 + $0xa0] sm:$0xf]
        %v6675 = vld [vmem:[%s6646 + $0xa8] sm:$0xf]
        %v6676 = vld [vmem:[%s6646 + $0xac] sm:$0xf]
        %v6677 = vld [vmem:[%s6646 + $0xb4] sm:$0xf]
        %v6678 = vld [vmem:[%s6646 + $0xb8] sm:$0xf]
        %v6679 = vld [vmem:[%s6646 + $0x8] sm:$0x1]
        %v6680 = vld [vmem:[%s6646 + $0x14] sm:$0x1]
        %v6681 = vld [vmem:[%s6646 + $0x20] sm:$0x1]
        %v6682 = vld [vmem:[%s6646 + $0x2c] sm:$0x1]
        %v6683 = vld [vmem:[%s6646 + $0x38] sm:$0x1]
        %v6684 = vld [vmem:[%s6646 + $0x44] sm:$0x1]
        %v6685 = vld [vmem:[%s6646 + $0x50] sm:$0x1]
        %v6686 = vld [vmem:[%s6646 + $0x5c] sm:$0x1]
        %v6687 = vld [vmem:[%s6646 + $0x68] sm:$0x1]
        %v6688 = vld [vmem:[%s6646 + $0x74] sm:$0x1]
        %v6689 = vld [vmem:[%s6646 + $0x80] sm:$0x1]
        %v6690 = vld [vmem:[%s6646 + $0x8c] sm:$0x1]
        %v6691 = vld [vmem:[%s6646 + $0x98] sm:$0x1]
        %v6692 = vld [vmem:[%s6646 + $0xa4] sm:$0x1]
        %v6693 = vld [vmem:[%s6646 + $0xb0] sm:$0x1]
        %v6694 = vld [vmem:[%s6646 + $0xbc] sm:$0x1]
        %v6696 = vshrl.u32 %v6647, 16
        %v6698 = vrot.slane %v6696, 4
        %v6699 = vshll.u32 %v6647, 16
        %v6701 = vrot.slane %v6699, 5
        %v6702 = vor.u32 %v6698, %v6701
        %v6703 = vrot.slane %v6702, 4
        %v6705 = vshll.u32 %v6648, 16
        %v6707 = vrot.slane %v6705, 5
        %v6708 = vsel %vm417, %v6703, %v6707
        %v6709 = vshrl.u32 %v6648, 16
        %v6711 = vrot.slane %v6709, 4
        %v6712 = vor.u32 %v6711, %v6707
        %v6713 = vrot.slane %v6712, 4
        %v6715 = vshll.u32 %v6679, 16
        %v6717 = vrot.slane %v6715, 5
        %v6718 = vsel %vm417, %v6713, %v6717
        %v6720 = vshrl.u32 %v6649, 16
        %v6722 = vrot.slane %v6720, 4
        %v6723 = vshll.u32 %v6649, 16
        %v6725 = vrot.slane %v6723, 5
        %v6726 = vor.u32 %v6722, %v6725
        %v6727 = vrot.slane %v6726, 4
        %v6729 = vshll.u32 %v6650, 16
        %v6731 = vrot.slane %v6729, 5
        %v6732 = vsel %vm417, %v6727, %v6731
        %v6733 = vshrl.u32 %v6650, 16
        %v6735 = vrot.slane %v6733, 4
        %v6736 = vor.u32 %v6735, %v6731
        %v6737 = vrot.slane %v6736, 4
        %v6739 = vshll.u32 %v6680, 16
        %v6741 = vrot.slane %v6739, 5
        %v6742 = vsel %vm417, %v6737, %v6741
        %v6744 = vshrl.u32 %v6651, 16
        %v6746 = vrot.slane %v6744, 4
        %v6747 = vshll.u32 %v6651, 16
        %v6749 = vrot.slane %v6747, 5
        %v6750 = vor.u32 %v6746, %v6749
        %v6751 = vrot.slane %v6750, 4
        %v6753 = vshll.u32 %v6652, 16
        %v6755 = vrot.slane %v6753, 5
        %v6756 = vsel %vm417, %v6751, %v6755
        %v6757 = vshrl.u32 %v6652, 16
        %v6759 = vrot.slane %v6757, 4
        %v6760 = vor.u32 %v6759, %v6755
        %v6761 = vrot.slane %v6760, 4
        %v6763 = vshll.u32 %v6681, 16
        %v6765 = vrot.slane %v6763, 5
        %v6766 = vsel %vm417, %v6761, %v6765
        %v6768 = vshrl.u32 %v6653, 16
        %v6770 = vrot.slane %v6768, 4
        %v6771 = vshll.u32 %v6653, 16
        %v6773 = vrot.slane %v6771, 5
        %v6774 = vor.u32 %v6770, %v6773
        %v6775 = vrot.slane %v6774, 4
        %v6777 = vshll.u32 %v6654, 16
        %v6779 = vrot.slane %v6777, 5
        %v6780 = vsel %vm417, %v6775, %v6779
        %v6781 = vshrl.u32 %v6654, 16
        %v6783 = vrot.slane %v6781, 4
        %v6784 = vor.u32 %v6783, %v6779
        %v6785 = vrot.slane %v6784, 4
        %v6787 = vshll.u32 %v6682, 16
        %v6789 = vrot.slane %v6787, 5
        %v6790 = vsel %vm417, %v6785, %v6789
        %v6792 = vshrl.u32 %v6655, 16
        %v6794 = vrot.slane %v6792, 4
        %v6795 = vshll.u32 %v6655, 16
        %v6797 = vrot.slane %v6795, 5
        %v6798 = vor.u32 %v6794, %v6797
        %v6799 = vrot.slane %v6798, 4
        %v6801 = vshll.u32 %v6656, 16
        %v6803 = vrot.slane %v6801, 5
        %v6804 = vsel %vm417, %v6799, %v6803
        %v6805 = vshrl.u32 %v6656, 16
        %v6807 = vrot.slane %v6805, 4
        %v6808 = vor.u32 %v6807, %v6803
        %v6809 = vrot.slane %v6808, 4
        %v6811 = vshll.u32 %v6683, 16
        %v6813 = vrot.slane %v6811, 5
        %v6814 = vsel %vm417, %v6809, %v6813
        %v6816 = vshrl.u32 %v6657, 16
        %v6818 = vrot.slane %v6816, 4
        %v6819 = vshll.u32 %v6657, 16
        %v6821 = vrot.slane %v6819, 5
        %v6822 = vor.u32 %v6818, %v6821
        %v6823 = vrot.slane %v6822, 4
        %v6825 = vshll.u32 %v6658, 16
        %v6827 = vrot.slane %v6825, 5
        %v6828 = vsel %vm417, %v6823, %v6827
        %v6829 = vshrl.u32 %v6658, 16
        %v6831 = vrot.slane %v6829, 4
        %v6832 = vor.u32 %v6831, %v6827
        %v6833 = vrot.slane %v6832, 4
        %v6835 = vshll.u32 %v6684, 16
        %v6837 = vrot.slane %v6835, 5
        %v6838 = vsel %vm417, %v6833, %v6837
        %v6840 = vshrl.u32 %v6659, 16
        %v6842 = vrot.slane %v6840, 4
        %v6843 = vshll.u32 %v6659, 16
        %v6845 = vrot.slane %v6843, 5
        %v6846 = vor.u32 %v6842, %v6845
        %v6847 = vrot.slane %v6846, 4
        %v6849 = vshll.u32 %v6660, 16
        %v6851 = vrot.slane %v6849, 5
        %v6852 = vsel %vm417, %v6847, %v6851
        %v6853 = vshrl.u32 %v6660, 16
        %v6855 = vrot.slane %v6853, 4
        %v6856 = vor.u32 %v6855, %v6851
        %v6857 = vrot.slane %v6856, 4
        %v6859 = vshll.u32 %v6685, 16
        %v6861 = vrot.slane %v6859, 5
        %v6862 = vsel %vm417, %v6857, %v6861
        %v6864 = vshrl.u32 %v6661, 16
        %v6866 = vrot.slane %v6864, 4
        %v6867 = vshll.u32 %v6661, 16
        %v6869 = vrot.slane %v6867, 5
        %v6870 = vor.u32 %v6866, %v6869
        %v6871 = vrot.slane %v6870, 4
        %v6873 = vshll.u32 %v6662, 16
        %v6875 = vrot.slane %v6873, 5
        %v6876 = vsel %vm417, %v6871, %v6875
        %v6877 = vshrl.u32 %v6662, 16
        %v6879 = vrot.slane %v6877, 4
        %v6880 = vor.u32 %v6879, %v6875
        %v6881 = vrot.slane %v6880, 4
        %v6883 = vshll.u32 %v6686, 16
        %v6885 = vrot.slane %v6883, 5
        %v6886 = vsel %vm417, %v6881, %v6885
        %v6888 = vshrl.u32 %v6663, 16
        %v6890 = vrot.slane %v6888, 4
        %v6891 = vshll.u32 %v6663, 16
        %v6893 = vrot.slane %v6891, 5
        %v6894 = vor.u32 %v6890, %v6893
        %v6895 = vrot.slane %v6894, 4
        %v6897 = vshll.u32 %v6664, 16
        %v6899 = vrot.slane %v6897, 5
        %v6900 = vsel %vm417, %v6895, %v6899
        %v6901 = vshrl.u32 %v6664, 16
        %v6903 = vrot.slane %v6901, 4
        %v6904 = vor.u32 %v6903, %v6899
        %v6905 = vrot.slane %v6904, 4
        %v6907 = vshll.u32 %v6687, 16
        %v6909 = vrot.slane %v6907, 5
        %v6910 = vsel %vm417, %v6905, %v6909
        %v6912 = vshrl.u32 %v6665, 16
        %v6914 = vrot.slane %v6912, 4
        %v6915 = vshll.u32 %v6665, 16
        %v6917 = vrot.slane %v6915, 5
        %v6918 = vor.u32 %v6914, %v6917
        %v6919 = vrot.slane %v6918, 4
        %v6921 = vshll.u32 %v6666, 16
        %v6923 = vrot.slane %v6921, 5
        %v6924 = vsel %vm417, %v6919, %v6923
        %v6925 = vshrl.u32 %v6666, 16
        %v6927 = vrot.slane %v6925, 4
        %v6928 = vor.u32 %v6927, %v6923
        %v6929 = vrot.slane %v6928, 4
        %v6931 = vshll.u32 %v6688, 16
        %v6933 = vrot.slane %v6931, 5
        %v6934 = vsel %vm417, %v6929, %v6933
        %v6936 = vshrl.u32 %v6667, 16
        %v6938 = vrot.slane %v6936, 4
        %v6939 = vshll.u32 %v6667, 16
        %v6941 = vrot.slane %v6939, 5
        %v6942 = vor.u32 %v6938, %v6941
        %v6943 = vrot.slane %v6942, 4
        %v6945 = vshll.u32 %v6668, 16
        %v6947 = vrot.slane %v6945, 5
        %v6948 = vsel %vm417, %v6943, %v6947
        %v6949 = vshrl.u32 %v6668, 16
        %v6951 = vrot.slane %v6949, 4
        %v6952 = vor.u32 %v6951, %v6947
        %v6953 = vrot.slane %v6952, 4
        %v6955 = vshll.u32 %v6689, 16
        %v6957 = vrot.slane %v6955, 5
        %v6958 = vsel %vm417, %v6953, %v6957
        %v6960 = vshrl.u32 %v6669, 16
        %v6962 = vrot.slane %v6960, 4
        %v6963 = vshll.u32 %v6669, 16
        %v6965 = vrot.slane %v6963, 5
        %v6966 = vor.u32 %v6962, %v6965
        %v6967 = vrot.slane %v6966, 4
        %v6969 = vshll.u32 %v6670, 16
        %v6971 = vrot.slane %v6969, 5
        %v6972 = vsel %vm417, %v6967, %v6971
        %v6973 = vshrl.u32 %v6670, 16
        %v6975 = vrot.slane %v6973, 4
        %v6976 = vor.u32 %v6975, %v6971
        %v6977 = vrot.slane %v6976, 4
        %v6979 = vshll.u32 %v6690, 16
        %v6981 = vrot.slane %v6979, 5
        %v6982 = vsel %vm417, %v6977, %v6981
        %v6984 = vshrl.u32 %v6671, 16
        %v6986 = vrot.slane %v6984, 4
        %v6987 = vshll.u32 %v6671, 16
        %v6989 = vrot.slane %v6987, 5
        %v6990 = vor.u32 %v6986, %v6989
        %v6991 = vrot.slane %v6990, 4
        %v6993 = vshll.u32 %v6672, 16
        %v6995 = vrot.slane %v6993, 5
        %v6996 = vsel %vm417, %v6991, %v6995
        %v6997 = vshrl.u32 %v6672, 16
        %v6999 = vrot.slane %v6997, 4
        %v7000 = vor.u32 %v6999, %v6995
        %v7001 = vrot.slane %v7000, 4
        %v7003 = vshll.u32 %v6691, 16
        %v7005 = vrot.slane %v7003, 5
        %v7006 = vsel %vm417, %v7001, %v7005
        %v7008 = vshrl.u32 %v6673, 16
        %v7010 = vrot.slane %v7008, 4
        %v7011 = vshll.u32 %v6673, 16
        %v7013 = vrot.slane %v7011, 5
        %v7014 = vor.u32 %v7010, %v7013
        %v7015 = vrot.slane %v7014, 4
        %v7017 = vshll.u32 %v6674, 16
        %v7019 = vrot.slane %v7017, 5
        %v7020 = vsel %vm417, %v7015, %v7019
        %v7021 = vshrl.u32 %v6674, 16
        %v7023 = vrot.slane %v7021, 4
        %v7024 = vor.u32 %v7023, %v7019
        %v7025 = vrot.slane %v7024, 4
        %v7027 = vshll.u32 %v6692, 16
        %v7029 = vrot.slane %v7027, 5
        %v7030 = vsel %vm417, %v7025, %v7029
        %v7032 = vshrl.u32 %v6675, 16
        %v7034 = vrot.slane %v7032, 4
        %v7035 = vshll.u32 %v6675, 16
        %v7037 = vrot.slane %v7035, 5
        %v7038 = vor.u32 %v7034, %v7037
        %v7039 = vrot.slane %v7038, 4
        %v7041 = vshll.u32 %v6676, 16
        %v7043 = vrot.slane %v7041, 5
        %v7044 = vsel %vm417, %v7039, %v7043
        %v7045 = vshrl.u32 %v6676, 16
        %v7047 = vrot.slane %v7045, 4
        %v7048 = vor.u32 %v7047, %v7043
        %v7049 = vrot.slane %v7048, 4
        %v7051 = vshll.u32 %v6693, 16
        %v7053 = vrot.slane %v7051, 5
        %v7054 = vsel %vm417, %v7049, %v7053
        %v7056 = vshrl.u32 %v6677, 16
        %v7058 = vrot.slane %v7056, 4
        %v7059 = vshll.u32 %v6677, 16
        %v7061 = vrot.slane %v7059, 5
        %v7062 = vor.u32 %v7058, %v7061
        %v7063 = vrot.slane %v7062, 4
        %v7065 = vshll.u32 %v6678, 16
        %v7067 = vrot.slane %v7065, 5
        %v7068 = vsel %vm417, %v7063, %v7067
        %v7069 = vshrl.u32 %v6678, 16
        %v7071 = vrot.slane %v7069, 4
        %v7072 = vor.u32 %v7071, %v7067
        %v7073 = vrot.slane %v7072, 4
        %v7075 = vshll.u32 %v6694, 16
        %v7077 = vrot.slane %v7075, 5
        %v7078 = vsel %vm417, %v7073, %v7077
        %v7079 = vld [vmem:[%s6646] sm:$0xe]
        %v7080 = vld [vmem:[%s6646 + $0xc] sm:$0xe]
        %v7081 = vld [vmem:[%s6646 + $0x18] sm:$0xe]
        %v7082 = vld [vmem:[%s6646 + $0x24] sm:$0xe]
        %v7083 = vld [vmem:[%s6646 + $0x30] sm:$0xe]
        %v7084 = vld [vmem:[%s6646 + $0x3c] sm:$0xe]
        %v7085 = vld [vmem:[%s6646 + $0x48] sm:$0xe]
        %v7086 = vld [vmem:[%s6646 + $0x54] sm:$0xe]
        %v7087 = vld [vmem:[%s6646 + $0x60] sm:$0xe]
        %v7088 = vld [vmem:[%s6646 + $0x6c] sm:$0xe]
        %v7089 = vld [vmem:[%s6646 + $0x78] sm:$0xe]
        %v7090 = vld [vmem:[%s6646 + $0x84] sm:$0xe]
        %v7091 = vld [vmem:[%s6646 + $0x90] sm:$0xe]
        %v7092 = vld [vmem:[%s6646 + $0x9c] sm:$0xe]
        %v7093 = vld [vmem:[%s6646 + $0xa8] sm:$0xe]
        %v7094 = vld [vmem:[%s6646 + $0xb4] sm:$0xe]
        %v7143 = vrot.slane %v7079, 5
        %v7144 = vrot.slane %v7143, 4
        %v7145 = vrot.slane %v6648, 5
        %v7146 = vsel %vm924, %v7144, %v7145
        %v7147 = vrot.slane %v7145, 4
        %v7148 = vrot.slane %v6679, 5
        %v7149 = vsel %vm924, %v7147, %v7148
        %v7150 = vrot.slane %v7080, 5
        %v7151 = vrot.slane %v7150, 4
        %v7152 = vrot.slane %v6650, 5
        %v7153 = vsel %vm924, %v7151, %v7152
        %v7154 = vrot.slane %v7152, 4
        %v7155 = vrot.slane %v6680, 5
        %v7156 = vsel %vm924, %v7154, %v7155
        %v7157 = vrot.slane %v7081, 5
        %v7158 = vrot.slane %v7157, 4
        %v7159 = vrot.slane %v6652, 5
        %v7160 = vsel %vm924, %v7158, %v7159
        %v7161 = vrot.slane %v7159, 4
        %v7162 = vrot.slane %v6681, 5
        %v7163 = vsel %vm924, %v7161, %v7162
        %v7164 = vrot.slane %v7082, 5
        %v7165 = vrot.slane %v7164, 4
        %v7166 = vrot.slane %v6654, 5
        %v7167 = vsel %vm924, %v7165, %v7166
        %v7168 = vrot.slane %v7166, 4
        %v7169 = vrot.slane %v6682, 5
        %v7170 = vsel %vm924, %v7168, %v7169
        %v7171 = vrot.slane %v7083, 5
        %v7172 = vrot.slane %v7171, 4
        %v7173 = vrot.slane %v6656, 5
        %v7174 = vsel %vm924, %v7172, %v7173
        %v7175 = vrot.slane %v7173, 4
        %v7176 = vrot.slane %v6683, 5
        %v7177 = vsel %vm924, %v7175, %v7176
        %v7178 = vrot.slane %v7084, 5
        %v7179 = vrot.slane %v7178, 4
        %v7180 = vrot.slane %v6658, 5
        %v7181 = vsel %vm924, %v7179, %v7180
        %v7182 = vrot.slane %v7180, 4
        %v7183 = vrot.slane %v6684, 5
        %v7184 = vsel %vm924, %v7182, %v7183
        %v7185 = vrot.slane %v7085, 5
        %v7186 = vrot.slane %v7185, 4
        %v7187 = vrot.slane %v6660, 5
        %v7188 = vsel %vm924, %v7186, %v7187
        %v7189 = vrot.slane %v7187, 4
        %v7190 = vrot.slane %v6685, 5
        %v7191 = vsel %vm924, %v7189, %v7190
        %v7192 = vrot.slane %v7086, 5
        %v7193 = vrot.slane %v7192, 4
        %v7194 = vrot.slane %v6662, 5
        %v7195 = vsel %vm924, %v7193, %v7194
        %v7196 = vrot.slane %v7194, 4
        %v7197 = vrot.slane %v6686, 5
        %v7198 = vsel %vm924, %v7196, %v7197
        %v7199 = vrot.slane %v7087, 5
        %v7200 = vrot.slane %v7199, 4
        %v7201 = vrot.slane %v6664, 5
        %v7202 = vsel %vm924, %v7200, %v7201
        %v7203 = vrot.slane %v7201, 4
        %v7204 = vrot.slane %v6687, 5
        %v7205 = vsel %vm924, %v7203, %v7204
        %v7206 = vrot.slane %v7088, 5
        %v7207 = vrot.slane %v7206, 4
        %v7208 = vrot.slane %v6666, 5
        %v7209 = vsel %vm924, %v7207, %v7208
        %v7210 = vrot.slane %v7208, 4
        %v7211 = vrot.slane %v6688, 5
        %v7212 = vsel %vm924, %v7210, %v7211
        %v7213 = vrot.slane %v7089, 5
        %v7214 = vrot.slane %v7213, 4
        %v7215 = vrot.slane %v6668, 5
        %v7216 = vsel %vm924, %v7214, %v7215
        %v7217 = vrot.slane %v7215, 4
        %v7218 = vrot.slane %v6689, 5
        %v7219 = vsel %vm924, %v7217, %v7218
        %v7220 = vrot.slane %v7090, 5
        %v7221 = vrot.slane %v7220, 4
        %v7222 = vrot.slane %v6670, 5
        %v7223 = vsel %vm924, %v7221, %v7222
        %v7224 = vrot.slane %v7222, 4
        %v7225 = vrot.slane %v6690, 5
        %v7226 = vsel %vm924, %v7224, %v7225
        %v7227 = vrot.slane %v7091, 5
        %v7228 = vrot.slane %v7227, 4
        %v7229 = vrot.slane %v6672, 5
        %v7230 = vsel %vm924, %v7228, %v7229
        %v7231 = vrot.slane %v7229, 4
        %v7232 = vrot.slane %v6691, 5
        %v7233 = vsel %vm924, %v7231, %v7232
        %v7234 = vrot.slane %v7092, 5
        %v7235 = vrot.slane %v7234, 4
        %v7236 = vrot.slane %v6674, 5
        %v7237 = vsel %vm924, %v7235, %v7236
        %v7238 = vrot.slane %v7236, 4
        %v7239 = vrot.slane %v6692, 5
        %v7240 = vsel %vm924, %v7238, %v7239
        %v7241 = vrot.slane %v7093, 5
        %v7242 = vrot.slane %v7241, 4
        %v7243 = vrot.slane %v6676, 5
        %v7244 = vsel %vm924, %v7242, %v7243
        %v7245 = vrot.slane %v7243, 4
        %v7246 = vrot.slane %v6693, 5
        %v7247 = vsel %vm924, %v7245, %v7246
        %v7248 = vrot.slane %v7094, 5
        %v7249 = vrot.slane %v7248, 4
        %v7250 = vrot.slane %v6678, 5
        %v7251 = vsel %vm924, %v7249, %v7250
        %v7252 = vrot.slane %v7250, 4
        %v7253 = vrot.slane %v6694, 5
        %v7254 = vsel %vm924, %v7252, %v7253
        %v7271 = vunpack.c.l.b16 %v5429
        %v7272 = vunpack.c.l.b16 %v5430
        %v7273 = vunpack.c.l.b16 %v5431
        %v7274 = vunpack.c.l.b16 %v5432
        %v7275 = vunpack.c.l.b16 %v5433
        %v7276 = vunpack.c.l.b16 %v5434
        %v7277 = vunpack.c.l.b16 %v5435
        %v7278 = vunpack.c.l.b16 %v5436
        %v7279 = vunpack.c.l.b16 %v5437
        %v7280 = vunpack.c.l.b16 %v5438
        %v7281 = vunpack.c.l.b16 %v5439
        %v7282 = vunpack.c.l.b16 %v5440
        %v7283 = vunpack.c.l.b16 %v5441
        %v7284 = vunpack.c.l.b16 %v5442
        %v7285 = vunpack.c.l.b16 %v5443
        %v7286 = vunpack.c.l.b16 %v5444
        %v7287 = vunpack.c.l.b16 %v5445
        %v7288 = vunpack.c.l.b16 %v5446
        %v7289 = vunpack.c.l.b16 %v5447
        %v7290 = vunpack.c.l.b16 %v5448
        %v7291 = vunpack.c.l.b16 %v5449
        %v7292 = vunpack.c.l.b16 %v5450
        %v7293 = vunpack.c.l.b16 %v5451
        %v7294 = vunpack.c.l.b16 %v5452
        %v7295 = vunpack.c.l.b16 %v5453
        %v7296 = vunpack.c.l.b16 %v5454
        %v7297 = vunpack.c.l.b16 %v5455
        %v7298 = vunpack.c.l.b16 %v5456
        %v7299 = vunpack.c.l.b16 %v5457
        %v7300 = vunpack.c.l.b16 %v5458
        %v7301 = vunpack.c.l.b16 %v5459
        %v7302 = vunpack.c.l.b16 %v5460
        %v7303 = vpack.c.b16 %v7272, %v7271
        %v7304 = vpack.c.b16 %v7274, %v7273
        %v7305 = vpack.c.b16 %v7276, %v7275
        %v7306 = vpack.c.b16 %v7278, %v7277
        %v7307 = vpack.c.b16 %v7280, %v7279
        %v7308 = vpack.c.b16 %v7282, %v7281
        %v7309 = vpack.c.b16 %v7284, %v7283
        %v7310 = vpack.c.b16 %v7286, %v7285
        %v7311 = vpack.c.b16 %v7288, %v7287
        %v7312 = vpack.c.b16 %v7290, %v7289
        %v7313 = vpack.c.b16 %v7292, %v7291
        %v7314 = vpack.c.b16 %v7294, %v7293
        %v7315 = vpack.c.b16 %v7296, %v7295
        %v7316 = vpack.c.b16 %v7298, %v7297
        %v7317 = vpack.c.b16 %v7300, %v7299
        %v7318 = vpack.c.b16 %v7302, %v7301
        %v7335 = vunpack.c.l.b16 %v5490
        %v7336 = vunpack.c.l.b16 %v5500
        %v7337 = vunpack.c.l.b16 %v5514
        %v7338 = vunpack.c.l.b16 %v5524
        %v7339 = vunpack.c.l.b16 %v5538
        %v7340 = vunpack.c.l.b16 %v5548
        %v7341 = vunpack.c.l.b16 %v5562
        %v7342 = vunpack.c.l.b16 %v5572
        %v7343 = vunpack.c.l.b16 %v5586
        %v7344 = vunpack.c.l.b16 %v5596
        %v7345 = vunpack.c.l.b16 %v5610
        %v7346 = vunpack.c.l.b16 %v5620
        %v7347 = vunpack.c.l.b16 %v5634
        %v7348 = vunpack.c.l.b16 %v5644
        %v7349 = vunpack.c.l.b16 %v5658
        %v7350 = vunpack.c.l.b16 %v5668
        %v7351 = vunpack.c.l.b16 %v5682
        %v7352 = vunpack.c.l.b16 %v5692
        %v7353 = vunpack.c.l.b16 %v5706
        %v7354 = vunpack.c.l.b16 %v5716
        %v7355 = vunpack.c.l.b16 %v5730
        %v7356 = vunpack.c.l.b16 %v5740
        %v7357 = vunpack.c.l.b16 %v5754
        %v7358 = vunpack.c.l.b16 %v5764
        %v7359 = vunpack.c.l.b16 %v5778
        %v7360 = vunpack.c.l.b16 %v5788
        %v7361 = vunpack.c.l.b16 %v5802
        %v7362 = vunpack.c.l.b16 %v5812
        %v7363 = vunpack.c.l.b16 %v5826
        %v7364 = vunpack.c.l.b16 %v5836
        %v7365 = vunpack.c.l.b16 %v5850
        %v7366 = vunpack.c.l.b16 %v5860
        %v7367 = vpack.c.b16 %v7336, %v7335
        %v7368 = vpack.c.b16 %v7338, %v7337
        %v7369 = vpack.c.b16 %v7340, %v7339
        %v7370 = vpack.c.b16 %v7342, %v7341
        %v7371 = vpack.c.b16 %v7344, %v7343
        %v7372 = vpack.c.b16 %v7346, %v7345
        %v7373 = vpack.c.b16 %v7348, %v7347
        %v7374 = vpack.c.b16 %v7350, %v7349
        %v7375 = vpack.c.b16 %v7352, %v7351
        %v7376 = vpack.c.b16 %v7354, %v7353
        %v7377 = vpack.c.b16 %v7356, %v7355
        %v7378 = vpack.c.b16 %v7358, %v7357
        %v7379 = vpack.c.b16 %v7360, %v7359
        %v7380 = vpack.c.b16 %v7362, %v7361
        %v7381 = vpack.c.b16 %v7364, %v7363
        %v7382 = vpack.c.b16 %v7366, %v7365
        %v7399 = vunpack.c.l.b16 %v5928
        %v7400 = vunpack.c.l.b16 %v5931
        %v7401 = vunpack.c.l.b16 %v5935
        %v7402 = vunpack.c.l.b16 %v5938
        %v7403 = vunpack.c.l.b16 %v5942
        %v7404 = vunpack.c.l.b16 %v5945
        %v7405 = vunpack.c.l.b16 %v5949
        %v7406 = vunpack.c.l.b16 %v5952
        %v7407 = vunpack.c.l.b16 %v5956
        %v7408 = vunpack.c.l.b16 %v5959
        %v7409 = vunpack.c.l.b16 %v5963
        %v7410 = vunpack.c.l.b16 %v5966
        %v7411 = vunpack.c.l.b16 %v5970
        %v7412 = vunpack.c.l.b16 %v5973
        %v7413 = vunpack.c.l.b16 %v5977
        %v7414 = vunpack.c.l.b16 %v5980
        %v7415 = vunpack.c.l.b16 %v5984
        %v7416 = vunpack.c.l.b16 %v5987
        %v7417 = vunpack.c.l.b16 %v5991
        %v7418 = vunpack.c.l.b16 %v5994
        %v7419 = vunpack.c.l.b16 %v5998
        %v7420 = vunpack.c.l.b16 %v6001
        %v7421 = vunpack.c.l.b16 %v6005
        %v7422 = vunpack.c.l.b16 %v6008
        %v7423 = vunpack.c.l.b16 %v6012
        %v7424 = vunpack.c.l.b16 %v6015
        %v7425 = vunpack.c.l.b16 %v6019
        %v7426 = vunpack.c.l.b16 %v6022
        %v7427 = vunpack.c.l.b16 %v6026
        %v7428 = vunpack.c.l.b16 %v6029
        %v7429 = vunpack.c.l.b16 %v6033
        %v7430 = vunpack.c.l.b16 %v6036
        %v7431 = vpack.c.b16 %v7400, %v7399
        %v7432 = vpack.c.b16 %v7402, %v7401
        %v7433 = vpack.c.b16 %v7404, %v7403
        %v7434 = vpack.c.b16 %v7406, %v7405
        %v7435 = vpack.c.b16 %v7408, %v7407
        %v7436 = vpack.c.b16 %v7410, %v7409
        %v7437 = vpack.c.b16 %v7412, %v7411
        %v7438 = vpack.c.b16 %v7414, %v7413
        %v7439 = vpack.c.b16 %v7416, %v7415
        %v7440 = vpack.c.b16 %v7418, %v7417
        %v7441 = vpack.c.b16 %v7420, %v7419
        %v7442 = vpack.c.b16 %v7422, %v7421
        %v7443 = vpack.c.b16 %v7424, %v7423
        %v7444 = vpack.c.b16 %v7426, %v7425
        %v7445 = vpack.c.b16 %v7428, %v7427
        %v7446 = vpack.c.b16 %v7430, %v7429
        %v7479 = vunpack.c.l.b16 %v6038
        %v7480 = vunpack.c.l.b16 %v6039
        %v7481 = vunpack.c.l.b16 %v6040
        %v7482 = vunpack.c.l.b16 %v6041
        %v7483 = vunpack.c.l.b16 %v6042
        %v7484 = vunpack.c.l.b16 %v6043
        %v7485 = vunpack.c.l.b16 %v6044
        %v7486 = vunpack.c.l.b16 %v6045
        %v7487 = vunpack.c.l.b16 %v6046
        %v7488 = vunpack.c.l.b16 %v6047
        %v7489 = vunpack.c.l.b16 %v6048
        %v7490 = vunpack.c.l.b16 %v6049
        %v7491 = vunpack.c.l.b16 %v6050
        %v7492 = vunpack.c.l.b16 %v6051
        %v7493 = vunpack.c.l.b16 %v6052
        %v7494 = vunpack.c.l.b16 %v6053
        %v7495 = vunpack.c.l.b16 %v6054
        %v7496 = vunpack.c.l.b16 %v6055
        %v7497 = vunpack.c.l.b16 %v6056
        %v7498 = vunpack.c.l.b16 %v6057
        %v7499 = vunpack.c.l.b16 %v6058
        %v7500 = vunpack.c.l.b16 %v6059
        %v7501 = vunpack.c.l.b16 %v6060
        %v7502 = vunpack.c.l.b16 %v6061
        %v7503 = vunpack.c.l.b16 %v6062
        %v7504 = vunpack.c.l.b16 %v6063
        %v7505 = vunpack.c.l.b16 %v6064
        %v7506 = vunpack.c.l.b16 %v6065
        %v7507 = vunpack.c.l.b16 %v6066
        %v7508 = vunpack.c.l.b16 %v6067
        %v7509 = vunpack.c.l.b16 %v6068
        %v7510 = vunpack.c.l.b16 %v6069
        %v7511 = vpack.c.b16 %v7480, %v7479
        %v7512 = vpack.c.b16 %v7482, %v7481
        %v7513 = vpack.c.b16 %v7484, %v7483
        %v7514 = vpack.c.b16 %v7486, %v7485
        %v7515 = vpack.c.b16 %v7488, %v7487
        %v7516 = vpack.c.b16 %v7490, %v7489
        %v7517 = vpack.c.b16 %v7492, %v7491
        %v7518 = vpack.c.b16 %v7494, %v7493
        %v7519 = vpack.c.b16 %v7496, %v7495
        %v7520 = vpack.c.b16 %v7498, %v7497
        %v7521 = vpack.c.b16 %v7500, %v7499
        %v7522 = vpack.c.b16 %v7502, %v7501
        %v7523 = vpack.c.b16 %v7504, %v7503
        %v7524 = vpack.c.b16 %v7506, %v7505
        %v7525 = vpack.c.b16 %v7508, %v7507
        %v7526 = vpack.c.b16 %v7510, %v7509
        %v7543 = vunpack.c.l.b16 %v6099
        %v7544 = vunpack.c.l.b16 %v6109
        %v7545 = vunpack.c.l.b16 %v6123
        %v7546 = vunpack.c.l.b16 %v6133
        %v7547 = vunpack.c.l.b16 %v6147
        %v7548 = vunpack.c.l.b16 %v6157
        %v7549 = vunpack.c.l.b16 %v6171
        %v7550 = vunpack.c.l.b16 %v6181
        %v7551 = vunpack.c.l.b16 %v6195
        %v7552 = vunpack.c.l.b16 %v6205
        %v7553 = vunpack.c.l.b16 %v6219
        %v7554 = vunpack.c.l.b16 %v6229
        %v7555 = vunpack.c.l.b16 %v6243
        %v7556 = vunpack.c.l.b16 %v6253
        %v7557 = vunpack.c.l.b16 %v6267
        %v7558 = vunpack.c.l.b16 %v6277
        %v7559 = vunpack.c.l.b16 %v6291
        %v7560 = vunpack.c.l.b16 %v6301
        %v7561 = vunpack.c.l.b16 %v6315
        %v7562 = vunpack.c.l.b16 %v6325
        %v7563 = vunpack.c.l.b16 %v6339
        %v7564 = vunpack.c.l.b16 %v6349
        %v7565 = vunpack.c.l.b16 %v6363
        %v7566 = vunpack.c.l.b16 %v6373
        %v7567 = vunpack.c.l.b16 %v6387
        %v7568 = vunpack.c.l.b16 %v6397
        %v7569 = vunpack.c.l.b16 %v6411
        %v7570 = vunpack.c.l.b16 %v6421
        %v7571 = vunpack.c.l.b16 %v6435
        %v7572 = vunpack.c.l.b16 %v6445
        %v7573 = vunpack.c.l.b16 %v6459
        %v7574 = vunpack.c.l.b16 %v6469
        %v7575 = vpack.c.b16 %v7544, %v7543
        %v7576 = vpack.c.b16 %v7546, %v7545
        %v7577 = vpack.c.b16 %v7548, %v7547
        %v7578 = vpack.c.b16 %v7550, %v7549
        %v7579 = vpack.c.b16 %v7552, %v7551
        %v7580 = vpack.c.b16 %v7554, %v7553
        %v7581 = vpack.c.b16 %v7556, %v7555
        %v7582 = vpack.c.b16 %v7558, %v7557
        %v7583 = vpack.c.b16 %v7560, %v7559
        %v7584 = vpack.c.b16 %v7562, %v7561
        %v7585 = vpack.c.b16 %v7564, %v7563
        %v7586 = vpack.c.b16 %v7566, %v7565
        %v7587 = vpack.c.b16 %v7568, %v7567
        %v7588 = vpack.c.b16 %v7570, %v7569
        %v7589 = vpack.c.b16 %v7572, %v7571
        %v7590 = vpack.c.b16 %v7574, %v7573
        %v7607 = vunpack.c.l.b16 %v6537
        %v7608 = vunpack.c.l.b16 %v6540
        %v7609 = vunpack.c.l.b16 %v6544
        %v7610 = vunpack.c.l.b16 %v6547
        %v7611 = vunpack.c.l.b16 %v6551
        %v7612 = vunpack.c.l.b16 %v6554
        %v7613 = vunpack.c.l.b16 %v6558
        %v7614 = vunpack.c.l.b16 %v6561
        %v7615 = vunpack.c.l.b16 %v6565
        %v7616 = vunpack.c.l.b16 %v6568
        %v7617 = vunpack.c.l.b16 %v6572
        %v7618 = vunpack.c.l.b16 %v6575
        %v7619 = vunpack.c.l.b16 %v6579
        %v7620 = vunpack.c.l.b16 %v6582
        %v7621 = vunpack.c.l.b16 %v6586
        %v7622 = vunpack.c.l.b16 %v6589
        %v7623 = vunpack.c.l.b16 %v6593
        %v7624 = vunpack.c.l.b16 %v6596
        %v7625 = vunpack.c.l.b16 %v6600
        %v7626 = vunpack.c.l.b16 %v6603
        %v7627 = vunpack.c.l.b16 %v6607
        %v7628 = vunpack.c.l.b16 %v6610
        %v7629 = vunpack.c.l.b16 %v6614
        %v7630 = vunpack.c.l.b16 %v6617
        %v7631 = vunpack.c.l.b16 %v6621
        %v7632 = vunpack.c.l.b16 %v6624
        %v7633 = vunpack.c.l.b16 %v6628
        %v7634 = vunpack.c.l.b16 %v6631
        %v7635 = vunpack.c.l.b16 %v6635
        %v7636 = vunpack.c.l.b16 %v6638
        %v7637 = vunpack.c.l.b16 %v6642
        %v7638 = vunpack.c.l.b16 %v6645
        %v7639 = vpack.c.b16 %v7608, %v7607
        %v7640 = vpack.c.b16 %v7610, %v7609
        %v7641 = vpack.c.b16 %v7612, %v7611
        %v7642 = vpack.c.b16 %v7614, %v7613
        %v7643 = vpack.c.b16 %v7616, %v7615
        %v7644 = vpack.c.b16 %v7618, %v7617
        %v7645 = vpack.c.b16 %v7620, %v7619
        %v7646 = vpack.c.b16 %v7622, %v7621
        %v7647 = vpack.c.b16 %v7624, %v7623
        %v7648 = vpack.c.b16 %v7626, %v7625
        %v7649 = vpack.c.b16 %v7628, %v7627
        %v7650 = vpack.c.b16 %v7630, %v7629
        %v7651 = vpack.c.b16 %v7632, %v7631
        %v7652 = vpack.c.b16 %v7634, %v7633
        %v7653 = vpack.c.b16 %v7636, %v7635
        %v7654 = vpack.c.b16 %v7638, %v7637
        %v7687 = vunpack.c.l.b16 %v6647
        %v7688 = vunpack.c.l.b16 %v6648
        %v7689 = vunpack.c.l.b16 %v6649
        %v7690 = vunpack.c.l.b16 %v6650
        %v7691 = vunpack.c.l.b16 %v6651
        %v7692 = vunpack.c.l.b16 %v6652
        %v7693 = vunpack.c.l.b16 %v6653
        %v7694 = vunpack.c.l.b16 %v6654
        %v7695 = vunpack.c.l.b16 %v6655
        %v7696 = vunpack.c.l.b16 %v6656
        %v7697 = vunpack.c.l.b16 %v6657
        %v7698 = vunpack.c.l.b16 %v6658
        %v7699 = vunpack.c.l.b16 %v6659
        %v7700 = vunpack.c.l.b16 %v6660
        %v7701 = vunpack.c.l.b16 %v6661
        %v7702 = vunpack.c.l.b16 %v6662
        %v7703 = vunpack.c.l.b16 %v6663
        %v7704 = vunpack.c.l.b16 %v6664
        %v7705 = vunpack.c.l.b16 %v6665
        %v7706 = vunpack.c.l.b16 %v6666
        %v7707 = vunpack.c.l.b16 %v6667
        %v7708 = vunpack.c.l.b16 %v6668
        %v7709 = vunpack.c.l.b16 %v6669
        %v7710 = vunpack.c.l.b16 %v6670
        %v7711 = vunpack.c.l.b16 %v6671
        %v7712 = vunpack.c.l.b16 %v6672
        %v7713 = vunpack.c.l.b16 %v6673
        %v7714 = vunpack.c.l.b16 %v6674
        %v7715 = vunpack.c.l.b16 %v6675
        %v7716 = vunpack.c.l.b16 %v6676
        %v7717 = vunpack.c.l.b16 %v6677
        %v7718 = vunpack.c.l.b16 %v6678
        %v7719 = vpack.c.b16 %v7688, %v7687
        %v7720 = vpack.c.b16 %v7690, %v7689
        %v7721 = vpack.c.b16 %v7692, %v7691
        %v7722 = vpack.c.b16 %v7694, %v7693
        %v7723 = vpack.c.b16 %v7696, %v7695
        %v7724 = vpack.c.b16 %v7698, %v7697
        %v7725 = vpack.c.b16 %v7700, %v7699
        %v7726 = vpack.c.b16 %v7702, %v7701
        %v7727 = vpack.c.b16 %v7704, %v7703
        %v7728 = vpack.c.b16 %v7706, %v7705
        %v7729 = vpack.c.b16 %v7708, %v7707
        %v7730 = vpack.c.b16 %v7710, %v7709
        %v7731 = vpack.c.b16 %v7712, %v7711
        %v7732 = vpack.c.b16 %v7714, %v7713
        %v7733 = vpack.c.b16 %v7716, %v7715
        %v7734 = vpack.c.b16 %v7718, %v7717
        %v7751 = vunpack.c.l.b16 %v6708
        %v7752 = vunpack.c.l.b16 %v6718
        %v7753 = vunpack.c.l.b16 %v6732
        %v7754 = vunpack.c.l.b16 %v6742
        %v7755 = vunpack.c.l.b16 %v6756
        %v7756 = vunpack.c.l.b16 %v6766
        %v7757 = vunpack.c.l.b16 %v6780
        %v7758 = vunpack.c.l.b16 %v6790
        %v7759 = vunpack.c.l.b16 %v6804
        %v7760 = vunpack.c.l.b16 %v6814
        %v7761 = vunpack.c.l.b16 %v6828
        %v7762 = vunpack.c.l.b16 %v6838
        %v7763 = vunpack.c.l.b16 %v6852
        %v7764 = vunpack.c.l.b16 %v6862
        %v7765 = vunpack.c.l.b16 %v6876
        %v7766 = vunpack.c.l.b16 %v6886
        %v7767 = vunpack.c.l.b16 %v6900
        %v7768 = vunpack.c.l.b16 %v6910
        %v7769 = vunpack.c.l.b16 %v6924
        %v7770 = vunpack.c.l.b16 %v6934
        %v7771 = vunpack.c.l.b16 %v6948
        %v7772 = vunpack.c.l.b16 %v6958
        %v7773 = vunpack.c.l.b16 %v6972
        %v7774 = vunpack.c.l.b16 %v6982
        %v7775 = vunpack.c.l.b16 %v6996
        %v7776 = vunpack.c.l.b16 %v7006
        %v7777 = vunpack.c.l.b16 %v7020
        %v7778 = vunpack.c.l.b16 %v7030
        %v7779 = vunpack.c.l.b16 %v7044
        %v7780 = vunpack.c.l.b16 %v7054
        %v7781 = vunpack.c.l.b16 %v7068
        %v7782 = vunpack.c.l.b16 %v7078
        %v7783 = vpack.c.b16 %v7752, %v7751
        %v7784 = vpack.c.b16 %v7754, %v7753
        %v7785 = vpack.c.b16 %v7756, %v7755
        %v7786 = vpack.c.b16 %v7758, %v7757
        %v7787 = vpack.c.b16 %v7760, %v7759
        %v7788 = vpack.c.b16 %v7762, %v7761
        %v7789 = vpack.c.b16 %v7764, %v7763
        %v7790 = vpack.c.b16 %v7766, %v7765
        %v7791 = vpack.c.b16 %v7768, %v7767
        %v7792 = vpack.c.b16 %v7770, %v7769
        %v7793 = vpack.c.b16 %v7772, %v7771
        %v7794 = vpack.c.b16 %v7774, %v7773
        %v7795 = vpack.c.b16 %v7776, %v7775
        %v7796 = vpack.c.b16 %v7778, %v7777
        %v7797 = vpack.c.b16 %v7780, %v7779
        %v7798 = vpack.c.b16 %v7782, %v7781
        %v7815 = vunpack.c.l.b16 %v7146
        %v7816 = vunpack.c.l.b16 %v7149
        %v7817 = vunpack.c.l.b16 %v7153
        %v7818 = vunpack.c.l.b16 %v7156
        %v7819 = vunpack.c.l.b16 %v7160
        %v7820 = vunpack.c.l.b16 %v7163
        %v7821 = vunpack.c.l.b16 %v7167
        %v7822 = vunpack.c.l.b16 %v7170
        %v7823 = vunpack.c.l.b16 %v7174
        %v7824 = vunpack.c.l.b16 %v7177
        %v7825 = vunpack.c.l.b16 %v7181
        %v7826 = vunpack.c.l.b16 %v7184
        %v7827 = vunpack.c.l.b16 %v7188
        %v7828 = vunpack.c.l.b16 %v7191
        %v7829 = vunpack.c.l.b16 %v7195
        %v7830 = vunpack.c.l.b16 %v7198
        %v7831 = vunpack.c.l.b16 %v7202
        %v7832 = vunpack.c.l.b16 %v7205
        %v7833 = vunpack.c.l.b16 %v7209
        %v7834 = vunpack.c.l.b16 %v7212
        %v7835 = vunpack.c.l.b16 %v7216
        %v7836 = vunpack.c.l.b16 %v7219
        %v7837 = vunpack.c.l.b16 %v7223
        %v7838 = vunpack.c.l.b16 %v7226
        %v7839 = vunpack.c.l.b16 %v7230
        %v7840 = vunpack.c.l.b16 %v7233
        %v7841 = vunpack.c.l.b16 %v7237
        %v7842 = vunpack.c.l.b16 %v7240
        %v7843 = vunpack.c.l.b16 %v7244
        %v7844 = vunpack.c.l.b16 %v7247
        %v7845 = vunpack.c.l.b16 %v7251
        %v7846 = vunpack.c.l.b16 %v7254
        %v7847 = vpack.c.b16 %v7816, %v7815
        %v7848 = vpack.c.b16 %v7818, %v7817
        %v7849 = vpack.c.b16 %v7820, %v7819
        %v7850 = vpack.c.b16 %v7822, %v7821
        %v7851 = vpack.c.b16 %v7824, %v7823
        %v7852 = vpack.c.b16 %v7826, %v7825
        %v7853 = vpack.c.b16 %v7828, %v7827
        %v7854 = vpack.c.b16 %v7830, %v7829
        %v7855 = vpack.c.b16 %v7832, %v7831
        %v7856 = vpack.c.b16 %v7834, %v7833
        %v7857 = vpack.c.b16 %v7836, %v7835
        %v7858 = vpack.c.b16 %v7838, %v7837
        %v7859 = vpack.c.b16 %v7840, %v7839
        %v7860 = vpack.c.b16 %v7842, %v7841
        %v7861 = vpack.c.b16 %v7844, %v7843
        %v7862 = vpack.c.b16 %v7846, %v7845
        %v7879 = vld [vmem:[#allocation8] sm:$0xf]
        %v7880 = vld [vmem:[#allocation8 + $0x4] sm:$0xf]
        %v7881 = vld [vmem:[#allocation8 + $0x8] sm:$0xf]
        %v7882 = vld [vmem:[#allocation8 + $0xc] sm:$0xf]
        %v7883 = vld [vmem:[#allocation8 + $0x10] sm:$0xf]
        %v7884 = vld [vmem:[#allocation8 + $0x14] sm:$0xf]
        %v7885 = vld [vmem:[#allocation8 + $0x18] sm:$0xf]
        %v7886 = vld [vmem:[#allocation8 + $0x1c] sm:$0xf]
        %v7887 = vld [vmem:[#allocation8 + $0x20] sm:$0xf]
        %v7888 = vld [vmem:[#allocation8 + $0x24] sm:$0xf]
        %v7889 = vld [vmem:[#allocation8 + $0x28] sm:$0xf]
        %v7890 = vld [vmem:[#allocation8 + $0x2c] sm:$0xf]
        %v7891 = vld [vmem:[#allocation8 + $0x30] sm:$0xf]
        %v7892 = vld [vmem:[#allocation8 + $0x34] sm:$0xf]
        %v7893 = vld [vmem:[#allocation8 + $0x38] sm:$0xf]
        %v7894 = vld [vmem:[#allocation8 + $0x3c] sm:$0xf]
        %v7895 = vld [vmem:[#allocation8 + $0x40] sm:$0xf]
        %v7896 = vld [vmem:[#allocation8 + $0x44] sm:$0xf]
        %v7897 = vld [vmem:[#allocation8 + $0x48] sm:$0xf]
        %v7898 = vld [vmem:[#allocation8 + $0x4c] sm:$0xf]
        %v7899 = vld [vmem:[#allocation8 + $0x50] sm:$0xf]
        %v7900 = vld [vmem:[#allocation8 + $0x54] sm:$0xf]
        %v7901 = vld [vmem:[#allocation8 + $0x58] sm:$0xf]
        %v7902 = vld [vmem:[#allocation8 + $0x5c] sm:$0xf]
        %v7903 = vld [vmem:[#allocation8 + $0x60] sm:$0xf]
        %v7904 = vld [vmem:[#allocation8 + $0x64] sm:$0xf]
        %v7905 = vld [vmem:[#allocation8 + $0x68] sm:$0xf]
        %v7906 = vld [vmem:[#allocation8 + $0x6c] sm:$0xf]
        %v7907 = vld [vmem:[#allocation8 + $0x70] sm:$0xf]
        %v7908 = vld [vmem:[#allocation8 + $0x74] sm:$0xf]
        %v7909 = vld [vmem:[#allocation8 + $0x78] sm:$0xf]
        %v7910 = vld [vmem:[#allocation8 + $0x7c] sm:$0xf]
        %v7911 = vld [vmem:[#allocation8 + $0x80] sm:$0xf]
        %v7912 = vld [vmem:[#allocation8 + $0x84] sm:$0xf]
        %v7913 = vld [vmem:[#allocation8 + $0x88] sm:$0xf]
        %v7914 = vld [vmem:[#allocation8 + $0x8c] sm:$0xf]
        %v7915 = vld [vmem:[#allocation8 + $0x90] sm:$0xf]
        %v7916 = vld [vmem:[#allocation8 + $0x94] sm:$0xf]
        %v7917 = vld [vmem:[#allocation8 + $0x98] sm:$0xf]
        %v7918 = vld [vmem:[#allocation8 + $0x9c] sm:$0xf]
        %v7919 = vld [vmem:[#allocation8 + $0xa0] sm:$0xf]
        %v7920 = vld [vmem:[#allocation8 + $0xa4] sm:$0xf]
        %v7921 = vld [vmem:[#allocation8 + $0xa8] sm:$0xf]
        %v7922 = vld [vmem:[#allocation8 + $0xac] sm:$0xf]
        %v7923 = vld [vmem:[#allocation8 + $0xb0] sm:$0xf]
        %v7924 = vld [vmem:[#allocation8 + $0xb4] sm:$0xf]
        %v7925 = vld [vmem:[#allocation8 + $0xb8] sm:$0xf]
        %v7926 = vld [vmem:[#allocation8 + $0xbc] sm:$0xf]
        %v7927 = vld [vmem:[#allocation8 + $0xc0] sm:$0xf]
        %v7928 = vld [vmem:[#allocation8 + $0xc4] sm:$0xf]
        %v7929 = vld [vmem:[#allocation8 + $0xc8] sm:$0xf]
        %v7930 = vld [vmem:[#allocation8 + $0xcc] sm:$0xf]
        %v7931 = vld [vmem:[#allocation8 + $0xd0] sm:$0xf]
        %v7932 = vld [vmem:[#allocation8 + $0xd4] sm:$0xf]
        %v7933 = vld [vmem:[#allocation8 + $0xd8] sm:$0xf]
        %v7934 = vld [vmem:[#allocation8 + $0xdc] sm:$0xf]
        %v7935 = vld [vmem:[#allocation8 + $0xe0] sm:$0xf]
        %v7936 = vld [vmem:[#allocation8 + $0xe4] sm:$0xf]
        %v7937 = vld [vmem:[#allocation8 + $0xe8] sm:$0xf]
        %v7938 = vld [vmem:[#allocation8 + $0xec] sm:$0xf]
        %v7939 = vld [vmem:[#allocation8 + $0xf0] sm:$0xf]
        %v7940 = vld [vmem:[#allocation8 + $0xf4] sm:$0xf]
        %v7941 = vld [vmem:[#allocation8 + $0xf8] sm:$0xf]
        %v7942 = vld [vmem:[#allocation8 + $0xfc] sm:$0xf]
        %v7943 = vld [vmem:[#allocation8 + $0x100] sm:$0xf]
        %v7944 = vld [vmem:[#allocation8 + $0x104] sm:$0xf]
        %v7945 = vld [vmem:[#allocation8 + $0x108] sm:$0xf]
        %v7946 = vld [vmem:[#allocation8 + $0x10c] sm:$0xf]
        %v7947 = vld [vmem:[#allocation8 + $0x110] sm:$0xf]
        %v7948 = vld [vmem:[#allocation8 + $0x114] sm:$0xf]
        %v7949 = vld [vmem:[#allocation8 + $0x118] sm:$0xf]
        %v7950 = vld [vmem:[#allocation8 + $0x11c] sm:$0xf]
        %v7951 = vld [vmem:[#allocation8 + $0x120] sm:$0xf]
        %v7952 = vld [vmem:[#allocation8 + $0x124] sm:$0xf]
        %v7953 = vld [vmem:[#allocation8 + $0x128] sm:$0xf]
        %v7954 = vld [vmem:[#allocation8 + $0x12c] sm:$0xf]
        %v7955 = vld [vmem:[#allocation8 + $0x130] sm:$0xf]
        %v7956 = vld [vmem:[#allocation8 + $0x134] sm:$0xf]
        %v7957 = vld [vmem:[#allocation8 + $0x138] sm:$0xf]
        %v7958 = vld [vmem:[#allocation8 + $0x13c] sm:$0xf]
        %v7959 = vld [vmem:[#allocation8 + $0x140] sm:$0xf]
        %v7960 = vld [vmem:[#allocation8 + $0x144] sm:$0xf]
        %v7961 = vld [vmem:[#allocation8 + $0x148] sm:$0xf]
        %v7962 = vld [vmem:[#allocation8 + $0x14c] sm:$0xf]
        %v7963 = vld [vmem:[#allocation8 + $0x150] sm:$0xf]
        %v7964 = vld [vmem:[#allocation8 + $0x154] sm:$0xf]
        %v7965 = vld [vmem:[#allocation8 + $0x158] sm:$0xf]
        %v7966 = vld [vmem:[#allocation8 + $0x15c] sm:$0xf]
        %v7967 = vld [vmem:[#allocation8 + $0x160] sm:$0xf]
        %v7968 = vld [vmem:[#allocation8 + $0x164] sm:$0xf]
        %v7969 = vld [vmem:[#allocation8 + $0x168] sm:$0xf]
        %v7970 = vld [vmem:[#allocation8 + $0x16c] sm:$0xf]
        %v7971 = vld [vmem:[#allocation8 + $0x170] sm:$0xf]
        %v7972 = vld [vmem:[#allocation8 + $0x174] sm:$0xf]
        %v7973 = vld [vmem:[#allocation8 + $0x178] sm:$0xf]
        %v7974 = vld [vmem:[#allocation8 + $0x17c] sm:$0xf]
        %v7975 = vld [vmem:[#allocation8 + $0x180] sm:$0xf]
        %v7976 = vld [vmem:[#allocation8 + $0x184] sm:$0xf]
        %v7977 = vld [vmem:[#allocation8 + $0x188] sm:$0xf]
        %v7978 = vld [vmem:[#allocation8 + $0x18c] sm:$0xf]
        %v7979 = vld [vmem:[#allocation8 + $0x190] sm:$0xf]
        %v7980 = vld [vmem:[#allocation8 + $0x194] sm:$0xf]
        %v7981 = vld [vmem:[#allocation8 + $0x198] sm:$0xf]
        %v7982 = vld [vmem:[#allocation8 + $0x19c] sm:$0xf]
        %v7983 = vld [vmem:[#allocation8 + $0x1a0] sm:$0xf]
        %v7984 = vld [vmem:[#allocation8 + $0x1a4] sm:$0xf]
        %v7985 = vld [vmem:[#allocation8 + $0x1a8] sm:$0xf]
        %v7986 = vld [vmem:[#allocation8 + $0x1ac] sm:$0xf]
        %v7987 = vld [vmem:[#allocation8 + $0x1b0] sm:$0xf]
        %v7988 = vld [vmem:[#allocation8 + $0x1b4] sm:$0xf]
        %v7989 = vld [vmem:[#allocation8 + $0x1b8] sm:$0xf]
        %v7990 = vld [vmem:[#allocation8 + $0x1bc] sm:$0xf]
        %v7991 = vld [vmem:[#allocation8 + $0x1c0] sm:$0xf]
        %v7992 = vld [vmem:[#allocation8 + $0x1c4] sm:$0xf]
        %v7993 = vld [vmem:[#allocation8 + $0x1c8] sm:$0xf]
        %v7994 = vld [vmem:[#allocation8 + $0x1cc] sm:$0xf]
        %v7995 = vld [vmem:[#allocation8 + $0x1d0] sm:$0xf]
        %v7996 = vld [vmem:[#allocation8 + $0x1d4] sm:$0xf]
        %v7997 = vld [vmem:[#allocation8 + $0x1d8] sm:$0xf]
        %v7998 = vld [vmem:[#allocation8 + $0x1dc] sm:$0xf]
        %v7999 = vld [vmem:[#allocation8 + $0x1e0] sm:$0xf]
        %v8000 = vld [vmem:[#allocation8 + $0x1e4] sm:$0xf]
        %v8001 = vld [vmem:[#allocation8 + $0x1e8] sm:$0xf]
        %v8002 = vld [vmem:[#allocation8 + $0x1ec] sm:$0xf]
        %v8003 = vld [vmem:[#allocation8 + $0x1f0] sm:$0xf]
        %v8004 = vld [vmem:[#allocation8 + $0x1f4] sm:$0xf]
        %v8005 = vld [vmem:[#allocation8 + $0x1f8] sm:$0xf]
        %v8006 = vld [vmem:[#allocation8 + $0x1fc] sm:$0xf]
        %v8007 = vld [vmem:[#allocation8 + $0x200] sm:$0xf]
        %v8008 = vld [vmem:[#allocation8 + $0x204] sm:$0xf]
        %v8009 = vld [vmem:[#allocation8 + $0x208] sm:$0xf]
        %v8010 = vld [vmem:[#allocation8 + $0x20c] sm:$0xf]
        %v8011 = vld [vmem:[#allocation8 + $0x210] sm:$0xf]
        %v8012 = vld [vmem:[#allocation8 + $0x214] sm:$0xf]
        %v8013 = vld [vmem:[#allocation8 + $0x218] sm:$0xf]
        %v8014 = vld [vmem:[#allocation8 + $0x21c] sm:$0xf]
        %v8015 = vld [vmem:[#allocation8 + $0x220] sm:$0xf]
        %v8016 = vld [vmem:[#allocation8 + $0x224] sm:$0xf]
        %v8017 = vld [vmem:[#allocation8 + $0x228] sm:$0xf]
        %v8018 = vld [vmem:[#allocation8 + $0x22c] sm:$0xf]
        %v8019 = vld [vmem:[#allocation8 + $0x230] sm:$0xf]
        %v8020 = vld [vmem:[#allocation8 + $0x234] sm:$0xf]
        %v8021 = vld [vmem:[#allocation8 + $0x238] sm:$0xf]
        %v8022 = vld [vmem:[#allocation8 + $0x23c] sm:$0xf]
        %v8023 = vld [vmem:[%s4] sm:$0x1]
        %v8025 = vlaneseq
        %v8026 = vshrl.u32 %v8025, 7
        %v8027 = vsub.s32 0, %v8026
        %v8028 = vrot.slane %v8023, %v8027
        %v8174 = vunpack.c.l.b16 %v7879
        %v8175 = vunpack.c.l.b16 %v7880
        %v8176 = vunpack.c.l.b16 %v7881
        %v8177 = vunpack.c.l.b16 %v7882
        %v8178 = vunpack.c.l.b16 %v7883
        %v8179 = vunpack.c.l.b16 %v7884
        %v8180 = vunpack.c.l.b16 %v7885
        %v8181 = vunpack.c.l.b16 %v7886
        %v8182 = vunpack.c.l.b16 %v7887
        %v8183 = vunpack.c.l.b16 %v7888
        %v8184 = vunpack.c.l.b16 %v7889
        %v8185 = vunpack.c.l.b16 %v7890
        %v8186 = vunpack.c.l.b16 %v7891
        %v8187 = vunpack.c.l.b16 %v7892
        %v8188 = vunpack.c.l.b16 %v7893
        %v8189 = vunpack.c.l.b16 %v7894
        %v8190 = vunpack.c.l.b16 %v7895
        %v8191 = vunpack.c.l.b16 %v7896
        %v8192 = vunpack.c.l.b16 %v7897
        %v8193 = vunpack.c.l.b16 %v7898
        %v8194 = vunpack.c.l.b16 %v7899
        %v8195 = vunpack.c.l.b16 %v7900
        %v8196 = vunpack.c.l.b16 %v7901
        %v8197 = vunpack.c.l.b16 %v7902
        %v8198 = vunpack.c.l.b16 %v7903
        %v8199 = vunpack.c.l.b16 %v7904
        %v8200 = vunpack.c.l.b16 %v7905
        %v8201 = vunpack.c.l.b16 %v7906
        %v8202 = vunpack.c.l.b16 %v7907
        %v8203 = vunpack.c.l.b16 %v7908
        %v8204 = vunpack.c.l.b16 %v7909
        %v8205 = vunpack.c.l.b16 %v7910
        %v8206 = vunpack.c.l.b16 %v7911
        %v8207 = vunpack.c.l.b16 %v7912
        %v8208 = vunpack.c.l.b16 %v7913
        %v8209 = vunpack.c.l.b16 %v7914
        %v8210 = vunpack.c.l.b16 %v7915
        %v8211 = vunpack.c.l.b16 %v7916
        %v8212 = vunpack.c.l.b16 %v7917
        %v8213 = vunpack.c.l.b16 %v7918
        %v8214 = vunpack.c.l.b16 %v7919
        %v8215 = vunpack.c.l.b16 %v7920
        %v8216 = vunpack.c.l.b16 %v7921
        %v8217 = vunpack.c.l.b16 %v7922
        %v8218 = vunpack.c.l.b16 %v7923
        %v8219 = vunpack.c.l.b16 %v7924
        %v8220 = vunpack.c.l.b16 %v7925
        %v8221 = vunpack.c.l.b16 %v7926
        %v8222 = vunpack.c.l.b16 %v7927
        %v8223 = vunpack.c.l.b16 %v7928
        %v8224 = vunpack.c.l.b16 %v7929
        %v8225 = vunpack.c.l.b16 %v7930
        %v8226 = vunpack.c.l.b16 %v7931
        %v8227 = vunpack.c.l.b16 %v7932
        %v8228 = vunpack.c.l.b16 %v7933
        %v8229 = vunpack.c.l.b16 %v7934
        %v8230 = vunpack.c.l.b16 %v7935
        %v8231 = vunpack.c.l.b16 %v7936
        %v8232 = vunpack.c.l.b16 %v7937
        %v8233 = vunpack.c.l.b16 %v7938
        %v8234 = vunpack.c.l.b16 %v7939
        %v8235 = vunpack.c.l.b16 %v7940
        %v8236 = vunpack.c.l.b16 %v7941
        %v8237 = vunpack.c.l.b16 %v7942
        %v8238 = vunpack.c.l.b16 %v7943
        %v8239 = vunpack.c.l.b16 %v7944
        %v8240 = vunpack.c.l.b16 %v7945
        %v8241 = vunpack.c.l.b16 %v7946
        %v8242 = vunpack.c.l.b16 %v7947
        %v8243 = vunpack.c.l.b16 %v7948
        %v8244 = vunpack.c.l.b16 %v7949
        %v8245 = vunpack.c.l.b16 %v7950
        %v8246 = vunpack.c.l.b16 %v7951
        %v8247 = vunpack.c.l.b16 %v7952
        %v8248 = vunpack.c.l.b16 %v7953
        %v8249 = vunpack.c.l.b16 %v7954
        %v8250 = vunpack.c.l.b16 %v7955
        %v8251 = vunpack.c.l.b16 %v7956
        %v8252 = vunpack.c.l.b16 %v7957
        %v8253 = vunpack.c.l.b16 %v7958
        %v8254 = vunpack.c.l.b16 %v7959
        %v8255 = vunpack.c.l.b16 %v7960
        %v8256 = vunpack.c.l.b16 %v7961
        %v8257 = vunpack.c.l.b16 %v7962
        %v8258 = vunpack.c.l.b16 %v7963
        %v8259 = vunpack.c.l.b16 %v7964
        %v8260 = vunpack.c.l.b16 %v7965
        %v8261 = vunpack.c.l.b16 %v7966
        %v8262 = vunpack.c.l.b16 %v7967
        %v8263 = vunpack.c.l.b16 %v7968
        %v8264 = vunpack.c.l.b16 %v7969
        %v8265 = vunpack.c.l.b16 %v7970
        %v8266 = vunpack.c.l.b16 %v7971
        %v8267 = vunpack.c.l.b16 %v7972
        %v8268 = vunpack.c.l.b16 %v7973
        %v8269 = vunpack.c.l.b16 %v7974
        %v8270 = vunpack.c.l.b16 %v7975
        %v8271 = vunpack.c.l.b16 %v7976
        %v8272 = vunpack.c.l.b16 %v7977
        %v8273 = vunpack.c.l.b16 %v7978
        %v8274 = vunpack.c.l.b16 %v7979
        %v8275 = vunpack.c.l.b16 %v7980
        %v8276 = vunpack.c.l.b16 %v7981
        %v8277 = vunpack.c.l.b16 %v7982
        %v8278 = vunpack.c.l.b16 %v7983
        %v8279 = vunpack.c.l.b16 %v7984
        %v8280 = vunpack.c.l.b16 %v7985
        %v8281 = vunpack.c.l.b16 %v7986
        %v8282 = vunpack.c.l.b16 %v7987
        %v8283 = vunpack.c.l.b16 %v7988
        %v8284 = vunpack.c.l.b16 %v7989
        %v8285 = vunpack.c.l.b16 %v7990
        %v8286 = vunpack.c.l.b16 %v7991
        %v8287 = vunpack.c.l.b16 %v7992
        %v8288 = vunpack.c.l.b16 %v7993
        %v8289 = vunpack.c.l.b16 %v7994
        %v8290 = vunpack.c.l.b16 %v7995
        %v8291 = vunpack.c.l.b16 %v7996
        %v8292 = vunpack.c.l.b16 %v7997
        %v8293 = vunpack.c.l.b16 %v7998
        %v8294 = vunpack.c.l.b16 %v7999
        %v8295 = vunpack.c.l.b16 %v8000
        %v8296 = vunpack.c.l.b16 %v8001
        %v8297 = vunpack.c.l.b16 %v8002
        %v8298 = vunpack.c.l.b16 %v8003
        %v8299 = vunpack.c.l.b16 %v8004
        %v8300 = vunpack.c.l.b16 %v8005
        %v8301 = vunpack.c.l.b16 %v8006
        %v8302 = vunpack.c.l.b16 %v8007
        %v8303 = vunpack.c.l.b16 %v8008
        %v8304 = vunpack.c.l.b16 %v8009
        %v8305 = vunpack.c.l.b16 %v8010
        %v8306 = vunpack.c.l.b16 %v8011
        %v8307 = vunpack.c.l.b16 %v8012
        %v8308 = vunpack.c.l.b16 %v8013
        %v8309 = vunpack.c.l.b16 %v8014
        %v8310 = vunpack.c.l.b16 %v8015
        %v8311 = vunpack.c.l.b16 %v8016
        %v8312 = vunpack.c.l.b16 %v8017
        %v8313 = vunpack.c.l.b16 %v8018
        %v8314 = vunpack.c.l.b16 %v8019
        %v8315 = vunpack.c.l.b16 %v8020
        %v8316 = vunpack.c.l.b16 %v8021
        %v8317 = vunpack.c.l.b16 %v8022
        %v8318 = vpack.c.b16 %v8175, %v8174
        %v8319 = vpack.c.b16 %v8177, %v8176
        %v8320 = vpack.c.b16 %v8179, %v8178
        %v8321 = vpack.c.b16 %v8181, %v8180
        %v8322 = vpack.c.b16 %v8183, %v8182
        %v8323 = vpack.c.b16 %v8185, %v8184
        %v8324 = vpack.c.b16 %v8187, %v8186
        %v8325 = vpack.c.b16 %v8189, %v8188
        %v8326 = vpack.c.b16 %v8191, %v8190
        %v8327 = vpack.c.b16 %v8193, %v8192
        %v8328 = vpack.c.b16 %v8195, %v8194
        %v8329 = vpack.c.b16 %v8197, %v8196
        %v8330 = vpack.c.b16 %v8199, %v8198
        %v8331 = vpack.c.b16 %v8201, %v8200
        %v8332 = vpack.c.b16 %v8203, %v8202
        %v8333 = vpack.c.b16 %v8205, %v8204
        %v8334 = vpack.c.b16 %v8207, %v8206
        %v8335 = vpack.c.b16 %v8209, %v8208
        %v8336 = vpack.c.b16 %v8211, %v8210
        %v8337 = vpack.c.b16 %v8213, %v8212
        %v8338 = vpack.c.b16 %v8215, %v8214
        %v8339 = vpack.c.b16 %v8217, %v8216
        %v8340 = vpack.c.b16 %v8219, %v8218
        %v8341 = vpack.c.b16 %v8221, %v8220
        %v8342 = vpack.c.b16 %v8223, %v8222
        %v8343 = vpack.c.b16 %v8225, %v8224
        %v8344 = vpack.c.b16 %v8227, %v8226
        %v8345 = vpack.c.b16 %v8229, %v8228
        %v8346 = vpack.c.b16 %v8231, %v8230
        %v8347 = vpack.c.b16 %v8233, %v8232
        %v8348 = vpack.c.b16 %v8235, %v8234
        %v8349 = vpack.c.b16 %v8237, %v8236
        %v8350 = vpack.c.b16 %v8239, %v8238
        %v8351 = vpack.c.b16 %v8241, %v8240
        %v8352 = vpack.c.b16 %v8243, %v8242
        %v8353 = vpack.c.b16 %v8245, %v8244
        %v8354 = vpack.c.b16 %v8247, %v8246
        %v8355 = vpack.c.b16 %v8249, %v8248
        %v8356 = vpack.c.b16 %v8251, %v8250
        %v8357 = vpack.c.b16 %v8253, %v8252
        %v8358 = vpack.c.b16 %v8255, %v8254
        %v8359 = vpack.c.b16 %v8257, %v8256
        %v8360 = vpack.c.b16 %v8259, %v8258
        %v8361 = vpack.c.b16 %v8261, %v8260
        %v8362 = vpack.c.b16 %v8263, %v8262
        %v8363 = vpack.c.b16 %v8265, %v8264
        %v8364 = vpack.c.b16 %v8267, %v8266
        %v8365 = vpack.c.b16 %v8269, %v8268
        %v8366 = vpack.c.b16 %v8271, %v8270
        %v8367 = vpack.c.b16 %v8273, %v8272
        %v8368 = vpack.c.b16 %v8275, %v8274
        %v8369 = vpack.c.b16 %v8277, %v8276
        %v8370 = vpack.c.b16 %v8279, %v8278
        %v8371 = vpack.c.b16 %v8281, %v8280
        %v8372 = vpack.c.b16 %v8283, %v8282
        %v8373 = vpack.c.b16 %v8285, %v8284
        %v8374 = vpack.c.b16 %v8287, %v8286
        %v8375 = vpack.c.b16 %v8289, %v8288
        %v8376 = vpack.c.b16 %v8291, %v8290
        %v8377 = vpack.c.b16 %v8293, %v8292
        %v8378 = vpack.c.b16 %v8295, %v8294
        %v8379 = vpack.c.b16 %v8297, %v8296
        %v8380 = vpack.c.b16 %v8299, %v8298
        %v8381 = vpack.c.b16 %v8301, %v8300
        %v8382 = vpack.c.b16 %v8303, %v8302
        %v8383 = vpack.c.b16 %v8305, %v8304
        %v8384 = vpack.c.b16 %v8307, %v8306
        %v8385 = vpack.c.b16 %v8309, %v8308
        %v8386 = vpack.c.b16 %v8311, %v8310
        %v8387 = vpack.c.b16 %v8313, %v8312
        %v8388 = vpack.c.b16 %v8315, %v8314
        %v8389 = vpack.c.b16 %v8317, %v8316
        %8462 = vmatprep.subr.bf16.mxu0 0
        %8463 = vmatpush1.bf16.msra.mxu0 %v8318
        %8464 = vmatprep.subr.bf16.mxu0 0
        %8465 = vmatpush1.bf16.msra.mxu0 %v8319
        %8466 = vmatprep.subr.bf16.mxu0 0
        %8467 = vmatpush1.bf16.msra.mxu0 %v8320
        %8468 = vmatprep.subr.bf16.mxu0 0
        %8469 = vmatpush1.bf16.msra.mxu0 %v8321
        %8470 = vmatprep.subr.bf16.mxu0 0
        %8471 = vmatpush1.bf16.msra.mxu0 %v8322
        %8472 = vmatprep.subr.bf16.mxu0 0
        %8473 = vmatpush1.bf16.msra.mxu0 %v8323
        %8474 = vmatprep.subr.bf16.mxu0 0
        %8475 = vmatpush1.bf16.msra.mxu0 %v8324
        %8476 = vmatprep.subr.bf16.mxu0 0
        %8477 = vmatpush1.bf16.msra.mxu0 %v8325
        %8478 = vmatprep.subr.bf16.mxu0 0
        %8479 = vmatpush1.bf16.msra.mxu0 %v8326
        %8480 = vmatprep.subr.bf16.mxu0 0
        %8481 = vmatpush1.bf16.msra.mxu0 %v8327
        %8482 = vmatprep.subr.bf16.mxu0 0
        %8483 = vmatpush1.bf16.msra.mxu0 %v8328
        %8484 = vmatprep.subr.bf16.mxu0 0
        %8485 = vmatpush1.bf16.msra.mxu0 %v8329
        %8486 = vmatprep.subr.bf16.mxu0 0
        %8487 = vmatpush1.bf16.msra.mxu0 %v8330
        %8488 = vmatprep.subr.bf16.mxu0 0
        %8489 = vmatpush1.bf16.msra.mxu0 %v8331
        %8490 = vmatprep.subr.bf16.mxu0 0
        %8491 = vmatpush1.bf16.msra.mxu0 %v8332
        %8492 = vmatprep.subr.bf16.mxu0 0
        %8493 = vmatpush1.bf16.msra.mxu0 %v8333
        %8494 = vmatprep.mubr.bf16.mxu0 %v7367
        %8495 = vmatmul.mubr.bf16.gmra.mrb[0].mxu0 %v7303
        %v8496 = vpop.f32.mrb[0].mxu0
        %v8497 = vadd.f32 %v8028, %v8496
        %v8498 = vpop.f32.mrb[0].mxu0
        %v8499 = vpop.f32.mrb[0].mxu0
        %v8500 = vadd.f32 %v8028, %v8499
        %v8501 = vpop.f32.mrb[0].mxu0
        %8502 = vmatprep.mubr.bf16.mxu0 %v7368
        %8503 = vmatmul.mubr.bf16.gmra.mrb[0].mxu0 %v7304
        %v8504 = vpop.f32.mrb[0].mxu0
        %v8505 = vadd.f32 %v8028, %v8504
        %v8506 = vpop.f32.mrb[0].mxu0
        %v8507 = vpop.f32.mrb[0].mxu0
        %v8508 = vadd.f32 %v8028, %v8507
        %v8509 = vpop.f32.mrb[0].mxu0
        %8510 = vmatprep.mubr.bf16.mxu0 %v7369
        %8511 = vmatmul.mubr.bf16.gmra.mrb[0].mxu0 %v7305
        %v8512 = vpop.f32.mrb[0].mxu0
        %v8513 = vadd.f32 %v8028, %v8512
        %v8514 = vpop.f32.mrb[0].mxu0
        %v8515 = vpop.f32.mrb[0].mxu0
        %v8516 = vadd.f32 %v8028, %v8515
        %v8517 = vpop.f32.mrb[0].mxu0
        %8518 = vmatprep.mubr.bf16.mxu0 %v7370
        %8519 = vmatmul.mubr.bf16.gmra.mrb[0].mxu0 %v7306
        %v8520 = vpop.f32.mrb[0].mxu0
        %v8521 = vadd.f32 %v8028, %v8520
        %v8522 = vpop.f32.mrb[0].mxu0
        %v8523 = vpop.f32.mrb[0].mxu0
        %v8524 = vadd.f32 %v8028, %v8523
        %v8525 = vpop.f32.mrb[0].mxu0
        %8526 = vmatprep.mubr.bf16.mxu0 %v7371
        %8527 = vmatmul.mubr.bf16.gmra.mrb[0].mxu0 %v7307
        %v8528 = vpop.f32.mrb[0].mxu0
        %v8529 = vadd.f32 %v8028, %v8528
        %v8530 = vpop.f32.mrb[0].mxu0
        %v8531 = vpop.f32.mrb[0].mxu0
        %v8532 = vadd.f32 %v8028, %v8531
        %v8533 = vpop.f32.mrb[0].mxu0
        %8534 = vmatprep.mubr.bf16.mxu0 %v7372
        %8535 = vmatmul.mubr.bf16.gmra.mrb[0].mxu0 %v7308
        %v8536 = vpop.f32.mrb[0].mxu0
        %v8537 = vadd.f32 %v8028, %v8536
        %v8538 = vpop.f32.mrb[0].mxu0
        %v8539 = vpop.f32.mrb[0].mxu0
        %v8540 = vadd.f32 %v8028, %v8539
        %v8541 = vpop.f32.mrb[0].mxu0
        %8542 = vmatprep.mubr.bf16.mxu0 %v7373
        %8543 = vmatmul.mubr.bf16.gmra.mrb[0].mxu0 %v7309
        %v8544 = vpop.f32.mrb[0].mxu0
        %v8545 = vadd.f32 %v8028, %v8544
        %v8546 = vpop.f32.mrb[0].mxu0
        %v8547 = vpop.f32.mrb[0].mxu0
        %v8548 = vadd.f32 %v8028, %v8547
        %v8549 = vpop.f32.mrb[0].mxu0
        %8550 = vmatprep.mubr.bf16.mxu0 %v7374
        %8551 = vmatmul.mubr.bf16.gmra.mrb[0].mxu0 %v7310
        %v8552 = vpop.f32.mrb[0].mxu0
        %v8553 = vadd.f32 %v8028, %v8552
        %v8554 = vpop.f32.mrb[0].mxu0
        %v8555 = vpop.f32.mrb[0].mxu0
        %v8556 = vadd.f32 %v8028, %v8555
        %v8557 = vpop.f32.mrb[0].mxu0
        %8558 = vmatprep.mubr.bf16.mxu0 %v7375
        %8559 = vmatmul.mubr.bf16.gmra.mrb[0].mxu0 %v7311
        %v8560 = vpop.f32.mrb[0].mxu0
        %v8561 = vadd.f32 %v8028, %v8560
        %v8562 = vpop.f32.mrb[0].mxu0
        %v8563 = vpop.f32.mrb[0].mxu0
        %v8564 = vadd.f32 %v8028, %v8563
        %v8565 = vpop.f32.mrb[0].mxu0
        %8566 = vmatprep.mubr.bf16.mxu0 %v7376
        %8567 = vmatmul.mubr.bf16.gmra.mrb[0].mxu0 %v7312
        %v8568 = vpop.f32.mrb[0].mxu0
        %v8569 = vadd.f32 %v8028, %v8568
        %v8570 = vpop.f32.mrb[0].mxu0
        %v8571 = vpop.f32.mrb[0].mxu0
        %v8572 = vadd.f32 %v8028, %v8571
        %v8573 = vpop.f32.mrb[0].mxu0
        %8574 = vmatprep.mubr.bf16.mxu0 %v7377
        %8575 = vmatmul.mubr.bf16.gmra.mrb[0].mxu0 %v7313
        %v8576 = vpop.f32.mrb[0].mxu0
        %v8577 = vadd.f32 %v8028, %v8576
        %v8578 = vpop.f32.mrb[0].mxu0
        %v8579 = vpop.f32.mrb[0].mxu0
        %v8580 = vadd.f32 %v8028, %v8579
        %v8581 = vpop.f32.mrb[0].mxu0
        %8582 = vmatprep.mubr.bf16.mxu0 %v7378
        %8583 = vmatmul.mubr.bf16.gmra.mrb[0].mxu0 %v7314
        %v8584 = vpop.f32.mrb[0].mxu0
        %v8585 = vadd.f32 %v8028, %v8584
        %v8586 = vpop.f32.mrb[0].mxu0
        %v8587 = vpop.f32.mrb[0].mxu0
        %v8588 = vadd.f32 %v8028, %v8587
        %v8589 = vpop.f32.mrb[0].mxu0
        %8590 = vmatprep.mubr.bf16.mxu0 %v7379
        %8591 = vmatmul.mubr.bf16.gmra.mrb[0].mxu0 %v7315
        %v8592 = vpop.f32.mrb[0].mxu0
        %v8593 = vadd.f32 %v8028, %v8592
        %v8594 = vpop.f32.mrb[0].mxu0
        %v8595 = vpop.f32.mrb[0].mxu0
        %v8596 = vadd.f32 %v8028, %v8595
        %v8597 = vpop.f32.mrb[0].mxu0
        %8598 = vmatprep.mubr.bf16.mxu0 %v7380
        %8599 = vmatmul.mubr.bf16.gmra.mrb[0].mxu0 %v7316
        %v8600 = vpop.f32.mrb[0].mxu0
        %v8601 = vadd.f32 %v8028, %v8600
        %v8602 = vpop.f32.mrb[0].mxu0
        %v8603 = vpop.f32.mrb[0].mxu0
        %v8604 = vadd.f32 %v8028, %v8603
        %v8605 = vpop.f32.mrb[0].mxu0
        %8606 = vmatprep.mubr.bf16.mxu0 %v7381
        %8607 = vmatmul.mubr.bf16.gmra.mrb[0].mxu0 %v7317
        %v8608 = vpop.f32.mrb[0].mxu0
        %v8609 = vadd.f32 %v8028, %v8608
        %v8610 = vpop.f32.mrb[0].mxu0
        %v8611 = vpop.f32.mrb[0].mxu0
        %v8612 = vadd.f32 %v8028, %v8611
        %v8613 = vpop.f32.mrb[0].mxu0
        %8614 = vmatprep.mubr.bf16.mxu0 %v7382
        %8615 = vmatmul.mubr.bf16.gmra.mrb[0].mxu0 %v7318
        %v8616 = vpop.f32.mrb[0].mxu0
        %v8617 = vadd.f32 %v8028, %v8616
        %v8618 = vpop.f32.mrb[0].mxu0
        %v8619 = vpop.f32.mrb[0].mxu0
        %v8620 = vadd.f32 %v8028, %v8619
        %v8621 = vpop.f32.mrb[0].mxu0
        %8622 = vdwg.mxu0
        %8623 = vmatprep.subr.bf16.mxu0 0
        %8624 = vmatpush1.bf16.msra.mxu0 %v8334
        %8625 = vmatprep.subr.bf16.mxu0 0
        %8626 = vmatpush1.bf16.msra.mxu0 %v8335
        %8627 = vmatprep.subr.bf16.mxu0 0
        %8628 = vmatpush1.bf16.msra.mxu0 %v8336
        %8629 = vmatprep.subr.bf16.mxu0 0
        %8630 = vmatpush1.bf16.msra.mxu0 %v8337
        %8631 = vmatprep.subr.bf16.mxu0 0
        %8632 = vmatpush1.bf16.msra.mxu0 %v8338
        %8633 = vmatprep.subr.bf16.mxu0 0
        %8634 = vmatpush1.bf16.msra.mxu0 %v8339
        %8635 = vmatprep.subr.bf16.mxu0 0
        %8636 = vmatpush1.bf16.msra.mxu0 %v8340
        %8637 = vmatprep.subr.bf16.mxu0 0
        %8638 = vmatpush1.bf16.msra.mxu0 %v8341
        %8639 = vmatprep.subr.bf16.mxu0 0
        %8640 = vmatpush1.bf16.msra.mxu0 %v8342
        %8641 = vmatprep.subr.bf16.mxu0 0
        %8642 = vmatpush1.bf16.msra.mxu0 %v8343
        %8643 = vmatprep.subr.bf16.mxu0 0
        %8644 = vmatpush1.bf16.msra.mxu0 %v8344
        %8645 = vmatprep.subr.bf16.mxu0 0
        %8646 = vmatpush1.bf16.msra.mxu0 %v8345
        %8647 = vmatprep.subr.bf16.mxu0 0
        %8648 = vmatpush1.bf16.msra.mxu0 %v8346
        %8649 = vmatprep.subr.bf16.mxu0 0
        %8650 = vmatpush1.bf16.msra.mxu0 %v8347
        %8651 = vmatprep.subr.bf16.mxu0 0
        %8652 = vmatpush1.bf16.msra.mxu0 %v8348
        %8653 = vmatprep.subr.bf16.mxu0 0
        %8654 = vmatpush1.bf16.msra.mxu0 %v8349
        %8655 = vmatprep.mubr.bf16.mxu0 %v7511
        %8656 = vmatmul.mubr.bf16.gmra.mrb[0].mxu0 %v7431
        %v8657 = vpop.f32.mrb[0].mxu0
        %v8658 = vadd.f32 %v8497, %v8657
        %v8659 = vpop.f32.mrb[0].mxu0
        %v8660 = vpop.f32.mrb[0].mxu0
        %v8661 = vadd.f32 %v8500, %v8660
        %v8662 = vpop.f32.mrb[0].mxu0
        %8663 = vmatprep.mubr.bf16.mxu0 %v7512
        %8664 = vmatmul.mubr.bf16.gmra.mrb[0].mxu0 %v7432
        %v8665 = vpop.f32.mrb[0].mxu0
        %v8666 = vadd.f32 %v8505, %v8665
        %v8667 = vpop.f32.mrb[0].mxu0
        %v8668 = vpop.f32.mrb[0].mxu0
        %v8669 = vadd.f32 %v8508, %v8668
        %v8670 = vpop.f32.mrb[0].mxu0
        %8671 = vmatprep.mubr.bf16.mxu0 %v7513
        %8672 = vmatmul.mubr.bf16.gmra.mrb[0].mxu0 %v7433
        %v8673 = vpop.f32.mrb[0].mxu0
        %v8674 = vadd.f32 %v8513, %v8673
        %v8675 = vpop.f32.mrb[0].mxu0
        %v8676 = vpop.f32.mrb[0].mxu0
        %v8677 = vadd.f32 %v8516, %v8676
        %v8678 = vpop.f32.mrb[0].mxu0
        %8679 = vmatprep.mubr.bf16.mxu0 %v7514
        %8680 = vmatmul.mubr.bf16.gmra.mrb[0].mxu0 %v7434
        %v8681 = vpop.f32.mrb[0].mxu0
        %v8682 = vadd.f32 %v8521, %v8681
        %v8683 = vpop.f32.mrb[0].mxu0
        %v8684 = vpop.f32.mrb[0].mxu0
        %v8685 = vadd.f32 %v8524, %v8684
        %v8686 = vpop.f32.mrb[0].mxu0
        %8687 = vmatprep.mubr.bf16.mxu0 %v7515
        %8688 = vmatmul.mubr.bf16.gmra.mrb[0].mxu0 %v7435
        %v8689 = vpop.f32.mrb[0].mxu0
        %v8690 = vadd.f32 %v8529, %v8689
        %v8691 = vpop.f32.mrb[0].mxu0
        %v8692 = vpop.f32.mrb[0].mxu0
        %v8693 = vadd.f32 %v8532, %v8692
        %v8694 = vpop.f32.mrb[0].mxu0
        %8695 = vmatprep.mubr.bf16.mxu0 %v7516
        %8696 = vmatmul.mubr.bf16.gmra.mrb[0].mxu0 %v7436
        %v8697 = vpop.f32.mrb[0].mxu0
        %v8698 = vadd.f32 %v8537, %v8697
        %v8699 = vpop.f32.mrb[0].mxu0
        %v8700 = vpop.f32.mrb[0].mxu0
        %v8701 = vadd.f32 %v8540, %v8700
        %v8702 = vpop.f32.mrb[0].mxu0
        %8703 = vmatprep.mubr.bf16.mxu0 %v7517
        %8704 = vmatmul.mubr.bf16.gmra.mrb[0].mxu0 %v7437
        %v8705 = vpop.f32.mrb[0].mxu0
        %v8706 = vadd.f32 %v8545, %v8705
        %v8707 = vpop.f32.mrb[0].mxu0
        %v8708 = vpop.f32.mrb[0].mxu0
        %v8709 = vadd.f32 %v8548, %v8708
        %v8710 = vpop.f32.mrb[0].mxu0
        %8711 = vmatprep.mubr.bf16.mxu0 %v7518
        %8712 = vmatmul.mubr.bf16.gmra.mrb[0].mxu0 %v7438
        %v8713 = vpop.f32.mrb[0].mxu0
        %v8714 = vadd.f32 %v8553, %v8713
        %v8715 = vpop.f32.mrb[0].mxu0
        %v8716 = vpop.f32.mrb[0].mxu0
        %v8717 = vadd.f32 %v8556, %v8716
        %v8718 = vpop.f32.mrb[0].mxu0
        %8719 = vmatprep.mubr.bf16.mxu0 %v7519
        %8720 = vmatmul.mubr.bf16.gmra.mrb[0].mxu0 %v7439
        %v8721 = vpop.f32.mrb[0].mxu0
        %v8722 = vadd.f32 %v8561, %v8721
        %v8723 = vpop.f32.mrb[0].mxu0
        %v8724 = vpop.f32.mrb[0].mxu0
        %v8725 = vadd.f32 %v8564, %v8724
        %v8726 = vpop.f32.mrb[0].mxu0
        %8727 = vmatprep.mubr.bf16.mxu0 %v7520
        %8728 = vmatmul.mubr.bf16.gmra.mrb[0].mxu0 %v7440
        %v8729 = vpop.f32.mrb[0].mxu0
        %v8730 = vadd.f32 %v8569, %v8729
        %v8731 = vpop.f32.mrb[0].mxu0
        %v8732 = vpop.f32.mrb[0].mxu0
        %v8733 = vadd.f32 %v8572, %v8732
        %v8734 = vpop.f32.mrb[0].mxu0
        %8735 = vmatprep.mubr.bf16.mxu0 %v7521
        %8736 = vmatmul.mubr.bf16.gmra.mrb[0].mxu0 %v7441
        %v8737 = vpop.f32.mrb[0].mxu0
        %v8738 = vadd.f32 %v8577, %v8737
        %v8739 = vpop.f32.mrb[0].mxu0
        %v8740 = vpop.f32.mrb[0].mxu0
        %v8741 = vadd.f32 %v8580, %v8740
        %v8742 = vpop.f32.mrb[0].mxu0
        %8743 = vmatprep.mubr.bf16.mxu0 %v7522
        %8744 = vmatmul.mubr.bf16.gmra.mrb[0].mxu0 %v7442
        %v8745 = vpop.f32.mrb[0].mxu0
        %v8746 = vadd.f32 %v8585, %v8745
        %v8747 = vpop.f32.mrb[0].mxu0
        %v8748 = vpop.f32.mrb[0].mxu0
        %v8749 = vadd.f32 %v8588, %v8748
        %v8750 = vpop.f32.mrb[0].mxu0
        %8751 = vmatprep.mubr.bf16.mxu0 %v7523
        %8752 = vmatmul.mubr.bf16.gmra.mrb[0].mxu0 %v7443
        %v8753 = vpop.f32.mrb[0].mxu0
        %v8754 = vadd.f32 %v8593, %v8753
        %v8755 = vpop.f32.mrb[0].mxu0
        %v8756 = vpop.f32.mrb[0].mxu0
        %v8757 = vadd.f32 %v8596, %v8756
        %v8758 = vpop.f32.mrb[0].mxu0
        %8759 = vmatprep.mubr.bf16.mxu0 %v7524
        %8760 = vmatmul.mubr.bf16.gmra.mrb[0].mxu0 %v7444
        %v8761 = vpop.f32.mrb[0].mxu0
        %v8762 = vadd.f32 %v8601, %v8761
        %v8763 = vpop.f32.mrb[0].mxu0
        %v8764 = vpop.f32.mrb[0].mxu0
        %v8765 = vadd.f32 %v8604, %v8764
        %v8766 = vpop.f32.mrb[0].mxu0
        %8767 = vmatprep.mubr.bf16.mxu0 %v7525
        %8768 = vmatmul.mubr.bf16.gmra.mrb[0].mxu0 %v7445
        %v8769 = vpop.f32.mrb[0].mxu0
        %v8770 = vadd.f32 %v8609, %v8769
        %v8771 = vpop.f32.mrb[0].mxu0
        %v8772 = vpop.f32.mrb[0].mxu0
        %v8773 = vadd.f32 %v8612, %v8772
        %v8774 = vpop.f32.mrb[0].mxu0
        %8775 = vmatprep.mubr.bf16.mxu0 %v7526
        %8776 = vmatmul.mubr.bf16.gmra.mrb[0].mxu0 %v7446
        %v8777 = vpop.f32.mrb[0].mxu0
        %v8778 = vadd.f32 %v8617, %v8777
        %v8779 = vpop.f32.mrb[0].mxu0
        %v8780 = vpop.f32.mrb[0].mxu0
        %v8781 = vadd.f32 %v8620, %v8780
        %v8782 = vpop.f32.mrb[0].mxu0
        %8783 = vdwg.mxu0
        %8784 = vmatprep.subr.bf16.mxu0 0
        %8785 = vmatpush1.bf16.msra.mxu0 %v8350
        %8786 = vmatprep.subr.bf16.mxu0 0
        %8787 = vmatpush1.bf16.msra.mxu0 %v8351
        %8788 = vmatprep.subr.bf16.mxu0 0
        %8789 = vmatpush1.bf16.msra.mxu0 %v8352
        %8790 = vmatprep.subr.bf16.mxu0 0
        %8791 = vmatpush1.bf16.msra.mxu0 %v8353
        %8792 = vmatprep.subr.bf16.mxu0 0
        %8793 = vmatpush1.bf16.msra.mxu0 %v8354
        %8794 = vmatprep.subr.bf16.mxu0 0
        %8795 = vmatpush1.bf16.msra.mxu0 %v8355
        %8796 = vmatprep.subr.bf16.mxu0 0
        %8797 = vmatpush1.bf16.msra.mxu0 %v8356
        %8798 = vmatprep.subr.bf16.mxu0 0
        %8799 = vmatpush1.bf16.msra.mxu0 %v8357
        %8800 = vmatprep.subr.bf16.mxu0 0
        %8801 = vmatpush1.bf16.msra.mxu0 %v8358
        %8802 = vmatprep.subr.bf16.mxu0 0
        %8803 = vmatpush1.bf16.msra.mxu0 %v8359
        %8804 = vmatprep.subr.bf16.mxu0 0
        %8805 = vmatpush1.bf16.msra.mxu0 %v8360
        %8806 = vmatprep.subr.bf16.mxu0 0
        %8807 = vmatpush1.bf16.msra.mxu0 %v8361
        %8808 = vmatprep.subr.bf16.mxu0 0
        %8809 = vmatpush1.bf16.msra.mxu0 %v8362
        %8810 = vmatprep.subr.bf16.mxu0 0
        %8811 = vmatpush1.bf16.msra.mxu0 %v8363
        %8812 = vmatprep.subr.bf16.mxu0 0
        %8813 = vmatpush1.bf16.msra.mxu0 %v8364
        %8814 = vmatprep.subr.bf16.mxu0 0
        %8815 = vmatpush1.bf16.msra.mxu0 %v8365
        %8816 = vmatprep.mubr.bf16.mxu0 %v7639
        %8817 = vmatmul.mubr.bf16.gmra.mrb[0].mxu0 %v7575
        %v8818 = vpop.f32.mrb[0].mxu0
        %v8819 = vadd.f32 %v8658, %v8818
        %v8820 = vpop.f32.mrb[0].mxu0
        %v8821 = vpop.f32.mrb[0].mxu0
        %v8822 = vadd.f32 %v8661, %v8821
        %v8823 = vpop.f32.mrb[0].mxu0
        %8824 = vmatprep.mubr.bf16.mxu0 %v7640
        %8825 = vmatmul.mubr.bf16.gmra.mrb[0].mxu0 %v7576
        %v8826 = vpop.f32.mrb[0].mxu0
        %v8827 = vadd.f32 %v8666, %v8826
        %v8828 = vpop.f32.mrb[0].mxu0
        %v8829 = vpop.f32.mrb[0].mxu0
        %v8830 = vadd.f32 %v8669, %v8829
        %v8831 = vpop.f32.mrb[0].mxu0
        %8832 = vmatprep.mubr.bf16.mxu0 %v7641
        %8833 = vmatmul.mubr.bf16.gmra.mrb[0].mxu0 %v7577
        %v8834 = vpop.f32.mrb[0].mxu0
        %v8835 = vadd.f32 %v8674, %v8834
        %v8836 = vpop.f32.mrb[0].mxu0
        %v8837 = vpop.f32.mrb[0].mxu0
        %v8838 = vadd.f32 %v8677, %v8837
        %v8839 = vpop.f32.mrb[0].mxu0
        %8840 = vmatprep.mubr.bf16.mxu0 %v7642
        %8841 = vmatmul.mubr.bf16.gmra.mrb[0].mxu0 %v7578
        %v8842 = vpop.f32.mrb[0].mxu0
        %v8843 = vadd.f32 %v8682, %v8842
        %v8844 = vpop.f32.mrb[0].mxu0
        %v8845 = vpop.f32.mrb[0].mxu0
        %v8846 = vadd.f32 %v8685, %v8845
        %v8847 = vpop.f32.mrb[0].mxu0
        %8848 = vmatprep.mubr.bf16.mxu0 %v7643
        %8849 = vmatmul.mubr.bf16.gmra.mrb[0].mxu0 %v7579
        %v8850 = vpop.f32.mrb[0].mxu0
        %v8851 = vadd.f32 %v8690, %v8850
        %v8852 = vpop.f32.mrb[0].mxu0
        %v8853 = vpop.f32.mrb[0].mxu0
        %v8854 = vadd.f32 %v8693, %v8853
        %v8855 = vpop.f32.mrb[0].mxu0
        %8856 = vmatprep.mubr.bf16.mxu0 %v7644
        %8857 = vmatmul.mubr.bf16.gmra.mrb[0].mxu0 %v7580
        %v8858 = vpop.f32.mrb[0].mxu0
        %v8859 = vadd.f32 %v8698, %v8858
        %v8860 = vpop.f32.mrb[0].mxu0
        %v8861 = vpop.f32.mrb[0].mxu0
        %v8862 = vadd.f32 %v8701, %v8861
        %v8863 = vpop.f32.mrb[0].mxu0
        %8864 = vmatprep.mubr.bf16.mxu0 %v7645
        %8865 = vmatmul.mubr.bf16.gmra.mrb[0].mxu0 %v7581
        %v8866 = vpop.f32.mrb[0].mxu0
        %v8867 = vadd.f32 %v8706, %v8866
        %v8868 = vpop.f32.mrb[0].mxu0
        %v8869 = vpop.f32.mrb[0].mxu0
        %v8870 = vadd.f32 %v8709, %v8869
        %v8871 = vpop.f32.mrb[0].mxu0
        %8872 = vmatprep.mubr.bf16.mxu0 %v7646
        %8873 = vmatmul.mubr.bf16.gmra.mrb[0].mxu0 %v7582
        %v8874 = vpop.f32.mrb[0].mxu0
        %v8875 = vadd.f32 %v8714, %v8874
        %v8876 = vpop.f32.mrb[0].mxu0
        %v8877 = vpop.f32.mrb[0].mxu0
        %v8878 = vadd.f32 %v8717, %v8877
        %v8879 = vpop.f32.mrb[0].mxu0
        %8880 = vmatprep.mubr.bf16.mxu0 %v7647
        %8881 = vmatmul.mubr.bf16.gmra.mrb[0].mxu0 %v7583
        %v8882 = vpop.f32.mrb[0].mxu0
        %v8883 = vadd.f32 %v8722, %v8882
        %v8884 = vpop.f32.mrb[0].mxu0
        %v8885 = vpop.f32.mrb[0].mxu0
        %v8886 = vadd.f32 %v8725, %v8885
        %v8887 = vpop.f32.mrb[0].mxu0
        %8888 = vmatprep.mubr.bf16.mxu0 %v7648
        %8889 = vmatmul.mubr.bf16.gmra.mrb[0].mxu0 %v7584
        %v8890 = vpop.f32.mrb[0].mxu0
        %v8891 = vadd.f32 %v8730, %v8890
        %v8892 = vpop.f32.mrb[0].mxu0
        %v8893 = vpop.f32.mrb[0].mxu0
        %v8894 = vadd.f32 %v8733, %v8893
        %v8895 = vpop.f32.mrb[0].mxu0
        %8896 = vmatprep.mubr.bf16.mxu0 %v7649
        %8897 = vmatmul.mubr.bf16.gmra.mrb[0].mxu0 %v7585
        %v8898 = vpop.f32.mrb[0].mxu0
        %v8899 = vadd.f32 %v8738, %v8898
        %v8900 = vpop.f32.mrb[0].mxu0
        %v8901 = vpop.f32.mrb[0].mxu0
        %v8902 = vadd.f32 %v8741, %v8901
        %v8903 = vpop.f32.mrb[0].mxu0
        %8904 = vmatprep.mubr.bf16.mxu0 %v7650
        %8905 = vmatmul.mubr.bf16.gmra.mrb[0].mxu0 %v7586
        %v8906 = vpop.f32.mrb[0].mxu0
        %v8907 = vadd.f32 %v8746, %v8906
        %v8908 = vpop.f32.mrb[0].mxu0
        %v8909 = vpop.f32.mrb[0].mxu0
        %v8910 = vadd.f32 %v8749, %v8909
        %v8911 = vpop.f32.mrb[0].mxu0
        %8912 = vmatprep.mubr.bf16.mxu0 %v7651
        %8913 = vmatmul.mubr.bf16.gmra.mrb[0].mxu0 %v7587
        %v8914 = vpop.f32.mrb[0].mxu0
        %v8915 = vadd.f32 %v8754, %v8914
        %v8916 = vpop.f32.mrb[0].mxu0
        %v8917 = vpop.f32.mrb[0].mxu0
        %v8918 = vadd.f32 %v8757, %v8917
        %v8919 = vpop.f32.mrb[0].mxu0
        %8920 = vmatprep.mubr.bf16.mxu0 %v7652
        %8921 = vmatmul.mubr.bf16.gmra.mrb[0].mxu0 %v7588
        %v8922 = vpop.f32.mrb[0].mxu0
        %v8923 = vadd.f32 %v8762, %v8922
        %v8924 = vpop.f32.mrb[0].mxu0
        %v8925 = vpop.f32.mrb[0].mxu0
        %v8926 = vadd.f32 %v8765, %v8925
        %v8927 = vpop.f32.mrb[0].mxu0
        %8928 = vmatprep.mubr.bf16.mxu0 %v7653
        %8929 = vmatmul.mubr.bf16.gmra.mrb[0].mxu0 %v7589
        %v8930 = vpop.f32.mrb[0].mxu0
        %v8931 = vadd.f32 %v8770, %v8930
        %v8932 = vpop.f32.mrb[0].mxu0
        %v8933 = vpop.f32.mrb[0].mxu0
        %v8934 = vadd.f32 %v8773, %v8933
        %v8935 = vpop.f32.mrb[0].mxu0
        %8936 = vmatprep.mubr.bf16.mxu0 %v7654
        %8937 = vmatmul.mubr.bf16.gmra.mrb[0].mxu0 %v7590
        %v8938 = vpop.f32.mrb[0].mxu0
        %v8939 = vadd.f32 %v8778, %v8938
        %v8940 = vpop.f32.mrb[0].mxu0
        %v8941 = vpop.f32.mrb[0].mxu0
        %v8942 = vadd.f32 %v8781, %v8941
        %v8943 = vpop.f32.mrb[0].mxu0
        %8944 = vdwg.mxu0
        %8945 = vmatprep.subr.bf16.mxu0 0
        %8946 = vmatpush1.bf16.msra.mxu0 %v8366
        %8947 = vmatprep.subr.bf16.mxu0 0
        %8948 = vmatpush1.bf16.msra.mxu0 %v8367
        %8949 = vmatprep.subr.bf16.mxu0 0
        %8950 = vmatpush1.bf16.msra.mxu0 %v8368
        %8951 = vmatprep.subr.bf16.mxu0 0
        %8952 = vmatpush1.bf16.msra.mxu0 %v8369
        %8953 = vmatprep.subr.bf16.mxu0 0
        %8954 = vmatpush1.bf16.msra.mxu0 %v8370
        %8955 = vmatprep.subr.bf16.mxu0 0
        %8956 = vmatpush1.bf16.msra.mxu0 %v8371
        %8957 = vmatprep.subr.bf16.mxu0 0
        %8958 = vmatpush1.bf16.msra.mxu0 %v8372
        %8959 = vmatprep.subr.bf16.mxu0 0
        %8960 = vmatpush1.bf16.msra.mxu0 %v8373
        %8961 = vmatprep.subr.bf16.mxu0 0
        %8962 = vmatpush1.bf16.msra.mxu0 %v8374
        %8963 = vmatprep.subr.bf16.mxu0 0
        %8964 = vmatpush1.bf16.msra.mxu0 %v8375
        %8965 = vmatprep.subr.bf16.mxu0 0
        %8966 = vmatpush1.bf16.msra.mxu0 %v8376
        %8967 = vmatprep.subr.bf16.mxu0 0
        %8968 = vmatpush1.bf16.msra.mxu0 %v8377
        %8969 = vmatprep.subr.bf16.mxu0 0
        %8970 = vmatpush1.bf16.msra.mxu0 %v8378
        %8971 = vmatprep.subr.bf16.mxu0 0
        %8972 = vmatpush1.bf16.msra.mxu0 %v8379
        %8973 = vmatprep.subr.bf16.mxu0 0
        %8974 = vmatpush1.bf16.msra.mxu0 %v8380
        %8975 = vmatprep.subr.bf16.mxu0 0
        %8976 = vmatpush1.bf16.msra.mxu0 %v8381
        %8977 = vmatprep.mubr.bf16.mxu0 %v7783
        %8978 = vmatmul.mubr.bf16.gmra.mrb[0].mxu0 %v7719
        %v8979 = vpop.f32.mrb[0].mxu0
        %v8980 = vadd.f32 %v8819, %v8979
        %v8981 = vpop.f32.mrb[0].mxu0
        %v8982 = vpop.f32.mrb[0].mxu0
        %v8983 = vadd.f32 %v8822, %v8982
        %v8984 = vpop.f32.mrb[0].mxu0
        %8985 = vmatprep.mubr.bf16.mxu0 %v7784
        %8986 = vmatmul.mubr.bf16.gmra.mrb[0].mxu0 %v7720
        %v8987 = vpop.f32.mrb[0].mxu0
        %v8988 = vadd.f32 %v8827, %v8987
        %v8989 = vpop.f32.mrb[0].mxu0
        %v8990 = vpop.f32.mrb[0].mxu0
        %v8991 = vadd.f32 %v8830, %v8990
        %v8992 = vpop.f32.mrb[0].mxu0
        %8993 = vmatprep.mubr.bf16.mxu0 %v7785
        %8994 = vmatmul.mubr.bf16.gmra.mrb[0].mxu0 %v7721
        %v8995 = vpop.f32.mrb[0].mxu0
        %v8996 = vadd.f32 %v8835, %v8995
        %v8997 = vpop.f32.mrb[0].mxu0
        %v8998 = vpop.f32.mrb[0].mxu0
        %v8999 = vadd.f32 %v8838, %v8998
        %v9000 = vpop.f32.mrb[0].mxu0
        %9001 = vmatprep.mubr.bf16.mxu0 %v7786
        %9002 = vmatmul.mubr.bf16.gmra.mrb[0].mxu0 %v7722
        %v9003 = vpop.f32.mrb[0].mxu0
        %v9004 = vadd.f32 %v8843, %v9003
        %v9005 = vpop.f32.mrb[0].mxu0
        %v9006 = vpop.f32.mrb[0].mxu0
        %v9007 = vadd.f32 %v8846, %v9006
        %v9008 = vpop.f32.mrb[0].mxu0
        %9009 = vmatprep.mubr.bf16.mxu0 %v7787
        %9010 = vmatmul.mubr.bf16.gmra.mrb[0].mxu0 %v7723
        %v9011 = vpop.f32.mrb[0].mxu0
        %v9012 = vadd.f32 %v8851, %v9011
        %v9013 = vpop.f32.mrb[0].mxu0
        %v9014 = vpop.f32.mrb[0].mxu0
        %v9015 = vadd.f32 %v8854, %v9014
        %v9016 = vpop.f32.mrb[0].mxu0
        %9017 = vmatprep.mubr.bf16.mxu0 %v7788
        %9018 = vmatmul.mubr.bf16.gmra.mrb[0].mxu0 %v7724
        %v9019 = vpop.f32.mrb[0].mxu0
        %v9020 = vadd.f32 %v8859, %v9019
        %v9021 = vpop.f32.mrb[0].mxu0
        %v9022 = vpop.f32.mrb[0].mxu0
        %v9023 = vadd.f32 %v8862, %v9022
        %v9024 = vpop.f32.mrb[0].mxu0
        %9025 = vmatprep.mubr.bf16.mxu0 %v7789
        %9026 = vmatmul.mubr.bf16.gmra.mrb[0].mxu0 %v7725
        %v9027 = vpop.f32.mrb[0].mxu0
        %v9028 = vadd.f32 %v8867, %v9027
        %v9029 = vpop.f32.mrb[0].mxu0
        %v9030 = vpop.f32.mrb[0].mxu0
        %v9031 = vadd.f32 %v8870, %v9030
        %v9032 = vpop.f32.mrb[0].mxu0
        %9033 = vmatprep.mubr.bf16.mxu0 %v7790
        %9034 = vmatmul.mubr.bf16.gmra.mrb[0].mxu0 %v7726
        %v9035 = vpop.f32.mrb[0].mxu0
        %v9036 = vadd.f32 %v8875, %v9035
        %v9037 = vpop.f32.mrb[0].mxu0
        %v9038 = vpop.f32.mrb[0].mxu0
        %v9039 = vadd.f32 %v8878, %v9038
        %v9040 = vpop.f32.mrb[0].mxu0
        %9041 = vmatprep.mubr.bf16.mxu0 %v7791
        %9042 = vmatmul.mubr.bf16.gmra.mrb[0].mxu0 %v7727
        %v9043 = vpop.f32.mrb[0].mxu0
        %v9044 = vadd.f32 %v8883, %v9043
        %v9045 = vpop.f32.mrb[0].mxu0
        %v9046 = vpop.f32.mrb[0].mxu0
        %v9047 = vadd.f32 %v8886, %v9046
        %v9048 = vpop.f32.mrb[0].mxu0
        %9049 = vmatprep.mubr.bf16.mxu0 %v7792
        %9050 = vmatmul.mubr.bf16.gmra.mrb[0].mxu0 %v7728
        %v9051 = vpop.f32.mrb[0].mxu0
        %v9052 = vadd.f32 %v8891, %v9051
        %v9053 = vpop.f32.mrb[0].mxu0
        %v9054 = vpop.f32.mrb[0].mxu0
        %v9055 = vadd.f32 %v8894, %v9054
        %v9056 = vpop.f32.mrb[0].mxu0
        %9057 = vmatprep.mubr.bf16.mxu0 %v7793
        %9058 = vmatmul.mubr.bf16.gmra.mrb[0].mxu0 %v7729
        %v9059 = vpop.f32.mrb[0].mxu0
        %v9060 = vadd.f32 %v8899, %v9059
        %v9061 = vpop.f32.mrb[0].mxu0
        %v9062 = vpop.f32.mrb[0].mxu0
        %v9063 = vadd.f32 %v8902, %v9062
        %v9064 = vpop.f32.mrb[0].mxu0
        %9065 = vmatprep.mubr.bf16.mxu0 %v7794
        %9066 = vmatmul.mubr.bf16.gmra.mrb[0].mxu0 %v7730
        %v9067 = vpop.f32.mrb[0].mxu0
        %v9068 = vadd.f32 %v8907, %v9067
        %v9069 = vpop.f32.mrb[0].mxu0
        %v9070 = vpop.f32.mrb[0].mxu0
        %v9071 = vadd.f32 %v8910, %v9070
        %v9072 = vpop.f32.mrb[0].mxu0
        %9073 = vmatprep.mubr.bf16.mxu0 %v7795
        %9074 = vmatmul.mubr.bf16.gmra.mrb[0].mxu0 %v7731
        %v9075 = vpop.f32.mrb[0].mxu0
        %v9076 = vadd.f32 %v8915, %v9075
        %v9077 = vpop.f32.mrb[0].mxu0
        %v9078 = vpop.f32.mrb[0].mxu0
        %v9079 = vadd.f32 %v8918, %v9078
        %v9080 = vpop.f32.mrb[0].mxu0
        %9081 = vmatprep.mubr.bf16.mxu0 %v7796
        %9082 = vmatmul.mubr.bf16.gmra.mrb[0].mxu0 %v7732
        %v9083 = vpop.f32.mrb[0].mxu0
        %v9084 = vadd.f32 %v8923, %v9083
        %v9085 = vpop.f32.mrb[0].mxu0
        %v9086 = vpop.f32.mrb[0].mxu0
        %v9087 = vadd.f32 %v8926, %v9086
        %v9088 = vpop.f32.mrb[0].mxu0
        %9089 = vmatprep.mubr.bf16.mxu0 %v7797
        %9090 = vmatmul.mubr.bf16.gmra.mrb[0].mxu0 %v7733
        %v9091 = vpop.f32.mrb[0].mxu0
        %v9092 = vadd.f32 %v8931, %v9091
        %v9093 = vpop.f32.mrb[0].mxu0
        %v9094 = vpop.f32.mrb[0].mxu0
        %v9095 = vadd.f32 %v8934, %v9094
        %v9096 = vpop.f32.mrb[0].mxu0
        %9097 = vmatprep.mubr.bf16.mxu0 %v7798
        %9098 = vmatmul.mubr.bf16.gmra.mrb[0].mxu0 %v7734
        %v9099 = vpop.f32.mrb[0].mxu0
        %v9100 = vadd.f32 %v8939, %v9099
        %v9101 = vpop.f32.mrb[0].mxu0
        %v9102 = vpop.f32.mrb[0].mxu0
        %v9103 = vadd.f32 %v8942, %v9102
        %v9104 = vpop.f32.mrb[0].mxu0
        %9105 = vdwg.mxu0
        %9106 = vmatprep.subr.bf16.mxu0 0
        %9107 = vmatpush1.bf16.msra.mxu0 %v8382
        %9108 = vmatprep.subr.bf16.mxu0 0
        %9109 = vmatpush1.bf16.msra.mxu0 %v8383
        %9110 = vmatprep.subr.bf16.mxu0 0
        %9111 = vmatpush1.bf16.msra.mxu0 %v8384
        %9112 = vmatprep.subr.bf16.mxu0 0
        %9113 = vmatpush1.bf16.msra.mxu0 %v8385
        %9114 = vmatprep.subr.bf16.mxu0 0
        %9115 = vmatpush1.bf16.msra.mxu0 %v8386
        %9116 = vmatprep.subr.bf16.mxu0 0
        %9117 = vmatpush1.bf16.msra.mxu0 %v8387
        %9118 = vmatprep.subr.bf16.mxu0 0
        %9119 = vmatpush1.bf16.msra.mxu0 %v8388
        %9120 = vmatprep.subr.bf16.mxu0 0
        %9121 = vmatpush1.bf16.msra.mxu0 %v8389
        %9122 = vmatprep.subr.bf16.mxu0 0
        %9123 = vmatpush1.bf16.msra.mxu0 0
        %9124 = vmatprep.subr.bf16.mxu0 0
        %9125 = vmatpush1.bf16.msra.mxu0 0
        %9126 = vmatprep.subr.bf16.mxu0 0
        %9127 = vmatpush1.bf16.msra.mxu0 0
        %9128 = vmatprep.subr.bf16.mxu0 0
        %9129 = vmatpush1.bf16.msra.mxu0 0
        %9130 = vmatprep.subr.bf16.mxu0 0
        %9131 = vmatpush1.bf16.msra.mxu0 0
        %9132 = vmatprep.subr.bf16.mxu0 0
        %9133 = vmatpush1.bf16.msra.mxu0 0
        %9134 = vmatprep.subr.bf16.mxu0 0
        %9135 = vmatpush1.bf16.msra.mxu0 0
        %9136 = vmatprep.subr.bf16.mxu0 0
        %9137 = vmatpush1.bf16.msra.mxu0 0
        %9138 = vmatprep.mubr.bf16.mxu0 0
        %9139 = vmatmul.mubr.bf16.gmra.mrb[0].mxu0 %v7847
        %v9140 = vpop.f32.mrb[0].mxu0
        %v9141 = vadd.f32 %v8980, %v9140
        %v9142 = vpop.f32.mrb[0].mxu0
        %v9143 = vpop.f32.mrb[0].mxu0
        %v9144 = vadd.f32 %v8983, %v9143
        %v9145 = vpop.f32.mrb[0].mxu0
        %9146 = vmatprep.mubr.bf16.mxu0 0
        %9147 = vmatmul.mubr.bf16.gmra.mrb[0].mxu0 %v7848
        %v9148 = vpop.f32.mrb[0].mxu0
        %v9149 = vadd.f32 %v8988, %v9148
        %v9150 = vpop.f32.mrb[0].mxu0
        %v9151 = vpop.f32.mrb[0].mxu0
        %v9152 = vadd.f32 %v8991, %v9151
        %v9153 = vpop.f32.mrb[0].mxu0
        %9154 = vmatprep.mubr.bf16.mxu0 0
        %9155 = vmatmul.mubr.bf16.gmra.mrb[0].mxu0 %v7849
        %v9156 = vpop.f32.mrb[0].mxu0
        %v9157 = vadd.f32 %v8996, %v9156
        %v9158 = vpop.f32.mrb[0].mxu0
        %v9159 = vpop.f32.mrb[0].mxu0
        %v9160 = vadd.f32 %v8999, %v9159
        %v9161 = vpop.f32.mrb[0].mxu0
        %9162 = vmatprep.mubr.bf16.mxu0 0
        %9163 = vmatmul.mubr.bf16.gmra.mrb[0].mxu0 %v7850
        %v9164 = vpop.f32.mrb[0].mxu0
        %v9165 = vadd.f32 %v9004, %v9164
        %v9166 = vpop.f32.mrb[0].mxu0
        %v9167 = vpop.f32.mrb[0].mxu0
        %v9168 = vadd.f32 %v9007, %v9167
        %v9169 = vpop.f32.mrb[0].mxu0
        %9170 = vmatprep.mubr.bf16.mxu0 0
        %9171 = vmatmul.mubr.bf16.gmra.mrb[0].mxu0 %v7851
        %v9172 = vpop.f32.mrb[0].mxu0
        %v9173 = vadd.f32 %v9012, %v9172
        %v9174 = vpop.f32.mrb[0].mxu0
        %v9175 = vpop.f32.mrb[0].mxu0
        %v9176 = vadd.f32 %v9015, %v9175
        %v9177 = vpop.f32.mrb[0].mxu0
        %9178 = vmatprep.mubr.bf16.mxu0 0
        %9179 = vmatmul.mubr.bf16.gmra.mrb[0].mxu0 %v7852
        %v9180 = vpop.f32.mrb[0].mxu0
        %v9181 = vadd.f32 %v9020, %v9180
        %v9182 = vpop.f32.mrb[0].mxu0
        %v9183 = vpop.f32.mrb[0].mxu0
        %v9184 = vadd.f32 %v9023, %v9183
        %v9185 = vpop.f32.mrb[0].mxu0
        %9186 = vmatprep.mubr.bf16.mxu0 0
        %9187 = vmatmul.mubr.bf16.gmra.mrb[0].mxu0 %v7853
        %v9188 = vpop.f32.mrb[0].mxu0
        %v9189 = vadd.f32 %v9028, %v9188
        %v9190 = vpop.f32.mrb[0].mxu0
        %v9191 = vpop.f32.mrb[0].mxu0
        %v9192 = vadd.f32 %v9031, %v9191
        %v9193 = vpop.f32.mrb[0].mxu0
        %9194 = vmatprep.mubr.bf16.mxu0 0
        %9195 = vmatmul.mubr.bf16.gmra.mrb[0].mxu0 %v7854
        %v9196 = vpop.f32.mrb[0].mxu0
        %v9197 = vadd.f32 %v9036, %v9196
        %v9198 = vpop.f32.mrb[0].mxu0
        %v9199 = vpop.f32.mrb[0].mxu0
        %v9200 = vadd.f32 %v9039, %v9199
        %v9201 = vpop.f32.mrb[0].mxu0
        %9202 = vmatprep.mubr.bf16.mxu0 0
        %9203 = vmatmul.mubr.bf16.gmra.mrb[0].mxu0 %v7855
        %v9204 = vpop.f32.mrb[0].mxu0
        %v9205 = vadd.f32 %v9044, %v9204
        %v9206 = vpop.f32.mrb[0].mxu0
        %v9207 = vpop.f32.mrb[0].mxu0
        %v9208 = vadd.f32 %v9047, %v9207
        %v9209 = vpop.f32.mrb[0].mxu0
        %9210 = vmatprep.mubr.bf16.mxu0 0
        %9211 = vmatmul.mubr.bf16.gmra.mrb[0].mxu0 %v7856
        %v9212 = vpop.f32.mrb[0].mxu0
        %v9213 = vadd.f32 %v9052, %v9212
        %v9214 = vpop.f32.mrb[0].mxu0
        %v9215 = vpop.f32.mrb[0].mxu0
        %v9216 = vadd.f32 %v9055, %v9215
        %v9217 = vpop.f32.mrb[0].mxu0
        %9218 = vmatprep.mubr.bf16.mxu0 0
        %9219 = vmatmul.mubr.bf16.gmra.mrb[0].mxu0 %v7857
        %v9220 = vpop.f32.mrb[0].mxu0
        %v9221 = vadd.f32 %v9060, %v9220
        %v9222 = vpop.f32.mrb[0].mxu0
        %v9223 = vpop.f32.mrb[0].mxu0
        %v9224 = vadd.f32 %v9063, %v9223
        %v9225 = vpop.f32.mrb[0].mxu0
        %9226 = vmatprep.mubr.bf16.mxu0 0
        %9227 = vmatmul.mubr.bf16.gmra.mrb[0].mxu0 %v7858
        %v9228 = vpop.f32.mrb[0].mxu0
        %v9229 = vadd.f32 %v9068, %v9228
        %v9230 = vpop.f32.mrb[0].mxu0
        %v9231 = vpop.f32.mrb[0].mxu0
        %v9232 = vadd.f32 %v9071, %v9231
        %v9233 = vpop.f32.mrb[0].mxu0
        %9234 = vmatprep.mubr.bf16.mxu0 0
        %9235 = vmatmul.mubr.bf16.gmra.mrb[0].mxu0 %v7859
        %v9236 = vpop.f32.mrb[0].mxu0
        %v9237 = vadd.f32 %v9076, %v9236
        %v9238 = vpop.f32.mrb[0].mxu0
        %v9239 = vpop.f32.mrb[0].mxu0
        %v9240 = vadd.f32 %v9079, %v9239
        %v9241 = vpop.f32.mrb[0].mxu0
        %9242 = vmatprep.mubr.bf16.mxu0 0
        %9243 = vmatmul.mubr.bf16.gmra.mrb[0].mxu0 %v7860
        %v9244 = vpop.f32.mrb[0].mxu0
        %v9245 = vadd.f32 %v9084, %v9244
        %v9246 = vpop.f32.mrb[0].mxu0
        %v9247 = vpop.f32.mrb[0].mxu0
        %v9248 = vadd.f32 %v9087, %v9247
        %v9249 = vpop.f32.mrb[0].mxu0
        %9250 = vmatprep.mubr.bf16.mxu0 0
        %9251 = vmatmul.mubr.bf16.gmra.mrb[0].mxu0 %v7861
        %v9252 = vpop.f32.mrb[0].mxu0
        %v9253 = vadd.f32 %v9092, %v9252
        %v9254 = vpop.f32.mrb[0].mxu0
        %v9255 = vpop.f32.mrb[0].mxu0
        %v9256 = vadd.f32 %v9095, %v9255
        %v9257 = vpop.f32.mrb[0].mxu0
        %9258 = vmatprep.mubr.bf16.mxu0 0
        %9259 = vmatmul.mubr.bf16.gmra.mrb[0].mxu0 %v7862
        %v9260 = vpop.f32.mrb[0].mxu0
        %v9261 = vadd.f32 %v9100, %v9260
        %v9262 = vpop.f32.mrb[0].mxu0
        %v9263 = vpop.f32.mrb[0].mxu0
        %v9264 = vadd.f32 %v9103, %v9263
        %v9265 = vpop.f32.mrb[0].mxu0
        %9266 = vdwg.mxu0
        %vm9267 = vcmp.ge.f32.partialorder %v9141, 0.0
        %vm9268 = vcmp.ge.f32.partialorder %v9144, 0.0
        %vm9269 = vcmp.ge.f32.partialorder %v9149, 0.0
        %vm9270 = vcmp.ge.f32.partialorder %v9152, 0.0
        %vm9271 = vcmp.ge.f32.partialorder %v9157, 0.0
        %vm9272 = vcmp.ge.f32.partialorder %v9160, 0.0
        %vm9273 = vcmp.ge.f32.partialorder %v9165, 0.0
        %vm9274 = vcmp.ge.f32.partialorder %v9168, 0.0
        %vm9275 = vcmp.ge.f32.partialorder %v9173, 0.0
        %vm9276 = vcmp.ge.f32.partialorder %v9176, 0.0
        %vm9277 = vcmp.ge.f32.partialorder %v9181, 0.0
        %vm9278 = vcmp.ge.f32.partialorder %v9184, 0.0
        %vm9279 = vcmp.ge.f32.partialorder %v9189, 0.0
        %vm9280 = vcmp.ge.f32.partialorder %v9192, 0.0
        %vm9281 = vcmp.ge.f32.partialorder %v9197, 0.0
        %vm9282 = vcmp.ge.f32.partialorder %v9200, 0.0
        %vm9283 = vcmp.ge.f32.partialorder %v9205, 0.0
        %vm9284 = vcmp.ge.f32.partialorder %v9208, 0.0
        %vm9285 = vcmp.ge.f32.partialorder %v9213, 0.0
        %vm9286 = vcmp.ge.f32.partialorder %v9216, 0.0
        %vm9287 = vcmp.ge.f32.partialorder %v9221, 0.0
        %vm9288 = vcmp.ge.f32.partialorder %v9224, 0.0
        %vm9289 = vcmp.ge.f32.partialorder %v9229, 0.0
        %vm9290 = vcmp.ge.f32.partialorder %v9232, 0.0
        %vm9291 = vcmp.ge.f32.partialorder %v9237, 0.0
        %vm9292 = vcmp.ge.f32.partialorder %v9240, 0.0
        %vm9293 = vcmp.ge.f32.partialorder %v9245, 0.0
        %vm9294 = vcmp.ge.f32.partialorder %v9248, 0.0
        %vm9295 = vcmp.ge.f32.partialorder %v9253, 0.0
        %vm9296 = vcmp.ge.f32.partialorder %v9256, 0.0
        %vm9297 = vcmp.ge.f32.partialorder %v9261, 0.0
        %vm9298 = vcmp.ge.f32.partialorder %v9264, 0.0
        %v9299 = vmul.f32 %v9141, 0.2
        %v9300 = vmul.f32 %v9144, 0.2
        %v9301 = vmul.f32 %v9149, 0.2
        %v9302 = vmul.f32 %v9152, 0.2
        %v9303 = vmul.f32 %v9157, 0.2
        %v9304 = vmul.f32 %v9160, 0.2
        %v9305 = vmul.f32 %v9165, 0.2
        %v9306 = vmul.f32 %v9168, 0.2
        %v9307 = vmul.f32 %v9173, 0.2
        %v9308 = vmul.f32 %v9176, 0.2
        %v9309 = vmul.f32 %v9181, 0.2
        %v9310 = vmul.f32 %v9184, 0.2
        %v9311 = vmul.f32 %v9189, 0.2
        %v9312 = vmul.f32 %v9192, 0.2
        %v9313 = vmul.f32 %v9197, 0.2
        %v9314 = vmul.f32 %v9200, 0.2
        %v9315 = vmul.f32 %v9205, 0.2
        %v9316 = vmul.f32 %v9208, 0.2
        %v9317 = vmul.f32 %v9213, 0.2
        %v9318 = vmul.f32 %v9216, 0.2
        %v9319 = vmul.f32 %v9221, 0.2
        %v9320 = vmul.f32 %v9224, 0.2
        %v9321 = vmul.f32 %v9229, 0.2
        %v9322 = vmul.f32 %v9232, 0.2
        %v9323 = vmul.f32 %v9237, 0.2
        %v9324 = vmul.f32 %v9240, 0.2
        %v9325 = vmul.f32 %v9245, 0.2
        %v9326 = vmul.f32 %v9248, 0.2
        %v9327 = vmul.f32 %v9253, 0.2
        %v9328 = vmul.f32 %v9256, 0.2
        %v9329 = vmul.f32 %v9261, 0.2
        %v9330 = vmul.f32 %v9264, 0.2
        %v9331 = vsel %vm9267, %v9141, %v9299
        %v9332 = vsel %vm9268, %v9144, %v9300
        %v9333 = vsel %vm9269, %v9149, %v9301
        %v9334 = vsel %vm9270, %v9152, %v9302
        %v9335 = vsel %vm9271, %v9157, %v9303
        %v9336 = vsel %vm9272, %v9160, %v9304
        %v9337 = vsel %vm9273, %v9165, %v9305
        %v9338 = vsel %vm9274, %v9168, %v9306
        %v9339 = vsel %vm9275, %v9173, %v9307
        %v9340 = vsel %vm9276, %v9176, %v9308
        %v9341 = vsel %vm9277, %v9181, %v9309
        %v9342 = vsel %vm9278, %v9184, %v9310
        %v9343 = vsel %vm9279, %v9189, %v9311
        %v9344 = vsel %vm9280, %v9192, %v9312
        %v9345 = vsel %vm9281, %v9197, %v9313
        %v9346 = vsel %vm9282, %v9200, %v9314
        %v9347 = vsel %vm9283, %v9205, %v9315
        %v9348 = vsel %vm9284, %v9208, %v9316
        %v9349 = vsel %vm9285, %v9213, %v9317
        %v9350 = vsel %vm9286, %v9216, %v9318
        %v9351 = vsel %vm9287, %v9221, %v9319
        %v9352 = vsel %vm9288, %v9224, %v9320
        %v9353 = vsel %vm9289, %v9229, %v9321
        %v9354 = vsel %vm9290, %v9232, %v9322
        %v9355 = vsel %vm9291, %v9237, %v9323
        %v9356 = vsel %vm9292, %v9240, %v9324
        %v9357 = vsel %vm9293, %v9245, %v9325
        %v9358 = vsel %vm9294, %v9248, %v9326
        %v9359 = vsel %vm9295, %v9253, %v9327
        %v9360 = vsel %vm9296, %v9256, %v9328
        %v9361 = vsel %vm9297, %v9261, %v9329
        %v9362 = vsel %vm9298, %v9264, %v9330
        %v9363 = vpack.c.bf16 %v9332, %v9331
        %v9364 = vpack.c.bf16 %v9334, %v9333
        %v9365 = vpack.c.bf16 %v9336, %v9335
        %v9366 = vpack.c.bf16 %v9338, %v9337
        %v9367 = vpack.c.bf16 %v9340, %v9339
        %v9368 = vpack.c.bf16 %v9342, %v9341
        %v9369 = vpack.c.bf16 %v9344, %v9343
        %v9370 = vpack.c.bf16 %v9346, %v9345
        %v9371 = vpack.c.bf16 %v9348, %v9347
        %v9372 = vpack.c.bf16 %v9350, %v9349
        %v9373 = vpack.c.bf16 %v9352, %v9351
        %v9374 = vpack.c.bf16 %v9354, %v9353
        %v9375 = vpack.c.bf16 %v9356, %v9355
        %v9376 = vpack.c.bf16 %v9358, %v9357
        %v9377 = vpack.c.bf16 %v9360, %v9359
        %v9378 = vpack.c.bf16 %v9362, %v9361
        %v9379 = vld [vmem:[#allocation9] sm:$0xf]
        %v9380 = vld [vmem:[#allocation9 + $0x4] sm:$0xf]
        %v9381 = vld [vmem:[#allocation9 + $0x8] sm:$0xf]
        %v9382 = vld [vmem:[#allocation9 + $0xc] sm:$0xf]
        %v9383 = vld [vmem:[#allocation9 + $0x10] sm:$0xf]
        %v9384 = vld [vmem:[#allocation9 + $0x14] sm:$0xf]
        %v9385 = vld [vmem:[#allocation9 + $0x18] sm:$0xf]
        %v9386 = vld [vmem:[#allocation9 + $0x1c] sm:$0xf]
        %v9387 = vld [vmem:[#allocation9 + $0x20] sm:$0xf]
        %v9388 = vld [vmem:[#allocation9 + $0x24] sm:$0xf]
        %v9389 = vld [vmem:[#allocation9 + $0x28] sm:$0xf]
        %v9390 = vld [vmem:[#allocation9 + $0x2c] sm:$0xf]
        %v9391 = vld [vmem:[#allocation9 + $0x30] sm:$0xf]
        %v9392 = vld [vmem:[#allocation9 + $0x34] sm:$0xf]
        %v9393 = vld [vmem:[#allocation9 + $0x38] sm:$0xf]
        %v9394 = vld [vmem:[#allocation9 + $0x3c] sm:$0xf]
        %v9395 = vld [vmem:[%s6] sm:$0x1]
        %v9397 = vlaneseq
        %v9398 = vshrl.u32 %v9397, 7
        %v9399 = vsub.s32 0, %v9398
        %v9400 = vrot.slane %v9395, %v9399
        %v9418 = vunpack.c.l.b16 %v9379
        %v9419 = vunpack.c.l.b16 %v9380
        %v9420 = vunpack.c.l.b16 %v9381
        %v9421 = vunpack.c.l.b16 %v9382
        %v9422 = vunpack.c.l.b16 %v9383
        %v9423 = vunpack.c.l.b16 %v9384
        %v9424 = vunpack.c.l.b16 %v9385
        %v9425 = vunpack.c.l.b16 %v9386
        %v9426 = vunpack.c.l.b16 %v9387
        %v9427 = vunpack.c.l.b16 %v9388
        %v9428 = vunpack.c.l.b16 %v9389
        %v9429 = vunpack.c.l.b16 %v9390
        %v9430 = vunpack.c.l.b16 %v9391
        %v9431 = vunpack.c.l.b16 %v9392
        %v9432 = vunpack.c.l.b16 %v9393
        %v9433 = vunpack.c.l.b16 %v9394
        %v9434 = vpack.c.b16 %v9419, %v9418
        %v9435 = vpack.c.b16 %v9421, %v9420
        %v9436 = vpack.c.b16 %v9423, %v9422
        %v9437 = vpack.c.b16 %v9425, %v9424
        %v9438 = vpack.c.b16 %v9427, %v9426
        %v9439 = vpack.c.b16 %v9429, %v9428
        %v9440 = vpack.c.b16 %v9431, %v9430
        %v9441 = vpack.c.b16 %v9433, %v9432
        %9450 = vmatprep.subr.bf16.mxu0 0
        %9451 = vmatpush1.bf16.msra.mxu0 %v9434
        %9452 = vmatprep.subr.bf16.mxu0 0
        %9453 = vmatpush1.bf16.msra.mxu0 %v9435
        %9454 = vmatprep.subr.bf16.mxu0 0
        %9455 = vmatpush1.bf16.msra.mxu0 %v9436
        %9456 = vmatprep.subr.bf16.mxu0 0
        %9457 = vmatpush1.bf16.msra.mxu0 %v9437
        %9458 = vmatprep.subr.bf16.mxu0 0
        %9459 = vmatpush1.bf16.msra.mxu0 %v9438
        %9460 = vmatprep.subr.bf16.mxu0 0
        %9461 = vmatpush1.bf16.msra.mxu0 %v9439
        %9462 = vmatprep.subr.bf16.mxu0 0
        %9463 = vmatpush1.bf16.msra.mxu0 %v9440
        %9464 = vmatprep.subr.bf16.mxu0 0
        %9465 = vmatpush1.bf16.msra.mxu0 %v9441
        %9466 = vmatprep.subr.bf16.mxu0 0
        %9467 = vmatpush1.bf16.msra.mxu0 0
        %9468 = vmatprep.subr.bf16.mxu0 0
        %9469 = vmatpush1.bf16.msra.mxu0 0
        %9470 = vmatprep.subr.bf16.mxu0 0
        %9471 = vmatpush1.bf16.msra.mxu0 0
        %9472 = vmatprep.subr.bf16.mxu0 0
        %9473 = vmatpush1.bf16.msra.mxu0 0
        %9474 = vmatprep.subr.bf16.mxu0 0
        %9475 = vmatpush1.bf16.msra.mxu0 0
        %9476 = vmatprep.subr.bf16.mxu0 0
        %9477 = vmatpush1.bf16.msra.mxu0 0
        %9478 = vmatprep.subr.bf16.mxu0 0
        %9479 = vmatpush1.bf16.msra.mxu0 0
        %9480 = vmatprep.subr.bf16.mxu0 0
        %9481 = vmatpush1.bf16.msra.mxu0 0
        %9482 = vmatprep.mubr.bf16.mxu0 0
        %9483 = vmatmul.mubr.bf16.gmra.mrb[0].mxu0 %v9363
        %v9484 = vpop.f32.mrb[0].mxu0
        %v9485 = vadd.f32 %v9400, %v9484
        %v9486 = vpop.f32.mrb[0].mxu0
        %v9487 = vpop.f32.mrb[0].mxu0
        %v9488 = vadd.f32 %v9400, %v9487
        %v9489 = vpop.f32.mrb[0].mxu0
        %9490 = vmatprep.mubr.bf16.mxu0 0
        %9491 = vmatmul.mubr.bf16.gmra.mrb[0].mxu0 %v9364
        %v9492 = vpop.f32.mrb[0].mxu0
        %v9493 = vadd.f32 %v9400, %v9492
        %v9494 = vpop.f32.mrb[0].mxu0
        %v9495 = vpop.f32.mrb[0].mxu0
        %v9496 = vadd.f32 %v9400, %v9495
        %v9497 = vpop.f32.mrb[0].mxu0
        %9498 = vmatprep.mubr.bf16.mxu0 0
        %9499 = vmatmul.mubr.bf16.gmra.mrb[0].mxu0 %v9365
        %v9500 = vpop.f32.mrb[0].mxu0
        %v9501 = vadd.f32 %v9400, %v9500
        %v9502 = vpop.f32.mrb[0].mxu0
        %v9503 = vpop.f32.mrb[0].mxu0
        %v9504 = vadd.f32 %v9400, %v9503
        %v9505 = vpop.f32.mrb[0].mxu0
        %9506 = vmatprep.mubr.bf16.mxu0 0
        %9507 = vmatmul.mubr.bf16.gmra.mrb[0].mxu0 %v9366
        %v9508 = vpop.f32.mrb[0].mxu0
        %v9509 = vadd.f32 %v9400, %v9508
        %v9510 = vpop.f32.mrb[0].mxu0
        %v9511 = vpop.f32.mrb[0].mxu0
        %v9512 = vadd.f32 %v9400, %v9511
        %v9513 = vpop.f32.mrb[0].mxu0
        %9514 = vmatprep.mubr.bf16.mxu0 0
        %9515 = vmatmul.mubr.bf16.gmra.mrb[0].mxu0 %v9367
        %v9516 = vpop.f32.mrb[0].mxu0
        %v9517 = vadd.f32 %v9400, %v9516
        %v9518 = vpop.f32.mrb[0].mxu0
        %v9519 = vpop.f32.mrb[0].mxu0
        %v9520 = vadd.f32 %v9400, %v9519
        %v9521 = vpop.f32.mrb[0].mxu0
        %9522 = vmatprep.mubr.bf16.mxu0 0
        %9523 = vmatmul.mubr.bf16.gmra.mrb[0].mxu0 %v9368
        %v9524 = vpop.f32.mrb[0].mxu0
        %v9525 = vadd.f32 %v9400, %v9524
        %v9526 = vpop.f32.mrb[0].mxu0
        %v9527 = vpop.f32.mrb[0].mxu0
        %v9528 = vadd.f32 %v9400, %v9527
        %v9529 = vpop.f32.mrb[0].mxu0
        %9530 = vmatprep.mubr.bf16.mxu0 0
        %9531 = vmatmul.mubr.bf16.gmra.mrb[0].mxu0 %v9369
        %v9532 = vpop.f32.mrb[0].mxu0
        %v9533 = vadd.f32 %v9400, %v9532
        %v9534 = vpop.f32.mrb[0].mxu0
        %v9535 = vpop.f32.mrb[0].mxu0
        %v9536 = vadd.f32 %v9400, %v9535
        %v9537 = vpop.f32.mrb[0].mxu0
        %9538 = vmatprep.mubr.bf16.mxu0 0
        %9539 = vmatmul.mubr.bf16.gmra.mrb[0].mxu0 %v9370
        %v9540 = vpop.f32.mrb[0].mxu0
        %v9541 = vadd.f32 %v9400, %v9540
        %v9542 = vpop.f32.mrb[0].mxu0
        %v9543 = vpop.f32.mrb[0].mxu0
        %v9544 = vadd.f32 %v9400, %v9543
        %v9545 = vpop.f32.mrb[0].mxu0
        %9546 = vmatprep.mubr.bf16.mxu0 0
        %9547 = vmatmul.mubr.bf16.gmra.mrb[0].mxu0 %v9371
        %v9548 = vpop.f32.mrb[0].mxu0
        %v9549 = vadd.f32 %v9400, %v9548
        %v9550 = vpop.f32.mrb[0].mxu0
        %v9551 = vpop.f32.mrb[0].mxu0
        %v9552 = vadd.f32 %v9400, %v9551
        %v9553 = vpop.f32.mrb[0].mxu0
        %9554 = vmatprep.mubr.bf16.mxu0 0
        %9555 = vmatmul.mubr.bf16.gmra.mrb[0].mxu0 %v9372
        %v9556 = vpop.f32.mrb[0].mxu0
        %v9557 = vadd.f32 %v9400, %v9556
        %v9558 = vpop.f32.mrb[0].mxu0
        %v9559 = vpop.f32.mrb[0].mxu0
        %v9560 = vadd.f32 %v9400, %v9559
        %v9561 = vpop.f32.mrb[0].mxu0
        %9562 = vmatprep.mubr.bf16.mxu0 0
        %9563 = vmatmul.mubr.bf16.gmra.mrb[0].mxu0 %v9373
        %v9564 = vpop.f32.mrb[0].mxu0
        %v9565 = vadd.f32 %v9400, %v9564
        %v9566 = vpop.f32.mrb[0].mxu0
        %v9567 = vpop.f32.mrb[0].mxu0
        %v9568 = vadd.f32 %v9400, %v9567
        %v9569 = vpop.f32.mrb[0].mxu0
        %9570 = vmatprep.mubr.bf16.mxu0 0
        %9571 = vmatmul.mubr.bf16.gmra.mrb[0].mxu0 %v9374
        %v9572 = vpop.f32.mrb[0].mxu0
        %v9573 = vadd.f32 %v9400, %v9572
        %v9574 = vpop.f32.mrb[0].mxu0
        %v9575 = vpop.f32.mrb[0].mxu0
        %v9576 = vadd.f32 %v9400, %v9575
        %v9577 = vpop.f32.mrb[0].mxu0
        %9578 = vmatprep.mubr.bf16.mxu0 0
        %9579 = vmatmul.mubr.bf16.gmra.mrb[0].mxu0 %v9375
        %v9580 = vpop.f32.mrb[0].mxu0
        %v9581 = vadd.f32 %v9400, %v9580
        %v9582 = vpop.f32.mrb[0].mxu0
        %v9583 = vpop.f32.mrb[0].mxu0
        %v9584 = vadd.f32 %v9400, %v9583
        %v9585 = vpop.f32.mrb[0].mxu0
        %9586 = vmatprep.mubr.bf16.mxu0 0
        %9587 = vmatmul.mubr.bf16.gmra.mrb[0].mxu0 %v9376
        %v9588 = vpop.f32.mrb[0].mxu0
        %v9589 = vadd.f32 %v9400, %v9588
        %v9590 = vpop.f32.mrb[0].mxu0
        %v9591 = vpop.f32.mrb[0].mxu0
        %v9592 = vadd.f32 %v9400, %v9591
        %v9593 = vpop.f32.mrb[0].mxu0
        %9594 = vmatprep.mubr.bf16.mxu0 0
        %9595 = vmatmul.mubr.bf16.gmra.mrb[0].mxu0 %v9377
        %v9596 = vpop.f32.mrb[0].mxu0
        %v9597 = vadd.f32 %v9400, %v9596
        %v9598 = vpop.f32.mrb[0].mxu0
        %v9599 = vpop.f32.mrb[0].mxu0
        %v9600 = vadd.f32 %v9400, %v9599
        %v9601 = vpop.f32.mrb[0].mxu0
        %9602 = vmatprep.mubr.bf16.mxu0 0
        %9603 = vmatmul.mubr.bf16.gmra.mrb[0].mxu0 %v9378
        %v9604 = vpop.f32.mrb[0].mxu0
        %v9605 = vadd.f32 %v9400, %v9604
        %v9606 = vpop.f32.mrb[0].mxu0
        %v9607 = vpop.f32.mrb[0].mxu0
        %v9608 = vadd.f32 %v9400, %v9607
        %v9609 = vpop.f32.mrb[0].mxu0
        %9610 = vdwg.mxu0
        %v9611 = vld [vmem:[%s1736] sm:$0xf]
        %v9612 = vld [vmem:[%s1736 + $0x4] sm:$0xf]
        %v9613 = vld [vmem:[%s1736 + $0x8] sm:$0x1]
        %v9614 = vld [vmem:[%s1736 + $0xc] sm:$0xf]
        %v9615 = vld [vmem:[%s1736 + $0x10] sm:$0xf]
        %v9616 = vld [vmem:[%s1736 + $0x14] sm:$0x1]
        %v9617 = vld [vmem:[%s1736 + $0x18] sm:$0xf]
        %v9618 = vld [vmem:[%s1736 + $0x1c] sm:$0xf]
        %v9619 = vld [vmem:[%s1736 + $0x20] sm:$0x1]
        %v9620 = vld [vmem:[%s1736 + $0x24] sm:$0xf]
        %v9621 = vld [vmem:[%s1736 + $0x28] sm:$0xf]
        %v9622 = vld [vmem:[%s1736 + $0x2c] sm:$0x1]
        %v9623 = vld [vmem:[%s1736 + $0x30] sm:$0xf]
        %v9624 = vld [vmem:[%s1736 + $0x34] sm:$0xf]
        %v9625 = vld [vmem:[%s1736 + $0x38] sm:$0x1]
        %v9626 = vld [vmem:[%s1736 + $0x3c] sm:$0xf]
        %v9627 = vld [vmem:[%s1736 + $0x40] sm:$0xf]
        %v9628 = vld [vmem:[%s1736 + $0x44] sm:$0x1]
        %v9629 = vld [vmem:[%s1736 + $0x48] sm:$0xf]
        %v9630 = vld [vmem:[%s1736 + $0x4c] sm:$0xf]
        %v9631 = vld [vmem:[%s1736 + $0x50] sm:$0x1]
        %v9632 = vld [vmem:[%s1736 + $0x54] sm:$0xf]
        %v9633 = vld [vmem:[%s1736 + $0x58] sm:$0xf]
        %v9634 = vld [vmem:[%s1736 + $0x5c] sm:$0x1]
        %v9635 = vld [vmem:[%s1736 + $0x60] sm:$0xf]
        %v9636 = vld [vmem:[%s1736 + $0x64] sm:$0xf]
        %v9637 = vld [vmem:[%s1736 + $0x68] sm:$0x1]
        %v9638 = vld [vmem:[%s1736 + $0x6c] sm:$0xf]
        %v9639 = vld [vmem:[%s1736 + $0x70] sm:$0xf]
        %v9640 = vld [vmem:[%s1736 + $0x74] sm:$0x1]
        %v9641 = vld [vmem:[%s1736 + $0x78] sm:$0xf]
        %v9642 = vld [vmem:[%s1736 + $0x7c] sm:$0xf]
        %v9643 = vld [vmem:[%s1736 + $0x80] sm:$0x1]
        %v9644 = vld [vmem:[%s1736 + $0x84] sm:$0xf]
        %v9645 = vld [vmem:[%s1736 + $0x88] sm:$0xf]
        %v9646 = vld [vmem:[%s1736 + $0x8c] sm:$0x1]
        %v9647 = vld [vmem:[%s1736 + $0x90] sm:$0xf]
        %v9648 = vld [vmem:[%s1736 + $0x94] sm:$0xf]
        %v9649 = vld [vmem:[%s1736 + $0x98] sm:$0x1]
        %v9650 = vld [vmem:[%s1736 + $0x9c] sm:$0xf]
        %v9651 = vld [vmem:[%s1736 + $0xa0] sm:$0xf]
        %v9652 = vld [vmem:[%s1736 + $0xa4] sm:$0x1]
        %v9653 = vld [vmem:[%s1736 + $0xa8] sm:$0xf]
        %v9654 = vld [vmem:[%s1736 + $0xac] sm:$0xf]
        %v9655 = vld [vmem:[%s1736 + $0xb0] sm:$0x1]
        %v9656 = vld [vmem:[%s1736 + $0xb4] sm:$0xf]
        %v9657 = vld [vmem:[%s1736 + $0xb8] sm:$0xf]
        %v9658 = vld [vmem:[%s1736 + $0xbc] sm:$0x1]
        %v9659 = vunpack.c.l.bf16 %v9611
        %v9660 = vunpack.c.l.bf16 %v9612
        %v9661 = vunpack.c.l.bf16 %v9613
        %v9662 = vunpack.c.l.bf16 %v9614
        %v9663 = vunpack.c.l.bf16 %v9615
        %v9664 = vunpack.c.l.bf16 %v9616
        %v9665 = vunpack.c.l.bf16 %v9617
        %v9666 = vunpack.c.l.bf16 %v9618
        %v9667 = vunpack.c.l.bf16 %v9619
        %v9668 = vunpack.c.l.bf16 %v9620
        %v9669 = vunpack.c.l.bf16 %v9621
        %v9670 = vunpack.c.l.bf16 %v9622
        %v9671 = vunpack.c.l.bf16 %v9623
        %v9672 = vunpack.c.l.bf16 %v9624
        %v9673 = vunpack.c.l.bf16 %v9625
        %v9674 = vunpack.c.l.bf16 %v9626
        %v9675 = vunpack.c.l.bf16 %v9627
        %v9676 = vunpack.c.l.bf16 %v9628
        %v9677 = vunpack.c.l.bf16 %v9629
        %v9678 = vunpack.c.l.bf16 %v9630
        %v9679 = vunpack.c.l.bf16 %v9631
        %v9680 = vunpack.c.l.bf16 %v9632
        %v9681 = vunpack.c.l.bf16 %v9633
        %v9682 = vunpack.c.l.bf16 %v9634
        %v9683 = vunpack.c.l.bf16 %v9635
        %v9684 = vunpack.c.l.bf16 %v9636
        %v9685 = vunpack.c.l.bf16 %v9637
        %v9686 = vunpack.c.l.bf16 %v9638
        %v9687 = vunpack.c.l.bf16 %v9639
        %v9688 = vunpack.c.l.bf16 %v9640
        %v9689 = vunpack.c.l.bf16 %v9641
        %v9690 = vunpack.c.l.bf16 %v9642
        %v9691 = vunpack.c.l.bf16 %v9643
        %v9692 = vunpack.c.l.bf16 %v9644
        %v9693 = vunpack.c.l.bf16 %v9645
        %v9694 = vunpack.c.l.bf16 %v9646
        %v9695 = vunpack.c.l.bf16 %v9647
        %v9696 = vunpack.c.l.bf16 %v9648
        %v9697 = vunpack.c.l.bf16 %v9649
        %v9698 = vunpack.c.l.bf16 %v9650
        %v9699 = vunpack.c.l.bf16 %v9651
        %v9700 = vunpack.c.l.bf16 %v9652
        %v9701 = vunpack.c.l.bf16 %v9653
        %v9702 = vunpack.c.l.bf16 %v9654
        %v9703 = vunpack.c.l.bf16 %v9655
        %v9704 = vunpack.c.l.bf16 %v9656
        %v9705 = vunpack.c.l.bf16 %v9657
        %v9706 = vunpack.c.l.bf16 %v9658
        %vm9755 = vcmask 1046528
        %v9756 = vrot.slane %v9659, 1
        %v9757 = vrot.slane %v9660, 1
        %v9758 = vsel %vm9755, %v9756, %v9757
        %v9759 = vrot.slane %v9661, 1
        %v9760 = vsel %vm9755, %v9757, %v9759
        %v9761 = vrot.slane %v9662, 1
        %v9762 = vrot.slane %v9663, 1
        %v9763 = vsel %vm9755, %v9761, %v9762
        %v9764 = vrot.slane %v9664, 1
        %v9765 = vsel %vm9755, %v9762, %v9764
        %v9766 = vrot.slane %v9665, 1
        %v9767 = vrot.slane %v9666, 1
        %v9768 = vsel %vm9755, %v9766, %v9767
        %v9769 = vrot.slane %v9667, 1
        %v9770 = vsel %vm9755, %v9767, %v9769
        %v9771 = vrot.slane %v9668, 1
        %v9772 = vrot.slane %v9669, 1
        %v9773 = vsel %vm9755, %v9771, %v9772
        %v9774 = vrot.slane %v9670, 1
        %v9775 = vsel %vm9755, %v9772, %v9774
        %v9776 = vrot.slane %v9671, 1
        %v9777 = vrot.slane %v9672, 1
        %v9778 = vsel %vm9755, %v9776, %v9777
        %v9779 = vrot.slane %v9673, 1
        %v9780 = vsel %vm9755, %v9777, %v9779
        %v9781 = vrot.slane %v9674, 1
        %v9782 = vrot.slane %v9675, 1
        %v9783 = vsel %vm9755, %v9781, %v9782
        %v9784 = vrot.slane %v9676, 1
        %v9785 = vsel %vm9755, %v9782, %v9784
        %v9786 = vrot.slane %v9677, 1
        %v9787 = vrot.slane %v9678, 1
        %v9788 = vsel %vm9755, %v9786, %v9787
        %v9789 = vrot.slane %v9679, 1
        %v9790 = vsel %vm9755, %v9787, %v9789
        %v9791 = vrot.slane %v9680, 1
        %v9792 = vrot.slane %v9681, 1
        %v9793 = vsel %vm9755, %v9791, %v9792
        %v9794 = vrot.slane %v9682, 1
        %v9795 = vsel %vm9755, %v9792, %v9794
        %v9796 = vrot.slane %v9683, 1
        %v9797 = vrot.slane %v9684, 1
        %v9798 = vsel %vm9755, %v9796, %v9797
        %v9799 = vrot.slane %v9685, 1
        %v9800 = vsel %vm9755, %v9797, %v9799
        %v9801 = vrot.slane %v9686, 1
        %v9802 = vrot.slane %v9687, 1
        %v9803 = vsel %vm9755, %v9801, %v9802
        %v9804 = vrot.slane %v9688, 1
        %v9805 = vsel %vm9755, %v9802, %v9804
        %v9806 = vrot.slane %v9689, 1
        %v9807 = vrot.slane %v9690, 1
        %v9808 = vsel %vm9755, %v9806, %v9807
        %v9809 = vrot.slane %v9691, 1
        %v9810 = vsel %vm9755, %v9807, %v9809
        %v9811 = vrot.slane %v9692, 1
        %v9812 = vrot.slane %v9693, 1
        %v9813 = vsel %vm9755, %v9811, %v9812
        %v9814 = vrot.slane %v9694, 1
        %v9815 = vsel %vm9755, %v9812, %v9814
        %v9816 = vrot.slane %v9695, 1
        %v9817 = vrot.slane %v9696, 1
        %v9818 = vsel %vm9755, %v9816, %v9817
        %v9819 = vrot.slane %v9697, 1
        %v9820 = vsel %vm9755, %v9817, %v9819
        %v9821 = vrot.slane %v9698, 1
        %v9822 = vrot.slane %v9699, 1
        %v9823 = vsel %vm9755, %v9821, %v9822
        %v9824 = vrot.slane %v9700, 1
        %v9825 = vsel %vm9755, %v9822, %v9824
        %v9826 = vrot.slane %v9701, 1
        %v9827 = vrot.slane %v9702, 1
        %v9828 = vsel %vm9755, %v9826, %v9827
        %v9829 = vrot.slane %v9703, 1
        %v9830 = vsel %vm9755, %v9827, %v9829
        %v9831 = vrot.slane %v9704, 1
        %v9832 = vrot.slane %v9705, 1
        %v9833 = vsel %vm9755, %v9831, %v9832
        %v9834 = vrot.slane %v9706, 1
        %v9835 = vsel %vm9755, %v9832, %v9834
        %v9868 = vadd.f32 %v9485, %v9758
        %v9869 = vadd.f32 %v9488, %v9760
        %v9870 = vadd.f32 %v9493, %v9763
        %v9871 = vadd.f32 %v9496, %v9765
        %v9872 = vadd.f32 %v9501, %v9768
        %v9873 = vadd.f32 %v9504, %v9770
        %v9874 = vadd.f32 %v9509, %v9773
        %v9875 = vadd.f32 %v9512, %v9775
        %v9876 = vadd.f32 %v9517, %v9778
        %v9877 = vadd.f32 %v9520, %v9780
        %v9878 = vadd.f32 %v9525, %v9783
        %v9879 = vadd.f32 %v9528, %v9785
        %v9880 = vadd.f32 %v9533, %v9788
        %v9881 = vadd.f32 %v9536, %v9790
        %v9882 = vadd.f32 %v9541, %v9793
        %v9883 = vadd.f32 %v9544, %v9795
        %v9884 = vadd.f32 %v9549, %v9798
        %v9885 = vadd.f32 %v9552, %v9800
        %v9886 = vadd.f32 %v9557, %v9803
        %v9887 = vadd.f32 %v9560, %v9805
        %v9888 = vadd.f32 %v9565, %v9808
        %v9889 = vadd.f32 %v9568, %v9810
        %v9890 = vadd.f32 %v9573, %v9813
        %v9891 = vadd.f32 %v9576, %v9815
        %v9892 = vadd.f32 %v9581, %v9818
        %v9893 = vadd.f32 %v9584, %v9820
        %v9894 = vadd.f32 %v9589, %v9823
        %v9895 = vadd.f32 %v9592, %v9825
        %v9896 = vadd.f32 %v9597, %v9828
        %v9897 = vadd.f32 %v9600, %v9830
        %v9898 = vadd.f32 %v9605, %v9833
        %v9899 = vadd.f32 %v9608, %v9835
        %9900 = vst [vmem:[%s358] sm:$0xff] %v9868
        %9901 = vst [vmem:[%s358 + $0x8] sm:$0xff] %v9869
        %9902 = vst [vmem:[%s358 + $0x10] sm:$0xff] %v9870
        %9903 = vst [vmem:[%s358 + $0x18] sm:$0xff] %v9871
        %9904 = vst [vmem:[%s358 + $0x20] sm:$0xff] %v9872
        %9905 = vst [vmem:[%s358 + $0x28] sm:$0xff] %v9873
        %9906 = vst [vmem:[%s358 + $0x30] sm:$0xff] %v9874
        %9907 = vst [vmem:[%s358 + $0x38] sm:$0xff] %v9875
        %9908 = vst [vmem:[%s358 + $0x40] sm:$0xff] %v9876
        %9909 = vst [vmem:[%s358 + $0x48] sm:$0xff] %v9877
        %9910 = vst [vmem:[%s358 + $0x50] sm:$0xff] %v9878
        %9911 = vst [vmem:[%s358 + $0x58] sm:$0xff] %v9879
        %9912 = vst [vmem:[%s358 + $0x60] sm:$0xff] %v9880
        %9913 = vst [vmem:[%s358 + $0x68] sm:$0xff] %v9881
        %9914 = vst [vmem:[%s358 + $0x70] sm:$0xff] %v9882
        %9915 = vst [vmem:[%s358 + $0x78] sm:$0xff] %v9883
        %9916 = vst [vmem:[%s358 + $0x80] sm:$0xff] %v9884
        %9917 = vst [vmem:[%s358 + $0x88] sm:$0xff] %v9885
        %9918 = vst [vmem:[%s358 + $0x90] sm:$0xff] %v9886
        %9919 = vst [vmem:[%s358 + $0x98] sm:$0xff] %v9887
        %9920 = vst [vmem:[%s358 + $0xa0] sm:$0xff] %v9888
        %9921 = vst [vmem:[%s358 + $0xa8] sm:$0xff] %v9889
        %9922 = vst [vmem:[%s358 + $0xb0] sm:$0xff] %v9890
        %9923 = vst [vmem:[%s358 + $0xb8] sm:$0xff] %v9891
        %9924 = vst [vmem:[%s358 + $0xc0] sm:$0xff] %v9892
        %9925 = vst [vmem:[%s358 + $0xc8] sm:$0xff] %v9893
        %9926 = vst [vmem:[%s358 + $0xd0] sm:$0xff] %v9894
        %9927 = vst [vmem:[%s358 + $0xd8] sm:$0xff] %v9895
        %9928 = vst [vmem:[%s358 + $0xe0] sm:$0xff] %v9896
        %9929 = vst [vmem:[%s358 + $0xe8] sm:$0xff] %v9897
        %9930 = vst [vmem:[%s358 + $0xf0] sm:$0xff] %v9898
        %9931 = vst [vmem:[%s358 + $0xf8] sm:$0xff] %v9899
        %s9932 = sand.u32 %s202, 1
        %s9933 = scalar_lea.sflag [#allocation5], %s9932
        %s9934 = sand.u32 %s202, 1
        %s9935 = smul.addr %s9934, 256
        %s9936 = scalar_lea.vmem [#allocation11], %s9935
        // Predicated region
        $region69: #{tpu_custom_call.1} parent=47 // pred_check
          %p9937 = pneg %p212
        $region70: #{tpu_custom_call.1} parent=47 // pred_check_branch
          %9939 = sbr.rel (%p9937) target = $region72
        $region71: #{tpu_custom_call.1} parent=47 // pred_region
          %s9940 = smul.u32 16, %s31
          %s9942 = ssub.s32 4096, 4096
          %9943 = vsyncadd %s9933, %s9942
          %s9944 = smul.addr %s9940, 2
          %s9945 = smul.addr %s30, 32
          %s9946 = sadd.s32 %s9944, %s9945
          %s9947 = smul.addr %s9946, 128
          %s9948 = scalar_lea.hbm %s7, %s9947
          %s9949 = sshll.u32 %s9936, 4
          %s9950 = int_to_ptr.vmem [resolvable:$true] %s9949
          %9955 = dma.vmem_to_hbm [thread:$0]  %s9950, 4096, %s9948, %s9933, 128, 128, 8
        $region72: #{tpu_custom_call.1} parent=47 // pred_fallthru
          _
      $region48: #{tpu_custom_call.1} parent=5 // pred_fallthru
        _
      %p9956 = scmp.le.s32.totalorder 2, %s21
      // Predicated region
      $region73: #{tpu_custom_call.1} parent=5 // pred_check
        %p9957 = pneg %p9956
      $region74: #{tpu_custom_call.1} parent=5 // pred_check_branch
        %9959 = sbr.rel (%p9957) target = $region76
      $region75: #{tpu_custom_call.1} parent=5 // pred_region
        %s9960 = ssub.s32 %s21, 2
        // Predicated region
        $region77: #{tpu_custom_call.1} parent=75 // pred_check
          %p9961 = pneg %p218
        $region78: #{tpu_custom_call.1} parent=75 // pred_check_branch
          %9963 = sbr.rel (%p9961) target = $region80
        $region79: #{tpu_custom_call.1} parent=75 // pred_region
          %s9964 = sand.u32 %s203, 1
          %s9965 = scalar_lea.sflag [#allocation5], %s9964
          %s9966 = sand.u32 %s203, 1
          %s9967 = smul.addr %s9966, 256
          %s9968 = scalar_lea.vmem [#allocation11], %s9967
          %9969 = dma.done %s9965, 4096
        $region80: #{tpu_custom_call.1} parent=75 // pred_fallthru
          _
      $region76: #{tpu_custom_call.1} parent=5 // pred_fallthru
        _
    $region6: #{tpu_custom_call.1} parent=1 // loop_footer
      %s25 = sadd.s32 1, %s21
    $region7: #{tpu_custom_call.1} parent=1 // loop_footer_branch
      %20 = sbr.rel target = $region3
    $region8: #{tpu_custom_call.1} parent=1 // loop_exit
      _
    %9970 = vsyncpa [#allocation4], 1
    %s9971 = scalar_lea.sflag [#allocation4], 1
    %9972 = vsyncpa %s9971, 1
    %9973 = vsyncpa [#allocation7], 1
    %9974 = vsyncpa [#allocation10], 1
    %9975 = vsyncpa [#allocation5], 1
    %s9976 = scalar_lea.sflag [#allocation5], 1
    %9977 = vsyncpa %s9976, 1

</llo_original>
